<compile_context>
chip_gen: v6e
topology: v6e:2x2x1
jax: 0.10.0
libtpu: 0.0.40
codegen_flags: <defaults>
</compile_context>

<pallas_src>
import functools

import jax
import jax.numpy as jnp
from jax.experimental import pallas as pl
from jax.experimental.pallas import tpu as pltpu

N_ELLIPSE_PARAMETERS = 2 + 2 + 3 + 1 + 1   # = 9
N_SHAPES = 8

# bf16 MXU operands (native fast path on v5e/v6e/v7x); accumulation stays f32.
# Set to jnp.float32 (and approx=False in the softmax reciprocal) if bit-closeness is required.
MXU_DTYPE = jnp.bfloat16
NEG_INF = -1e30


# ---------------------------------------------------------------- fused ViT kernel

def _vit_kernel(patches_ref,
                pln1_g, pln1_b, pw, pb, pln2_g, pln2_b,
                cls, pos,
                ln1_g, ln1_b, wq, wk, wv, w_out, b_out,
                ln2_g, ln2_b, w1, b1, w2, b2,
                fln_g, fln_b, hw, hb, scales,
                o_ref, *, depth, heads, dim_head, seq_real):
    Bt, S, PD = patches_ref.shape          # S is the padded (multiple-of-8) sequence length
    D = pb.shape[-1]
    N = Bt * S
    H, Dh = heads, dim_head
    scale = float(Dh) ** -0.5

    def ln(v, g, b):
        v = v.astype(jnp.float32)
        mu = jnp.mean(v, axis=-1, keepdims=True)
        var = jnp.mean(jnp.square(v - mu), axis=-1, keepdims=True)
        return (v - mu) * jax.lax.rsqrt(var + 1e-5) * g + b

    def mm(a, bm):                          # a @ bm  (bf16 MXU operands, f32 accumulation)
        return jnp.dot(a.astype(MXU_DTYPE), bm.astype(MXU_DTYPE),
                       preferred_element_type=jnp.float32)

    # additive mask so padded key positions never contribute to real tokens' softmax
    key_ids = jax.lax.broadcasted_iota(jnp.int32, (1, 1, S), 2)
    neg_mask = jnp.where(key_ids >= seq_real, NEG_INF, 0.0).astype(jnp.float32)

    # ---- patch embedding: LN -> Linear -> LN, row-batched over the Bt images ----
    pt = patches_ref[...].reshape(N, PD)
    t = ln(pt, pln1_g[...], pln1_b[...])
    t = mm(t, pw[...]) + pb[...]
    t = ln(t, pln2_g[...], pln2_b[...])                      # (N, D)

    # replace row 0 of every image with the cls token, then add positional embedding
    t3 = t.reshape(Bt, S, D)
    row0 = jax.lax.broadcasted_iota(jnp.int32, (Bt, S, 1), 1) == 0
    x = (jnp.where(row0, cls[...], t3) + pos[...]).reshape(N, D)   # (N, D) f32

    # ---- transformer layers (statically unrolled; all weights resident in VMEM) ----
    for l in range(depth):
        # pre-LN multi-head attention + residual (to_qkv has no bias)
        xn = ln(x, ln1_g[l], ln1_b[l])                       # (N, D)
        pieces = []
        for h in range(H):
            q = mm(xn, wq[l, h]).reshape(Bt, S, Dh)          # major-axis weight indexing
            k = mm(xn, wk[l, h]).reshape(Bt, S, Dh)
            v = mm(xn, wv[l, h]).reshape(Bt, S, Dh)
            s = jnp.einsum('bqd,bkd->bqk',
                           q.astype(MXU_DTYPE), k.astype(MXU_DTYPE),
                           preferred_element_type=jnp.float32) * scale + neg_mask
            s = s - jnp.max(s, axis=-1, keepdims=True)
            p = jnp.exp(s)
            p = p * pl.reciprocal(jnp.sum(p, axis=-1, keepdims=True), approx=True)
            o = jnp.einsum('bqk,bkd->bqd',
                           p.astype(MXU_DTYPE), v.astype(MXU_DTYPE),
                           preferred_element_type=jnp.float32)
            pieces.append(o.reshape(N, Dh))
        att = jnp.concatenate(pieces, axis=-1)               # (N, H*Dh), head order matches torch
        x = x + mm(att, w_out[l]) + b_out[l]                 # single fused out-projection

        # pre-LN GELU MLP + residual
        xn2 = ln(x, ln2_g[l], ln2_b[l])
        h1 = mm(xn2, w1[l]) + b1[l]
        # TODO(synk): torch nn.GELU() uses exact erf; tanh-approx GELU used here (EUP-friendly).
        h1 = jax.nn.gelu(h1, approximate=True)
        x = x + mm(h1, w2[l]) + b2[l]

    # ---- final LN on the cls rows only, head linear, fused sigmoid * scales ----
    cls_x = x.reshape(Bt, S, D)[:, 0, :]                     # (Bt, D)
    xf = ln(cls_x, fln_g[...], fln_b[...])
    logits = mm(xf, hw[...]) + hb[...]                       # (Bt, n_classes)
    o_ref[0] = jax.nn.sigmoid(logits) * scales[...]


# ---------------------------------------------------------------- parameters

def init_params(key, cfg):
    C, p, D = cfg["channels"], cfg["patch_size"], cfg["dim"]
    H, Dh, M, depth = cfg["heads"], cfg["dim_head"], cfg["mlp_dim"], cfg["depth"]
    n_patches = (cfg["image_size"] // p) ** 2
    patch_dim = C * p * p
    inner = H * Dh
    n_classes = cfg["num_shapes"] * cfg["num_params"]

    ks = iter(jax.random.split(key, 16))
    w = lambda shape: jax.random.normal(next(ks), shape, jnp.float32) * 0.02

    return {
        "patch_ln1_g": jnp.ones((1, patch_dim), jnp.float32),
        "patch_ln1_b": jnp.zeros((1, patch_dim), jnp.float32),
        "patch_w": w((patch_dim, D)),
        "patch_b": jnp.zeros((1, D), jnp.float32),
        "patch_ln2_g": jnp.ones((1, D), jnp.float32),
        "patch_ln2_b": jnp.zeros((1, D), jnp.float32),
        "cls_token": w((1, D)),
        "pos_emb": w((n_patches + 1, D)),
        # per-layer weights stacked along a leading depth axis
        "ln1_g": jnp.ones((depth, 1, D), jnp.float32),
        "ln1_b": jnp.zeros((depth, 1, D), jnp.float32),
        "w_qkv": w((depth, D, 3 * inner)),                # to_qkv: no bias
        "w_out": w((depth, inner, D)),
        "b_out": jnp.zeros((depth, 1, D), jnp.float32),
        "ln2_g": jnp.ones((depth, 1, D), jnp.float32),
        "ln2_b": jnp.zeros((depth, 1, D), jnp.float32),
        "w1": w((depth, D, M)),
        "b1": jnp.zeros((depth, 1, M), jnp.float32),
        "w2": w((depth, M, D)),
        "b2": jnp.zeros((depth, 1, D), jnp.float32),
        "final_ln_g": jnp.ones((1, D), jnp.float32),
        "final_ln_b": jnp.zeros((1, D), jnp.float32),
        "head_w": w((D, n_classes)),
        "head_b": jnp.zeros((1, n_classes), jnp.float32),
    }


# ---------------------------------------------------------------- forward pass

def _pick_batch_tile(B):
    # ~8 images per grid step amortizes per-step overhead and fills MXU rows; keep the grid
    # length >= 2 when possible so v7x megacore (parallel batch axis) uses both TensorCores.
    if B <= 1:
        return 1
    return max(1, min(8, B // 2))


def ellipse_regressor_forward(x, params, cfg):
    B, C, Himg, Wimg = x.shape
    p, D = cfg["patch_size"], cfg["dim"]
    H, Dh, depth = cfg["heads"], cfg["dim_head"], cfg["depth"]
    NS, NP = cfg["num_shapes"], cfg["num_params"]
    NC = NS * NP
    hh, ww = Himg // p, Wimg // p
    n = hh * ww
    S = n + 1                                   # real sequence length (cls + patches)
    S_pad = ((S + 7) // 8) * 8                  # sublane-aligned -> free in-kernel reshapes
    patch_dim = C * p * p
    inner = H * Dh

    Bt = _pick_batch_tile(B)
    G = pl.cdiv(B, Bt)
    B_pad = G * Bt

    # patch rearrange 'b c (h p1) (w p2) -> b (h w) (p1 p2 c)' (pure layout, done in XLA), then
    # prepend a dummy cls row and zero-pad sequence/batch (pad rows are masked or overwritten).
    patches = (x.reshape(B, C, hh, p, ww, p)
                 .transpose(0, 2, 4, 3, 5, 1)
                 .reshape(B, n, patch_dim))
    patches = jnp.pad(patches, ((0, B_pad - B), (1, S_pad - 1 - n), (0, 0)))

    pos = jnp.pad(params["pos_emb"][:S], ((0, S_pad - S), (0, 0)))

    # split the fused qkv weight into per-head q/k/v so the kernel never lane-slices a 3*inner
    # wide matmul result; pre-cast all matmul weights to bf16 (halves DMA bytes / VMEM bytes).
    w_qkv = params["w_qkv"]                                   # (depth, D, 3*inner)

    def per_head(wpart):                                      # (depth, D, inner) -> (depth, H, D, Dh)
        return (wpart.reshape(depth, D, H, Dh)
                     .transpose(0, 2, 1, 3)
                     .astype(MXU_DTYPE))

    wq = per_head(w_qkv[:, :, 0 * inner:1 * inner])
    wk = per_head(w_qkv[:, :, 1 * inner:2 * inner])
    wv = per_head(w_qkv[:, :, 2 * inner:3 * inner])

    img = float(cfg["image_size"])
    scales = jnp.tile(
        jnp.array([img, img, img, img, 255.0, 255.0, 255.0, 1.0, 180.0], jnp.float32),
        NS).reshape(1, NC)

    weight_inputs = [
        params["patch_ln1_g"], params["patch_ln1_b"],
        params["patch_w"].astype(MXU_DTYPE), params["patch_b"],
        params["patch_ln2_g"], params["patch_ln2_b"],
        params["cls_token"], pos,
        params["ln1_g"], params["ln1_b"],
        wq, wk, wv,
        params["w_out"].astype(MXU_DTYPE), params["b_out"],
        params["ln2_g"], params["ln2_b"],
        params["w1"].astype(MXU_DTYPE), params["b1"],
        params["w2"].astype(MXU_DTYPE), params["b2"],
        params["final_ln_g"], params["final_ln_b"],
        params["head_w"].astype(MXU_DTYPE), params["head_b"], scales,
    ]

    kern = functools.partial(_vit_kernel, depth=depth, heads=H, dim_head=Dh, seq_real=S)

    def _full_spec(shape):
        nd = len(shape)
        return pl.BlockSpec(shape, lambda i, _n=nd: (0,) * _n)

    in_specs = [pl.BlockSpec((Bt, S_pad, patch_dim), lambda i: (i, 0, 0))]
    in_specs += [_full_spec(a.shape) for a in weight_inputs]

    out = pl.pallas_call(
        kern,
        out_shape=jax.ShapeDtypeStruct((G, Bt, NC), jnp.float32),
        grid=(G,),
        in_specs=in_specs,
        out_specs=pl.BlockSpec((1, Bt, NC), lambda i: (i, 0, 0)),
        compiler_params=pltpu.CompilerParams(
            dimension_semantics=("parallel",),       # v7x: shard grid steps over the 2 TCs
            vmem_limit_bytes=32 * 1024 * 1024),
    )(patches, *weight_inputs)

    scaled = out.reshape(B_pad, NC)[:B].reshape(B, NS, NP)
    return {
        "cx": scaled[..., 0],
        "cy": scaled[..., 1],
        "rx": scaled[..., 2],
        "ry": scaled[..., 3],
        "fill": scaled[..., 4:7],
        "opacity": scaled[..., 7],
        "angle": scaled[..., 8],
    }


# ---------------------------------------------------------------- main

if __name__ == "__main__":
    cfg = dict(image_size=32, patch_size=8, channels=3, dim=32, depth=2,
               heads=4, dim_head=8, mlp_dim=64,
               num_shapes=N_SHAPES, num_params=N_ELLIPSE_PARAMETERS)

    key = jax.random.PRNGKey(0)
    pkey, xkey = jax.random.split(key)
    params = init_params(pkey, cfg)
    x = jax.random.normal(
        xkey, (2, cfg["channels"], cfg["image_size"], cfg["image_size"]), jnp.float32)

    fwd = jax.jit(lambda img: ellipse_regressor_forward(img, params, cfg))
    out = fwd(x)
    jax.block_until_ready(out)

    assert out["cx"].shape == (2, N_SHAPES)
    assert out["fill"].shape == (2, N_SHAPES, 3)
    assert out["angle"].shape == (2, N_SHAPES)
    assert bool(jnp.all(jnp.isfinite(out["cx"])))
    print("KERNEL_OK")
</pallas_src>

<mosaic_0001>
module attributes {stable_mosaic.version = 11 : i64} {
  func.func @_vit_kernel(%arg0: i32, %arg1: memref<1x24x192xf32, #tpu.memory_space<vmem>>, %arg2: memref<1x192xf32, #tpu.memory_space<vmem>>, %arg3: memref<1x192xf32, #tpu.memory_space<vmem>>, %arg4: memref<192x32xbf16, #tpu.memory_space<vmem>>, %arg5: memref<1x32xf32, #tpu.memory_space<vmem>>, %arg6: memref<1x32xf32, #tpu.memory_space<vmem>>, %arg7: memref<1x32xf32, #tpu.memory_space<vmem>>, %arg8: memref<1x32xf32, #tpu.memory_space<vmem>>, %arg9: memref<24x32xf32, #tpu.memory_space<vmem>>, %arg10: memref<2x1x32xf32, #tpu.memory_space<vmem>>, %arg11: memref<2x1x32xf32, #tpu.memory_space<vmem>>, %arg12: memref<2x4x32x8xbf16, #tpu.memory_space<vmem>>, %arg13: memref<2x4x32x8xbf16, #tpu.memory_space<vmem>>, %arg14: memref<2x4x32x8xbf16, #tpu.memory_space<vmem>>, %arg15: memref<2x32x32xbf16, #tpu.memory_space<vmem>>, %arg16: memref<2x1x32xf32, #tpu.memory_space<vmem>>, %arg17: memref<2x1x32xf32, #tpu.memory_space<vmem>>, %arg18: memref<2x1x32xf32, #tpu.memory_space<vmem>>, %arg19: memref<2x32x64xbf16, #tpu.memory_space<vmem>>, %arg20: memref<2x1x64xf32, #tpu.memory_space<vmem>>, %arg21: memref<2x64x32xbf16, #tpu.memory_space<vmem>>, %arg22: memref<2x1x32xf32, #tpu.memory_space<vmem>>, %arg23: memref<1x32xf32, #tpu.memory_space<vmem>>, %arg24: memref<1x32xf32, #tpu.memory_space<vmem>>, %arg25: memref<32x72xbf16, #tpu.memory_space<vmem>>, %arg26: memref<1x72xf32, #tpu.memory_space<vmem>>, %arg27: memref<1x72xf32, #tpu.memory_space<vmem>>, %arg28: memref<1x1x72xf32, #tpu.memory_space<vmem>>) attributes {dimension_semantics = [#tpu.dimension_semantics<parallel>], iteration_bounds = array<i64: 2>, scalar_prefetch = 0 : i64, scratch_operands = 0 : i64, tpu.core_type = #tpu.core_type<tc>, window_params = [{transform_indices = @transform_0, window_bounds = array<i64: 1, 24, 192>}, {pipeline_mode = #tpu.pipeline_mode<synchronous>, transform_indices = @transform_1, window_bounds = array<i64: 1, 192>}, {pipeline_mode = #tpu.pipeline_mode<synchronous>, transform_indices = @transform_2, window_bounds = array<i64: 1, 192>}, {pipeline_mode = #tpu.pipeline_mode<synchronous>, transform_indices = @transform_3, window_bounds = array<i64: 192, 32>}, {pipeline_mode = #tpu.pipeline_mode<synchronous>, transform_indices = @transform_4, window_bounds = array<i64: 1, 32>}, {pipeline_mode = #tpu.pipeline_mode<synchronous>, transform_indices = @transform_5, window_bounds = array<i64: 1, 32>}, {pipeline_mode = #tpu.pipeline_mode<synchronous>, transform_indices = @transform_6, window_bounds = array<i64: 1, 32>}, {pipeline_mode = #tpu.pipeline_mode<synchronous>, transform_indices = @transform_7, window_bounds = array<i64: 1, 32>}, {pipeline_mode = #tpu.pipeline_mode<synchronous>, transform_indices = @transform_8, window_bounds = array<i64: 24, 32>}, {pipeline_mode = #tpu.pipeline_mode<synchronous>, transform_indices = @transform_9, window_bounds = array<i64: 2, 1, 32>}, {pipeline_mode = #tpu.pipeline_mode<synchronous>, transform_indices = @transform_10, window_bounds = array<i64: 2, 1, 32>}, {pipeline_mode = #tpu.pipeline_mode<synchronous>, transform_indices = @transform_11, window_bounds = array<i64: 2, 4, 32, 8>}, {pipeline_mode = #tpu.pipeline_mode<synchronous>, transform_indices = @transform_12, window_bounds = array<i64: 2, 4, 32, 8>}, {pipeline_mode = #tpu.pipeline_mode<synchronous>, transform_indices = @transform_13, window_bounds = array<i64: 2, 4, 32, 8>}, {pipeline_mode = #tpu.pipeline_mode<synchronous>, transform_indices = @transform_14, window_bounds = array<i64: 2, 32, 32>}, {pipeline_mode = #tpu.pipeline_mode<synchronous>, transform_indices = @transform_15, window_bounds = array<i64: 2, 1, 32>}, {pipeline_mode = #tpu.pipeline_mode<synchronous>, transform_indices = @transform_16, window_bounds = array<i64: 2, 1, 32>}, {pipeline_mode = #tpu.pipeline_mode<synchronous>, transform_indices = @transform_17, window_bounds = array<i64: 2, 1, 32>}, {pipeline_mode = #tpu.pipeline_mode<synchronous>, transform_indices = @transform_18, window_bounds = array<i64: 2, 32, 64>}, {pipeline_mode = #tpu.pipeline_mode<synchronous>, transform_indices = @transform_19, window_bounds = array<i64: 2, 1, 64>}, {pipeline_mode = #tpu.pipeline_mode<synchronous>, transform_indices = @transform_20, window_bounds = array<i64: 2, 64, 32>}, {pipeline_mode = #tpu.pipeline_mode<synchronous>, transform_indices = @transform_21, window_bounds = array<i64: 2, 1, 32>}, {pipeline_mode = #tpu.pipeline_mode<synchronous>, transform_indices = @transform_22, window_bounds = array<i64: 1, 32>}, {pipeline_mode = #tpu.pipeline_mode<synchronous>, transform_indices = @transform_23, window_bounds = array<i64: 1, 32>}, {pipeline_mode = #tpu.pipeline_mode<synchronous>, transform_indices = @transform_24, window_bounds = array<i64: 32, 72>}, {pipeline_mode = #tpu.pipeline_mode<synchronous>, transform_indices = @transform_25, window_bounds = array<i64: 1, 72>}, {pipeline_mode = #tpu.pipeline_mode<synchronous>, transform_indices = @transform_26, window_bounds = array<i64: 1, 72>}, {transform_indices = @transform_27, window_bounds = array<i64: 1, 1, 72>}]} {
    %0 = tpu.iota {dimensions = array<i32: 2>} : vector<1x1x24xi32>
    %c17_i32 = arith.constant 17 : i32
    %1 = vector.broadcast %c17_i32 : i32 to vector<1x1x24xi32>
    %2 = arith.cmpi sge, %0, %1 : vector<1x1x24xi32>
    %cst = arith.constant -1.000000e+30 : f32
    %cst_0 = arith.constant 0.000000e+00 : f32
    %3 = vector.broadcast %cst : f32 to vector<1x1x24xf32>
    %4 = vector.broadcast %cst_0 : f32 to vector<1x1x24xf32>
    %5 = arith.select %2, %3, %4 : vector<1x1x24xi1>, vector<1x1x24xf32>
    %c0 = arith.constant 0 : index
    %c0_1 = arith.constant 0 : index
    %c0_2 = arith.constant 0 : index
    %6 = vector.load %arg1[%c0, %c0_1, %c0_2] : memref<1x24x192xf32, #tpu.memory_space<vmem>>, vector<1x24x192xf32>
    %7 = vector.shape_cast %6 : vector<1x24x192xf32> to vector<24x192xf32>
    %c0_3 = arith.constant 0 : index
    %c0_4 = arith.constant 0 : index
    %8 = vector.load %arg2[%c0_3, %c0_4] : memref<1x192xf32, #tpu.memory_space<vmem>>, vector<1x192xf32>
    %c0_5 = arith.constant 0 : index
    %c0_6 = arith.constant 0 : index
    %9 = vector.load %arg3[%c0_5, %c0_6] : memref<1x192xf32, #tpu.memory_space<vmem>>, vector<1x192xf32>
    %cst_7 = arith.constant dense<0.000000e+00> : vector<24xf32>
    %10 = vector.multi_reduction <add>, %7, %cst_7 [1] : vector<24x192xf32> to vector<24xf32>
    %11 = vector.shape_cast %10 : vector<24xf32> to vector<24x1xf32>
    %cst_8 = arith.constant 1.920000e+02 : f32
    %12 = vector.broadcast %cst_8 : f32 to vector<24x1xf32>
    %13 = arith.divf %11, %12 : vector<24x1xf32>
    %14 = vector.broadcast %13 : vector<24x1xf32> to vector<24x192xf32>
    %15 = arith.subf %7, %14 : vector<24x192xf32>
    %16 = arith.mulf %15, %15 : vector<24x192xf32>
    %cst_9 = arith.constant dense<0.000000e+00> : vector<24xf32>
    %17 = vector.multi_reduction <add>, %16, %cst_9 [1] : vector<24x192xf32> to vector<24xf32>
    %18 = vector.shape_cast %17 : vector<24xf32> to vector<24x1xf32>
    %cst_10 = arith.constant 1.920000e+02 : f32
    %19 = vector.broadcast %cst_10 : f32 to vector<24x1xf32>
    %20 = arith.divf %18, %19 : vector<24x1xf32>
    %21 = vector.broadcast %13 : vector<24x1xf32> to vector<24x192xf32>
    %22 = arith.subf %7, %21 : vector<24x192xf32>
    %cst_11 = arith.constant 9.99999974E-6 : f32
    %23 = vector.broadcast %cst_11 : f32 to vector<24x1xf32>
    %24 = arith.addf %20, %23 : vector<24x1xf32>
    %25 = math.rsqrt %24 : vector<24x1xf32>
    %26 = vector.broadcast %25 : vector<24x1xf32> to vector<24x192xf32>
    %27 = arith.mulf %22, %26 : vector<24x192xf32>
    %28 = vector.broadcast %8 : vector<1x192xf32> to vector<24x192xf32>
    %29 = arith.mulf %27, %28 : vector<24x192xf32>
    %30 = vector.broadcast %9 : vector<1x192xf32> to vector<24x192xf32>
    %31 = arith.addf %29, %30 : vector<24x192xf32>
    %c0_12 = arith.constant 0 : index
    %c0_13 = arith.constant 0 : index
    %32 = vector.load %arg4[%c0_12, %c0_13] : memref<192x32xbf16, #tpu.memory_space<vmem>>, vector<192x32xbf16>
    %33 = arith.truncf %31 : vector<24x192xf32> to vector<24x192xbf16>
    %cst_14 = arith.constant dense<0.000000e+00> : vector<24x32xf32>
    %34 = tpu.matmul %33, %32, %cst_14 {dimension_numbers = #tpu.dot_dimension_numbers<[1], [0], [0], [1], [0, 0, 1, 1], [], []>} : vector<24x192xbf16>, vector<192x32xbf16>, vector<24x32xf32> -> vector<24x32xf32>
    %c0_15 = arith.constant 0 : index
    %c0_16 = arith.constant 0 : index
    %35 = vector.load %arg5[%c0_15, %c0_16] : memref<1x32xf32, #tpu.memory_space<vmem>>, vector<1x32xf32>
    %36 = vector.broadcast %35 : vector<1x32xf32> to vector<24x32xf32>
    %37 = arith.addf %34, %36 : vector<24x32xf32>
    %c0_17 = arith.constant 0 : index
    %c0_18 = arith.constant 0 : index
    %38 = vector.load %arg6[%c0_17, %c0_18] : memref<1x32xf32, #tpu.memory_space<vmem>>, vector<1x32xf32>
    %c0_19 = arith.constant 0 : index
    %c0_20 = arith.constant 0 : index
    %39 = vector.load %arg7[%c0_19, %c0_20] : memref<1x32xf32, #tpu.memory_space<vmem>>, vector<1x32xf32>
    %cst_21 = arith.constant dense<0.000000e+00> : vector<24xf32>
    %40 = vector.multi_reduction <add>, %37, %cst_21 [1] : vector<24x32xf32> to vector<24xf32>
    %41 = vector.shape_cast %40 : vector<24xf32> to vector<24x1xf32>
    %cst_22 = arith.constant 3.200000e+01 : f32
    %42 = vector.broadcast %cst_22 : f32 to vector<24x1xf32>
    %43 = arith.divf %41, %42 : vector<24x1xf32>
    %44 = vector.broadcast %43 : vector<24x1xf32> to vector<24x32xf32>
    %45 = arith.subf %37, %44 : vector<24x32xf32>
    %46 = arith.mulf %45, %45 : vector<24x32xf32>
    %cst_23 = arith.constant dense<0.000000e+00> : vector<24xf32>
    %47 = vector.multi_reduction <add>, %46, %cst_23 [1] : vector<24x32xf32> to vector<24xf32>
    %48 = vector.shape_cast %47 : vector<24xf32> to vector<24x1xf32>
    %cst_24 = arith.constant 3.200000e+01 : f32
    %49 = vector.broadcast %cst_24 : f32 to vector<24x1xf32>
    %50 = arith.divf %48, %49 : vector<24x1xf32>
    %51 = vector.broadcast %43 : vector<24x1xf32> to vector<24x32xf32>
    %52 = arith.subf %37, %51 : vector<24x32xf32>
    %cst_25 = arith.constant 9.99999974E-6 : f32
    %53 = vector.broadcast %cst_25 : f32 to vector<24x1xf32>
    %54 = arith.addf %50, %53 : vector<24x1xf32>
    %55 = math.rsqrt %54 : vector<24x1xf32>
    %56 = vector.broadcast %55 : vector<24x1xf32> to vector<24x32xf32>
    %57 = arith.mulf %52, %56 : vector<24x32xf32>
    %58 = vector.broadcast %38 : vector<1x32xf32> to vector<24x32xf32>
    %59 = arith.mulf %57, %58 : vector<24x32xf32>
    %60 = vector.broadcast %39 : vector<1x32xf32> to vector<24x32xf32>
    %61 = arith.addf %59, %60 : vector<24x32xf32>
    %62 = vector.shape_cast %61 : vector<24x32xf32> to vector<1x24x32xf32>
    %63 = tpu.iota {dimensions = array<i32: 1>} : vector<1x24x1xi32>
    %c0_i32 = arith.constant 0 : i32
    %64 = vector.broadcast %c0_i32 : i32 to vector<1x24x1xi32>
    %65 = arith.cmpi eq, %63, %64 : vector<1x24x1xi32>
    %c0_26 = arith.constant 0 : index
    %c0_27 = arith.constant 0 : index
    %66 = vector.load %arg8[%c0_26, %c0_27] : memref<1x32xf32, #tpu.memory_space<vmem>>, vector<1x32xf32>
    %67 = vector.shape_cast %65 : vector<1x24x1xi1> to vector<1x24x1xi1>
    %68 = vector.broadcast %67 : vector<1x24x1xi1> to vector<1x24x32xi1>
    %69 = vector.shape_cast %66 : vector<1x32xf32> to vector<1x1x32xf32>
    %70 = vector.broadcast %69 : vector<1x1x32xf32> to vector<1x24x32xf32>
    %71 = arith.select %68, %70, %62 : vector<1x24x32xi1>, vector<1x24x32xf32>
    %c0_28 = arith.constant 0 : index
    %c0_29 = arith.constant 0 : index
    %72 = vector.load %arg9[%c0_28, %c0_29] : memref<24x32xf32, #tpu.memory_space<vmem>>, vector<24x32xf32>
    %73 = vector.shape_cast %72 : vector<24x32xf32> to vector<1x24x32xf32>
    %74 = arith.addf %71, %73 : vector<1x24x32xf32>
    %75 = vector.shape_cast %74 : vector<1x24x32xf32> to vector<24x32xf32>
    %c0_30 = arith.constant 0 : index
    %c0_31 = arith.constant 0 : index
    %c0_32 = arith.constant 0 : index
    %76 = vector.load %arg10[%c0_30, %c0_31, %c0_32] : memref<2x1x32xf32, #tpu.memory_space<vmem>>, vector<1x1x32xf32>
    %77 = vector.shape_cast %76 : vector<1x1x32xf32> to vector<1x32xf32>
    %c0_33 = arith.constant 0 : index
    %c0_34 = arith.constant 0 : index
    %c0_35 = arith.constant 0 : index
    %78 = vector.load %arg11[%c0_33, %c0_34, %c0_35] : memref<2x1x32xf32, #tpu.memory_space<vmem>>, vector<1x1x32xf32>
    %79 = vector.shape_cast %78 : vector<1x1x32xf32> to vector<1x32xf32>
    %cst_36 = arith.constant dense<0.000000e+00> : vector<24xf32>
    %80 = vector.multi_reduction <add>, %75, %cst_36 [1] : vector<24x32xf32> to vector<24xf32>
    %81 = vector.shape_cast %80 : vector<24xf32> to vector<24x1xf32>
    %cst_37 = arith.constant 3.200000e+01 : f32
    %82 = vector.broadcast %cst_37 : f32 to vector<24x1xf32>
    %83 = arith.divf %81, %82 : vector<24x1xf32>
    %84 = vector.broadcast %83 : vector<24x1xf32> to vector<24x32xf32>
    %85 = arith.subf %75, %84 : vector<24x32xf32>
    %86 = arith.mulf %85, %85 : vector<24x32xf32>
    %cst_38 = arith.constant dense<0.000000e+00> : vector<24xf32>
    %87 = vector.multi_reduction <add>, %86, %cst_38 [1] : vector<24x32xf32> to vector<24xf32>
    %88 = vector.shape_cast %87 : vector<24xf32> to vector<24x1xf32>
    %cst_39 = arith.constant 3.200000e+01 : f32
    %89 = vector.broadcast %cst_39 : f32 to vector<24x1xf32>
    %90 = arith.divf %88, %89 : vector<24x1xf32>
    %91 = vector.broadcast %83 : vector<24x1xf32> to vector<24x32xf32>
    %92 = arith.subf %75, %91 : vector<24x32xf32>
    %cst_40 = arith.constant 9.99999974E-6 : f32
    %93 = vector.broadcast %cst_40 : f32 to vector<24x1xf32>
    %94 = arith.addf %90, %93 : vector<24x1xf32>
    %95 = math.rsqrt %94 : vector<24x1xf32>
    %96 = vector.broadcast %95 : vector<24x1xf32> to vector<24x32xf32>
    %97 = arith.mulf %92, %96 : vector<24x32xf32>
    %98 = vector.broadcast %77 : vector<1x32xf32> to vector<24x32xf32>
    %99 = arith.mulf %97, %98 : vector<24x32xf32>
    %100 = vector.broadcast %79 : vector<1x32xf32> to vector<24x32xf32>
    %101 = arith.addf %99, %100 : vector<24x32xf32>
    %c0_41 = arith.constant 0 : index
    %c0_42 = arith.constant 0 : index
    %c0_43 = arith.constant 0 : index
    %c0_44 = arith.constant 0 : index
    %102 = vector.load %arg12[%c0_41, %c0_42, %c0_43, %c0_44] : memref<2x4x32x8xbf16, #tpu.memory_space<vmem>>, vector<1x1x32x8xbf16>
    %103 = vector.shape_cast %102 : vector<1x1x32x8xbf16> to vector<32x8xbf16>
    %104 = arith.truncf %101 : vector<24x32xf32> to vector<24x32xbf16>
    %cst_45 = arith.constant dense<0.000000e+00> : vector<24x8xf32>
    %105 = tpu.matmul %104, %103, %cst_45 {dimension_numbers = #tpu.dot_dimension_numbers<[1], [0], [0], [1], [0, 0, 1, 1], [], []>} : vector<24x32xbf16>, vector<32x8xbf16>, vector<24x8xf32> -> vector<24x8xf32>
    %106 = vector.shape_cast %105 : vector<24x8xf32> to vector<1x24x8xf32>
    %c0_46 = arith.constant 0 : index
    %c0_47 = arith.constant 0 : index
    %c0_48 = arith.constant 0 : index
    %c0_49 = arith.constant 0 : index
    %107 = vector.load %arg13[%c0_46, %c0_47, %c0_48, %c0_49] : memref<2x4x32x8xbf16, #tpu.memory_space<vmem>>, vector<1x1x32x8xbf16>
    %108 = vector.shape_cast %107 : vector<1x1x32x8xbf16> to vector<32x8xbf16>
    %109 = arith.truncf %101 : vector<24x32xf32> to vector<24x32xbf16>
    %cst_50 = arith.constant dense<0.000000e+00> : vector<24x8xf32>
    %110 = tpu.matmul %109, %108, %cst_50 {dimension_numbers = #tpu.dot_dimension_numbers<[1], [0], [0], [1], [0, 0, 1, 1], [], []>} : vector<24x32xbf16>, vector<32x8xbf16>, vector<24x8xf32> -> vector<24x8xf32>
    %111 = vector.shape_cast %110 : vector<24x8xf32> to vector<1x24x8xf32>
    %c0_51 = arith.constant 0 : index
    %c0_52 = arith.constant 0 : index
    %c0_53 = arith.constant 0 : index
    %c0_54 = arith.constant 0 : index
    %112 = vector.load %arg14[%c0_51, %c0_52, %c0_53, %c0_54] : memref<2x4x32x8xbf16, #tpu.memory_space<vmem>>, vector<1x1x32x8xbf16>
    %113 = vector.shape_cast %112 : vector<1x1x32x8xbf16> to vector<32x8xbf16>
    %114 = arith.truncf %101 : vector<24x32xf32> to vector<24x32xbf16>
    %cst_55 = arith.constant dense<0.000000e+00> : vector<24x8xf32>
    %115 = tpu.matmul %114, %113, %cst_55 {dimension_numbers = #tpu.dot_dimension_numbers<[1], [0], [0], [1], [0, 0, 1, 1], [], []>} : vector<24x32xbf16>, vector<32x8xbf16>, vector<24x8xf32> -> vector<24x8xf32>
    %116 = vector.shape_cast %115 : vector<24x8xf32> to vector<1x24x8xf32>
    %117 = arith.truncf %106 : vector<1x24x8xf32> to vector<1x24x8xbf16>
    %118 = arith.truncf %111 : vector<1x24x8xf32> to vector<1x24x8xbf16>
    "tpu.trace_start"() <{level = 10 : i32, message = "bqd,bkd->bqk"}> : () -> ()
    %cst_56 = arith.constant dense<0.000000e+00> : vector<1x24x24xf32>
    %119 = tpu.matmul %117, %118, %cst_56 {dimension_numbers = #tpu.dot_dimension_numbers<[2], [2], [1], [1], [0, 0, 0, 1, 1, 1], [0], [0]>} : vector<1x24x8xbf16>, vector<1x24x8xbf16>, vector<1x24x24xf32> -> vector<1x24x24xf32>
    "tpu.trace_stop"() : () -> ()
    %cst_57 = arith.constant 0.353553385 : f32
    %120 = vector.broadcast %cst_57 : f32 to vector<1x24x24xf32>
    %121 = arith.mulf %119, %120 : vector<1x24x24xf32>
    %122 = vector.broadcast %5 : vector<1x1x24xf32> to vector<1x24x24xf32>
    %123 = arith.addf %121, %122 : vector<1x24x24xf32>
    %cst_58 = arith.constant dense<0xFF800000> : vector<1x24xf32>
    %124 = vector.multi_reduction <maximumf>, %123, %cst_58 [2] : vector<1x24x24xf32> to vector<1x24xf32>
    %125 = vector.shape_cast %124 : vector<1x24xf32> to vector<1x24x1xf32>
    %126 = vector.broadcast %125 : vector<1x24x1xf32> to vector<1x24x24xf32>
    %127 = arith.subf %123, %126 : vector<1x24x24xf32>
    %128 = math.exp %127 : vector<1x24x24xf32>
    %cst_59 = arith.constant dense<0.000000e+00> : vector<1x24xf32>
    %129 = vector.multi_reduction <add>, %128, %cst_59 [2] : vector<1x24x24xf32> to vector<1x24xf32>
    %130 = vector.shape_cast %129 : vector<1x24xf32> to vector<1x24x1xf32>
    %131 = tpu.reciprocal %130 {approx = true} : vector<1x24x1xf32> -> vector<1x24x1xf32>
    %132 = vector.broadcast %131 : vector<1x24x1xf32> to vector<1x24x24xf32>
    %133 = arith.mulf %128, %132 : vector<1x24x24xf32>
    %134 = arith.truncf %133 : vector<1x24x24xf32> to vector<1x24x24xbf16>
    %135 = arith.truncf %116 : vector<1x24x8xf32> to vector<1x24x8xbf16>
    "tpu.trace_start"() <{level = 10 : i32, message = "bqk,bkd->bqd"}> : () -> ()
    %cst_60 = arith.constant dense<0.000000e+00> : vector<1x24x8xf32>
    %136 = tpu.matmul %134, %135, %cst_60 {dimension_numbers = #tpu.dot_dimension_numbers<[2], [1], [1], [2], [0, 0, 0, 1, 1, 2], [0], [0]>} : vector<1x24x24xbf16>, vector<1x24x8xbf16>, vector<1x24x8xf32> -> vector<1x24x8xf32>
    "tpu.trace_stop"() : () -> ()
    %137 = vector.shape_cast %136 : vector<1x24x8xf32> to vector<24x8xf32>
    %c0_61 = arith.constant 0 : index
    %c1 = arith.constant 1 : index
    %c0_62 = arith.constant 0 : index
    %c0_63 = arith.constant 0 : index
    %138 = vector.load %arg12[%c0_61, %c1, %c0_62, %c0_63] : memref<2x4x32x8xbf16, #tpu.memory_space<vmem>>, vector<1x1x32x8xbf16>
    %139 = vector.shape_cast %138 : vector<1x1x32x8xbf16> to vector<32x8xbf16>
    %140 = arith.truncf %101 : vector<24x32xf32> to vector<24x32xbf16>
    %cst_64 = arith.constant dense<0.000000e+00> : vector<24x8xf32>
    %141 = tpu.matmul %140, %139, %cst_64 {dimension_numbers = #tpu.dot_dimension_numbers<[1], [0], [0], [1], [0, 0, 1, 1], [], []>} : vector<24x32xbf16>, vector<32x8xbf16>, vector<24x8xf32> -> vector<24x8xf32>
    %142 = vector.shape_cast %141 : vector<24x8xf32> to vector<1x24x8xf32>
    %c0_65 = arith.constant 0 : index
    %c1_66 = arith.constant 1 : index
    %c0_67 = arith.constant 0 : index
    %c0_68 = arith.constant 0 : index
    %143 = vector.load %arg13[%c0_65, %c1_66, %c0_67, %c0_68] : memref<2x4x32x8xbf16, #tpu.memory_space<vmem>>, vector<1x1x32x8xbf16>
    %144 = vector.shape_cast %143 : vector<1x1x32x8xbf16> to vector<32x8xbf16>
    %145 = arith.truncf %101 : vector<24x32xf32> to vector<24x32xbf16>
    %cst_69 = arith.constant dense<0.000000e+00> : vector<24x8xf32>
    %146 = tpu.matmul %145, %144, %cst_69 {dimension_numbers = #tpu.dot_dimension_numbers<[1], [0], [0], [1], [0, 0, 1, 1], [], []>} : vector<24x32xbf16>, vector<32x8xbf16>, vector<24x8xf32> -> vector<24x8xf32>
    %147 = vector.shape_cast %146 : vector<24x8xf32> to vector<1x24x8xf32>
    %c0_70 = arith.constant 0 : index
    %c1_71 = arith.constant 1 : index
    %c0_72 = arith.constant 0 : index
    %c0_73 = arith.constant 0 : index
    %148 = vector.load %arg14[%c0_70, %c1_71, %c0_72, %c0_73] : memref<2x4x32x8xbf16, #tpu.memory_space<vmem>>, vector<1x1x32x8xbf16>
    %149 = vector.shape_cast %148 : vector<1x1x32x8xbf16> to vector<32x8xbf16>
    %150 = arith.truncf %101 : vector<24x32xf32> to vector<24x32xbf16>
    %cst_74 = arith.constant dense<0.000000e+00> : vector<24x8xf32>
    %151 = tpu.matmul %150, %149, %cst_74 {dimension_numbers = #tpu.dot_dimension_numbers<[1], [0], [0], [1], [0, 0, 1, 1], [], []>} : vector<24x32xbf16>, vector<32x8xbf16>, vector<24x8xf32> -> vector<24x8xf32>
    %152 = vector.shape_cast %151 : vector<24x8xf32> to vector<1x24x8xf32>
    %153 = arith.truncf %142 : vector<1x24x8xf32> to vector<1x24x8xbf16>
    %154 = arith.truncf %147 : vector<1x24x8xf32> to vector<1x24x8xbf16>
    "tpu.trace_start"() <{level = 10 : i32, message = "bqd,bkd->bqk"}> : () -> ()
    %cst_75 = arith.constant dense<0.000000e+00> : vector<1x24x24xf32>
    %155 = tpu.matmul %153, %154, %cst_75 {dimension_numbers = #tpu.dot_dimension_numbers<[2], [2], [1], [1], [0, 0, 0, 1, 1, 1], [0], [0]>} : vector<1x24x8xbf16>, vector<1x24x8xbf16>, vector<1x24x24xf32> -> vector<1x24x24xf32>
    "tpu.trace_stop"() : () -> ()
    %cst_76 = arith.constant 0.353553385 : f32
    %156 = vector.broadcast %cst_76 : f32 to vector<1x24x24xf32>
    %157 = arith.mulf %155, %156 : vector<1x24x24xf32>
    %158 = vector.broadcast %5 : vector<1x1x24xf32> to vector<1x24x24xf32>
    %159 = arith.addf %157, %158 : vector<1x24x24xf32>
    %cst_77 = arith.constant dense<0xFF800000> : vector<1x24xf32>
    %160 = vector.multi_reduction <maximumf>, %159, %cst_77 [2] : vector<1x24x24xf32> to vector<1x24xf32>
    %161 = vector.shape_cast %160 : vector<1x24xf32> to vector<1x24x1xf32>
    %162 = vector.broadcast %161 : vector<1x24x1xf32> to vector<1x24x24xf32>
    %163 = arith.subf %159, %162 : vector<1x24x24xf32>
    %164 = math.exp %163 : vector<1x24x24xf32>
    %cst_78 = arith.constant dense<0.000000e+00> : vector<1x24xf32>
    %165 = vector.multi_reduction <add>, %164, %cst_78 [2] : vector<1x24x24xf32> to vector<1x24xf32>
    %166 = vector.shape_cast %165 : vector<1x24xf32> to vector<1x24x1xf32>
    %167 = tpu.reciprocal %166 {approx = true} : vector<1x24x1xf32> -> vector<1x24x1xf32>
    %168 = vector.broadcast %167 : vector<1x24x1xf32> to vector<1x24x24xf32>
    %169 = arith.mulf %164, %168 : vector<1x24x24xf32>
    %170 = arith.truncf %169 : vector<1x24x24xf32> to vector<1x24x24xbf16>
    %171 = arith.truncf %152 : vector<1x24x8xf32> to vector<1x24x8xbf16>
    "tpu.trace_start"() <{level = 10 : i32, message = "bqk,bkd->bqd"}> : () -> ()
    %cst_79 = arith.constant dense<0.000000e+00> : vector<1x24x8xf32>
    %172 = tpu.matmul %170, %171, %cst_79 {dimension_numbers = #tpu.dot_dimension_numbers<[2], [1], [1], [2], [0, 0, 0, 1, 1, 2], [0], [0]>} : vector<1x24x24xbf16>, vector<1x24x8xbf16>, vector<1x24x8xf32> -> vector<1x24x8xf32>
    "tpu.trace_stop"() : () -> ()
    %173 = vector.shape_cast %172 : vector<1x24x8xf32> to vector<24x8xf32>
    %c0_80 = arith.constant 0 : index
    %c2 = arith.constant 2 : index
    %c0_81 = arith.constant 0 : index
    %c0_82 = arith.constant 0 : index
    %174 = vector.load %arg12[%c0_80, %c2, %c0_81, %c0_82] : memref<2x4x32x8xbf16, #tpu.memory_space<vmem>>, vector<1x1x32x8xbf16>
    %175 = vector.shape_cast %174 : vector<1x1x32x8xbf16> to vector<32x8xbf16>
    %176 = arith.truncf %101 : vector<24x32xf32> to vector<24x32xbf16>
    %cst_83 = arith.constant dense<0.000000e+00> : vector<24x8xf32>
    %177 = tpu.matmul %176, %175, %cst_83 {dimension_numbers = #tpu.dot_dimension_numbers<[1], [0], [0], [1], [0, 0, 1, 1], [], []>} : vector<24x32xbf16>, vector<32x8xbf16>, vector<24x8xf32> -> vector<24x8xf32>
    %178 = vector.shape_cast %177 : vector<24x8xf32> to vector<1x24x8xf32>
    %c0_84 = arith.constant 0 : index
    %c2_85 = arith.constant 2 : index
    %c0_86 = arith.constant 0 : index
    %c0_87 = arith.constant 0 : index
    %179 = vector.load %arg13[%c0_84, %c2_85, %c0_86, %c0_87] : memref<2x4x32x8xbf16, #tpu.memory_space<vmem>>, vector<1x1x32x8xbf16>
    %180 = vector.shape_cast %179 : vector<1x1x32x8xbf16> to vector<32x8xbf16>
    %181 = arith.truncf %101 : vector<24x32xf32> to vector<24x32xbf16>
    %cst_88 = arith.constant dense<0.000000e+00> : vector<24x8xf32>
    %182 = tpu.matmul %181, %180, %cst_88 {dimension_numbers = #tpu.dot_dimension_numbers<[1], [0], [0], [1], [0, 0, 1, 1], [], []>} : vector<24x32xbf16>, vector<32x8xbf16>, vector<24x8xf32> -> vector<24x8xf32>
    %183 = vector.shape_cast %182 : vector<24x8xf32> to vector<1x24x8xf32>
    %c0_89 = arith.constant 0 : index
    %c2_90 = arith.constant 2 : index
    %c0_91 = arith.constant 0 : index
    %c0_92 = arith.constant 0 : index
    %184 = vector.load %arg14[%c0_89, %c2_90, %c0_91, %c0_92] : memref<2x4x32x8xbf16, #tpu.memory_space<vmem>>, vector<1x1x32x8xbf16>
    %185 = vector.shape_cast %184 : vector<1x1x32x8xbf16> to vector<32x8xbf16>
    %186 = arith.truncf %101 : vector<24x32xf32> to vector<24x32xbf16>
    %cst_93 = arith.constant dense<0.000000e+00> : vector<24x8xf32>
    %187 = tpu.matmul %186, %185, %cst_93 {dimension_numbers = #tpu.dot_dimension_numbers<[1], [0], [0], [1], [0, 0, 1, 1], [], []>} : vector<24x32xbf16>, vector<32x8xbf16>, vector<24x8xf32> -> vector<24x8xf32>
    %188 = vector.shape_cast %187 : vector<24x8xf32> to vector<1x24x8xf32>
    %189 = arith.truncf %178 : vector<1x24x8xf32> to vector<1x24x8xbf16>
    %190 = arith.truncf %183 : vector<1x24x8xf32> to vector<1x24x8xbf16>
    "tpu.trace_start"() <{level = 10 : i32, message = "bqd,bkd->bqk"}> : () -> ()
    %cst_94 = arith.constant dense<0.000000e+00> : vector<1x24x24xf32>
    %191 = tpu.matmul %189, %190, %cst_94 {dimension_numbers = #tpu.dot_dimension_numbers<[2], [2], [1], [1], [0, 0, 0, 1, 1, 1], [0], [0]>} : vector<1x24x8xbf16>, vector<1x24x8xbf16>, vector<1x24x24xf32> -> vector<1x24x24xf32>
    "tpu.trace_stop"() : () -> ()
    %cst_95 = arith.constant 0.353553385 : f32
    %192 = vector.broadcast %cst_95 : f32 to vector<1x24x24xf32>
    %193 = arith.mulf %191, %192 : vector<1x24x24xf32>
    %194 = vector.broadcast %5 : vector<1x1x24xf32> to vector<1x24x24xf32>
    %195 = arith.addf %193, %194 : vector<1x24x24xf32>
    %cst_96 = arith.constant dense<0xFF800000> : vector<1x24xf32>
    %196 = vector.multi_reduction <maximumf>, %195, %cst_96 [2] : vector<1x24x24xf32> to vector<1x24xf32>
    %197 = vector.shape_cast %196 : vector<1x24xf32> to vector<1x24x1xf32>
    %198 = vector.broadcast %197 : vector<1x24x1xf32> to vector<1x24x24xf32>
    %199 = arith.subf %195, %198 : vector<1x24x24xf32>
    %200 = math.exp %199 : vector<1x24x24xf32>
    %cst_97 = arith.constant dense<0.000000e+00> : vector<1x24xf32>
    %201 = vector.multi_reduction <add>, %200, %cst_97 [2] : vector<1x24x24xf32> to vector<1x24xf32>
    %202 = vector.shape_cast %201 : vector<1x24xf32> to vector<1x24x1xf32>
    %203 = tpu.reciprocal %202 {approx = true} : vector<1x24x1xf32> -> vector<1x24x1xf32>
    %204 = vector.broadcast %203 : vector<1x24x1xf32> to vector<1x24x24xf32>
    %205 = arith.mulf %200, %204 : vector<1x24x24xf32>
    %206 = arith.truncf %205 : vector<1x24x24xf32> to vector<1x24x24xbf16>
    %207 = arith.truncf %188 : vector<1x24x8xf32> to vector<1x24x8xbf16>
    "tpu.trace_start"() <{level = 10 : i32, message = "bqk,bkd->bqd"}> : () -> ()
    %cst_98 = arith.constant dense<0.000000e+00> : vector<1x24x8xf32>
    %208 = tpu.matmul %206, %207, %cst_98 {dimension_numbers = #tpu.dot_dimension_numbers<[2], [1], [1], [2], [0, 0, 0, 1, 1, 2], [0], [0]>} : vector<1x24x24xbf16>, vector<1x24x8xbf16>, vector<1x24x8xf32> -> vector<1x24x8xf32>
    "tpu.trace_stop"() : () -> ()
    %209 = vector.shape_cast %208 : vector<1x24x8xf32> to vector<24x8xf32>
    %c0_99 = arith.constant 0 : index
    %c3 = arith.constant 3 : index
    %c0_100 = arith.constant 0 : index
    %c0_101 = arith.constant 0 : index
    %210 = vector.load %arg12[%c0_99, %c3, %c0_100, %c0_101] : memref<2x4x32x8xbf16, #tpu.memory_space<vmem>>, vector<1x1x32x8xbf16>
    %211 = vector.shape_cast %210 : vector<1x1x32x8xbf16> to vector<32x8xbf16>
    %212 = arith.truncf %101 : vector<24x32xf32> to vector<24x32xbf16>
    %cst_102 = arith.constant dense<0.000000e+00> : vector<24x8xf32>
    %213 = tpu.matmul %212, %211, %cst_102 {dimension_numbers = #tpu.dot_dimension_numbers<[1], [0], [0], [1], [0, 0, 1, 1], [], []>} : vector<24x32xbf16>, vector<32x8xbf16>, vector<24x8xf32> -> vector<24x8xf32>
    %214 = vector.shape_cast %213 : vector<24x8xf32> to vector<1x24x8xf32>
    %c0_103 = arith.constant 0 : index
    %c3_104 = arith.constant 3 : index
    %c0_105 = arith.constant 0 : index
    %c0_106 = arith.constant 0 : index
    %215 = vector.load %arg13[%c0_103, %c3_104, %c0_105, %c0_106] : memref<2x4x32x8xbf16, #tpu.memory_space<vmem>>, vector<1x1x32x8xbf16>
    %216 = vector.shape_cast %215 : vector<1x1x32x8xbf16> to vector<32x8xbf16>
    %217 = arith.truncf %101 : vector<24x32xf32> to vector<24x32xbf16>
    %cst_107 = arith.constant dense<0.000000e+00> : vector<24x8xf32>
    %218 = tpu.matmul %217, %216, %cst_107 {dimension_numbers = #tpu.dot_dimension_numbers<[1], [0], [0], [1], [0, 0, 1, 1], [], []>} : vector<24x32xbf16>, vector<32x8xbf16>, vector<24x8xf32> -> vector<24x8xf32>
    %219 = vector.shape_cast %218 : vector<24x8xf32> to vector<1x24x8xf32>
    %c0_108 = arith.constant 0 : index
    %c3_109 = arith.constant 3 : index
    %c0_110 = arith.constant 0 : index
    %c0_111 = arith.constant 0 : index
    %220 = vector.load %arg14[%c0_108, %c3_109, %c0_110, %c0_111] : memref<2x4x32x8xbf16, #tpu.memory_space<vmem>>, vector<1x1x32x8xbf16>
    %221 = vector.shape_cast %220 : vector<1x1x32x8xbf16> to vector<32x8xbf16>
    %222 = arith.truncf %101 : vector<24x32xf32> to vector<24x32xbf16>
    %cst_112 = arith.constant dense<0.000000e+00> : vector<24x8xf32>
    %223 = tpu.matmul %222, %221, %cst_112 {dimension_numbers = #tpu.dot_dimension_numbers<[1], [0], [0], [1], [0, 0, 1, 1], [], []>} : vector<24x32xbf16>, vector<32x8xbf16>, vector<24x8xf32> -> vector<24x8xf32>
    %224 = vector.shape_cast %223 : vector<24x8xf32> to vector<1x24x8xf32>
    %225 = arith.truncf %214 : vector<1x24x8xf32> to vector<1x24x8xbf16>
    %226 = arith.truncf %219 : vector<1x24x8xf32> to vector<1x24x8xbf16>
    "tpu.trace_start"() <{level = 10 : i32, message = "bqd,bkd->bqk"}> : () -> ()
    %cst_113 = arith.constant dense<0.000000e+00> : vector<1x24x24xf32>
    %227 = tpu.matmul %225, %226, %cst_113 {dimension_numbers = #tpu.dot_dimension_numbers<[2], [2], [1], [1], [0, 0, 0, 1, 1, 1], [0], [0]>} : vector<1x24x8xbf16>, vector<1x24x8xbf16>, vector<1x24x24xf32> -> vector<1x24x24xf32>
    "tpu.trace_stop"() : () -> ()
    %cst_114 = arith.constant 0.353553385 : f32
    %228 = vector.broadcast %cst_114 : f32 to vector<1x24x24xf32>
    %229 = arith.mulf %227, %228 : vector<1x24x24xf32>
    %230 = vector.broadcast %5 : vector<1x1x24xf32> to vector<1x24x24xf32>
    %231 = arith.addf %229, %230 : vector<1x24x24xf32>
    %cst_115 = arith.constant dense<0xFF800000> : vector<1x24xf32>
    %232 = vector.multi_reduction <maximumf>, %231, %cst_115 [2] : vector<1x24x24xf32> to vector<1x24xf32>
    %233 = vector.shape_cast %232 : vector<1x24xf32> to vector<1x24x1xf32>
    %234 = vector.broadcast %233 : vector<1x24x1xf32> to vector<1x24x24xf32>
    %235 = arith.subf %231, %234 : vector<1x24x24xf32>
    %236 = math.exp %235 : vector<1x24x24xf32>
    %cst_116 = arith.constant dense<0.000000e+00> : vector<1x24xf32>
    %237 = vector.multi_reduction <add>, %236, %cst_116 [2] : vector<1x24x24xf32> to vector<1x24xf32>
    %238 = vector.shape_cast %237 : vector<1x24xf32> to vector<1x24x1xf32>
    %239 = tpu.reciprocal %238 {approx = true} : vector<1x24x1xf32> -> vector<1x24x1xf32>
    %240 = vector.broadcast %239 : vector<1x24x1xf32> to vector<1x24x24xf32>
    %241 = arith.mulf %236, %240 : vector<1x24x24xf32>
    %242 = arith.truncf %241 : vector<1x24x24xf32> to vector<1x24x24xbf16>
    %243 = arith.truncf %224 : vector<1x24x8xf32> to vector<1x24x8xbf16>
    "tpu.trace_start"() <{level = 10 : i32, message = "bqk,bkd->bqd"}> : () -> ()
    %cst_117 = arith.constant dense<0.000000e+00> : vector<1x24x8xf32>
    %244 = tpu.matmul %242, %243, %cst_117 {dimension_numbers = #tpu.dot_dimension_numbers<[2], [1], [1], [2], [0, 0, 0, 1, 1, 2], [0], [0]>} : vector<1x24x24xbf16>, vector<1x24x8xbf16>, vector<1x24x8xf32> -> vector<1x24x8xf32>
    "tpu.trace_stop"() : () -> ()
    %245 = vector.shape_cast %244 : vector<1x24x8xf32> to vector<24x8xf32>
    %246 = tpu.concatenate %137, %173, %209, %245 in 1 : vector<24x8xf32>, vector<24x8xf32>, vector<24x8xf32>, vector<24x8xf32> -> vector<24x32xf32>
    %c0_118 = arith.constant 0 : index
    %c0_119 = arith.constant 0 : index
    %c0_120 = arith.constant 0 : index
    %247 = vector.load %arg15[%c0_118, %c0_119, %c0_120] : memref<2x32x32xbf16, #tpu.memory_space<vmem>>, vector<1x32x32xbf16>
    %248 = vector.shape_cast %247 : vector<1x32x32xbf16> to vector<32x32xbf16>
    %249 = arith.truncf %246 : vector<24x32xf32> to vector<24x32xbf16>
    %cst_121 = arith.constant dense<0.000000e+00> : vector<24x32xf32>
    %250 = tpu.matmul %249, %248, %cst_121 {dimension_numbers = #tpu.dot_dimension_numbers<[1], [0], [0], [1], [0, 0, 1, 1], [], []>} : vector<24x32xbf16>, vector<32x32xbf16>, vector<24x32xf32> -> vector<24x32xf32>
    %251 = arith.addf %75, %250 : vector<24x32xf32>
    %c0_122 = arith.constant 0 : index
    %c0_123 = arith.constant 0 : index
    %c0_124 = arith.constant 0 : index
    %252 = vector.load %arg16[%c0_122, %c0_123, %c0_124] : memref<2x1x32xf32, #tpu.memory_space<vmem>>, vector<1x1x32xf32>
    %253 = vector.shape_cast %252 : vector<1x1x32xf32> to vector<1x32xf32>
    %254 = vector.broadcast %253 : vector<1x32xf32> to vector<24x32xf32>
    %255 = arith.addf %251, %254 : vector<24x32xf32>
    %c0_125 = arith.constant 0 : index
    %c0_126 = arith.constant 0 : index
    %c0_127 = arith.constant 0 : index
    %256 = vector.load %arg17[%c0_125, %c0_126, %c0_127] : memref<2x1x32xf32, #tpu.memory_space<vmem>>, vector<1x1x32xf32>
    %257 = vector.shape_cast %256 : vector<1x1x32xf32> to vector<1x32xf32>
    %c0_128 = arith.constant 0 : index
    %c0_129 = arith.constant 0 : index
    %c0_130 = arith.constant 0 : index
    %258 = vector.load %arg18[%c0_128, %c0_129, %c0_130] : memref<2x1x32xf32, #tpu.memory_space<vmem>>, vector<1x1x32xf32>
    %259 = vector.shape_cast %258 : vector<1x1x32xf32> to vector<1x32xf32>
    %cst_131 = arith.constant dense<0.000000e+00> : vector<24xf32>
    %260 = vector.multi_reduction <add>, %255, %cst_131 [1] : vector<24x32xf32> to vector<24xf32>
    %261 = vector.shape_cast %260 : vector<24xf32> to vector<24x1xf32>
    %cst_132 = arith.constant 3.200000e+01 : f32
    %262 = vector.broadcast %cst_132 : f32 to vector<24x1xf32>
    %263 = arith.divf %261, %262 : vector<24x1xf32>
    %264 = vector.broadcast %263 : vector<24x1xf32> to vector<24x32xf32>
    %265 = arith.subf %255, %264 : vector<24x32xf32>
    %266 = arith.mulf %265, %265 : vector<24x32xf32>
    %cst_133 = arith.constant dense<0.000000e+00> : vector<24xf32>
    %267 = vector.multi_reduction <add>, %266, %cst_133 [1] : vector<24x32xf32> to vector<24xf32>
    %268 = vector.shape_cast %267 : vector<24xf32> to vector<24x1xf32>
    %cst_134 = arith.constant 3.200000e+01 : f32
    %269 = vector.broadcast %cst_134 : f32 to vector<24x1xf32>
    %270 = arith.divf %268, %269 : vector<24x1xf32>
    %271 = vector.broadcast %263 : vector<24x1xf32> to vector<24x32xf32>
    %272 = arith.subf %255, %271 : vector<24x32xf32>
    %cst_135 = arith.constant 9.99999974E-6 : f32
    %273 = vector.broadcast %cst_135 : f32 to vector<24x1xf32>
    %274 = arith.addf %270, %273 : vector<24x1xf32>
    %275 = math.rsqrt %274 : vector<24x1xf32>
    %276 = vector.broadcast %275 : vector<24x1xf32> to vector<24x32xf32>
    %277 = arith.mulf %272, %276 : vector<24x32xf32>
    %278 = vector.broadcast %257 : vector<1x32xf32> to vector<24x32xf32>
    %279 = arith.mulf %277, %278 : vector<24x32xf32>
    %280 = vector.broadcast %259 : vector<1x32xf32> to vector<24x32xf32>
    %281 = arith.addf %279, %280 : vector<24x32xf32>
    %c0_136 = arith.constant 0 : index
    %c0_137 = arith.constant 0 : index
    %c0_138 = arith.constant 0 : index
    %282 = vector.load %arg19[%c0_136, %c0_137, %c0_138] : memref<2x32x64xbf16, #tpu.memory_space<vmem>>, vector<1x32x64xbf16>
    %283 = vector.shape_cast %282 : vector<1x32x64xbf16> to vector<32x64xbf16>
    %284 = arith.truncf %281 : vector<24x32xf32> to vector<24x32xbf16>
    %cst_139 = arith.constant dense<0.000000e+00> : vector<24x64xf32>
    %285 = tpu.matmul %284, %283, %cst_139 {dimension_numbers = #tpu.dot_dimension_numbers<[1], [0], [0], [1], [0, 0, 1, 1], [], []>} : vector<24x32xbf16>, vector<32x64xbf16>, vector<24x64xf32> -> vector<24x64xf32>
    %c0_140 = arith.constant 0 : index
    %c0_141 = arith.constant 0 : index
    %c0_142 = arith.constant 0 : index
    %286 = vector.load %arg20[%c0_140, %c0_141, %c0_142] : memref<2x1x64xf32, #tpu.memory_space<vmem>>, vector<1x1x64xf32>
    %287 = vector.shape_cast %286 : vector<1x1x64xf32> to vector<1x64xf32>
    %288 = vector.broadcast %287 : vector<1x64xf32> to vector<24x64xf32>
    %289 = arith.addf %285, %288 : vector<24x64xf32>
    %290 = arith.mulf %289, %289 : vector<24x64xf32>
    %291 = arith.mulf %289, %290 : vector<24x64xf32>
    %cst_143 = arith.constant 4.471500e-02 : f32
    %292 = vector.broadcast %cst_143 : f32 to vector<24x64xf32>
    %293 = arith.mulf %292, %291 : vector<24x64xf32>
    %294 = arith.addf %289, %293 : vector<24x64xf32>
    %cst_144 = arith.constant 0.797884583 : f32
    %295 = vector.broadcast %cst_144 : f32 to vector<24x64xf32>
    %296 = arith.mulf %295, %294 : vector<24x64xf32>
    %297 = math.tanh %296 : vector<24x64xf32>
    %cst_145 = arith.constant 1.000000e+00 : f32
    %298 = vector.broadcast %cst_145 : f32 to vector<24x64xf32>
    %299 = arith.addf %298, %297 : vector<24x64xf32>
    %cst_146 = arith.constant 5.000000e-01 : f32
    %300 = vector.broadcast %cst_146 : f32 to vector<24x64xf32>
    %301 = arith.mulf %300, %299 : vector<24x64xf32>
    %302 = arith.mulf %289, %301 : vector<24x64xf32>
    %c0_147 = arith.constant 0 : index
    %c0_148 = arith.constant 0 : index
    %c0_149 = arith.constant 0 : index
    %303 = vector.load %arg21[%c0_147, %c0_148, %c0_149] : memref<2x64x32xbf16, #tpu.memory_space<vmem>>, vector<1x64x32xbf16>
    %304 = vector.shape_cast %303 : vector<1x64x32xbf16> to vector<64x32xbf16>
    %305 = arith.truncf %302 : vector<24x64xf32> to vector<24x64xbf16>
    %cst_150 = arith.constant dense<0.000000e+00> : vector<24x32xf32>
    %306 = tpu.matmul %305, %304, %cst_150 {dimension_numbers = #tpu.dot_dimension_numbers<[1], [0], [0], [1], [0, 0, 1, 1], [], []>} : vector<24x64xbf16>, vector<64x32xbf16>, vector<24x32xf32> -> vector<24x32xf32>
    %307 = arith.addf %255, %306 : vector<24x32xf32>
    %c0_151 = arith.constant 0 : index
    %c0_152 = arith.constant 0 : index
    %c0_153 = arith.constant 0 : index
    %308 = vector.load %arg22[%c0_151, %c0_152, %c0_153] : memref<2x1x32xf32, #tpu.memory_space<vmem>>, vector<1x1x32xf32>
    %309 = vector.shape_cast %308 : vector<1x1x32xf32> to vector<1x32xf32>
    %310 = vector.broadcast %309 : vector<1x32xf32> to vector<24x32xf32>
    %311 = arith.addf %307, %310 : vector<24x32xf32>
    %c1_154 = arith.constant 1 : index
    %c0_155 = arith.constant 0 : index
    %c0_156 = arith.constant 0 : index
    %312 = vector.load %arg10[%c1_154, %c0_155, %c0_156] : memref<2x1x32xf32, #tpu.memory_space<vmem>>, vector<1x1x32xf32>
    %313 = vector.shape_cast %312 : vector<1x1x32xf32> to vector<1x32xf32>
    %c1_157 = arith.constant 1 : index
    %c0_158 = arith.constant 0 : index
    %c0_159 = arith.constant 0 : index
    %314 = vector.load %arg11[%c1_157, %c0_158, %c0_159] : memref<2x1x32xf32, #tpu.memory_space<vmem>>, vector<1x1x32xf32>
    %315 = vector.shape_cast %314 : vector<1x1x32xf32> to vector<1x32xf32>
    %cst_160 = arith.constant dense<0.000000e+00> : vector<24xf32>
    %316 = vector.multi_reduction <add>, %311, %cst_160 [1] : vector<24x32xf32> to vector<24xf32>
    %317 = vector.shape_cast %316 : vector<24xf32> to vector<24x1xf32>
    %cst_161 = arith.constant 3.200000e+01 : f32
    %318 = vector.broadcast %cst_161 : f32 to vector<24x1xf32>
    %319 = arith.divf %317, %318 : vector<24x1xf32>
    %320 = vector.broadcast %319 : vector<24x1xf32> to vector<24x32xf32>
    %321 = arith.subf %311, %320 : vector<24x32xf32>
    %322 = arith.mulf %321, %321 : vector<24x32xf32>
    %cst_162 = arith.constant dense<0.000000e+00> : vector<24xf32>
    %323 = vector.multi_reduction <add>, %322, %cst_162 [1] : vector<24x32xf32> to vector<24xf32>
    %324 = vector.shape_cast %323 : vector<24xf32> to vector<24x1xf32>
    %cst_163 = arith.constant 3.200000e+01 : f32
    %325 = vector.broadcast %cst_163 : f32 to vector<24x1xf32>
    %326 = arith.divf %324, %325 : vector<24x1xf32>
    %327 = vector.broadcast %319 : vector<24x1xf32> to vector<24x32xf32>
    %328 = arith.subf %311, %327 : vector<24x32xf32>
    %cst_164 = arith.constant 9.99999974E-6 : f32
    %329 = vector.broadcast %cst_164 : f32 to vector<24x1xf32>
    %330 = arith.addf %326, %329 : vector<24x1xf32>
    %331 = math.rsqrt %330 : vector<24x1xf32>
    %332 = vector.broadcast %331 : vector<24x1xf32> to vector<24x32xf32>
    %333 = arith.mulf %328, %332 : vector<24x32xf32>
    %334 = vector.broadcast %313 : vector<1x32xf32> to vector<24x32xf32>
    %335 = arith.mulf %333, %334 : vector<24x32xf32>
    %336 = vector.broadcast %315 : vector<1x32xf32> to vector<24x32xf32>
    %337 = arith.addf %335, %336 : vector<24x32xf32>
    %c1_165 = arith.constant 1 : index
    %c0_166 = arith.constant 0 : index
    %c0_167 = arith.constant 0 : index
    %c0_168 = arith.constant 0 : index
    %338 = vector.load %arg12[%c1_165, %c0_166, %c0_167, %c0_168] : memref<2x4x32x8xbf16, #tpu.memory_space<vmem>>, vector<1x1x32x8xbf16>
    %339 = vector.shape_cast %338 : vector<1x1x32x8xbf16> to vector<32x8xbf16>
    %340 = arith.truncf %337 : vector<24x32xf32> to vector<24x32xbf16>
    %cst_169 = arith.constant dense<0.000000e+00> : vector<24x8xf32>
    %341 = tpu.matmul %340, %339, %cst_169 {dimension_numbers = #tpu.dot_dimension_numbers<[1], [0], [0], [1], [0, 0, 1, 1], [], []>} : vector<24x32xbf16>, vector<32x8xbf16>, vector<24x8xf32> -> vector<24x8xf32>
    %342 = vector.shape_cast %341 : vector<24x8xf32> to vector<1x24x8xf32>
    %c1_170 = arith.constant 1 : index
    %c0_171 = arith.constant 0 : index
    %c0_172 = arith.constant 0 : index
    %c0_173 = arith.constant 0 : index
    %343 = vector.load %arg13[%c1_170, %c0_171, %c0_172, %c0_173] : memref<2x4x32x8xbf16, #tpu.memory_space<vmem>>, vector<1x1x32x8xbf16>
    %344 = vector.shape_cast %343 : vector<1x1x32x8xbf16> to vector<32x8xbf16>
    %345 = arith.truncf %337 : vector<24x32xf32> to vector<24x32xbf16>
    %cst_174 = arith.constant dense<0.000000e+00> : vector<24x8xf32>
    %346 = tpu.matmul %345, %344, %cst_174 {dimension_numbers = #tpu.dot_dimension_numbers<[1], [0], [0], [1], [0, 0, 1, 1], [], []>} : vector<24x32xbf16>, vector<32x8xbf16>, vector<24x8xf32> -> vector<24x8xf32>
    %347 = vector.shape_cast %346 : vector<24x8xf32> to vector<1x24x8xf32>
    %c1_175 = arith.constant 1 : index
    %c0_176 = arith.constant 0 : index
    %c0_177 = arith.constant 0 : index
    %c0_178 = arith.constant 0 : index
    %348 = vector.load %arg14[%c1_175, %c0_176, %c0_177, %c0_178] : memref<2x4x32x8xbf16, #tpu.memory_space<vmem>>, vector<1x1x32x8xbf16>
    %349 = vector.shape_cast %348 : vector<1x1x32x8xbf16> to vector<32x8xbf16>
    %350 = arith.truncf %337 : vector<24x32xf32> to vector<24x32xbf16>
    %cst_179 = arith.constant dense<0.000000e+00> : vector<24x8xf32>
    %351 = tpu.matmul %350, %349, %cst_179 {dimension_numbers = #tpu.dot_dimension_numbers<[1], [0], [0], [1], [0, 0, 1, 1], [], []>} : vector<24x32xbf16>, vector<32x8xbf16>, vector<24x8xf32> -> vector<24x8xf32>
    %352 = vector.shape_cast %351 : vector<24x8xf32> to vector<1x24x8xf32>
    %353 = arith.truncf %342 : vector<1x24x8xf32> to vector<1x24x8xbf16>
    %354 = arith.truncf %347 : vector<1x24x8xf32> to vector<1x24x8xbf16>
    "tpu.trace_start"() <{level = 10 : i32, message = "bqd,bkd->bqk"}> : () -> ()
    %cst_180 = arith.constant dense<0.000000e+00> : vector<1x24x24xf32>
    %355 = tpu.matmul %353, %354, %cst_180 {dimension_numbers = #tpu.dot_dimension_numbers<[2], [2], [1], [1], [0, 0, 0, 1, 1, 1], [0], [0]>} : vector<1x24x8xbf16>, vector<1x24x8xbf16>, vector<1x24x24xf32> -> vector<1x24x24xf32>
    "tpu.trace_stop"() : () -> ()
    %cst_181 = arith.constant 0.353553385 : f32
    %356 = vector.broadcast %cst_181 : f32 to vector<1x24x24xf32>
    %357 = arith.mulf %355, %356 : vector<1x24x24xf32>
    %358 = vector.broadcast %5 : vector<1x1x24xf32> to vector<1x24x24xf32>
    %359 = arith.addf %357, %358 : vector<1x24x24xf32>
    %cst_182 = arith.constant dense<0xFF800000> : vector<1x24xf32>
    %360 = vector.multi_reduction <maximumf>, %359, %cst_182 [2] : vector<1x24x24xf32> to vector<1x24xf32>
    %361 = vector.shape_cast %360 : vector<1x24xf32> to vector<1x24x1xf32>
    %362 = vector.broadcast %361 : vector<1x24x1xf32> to vector<1x24x24xf32>
    %363 = arith.subf %359, %362 : vector<1x24x24xf32>
    %364 = math.exp %363 : vector<1x24x24xf32>
    %cst_183 = arith.constant dense<0.000000e+00> : vector<1x24xf32>
    %365 = vector.multi_reduction <add>, %364, %cst_183 [2] : vector<1x24x24xf32> to vector<1x24xf32>
    %366 = vector.shape_cast %365 : vector<1x24xf32> to vector<1x24x1xf32>
    %367 = tpu.reciprocal %366 {approx = true} : vector<1x24x1xf32> -> vector<1x24x1xf32>
    %368 = vector.broadcast %367 : vector<1x24x1xf32> to vector<1x24x24xf32>
    %369 = arith.mulf %364, %368 : vector<1x24x24xf32>
    %370 = arith.truncf %369 : vector<1x24x24xf32> to vector<1x24x24xbf16>
    %371 = arith.truncf %352 : vector<1x24x8xf32> to vector<1x24x8xbf16>
    "tpu.trace_start"() <{level = 10 : i32, message = "bqk,bkd->bqd"}> : () -> ()
    %cst_184 = arith.constant dense<0.000000e+00> : vector<1x24x8xf32>
    %372 = tpu.matmul %370, %371, %cst_184 {dimension_numbers = #tpu.dot_dimension_numbers<[2], [1], [1], [2], [0, 0, 0, 1, 1, 2], [0], [0]>} : vector<1x24x24xbf16>, vector<1x24x8xbf16>, vector<1x24x8xf32> -> vector<1x24x8xf32>
    "tpu.trace_stop"() : () -> ()
    %373 = vector.shape_cast %372 : vector<1x24x8xf32> to vector<24x8xf32>
    %c1_185 = arith.constant 1 : index
    %c1_186 = arith.constant 1 : index
    %c0_187 = arith.constant 0 : index
    %c0_188 = arith.constant 0 : index
    %374 = vector.load %arg12[%c1_185, %c1_186, %c0_187, %c0_188] : memref<2x4x32x8xbf16, #tpu.memory_space<vmem>>, vector<1x1x32x8xbf16>
    %375 = vector.shape_cast %374 : vector<1x1x32x8xbf16> to vector<32x8xbf16>
    %376 = arith.truncf %337 : vector<24x32xf32> to vector<24x32xbf16>
    %cst_189 = arith.constant dense<0.000000e+00> : vector<24x8xf32>
    %377 = tpu.matmul %376, %375, %cst_189 {dimension_numbers = #tpu.dot_dimension_numbers<[1], [0], [0], [1], [0, 0, 1, 1], [], []>} : vector<24x32xbf16>, vector<32x8xbf16>, vector<24x8xf32> -> vector<24x8xf32>
    %378 = vector.shape_cast %377 : vector<24x8xf32> to vector<1x24x8xf32>
    %c1_190 = arith.constant 1 : index
    %c1_191 = arith.constant 1 : index
    %c0_192 = arith.constant 0 : index
    %c0_193 = arith.constant 0 : index
    %379 = vector.load %arg13[%c1_190, %c1_191, %c0_192, %c0_193] : memref<2x4x32x8xbf16, #tpu.memory_space<vmem>>, vector<1x1x32x8xbf16>
    %380 = vector.shape_cast %379 : vector<1x1x32x8xbf16> to vector<32x8xbf16>
    %381 = arith.truncf %337 : vector<24x32xf32> to vector<24x32xbf16>
    %cst_194 = arith.constant dense<0.000000e+00> : vector<24x8xf32>
    %382 = tpu.matmul %381, %380, %cst_194 {dimension_numbers = #tpu.dot_dimension_numbers<[1], [0], [0], [1], [0, 0, 1, 1], [], []>} : vector<24x32xbf16>, vector<32x8xbf16>, vector<24x8xf32> -> vector<24x8xf32>
    %383 = vector.shape_cast %382 : vector<24x8xf32> to vector<1x24x8xf32>
    %c1_195 = arith.constant 1 : index
    %c1_196 = arith.constant 1 : index
    %c0_197 = arith.constant 0 : index
    %c0_198 = arith.constant 0 : index
    %384 = vector.load %arg14[%c1_195, %c1_196, %c0_197, %c0_198] : memref<2x4x32x8xbf16, #tpu.memory_space<vmem>>, vector<1x1x32x8xbf16>
    %385 = vector.shape_cast %384 : vector<1x1x32x8xbf16> to vector<32x8xbf16>
    %386 = arith.truncf %337 : vector<24x32xf32> to vector<24x32xbf16>
    %cst_199 = arith.constant dense<0.000000e+00> : vector<24x8xf32>
    %387 = tpu.matmul %386, %385, %cst_199 {dimension_numbers = #tpu.dot_dimension_numbers<[1], [0], [0], [1], [0, 0, 1, 1], [], []>} : vector<24x32xbf16>, vector<32x8xbf16>, vector<24x8xf32> -> vector<24x8xf32>
    %388 = vector.shape_cast %387 : vector<24x8xf32> to vector<1x24x8xf32>
    %389 = arith.truncf %378 : vector<1x24x8xf32> to vector<1x24x8xbf16>
    %390 = arith.truncf %383 : vector<1x24x8xf32> to vector<1x24x8xbf16>
    "tpu.trace_start"() <{level = 10 : i32, message = "bqd,bkd->bqk"}> : () -> ()
    %cst_200 = arith.constant dense<0.000000e+00> : vector<1x24x24xf32>
    %391 = tpu.matmul %389, %390, %cst_200 {dimension_numbers = #tpu.dot_dimension_numbers<[2], [2], [1], [1], [0, 0, 0, 1, 1, 1], [0], [0]>} : vector<1x24x8xbf16>, vector<1x24x8xbf16>, vector<1x24x24xf32> -> vector<1x24x24xf32>
    "tpu.trace_stop"() : () -> ()
    %cst_201 = arith.constant 0.353553385 : f32
    %392 = vector.broadcast %cst_201 : f32 to vector<1x24x24xf32>
    %393 = arith.mulf %391, %392 : vector<1x24x24xf32>
    %394 = vector.broadcast %5 : vector<1x1x24xf32> to vector<1x24x24xf32>
    %395 = arith.addf %393, %394 : vector<1x24x24xf32>
    %cst_202 = arith.constant dense<0xFF800000> : vector<1x24xf32>
    %396 = vector.multi_reduction <maximumf>, %395, %cst_202 [2] : vector<1x24x24xf32> to vector<1x24xf32>
    %397 = vector.shape_cast %396 : vector<1x24xf32> to vector<1x24x1xf32>
    %398 = vector.broadcast %397 : vector<1x24x1xf32> to vector<1x24x24xf32>
    %399 = arith.subf %395, %398 : vector<1x24x24xf32>
    %400 = math.exp %399 : vector<1x24x24xf32>
    %cst_203 = arith.constant dense<0.000000e+00> : vector<1x24xf32>
    %401 = vector.multi_reduction <add>, %400, %cst_203 [2] : vector<1x24x24xf32> to vector<1x24xf32>
    %402 = vector.shape_cast %401 : vector<1x24xf32> to vector<1x24x1xf32>
    %403 = tpu.reciprocal %402 {approx = true} : vector<1x24x1xf32> -> vector<1x24x1xf32>
    %404 = vector.broadcast %403 : vector<1x24x1xf32> to vector<1x24x24xf32>
    %405 = arith.mulf %400, %404 : vector<1x24x24xf32>
    %406 = arith.truncf %405 : vector<1x24x24xf32> to vector<1x24x24xbf16>
    %407 = arith.truncf %388 : vector<1x24x8xf32> to vector<1x24x8xbf16>
    "tpu.trace_start"() <{level = 10 : i32, message = "bqk,bkd->bqd"}> : () -> ()
    %cst_204 = arith.constant dense<0.000000e+00> : vector<1x24x8xf32>
    %408 = tpu.matmul %406, %407, %cst_204 {dimension_numbers = #tpu.dot_dimension_numbers<[2], [1], [1], [2], [0, 0, 0, 1, 1, 2], [0], [0]>} : vector<1x24x24xbf16>, vector<1x24x8xbf16>, vector<1x24x8xf32> -> vector<1x24x8xf32>
    "tpu.trace_stop"() : () -> ()
    %409 = vector.shape_cast %408 : vector<1x24x8xf32> to vector<24x8xf32>
    %c1_205 = arith.constant 1 : index
    %c2_206 = arith.constant 2 : index
    %c0_207 = arith.constant 0 : index
    %c0_208 = arith.constant 0 : index
    %410 = vector.load %arg12[%c1_205, %c2_206, %c0_207, %c0_208] : memref<2x4x32x8xbf16, #tpu.memory_space<vmem>>, vector<1x1x32x8xbf16>
    %411 = vector.shape_cast %410 : vector<1x1x32x8xbf16> to vector<32x8xbf16>
    %412 = arith.truncf %337 : vector<24x32xf32> to vector<24x32xbf16>
    %cst_209 = arith.constant dense<0.000000e+00> : vector<24x8xf32>
    %413 = tpu.matmul %412, %411, %cst_209 {dimension_numbers = #tpu.dot_dimension_numbers<[1], [0], [0], [1], [0, 0, 1, 1], [], []>} : vector<24x32xbf16>, vector<32x8xbf16>, vector<24x8xf32> -> vector<24x8xf32>
    %414 = vector.shape_cast %413 : vector<24x8xf32> to vector<1x24x8xf32>
    %c1_210 = arith.constant 1 : index
    %c2_211 = arith.constant 2 : index
    %c0_212 = arith.constant 0 : index
    %c0_213 = arith.constant 0 : index
    %415 = vector.load %arg13[%c1_210, %c2_211, %c0_212, %c0_213] : memref<2x4x32x8xbf16, #tpu.memory_space<vmem>>, vector<1x1x32x8xbf16>
    %416 = vector.shape_cast %415 : vector<1x1x32x8xbf16> to vector<32x8xbf16>
    %417 = arith.truncf %337 : vector<24x32xf32> to vector<24x32xbf16>
    %cst_214 = arith.constant dense<0.000000e+00> : vector<24x8xf32>
    %418 = tpu.matmul %417, %416, %cst_214 {dimension_numbers = #tpu.dot_dimension_numbers<[1], [0], [0], [1], [0, 0, 1, 1], [], []>} : vector<24x32xbf16>, vector<32x8xbf16>, vector<24x8xf32> -> vector<24x8xf32>
    %419 = vector.shape_cast %418 : vector<24x8xf32> to vector<1x24x8xf32>
    %c1_215 = arith.constant 1 : index
    %c2_216 = arith.constant 2 : index
    %c0_217 = arith.constant 0 : index
    %c0_218 = arith.constant 0 : index
    %420 = vector.load %arg14[%c1_215, %c2_216, %c0_217, %c0_218] : memref<2x4x32x8xbf16, #tpu.memory_space<vmem>>, vector<1x1x32x8xbf16>
    %421 = vector.shape_cast %420 : vector<1x1x32x8xbf16> to vector<32x8xbf16>
    %422 = arith.truncf %337 : vector<24x32xf32> to vector<24x32xbf16>
    %cst_219 = arith.constant dense<0.000000e+00> : vector<24x8xf32>
    %423 = tpu.matmul %422, %421, %cst_219 {dimension_numbers = #tpu.dot_dimension_numbers<[1], [0], [0], [1], [0, 0, 1, 1], [], []>} : vector<24x32xbf16>, vector<32x8xbf16>, vector<24x8xf32> -> vector<24x8xf32>
    %424 = vector.shape_cast %423 : vector<24x8xf32> to vector<1x24x8xf32>
    %425 = arith.truncf %414 : vector<1x24x8xf32> to vector<1x24x8xbf16>
    %426 = arith.truncf %419 : vector<1x24x8xf32> to vector<1x24x8xbf16>
    "tpu.trace_start"() <{level = 10 : i32, message = "bqd,bkd->bqk"}> : () -> ()
    %cst_220 = arith.constant dense<0.000000e+00> : vector<1x24x24xf32>
    %427 = tpu.matmul %425, %426, %cst_220 {dimension_numbers = #tpu.dot_dimension_numbers<[2], [2], [1], [1], [0, 0, 0, 1, 1, 1], [0], [0]>} : vector<1x24x8xbf16>, vector<1x24x8xbf16>, vector<1x24x24xf32> -> vector<1x24x24xf32>
    "tpu.trace_stop"() : () -> ()
    %cst_221 = arith.constant 0.353553385 : f32
    %428 = vector.broadcast %cst_221 : f32 to vector<1x24x24xf32>
    %429 = arith.mulf %427, %428 : vector<1x24x24xf32>
    %430 = vector.broadcast %5 : vector<1x1x24xf32> to vector<1x24x24xf32>
    %431 = arith.addf %429, %430 : vector<1x24x24xf32>
    %cst_222 = arith.constant dense<0xFF800000> : vector<1x24xf32>
    %432 = vector.multi_reduction <maximumf>, %431, %cst_222 [2] : vector<1x24x24xf32> to vector<1x24xf32>
    %433 = vector.shape_cast %432 : vector<1x24xf32> to vector<1x24x1xf32>
    %434 = vector.broadcast %433 : vector<1x24x1xf32> to vector<1x24x24xf32>
    %435 = arith.subf %431, %434 : vector<1x24x24xf32>
    %436 = math.exp %435 : vector<1x24x24xf32>
    %cst_223 = arith.constant dense<0.000000e+00> : vector<1x24xf32>
    %437 = vector.multi_reduction <add>, %436, %cst_223 [2] : vector<1x24x24xf32> to vector<1x24xf32>
    %438 = vector.shape_cast %437 : vector<1x24xf32> to vector<1x24x1xf32>
    %439 = tpu.reciprocal %438 {approx = true} : vector<1x24x1xf32> -> vector<1x24x1xf32>
    %440 = vector.broadcast %439 : vector<1x24x1xf32> to vector<1x24x24xf32>
    %441 = arith.mulf %436, %440 : vector<1x24x24xf32>
    %442 = arith.truncf %441 : vector<1x24x24xf32> to vector<1x24x24xbf16>
    %443 = arith.truncf %424 : vector<1x24x8xf32> to vector<1x24x8xbf16>
    "tpu.trace_start"() <{level = 10 : i32, message = "bqk,bkd->bqd"}> : () -> ()
    %cst_224 = arith.constant dense<0.000000e+00> : vector<1x24x8xf32>
    %444 = tpu.matmul %442, %443, %cst_224 {dimension_numbers = #tpu.dot_dimension_numbers<[2], [1], [1], [2], [0, 0, 0, 1, 1, 2], [0], [0]>} : vector<1x24x24xbf16>, vector<1x24x8xbf16>, vector<1x24x8xf32> -> vector<1x24x8xf32>
    "tpu.trace_stop"() : () -> ()
    %445 = vector.shape_cast %444 : vector<1x24x8xf32> to vector<24x8xf32>
    %c1_225 = arith.constant 1 : index
    %c3_226 = arith.constant 3 : index
    %c0_227 = arith.constant 0 : index
    %c0_228 = arith.constant 0 : index
    %446 = vector.load %arg12[%c1_225, %c3_226, %c0_227, %c0_228] : memref<2x4x32x8xbf16, #tpu.memory_space<vmem>>, vector<1x1x32x8xbf16>
    %447 = vector.shape_cast %446 : vector<1x1x32x8xbf16> to vector<32x8xbf16>
    %448 = arith.truncf %337 : vector<24x32xf32> to vector<24x32xbf16>
    %cst_229 = arith.constant dense<0.000000e+00> : vector<24x8xf32>
    %449 = tpu.matmul %448, %447, %cst_229 {dimension_numbers = #tpu.dot_dimension_numbers<[1], [0], [0], [1], [0, 0, 1, 1], [], []>} : vector<24x32xbf16>, vector<32x8xbf16>, vector<24x8xf32> -> vector<24x8xf32>
    %450 = vector.shape_cast %449 : vector<24x8xf32> to vector<1x24x8xf32>
    %c1_230 = arith.constant 1 : index
    %c3_231 = arith.constant 3 : index
    %c0_232 = arith.constant 0 : index
    %c0_233 = arith.constant 0 : index
    %451 = vector.load %arg13[%c1_230, %c3_231, %c0_232, %c0_233] : memref<2x4x32x8xbf16, #tpu.memory_space<vmem>>, vector<1x1x32x8xbf16>
    %452 = vector.shape_cast %451 : vector<1x1x32x8xbf16> to vector<32x8xbf16>
    %453 = arith.truncf %337 : vector<24x32xf32> to vector<24x32xbf16>
    %cst_234 = arith.constant dense<0.000000e+00> : vector<24x8xf32>
    %454 = tpu.matmul %453, %452, %cst_234 {dimension_numbers = #tpu.dot_dimension_numbers<[1], [0], [0], [1], [0, 0, 1, 1], [], []>} : vector<24x32xbf16>, vector<32x8xbf16>, vector<24x8xf32> -> vector<24x8xf32>
    %455 = vector.shape_cast %454 : vector<24x8xf32> to vector<1x24x8xf32>
    %c1_235 = arith.constant 1 : index
    %c3_236 = arith.constant 3 : index
    %c0_237 = arith.constant 0 : index
    %c0_238 = arith.constant 0 : index
    %456 = vector.load %arg14[%c1_235, %c3_236, %c0_237, %c0_238] : memref<2x4x32x8xbf16, #tpu.memory_space<vmem>>, vector<1x1x32x8xbf16>
    %457 = vector.shape_cast %456 : vector<1x1x32x8xbf16> to vector<32x8xbf16>
    %458 = arith.truncf %337 : vector<24x32xf32> to vector<24x32xbf16>
    %cst_239 = arith.constant dense<0.000000e+00> : vector<24x8xf32>
    %459 = tpu.matmul %458, %457, %cst_239 {dimension_numbers = #tpu.dot_dimension_numbers<[1], [0], [0], [1], [0, 0, 1, 1], [], []>} : vector<24x32xbf16>, vector<32x8xbf16>, vector<24x8xf32> -> vector<24x8xf32>
    %460 = vector.shape_cast %459 : vector<24x8xf32> to vector<1x24x8xf32>
    %461 = arith.truncf %450 : vector<1x24x8xf32> to vector<1x24x8xbf16>
    %462 = arith.truncf %455 : vector<1x24x8xf32> to vector<1x24x8xbf16>
    "tpu.trace_start"() <{level = 10 : i32, message = "bqd,bkd->bqk"}> : () -> ()
    %cst_240 = arith.constant dense<0.000000e+00> : vector<1x24x24xf32>
    %463 = tpu.matmul %461, %462, %cst_240 {dimension_numbers = #tpu.dot_dimension_numbers<[2], [2], [1], [1], [0, 0, 0, 1, 1, 1], [0], [0]>} : vector<1x24x8xbf16>, vector<1x24x8xbf16>, vector<1x24x24xf32> -> vector<1x24x24xf32>
    "tpu.trace_stop"() : () -> ()
    %cst_241 = arith.constant 0.353553385 : f32
    %464 = vector.broadcast %cst_241 : f32 to vector<1x24x24xf32>
    %465 = arith.mulf %463, %464 : vector<1x24x24xf32>
    %466 = vector.broadcast %5 : vector<1x1x24xf32> to vector<1x24x24xf32>
    %467 = arith.addf %465, %466 : vector<1x24x24xf32>
    %cst_242 = arith.constant dense<0xFF800000> : vector<1x24xf32>
    %468 = vector.multi_reduction <maximumf>, %467, %cst_242 [2] : vector<1x24x24xf32> to vector<1x24xf32>
    %469 = vector.shape_cast %468 : vector<1x24xf32> to vector<1x24x1xf32>
    %470 = vector.broadcast %469 : vector<1x24x1xf32> to vector<1x24x24xf32>
    %471 = arith.subf %467, %470 : vector<1x24x24xf32>
    %472 = math.exp %471 : vector<1x24x24xf32>
    %cst_243 = arith.constant dense<0.000000e+00> : vector<1x24xf32>
    %473 = vector.multi_reduction <add>, %472, %cst_243 [2] : vector<1x24x24xf32> to vector<1x24xf32>
    %474 = vector.shape_cast %473 : vector<1x24xf32> to vector<1x24x1xf32>
    %475 = tpu.reciprocal %474 {approx = true} : vector<1x24x1xf32> -> vector<1x24x1xf32>
    %476 = vector.broadcast %475 : vector<1x24x1xf32> to vector<1x24x24xf32>
    %477 = arith.mulf %472, %476 : vector<1x24x24xf32>
    %478 = arith.truncf %477 : vector<1x24x24xf32> to vector<1x24x24xbf16>
    %479 = arith.truncf %460 : vector<1x24x8xf32> to vector<1x24x8xbf16>
    "tpu.trace_start"() <{level = 10 : i32, message = "bqk,bkd->bqd"}> : () -> ()
    %cst_244 = arith.constant dense<0.000000e+00> : vector<1x24x8xf32>
    %480 = tpu.matmul %478, %479, %cst_244 {dimension_numbers = #tpu.dot_dimension_numbers<[2], [1], [1], [2], [0, 0, 0, 1, 1, 2], [0], [0]>} : vector<1x24x24xbf16>, vector<1x24x8xbf16>, vector<1x24x8xf32> -> vector<1x24x8xf32>
    "tpu.trace_stop"() : () -> ()
    %481 = vector.shape_cast %480 : vector<1x24x8xf32> to vector<24x8xf32>
    %482 = tpu.concatenate %373, %409, %445, %481 in 1 : vector<24x8xf32>, vector<24x8xf32>, vector<24x8xf32>, vector<24x8xf32> -> vector<24x32xf32>
    %c1_245 = arith.constant 1 : index
    %c0_246 = arith.constant 0 : index
    %c0_247 = arith.constant 0 : index
    %483 = vector.load %arg15[%c1_245, %c0_246, %c0_247] : memref<2x32x32xbf16, #tpu.memory_space<vmem>>, vector<1x32x32xbf16>
    %484 = vector.shape_cast %483 : vector<1x32x32xbf16> to vector<32x32xbf16>
    %485 = arith.truncf %482 : vector<24x32xf32> to vector<24x32xbf16>
    %cst_248 = arith.constant dense<0.000000e+00> : vector<24x32xf32>
    %486 = tpu.matmul %485, %484, %cst_248 {dimension_numbers = #tpu.dot_dimension_numbers<[1], [0], [0], [1], [0, 0, 1, 1], [], []>} : vector<24x32xbf16>, vector<32x32xbf16>, vector<24x32xf32> -> vector<24x32xf32>
    %487 = arith.addf %311, %486 : vector<24x32xf32>
    %c1_249 = arith.constant 1 : index
    %c0_250 = arith.constant 0 : index
    %c0_251 = arith.constant 0 : index
    %488 = vector.load %arg16[%c1_249, %c0_250, %c0_251] : memref<2x1x32xf32, #tpu.memory_space<vmem>>, vector<1x1x32xf32>
    %489 = vector.shape_cast %488 : vector<1x1x32xf32> to vector<1x32xf32>
    %490 = vector.broadcast %489 : vector<1x32xf32> to vector<24x32xf32>
    %491 = arith.addf %487, %490 : vector<24x32xf32>
    %c1_252 = arith.constant 1 : index
    %c0_253 = arith.constant 0 : index
    %c0_254 = arith.constant 0 : index
    %492 = vector.load %arg17[%c1_252, %c0_253, %c0_254] : memref<2x1x32xf32, #tpu.memory_space<vmem>>, vector<1x1x32xf32>
    %493 = vector.shape_cast %492 : vector<1x1x32xf32> to vector<1x32xf32>
    %c1_255 = arith.constant 1 : index
    %c0_256 = arith.constant 0 : index
    %c0_257 = arith.constant 0 : index
    %494 = vector.load %arg18[%c1_255, %c0_256, %c0_257] : memref<2x1x32xf32, #tpu.memory_space<vmem>>, vector<1x1x32xf32>
    %495 = vector.shape_cast %494 : vector<1x1x32xf32> to vector<1x32xf32>
    %cst_258 = arith.constant dense<0.000000e+00> : vector<24xf32>
    %496 = vector.multi_reduction <add>, %491, %cst_258 [1] : vector<24x32xf32> to vector<24xf32>
    %497 = vector.shape_cast %496 : vector<24xf32> to vector<24x1xf32>
    %cst_259 = arith.constant 3.200000e+01 : f32
    %498 = vector.broadcast %cst_259 : f32 to vector<24x1xf32>
    %499 = arith.divf %497, %498 : vector<24x1xf32>
    %500 = vector.broadcast %499 : vector<24x1xf32> to vector<24x32xf32>
    %501 = arith.subf %491, %500 : vector<24x32xf32>
    %502 = arith.mulf %501, %501 : vector<24x32xf32>
    %cst_260 = arith.constant dense<0.000000e+00> : vector<24xf32>
    %503 = vector.multi_reduction <add>, %502, %cst_260 [1] : vector<24x32xf32> to vector<24xf32>
    %504 = vector.shape_cast %503 : vector<24xf32> to vector<24x1xf32>
    %cst_261 = arith.constant 3.200000e+01 : f32
    %505 = vector.broadcast %cst_261 : f32 to vector<24x1xf32>
    %506 = arith.divf %504, %505 : vector<24x1xf32>
    %507 = vector.broadcast %499 : vector<24x1xf32> to vector<24x32xf32>
    %508 = arith.subf %491, %507 : vector<24x32xf32>
    %cst_262 = arith.constant 9.99999974E-6 : f32
    %509 = vector.broadcast %cst_262 : f32 to vector<24x1xf32>
    %510 = arith.addf %506, %509 : vector<24x1xf32>
    %511 = math.rsqrt %510 : vector<24x1xf32>
    %512 = vector.broadcast %511 : vector<24x1xf32> to vector<24x32xf32>
    %513 = arith.mulf %508, %512 : vector<24x32xf32>
    %514 = vector.broadcast %493 : vector<1x32xf32> to vector<24x32xf32>
    %515 = arith.mulf %513, %514 : vector<24x32xf32>
    %516 = vector.broadcast %495 : vector<1x32xf32> to vector<24x32xf32>
    %517 = arith.addf %515, %516 : vector<24x32xf32>
    %c1_263 = arith.constant 1 : index
    %c0_264 = arith.constant 0 : index
    %c0_265 = arith.constant 0 : index
    %518 = vector.load %arg19[%c1_263, %c0_264, %c0_265] : memref<2x32x64xbf16, #tpu.memory_space<vmem>>, vector<1x32x64xbf16>
    %519 = vector.shape_cast %518 : vector<1x32x64xbf16> to vector<32x64xbf16>
    %520 = arith.truncf %517 : vector<24x32xf32> to vector<24x32xbf16>
    %cst_266 = arith.constant dense<0.000000e+00> : vector<24x64xf32>
    %521 = tpu.matmul %520, %519, %cst_266 {dimension_numbers = #tpu.dot_dimension_numbers<[1], [0], [0], [1], [0, 0, 1, 1], [], []>} : vector<24x32xbf16>, vector<32x64xbf16>, vector<24x64xf32> -> vector<24x64xf32>
    %c1_267 = arith.constant 1 : index
    %c0_268 = arith.constant 0 : index
    %c0_269 = arith.constant 0 : index
    %522 = vector.load %arg20[%c1_267, %c0_268, %c0_269] : memref<2x1x64xf32, #tpu.memory_space<vmem>>, vector<1x1x64xf32>
    %523 = vector.shape_cast %522 : vector<1x1x64xf32> to vector<1x64xf32>
    %524 = vector.broadcast %523 : vector<1x64xf32> to vector<24x64xf32>
    %525 = arith.addf %521, %524 : vector<24x64xf32>
    %526 = arith.mulf %525, %525 : vector<24x64xf32>
    %527 = arith.mulf %525, %526 : vector<24x64xf32>
    %cst_270 = arith.constant 4.471500e-02 : f32
    %528 = vector.broadcast %cst_270 : f32 to vector<24x64xf32>
    %529 = arith.mulf %528, %527 : vector<24x64xf32>
    %530 = arith.addf %525, %529 : vector<24x64xf32>
    %cst_271 = arith.constant 0.797884583 : f32
    %531 = vector.broadcast %cst_271 : f32 to vector<24x64xf32>
    %532 = arith.mulf %531, %530 : vector<24x64xf32>
    %533 = math.tanh %532 : vector<24x64xf32>
    %cst_272 = arith.constant 1.000000e+00 : f32
    %534 = vector.broadcast %cst_272 : f32 to vector<24x64xf32>
    %535 = arith.addf %534, %533 : vector<24x64xf32>
    %cst_273 = arith.constant 5.000000e-01 : f32
    %536 = vector.broadcast %cst_273 : f32 to vector<24x64xf32>
    %537 = arith.mulf %536, %535 : vector<24x64xf32>
    %538 = arith.mulf %525, %537 : vector<24x64xf32>
    %c1_274 = arith.constant 1 : index
    %c0_275 = arith.constant 0 : index
    %c0_276 = arith.constant 0 : index
    %539 = vector.load %arg21[%c1_274, %c0_275, %c0_276] : memref<2x64x32xbf16, #tpu.memory_space<vmem>>, vector<1x64x32xbf16>
    %540 = vector.shape_cast %539 : vector<1x64x32xbf16> to vector<64x32xbf16>
    %541 = arith.truncf %538 : vector<24x64xf32> to vector<24x64xbf16>
    %cst_277 = arith.constant dense<0.000000e+00> : vector<24x32xf32>
    %542 = tpu.matmul %541, %540, %cst_277 {dimension_numbers = #tpu.dot_dimension_numbers<[1], [0], [0], [1], [0, 0, 1, 1], [], []>} : vector<24x64xbf16>, vector<64x32xbf16>, vector<24x32xf32> -> vector<24x32xf32>
    %543 = arith.addf %491, %542 : vector<24x32xf32>
    %c1_278 = arith.constant 1 : index
    %c0_279 = arith.constant 0 : index
    %c0_280 = arith.constant 0 : index
    %544 = vector.load %arg22[%c1_278, %c0_279, %c0_280] : memref<2x1x32xf32, #tpu.memory_space<vmem>>, vector<1x1x32xf32>
    %545 = vector.shape_cast %544 : vector<1x1x32xf32> to vector<1x32xf32>
    %546 = vector.broadcast %545 : vector<1x32xf32> to vector<24x32xf32>
    %547 = arith.addf %543, %546 : vector<24x32xf32>
    %548 = vector.shape_cast %547 : vector<24x32xf32> to vector<1x24x32xf32>
    %549 = vector.extract_strided_slice %548 {offsets = [0, 0, 0], sizes = [1, 1, 32], strides = [1, 1, 1]} : vector<1x24x32xf32> to vector<1x1x32xf32>
    %550 = vector.shape_cast %549 : vector<1x1x32xf32> to vector<1x32xf32>
    %c0_281 = arith.constant 0 : index
    %c0_282 = arith.constant 0 : index
    %551 = vector.load %arg23[%c0_281, %c0_282] : memref<1x32xf32, #tpu.memory_space<vmem>>, vector<1x32xf32>
    %c0_283 = arith.constant 0 : index
    %c0_284 = arith.constant 0 : index
    %552 = vector.load %arg24[%c0_283, %c0_284] : memref<1x32xf32, #tpu.memory_space<vmem>>, vector<1x32xf32>
    %cst_285 = arith.constant dense<0.000000e+00> : vector<1xf32>
    %553 = vector.multi_reduction <add>, %550, %cst_285 [1] : vector<1x32xf32> to vector<1xf32>
    %554 = vector.shape_cast %553 : vector<1xf32> to vector<1x1xf32>
    %cst_286 = arith.constant 3.200000e+01 : f32
    %555 = vector.broadcast %cst_286 : f32 to vector<1x1xf32>
    %556 = arith.divf %554, %555 : vector<1x1xf32>
    %557 = vector.broadcast %556 : vector<1x1xf32> to vector<1x32xf32>
    %558 = arith.subf %550, %557 : vector<1x32xf32>
    %559 = arith.mulf %558, %558 : vector<1x32xf32>
    %cst_287 = arith.constant dense<0.000000e+00> : vector<1xf32>
    %560 = vector.multi_reduction <add>, %559, %cst_287 [1] : vector<1x32xf32> to vector<1xf32>
    %561 = vector.shape_cast %560 : vector<1xf32> to vector<1x1xf32>
    %cst_288 = arith.constant 3.200000e+01 : f32
    %562 = vector.broadcast %cst_288 : f32 to vector<1x1xf32>
    %563 = arith.divf %561, %562 : vector<1x1xf32>
    %564 = vector.broadcast %556 : vector<1x1xf32> to vector<1x32xf32>
    %565 = arith.subf %550, %564 : vector<1x32xf32>
    %cst_289 = arith.constant 9.99999974E-6 : f32
    %566 = vector.broadcast %cst_289 : f32 to vector<1x1xf32>
    %567 = arith.addf %563, %566 : vector<1x1xf32>
    %568 = math.rsqrt %567 : vector<1x1xf32>
    %569 = vector.broadcast %568 : vector<1x1xf32> to vector<1x32xf32>
    %570 = arith.mulf %565, %569 : vector<1x32xf32>
    %571 = arith.mulf %570, %551 : vector<1x32xf32>
    %572 = arith.addf %571, %552 : vector<1x32xf32>
    %c0_290 = arith.constant 0 : index
    %c0_291 = arith.constant 0 : index
    %573 = vector.load %arg25[%c0_290, %c0_291] : memref<32x72xbf16, #tpu.memory_space<vmem>>, vector<32x72xbf16>
    %574 = arith.truncf %572 : vector<1x32xf32> to vector<1x32xbf16>
    %cst_292 = arith.constant dense<0.000000e+00> : vector<1x72xf32>
    %575 = tpu.matmul %574, %573, %cst_292 {dimension_numbers = #tpu.dot_dimension_numbers<[1], [0], [0], [1], [0, 0, 1, 1], [], []>} : vector<1x32xbf16>, vector<32x72xbf16>, vector<1x72xf32> -> vector<1x72xf32>
    %c0_293 = arith.constant 0 : index
    %c0_294 = arith.constant 0 : index
    %576 = vector.load %arg26[%c0_293, %c0_294] : memref<1x72xf32, #tpu.memory_space<vmem>>, vector<1x72xf32>
    %577 = arith.addf %575, %576 : vector<1x72xf32>
    %578 = arith.negf %577 : vector<1x72xf32>
    %579 = math.exp %578 : vector<1x72xf32>
    %cst_295 = arith.constant 1.000000e+00 : f32
    %580 = vector.broadcast %cst_295 : f32 to vector<1x72xf32>
    %581 = arith.addf %580, %579 : vector<1x72xf32>
    %582 = arith.divf %580, %581 : vector<1x72xf32>
    %c0_296 = arith.constant 0 : index
    %c0_297 = arith.constant 0 : index
    %583 = vector.load %arg27[%c0_296, %c0_297] : memref<1x72xf32, #tpu.memory_space<vmem>>, vector<1x72xf32>
    %584 = arith.mulf %582, %583 : vector<1x72xf32>
    %c0_298 = arith.constant 0 : index
    %c0_299 = arith.constant 0 : index
    %c0_300 = arith.constant 0 : index
    %585 = vector.load %arg28[%c0_298, %c0_299, %c0_300] : memref<1x1x72xf32, #tpu.memory_space<vmem>>, vector<1x1x72xf32>
    %586 = vector.shape_cast %585 : vector<1x1x72xf32> to vector<1x72xf32>
    %587 = vector.shape_cast %584 : vector<1x72xf32> to vector<1x1x72xf32>
    tpu.vector_store %arg28[%c0_298, %c0_299, %c0_300], %587 {strides = array<i32>} : memref<1x1x72xf32, #tpu.memory_space<vmem>>, vector<1x1x72xf32>,
    return
  }
  func.func @transform_0(%arg0: i32) -> (i32, i32, i32) {
    %c0_i32 = arith.constant 0 : i32
    %c0_i32_0 = arith.constant 0 : i32
    %c0_i32_1 = arith.constant 0 : i32
    return %arg0, %c0_i32, %c0_i32_0 : i32, i32, i32
  }
  func.func @transform_1(%arg0: i32) -> (i32, i32) {
    %c0_i32 = arith.constant 0 : i32
    %c0_i32_0 = arith.constant 0 : i32
    %c0_i32_1 = arith.constant 0 : i32
    return %c0_i32, %c0_i32_0 : i32, i32
  }
  func.func @transform_2(%arg0: i32) -> (i32, i32) {
    %c0_i32 = arith.constant 0 : i32
    %c0_i32_0 = arith.constant 0 : i32
    %c0_i32_1 = arith.constant 0 : i32
    return %c0_i32, %c0_i32_0 : i32, i32
  }
  func.func @transform_3(%arg0: i32) -> (i32, i32) {
    %c0_i32 = arith.constant 0 : i32
    %c0_i32_0 = arith.constant 0 : i32
    %c0_i32_1 = arith.constant 0 : i32
    return %c0_i32, %c0_i32_0 : i32, i32
  }
  func.func @transform_4(%arg0: i32) -> (i32, i32) {
    %c0_i32 = arith.constant 0 : i32
    %c0_i32_0 = arith.constant 0 : i32
    %c0_i32_1 = arith.constant 0 : i32
    return %c0_i32, %c0_i32_0 : i32, i32
  }
  func.func @transform_5(%arg0: i32) -> (i32, i32) {
    %c0_i32 = arith.constant 0 : i32
    %c0_i32_0 = arith.constant 0 : i32
    %c0_i32_1 = arith.constant 0 : i32
    return %c0_i32, %c0_i32_0 : i32, i32
  }
  func.func @transform_6(%arg0: i32) -> (i32, i32) {
    %c0_i32 = arith.constant 0 : i32
    %c0_i32_0 = arith.constant 0 : i32
    %c0_i32_1 = arith.constant 0 : i32
    return %c0_i32, %c0_i32_0 : i32, i32
  }
  func.func @transform_7(%arg0: i32) -> (i32, i32) {
    %c0_i32 = arith.constant 0 : i32
    %c0_i32_0 = arith.constant 0 : i32
    %c0_i32_1 = arith.constant 0 : i32
    return %c0_i32, %c0_i32_0 : i32, i32
  }
  func.func @transform_8(%arg0: i32) -> (i32, i32) {
    %c0_i32 = arith.constant 0 : i32
    %c0_i32_0 = arith.constant 0 : i32
    %c0_i32_1 = arith.constant 0 : i32
    return %c0_i32, %c0_i32_0 : i32, i32
  }
  func.func @transform_9(%arg0: i32) -> (i32, i32, i32) {
    %c0_i32 = arith.constant 0 : i32
    %c0_i32_0 = arith.constant 0 : i32
    %c0_i32_1 = arith.constant 0 : i32
    %c0_i32_2 = arith.constant 0 : i32
    return %c0_i32, %c0_i32_0, %c0_i32_1 : i32, i32, i32
  }
  func.func @transform_10(%arg0: i32) -> (i32, i32, i32) {
    %c0_i32 = arith.constant 0 : i32
    %c0_i32_0 = arith.constant 0 : i32
    %c0_i32_1 = arith.constant 0 : i32
    %c0_i32_2 = arith.constant 0 : i32
    return %c0_i32, %c0_i32_0, %c0_i32_1 : i32, i32, i32
  }
  func.func @transform_11(%arg0: i32) -> (i32, i32, i32, i32) {
    %c0_i32 = arith.constant 0 : i32
    %c0_i32_0 = arith.constant 0 : i32
    %c0_i32_1 = arith.constant 0 : i32
    %c0_i32_2 = arith.constant 0 : i32
    %c0_i32_3 = arith.constant 0 : i32
    return %c0_i32, %c0_i32_0, %c0_i32_1, %c0_i32_2 : i32, i32, i32, i32
  }
  func.func @transform_12(%arg0: i32) -> (i32, i32, i32, i32) {
    %c0_i32 = arith.constant 0 : i32
    %c0_i32_0 = arith.constant 0 : i32
    %c0_i32_1 = arith.constant 0 : i32
    %c0_i32_2 = arith.constant 0 : i32
    %c0_i32_3 = arith.constant 0 : i32
    return %c0_i32, %c0_i32_0, %c0_i32_1, %c0_i32_2 : i32, i32, i32, i32
  }
  func.func @transform_13(%arg0: i32) -> (i32, i32, i32, i32) {
    %c0_i32 = arith.constant 0 : i32
    %c0_i32_0 = arith.constant 0 : i32
    %c0_i32_1 = arith.constant 0 : i32
    %c0_i32_2 = arith.constant 0 : i32
    %c0_i32_3 = arith.constant 0 : i32
    return %c0_i32, %c0_i32_0, %c0_i32_1, %c0_i32_2 : i32, i32, i32, i32
  }
  func.func @transform_14(%arg0: i32) -> (i32, i32, i32) {
    %c0_i32 = arith.constant 0 : i32
    %c0_i32_0 = arith.constant 0 : i32
    %c0_i32_1 = arith.constant 0 : i32
    %c0_i32_2 = arith.constant 0 : i32
    return %c0_i32, %c0_i32_0, %c0_i32_1 : i32, i32, i32
  }
  func.func @transform_15(%arg0: i32) -> (i32, i32, i32) {
    %c0_i32 = arith.constant 0 : i32
    %c0_i32_0 = arith.constant 0 : i32
    %c0_i32_1 = arith.constant 0 : i32
    %c0_i32_2 = arith.constant 0 : i32
    return %c0_i32, %c0_i32_0, %c0_i32_1 : i32, i32, i32
  }
  func.func @transform_16(%arg0: i32) -> (i32, i32, i32) {
    %c0_i32 = arith.constant 0 : i32
    %c0_i32_0 = arith.constant 0 : i32
    %c0_i32_1 = arith.constant 0 : i32
    %c0_i32_2 = arith.constant 0 : i32
    return %c0_i32, %c0_i32_0, %c0_i32_1 : i32, i32, i32
  }
  func.func @transform_17(%arg0: i32) -> (i32, i32, i32) {
    %c0_i32 = arith.constant 0 : i32
    %c0_i32_0 = arith.constant 0 : i32
    %c0_i32_1 = arith.constant 0 : i32
    %c0_i32_2 = arith.constant 0 : i32
    return %c0_i32, %c0_i32_0, %c0_i32_1 : i32, i32, i32
  }
  func.func @transform_18(%arg0: i32) -> (i32, i32, i32) {
    %c0_i32 = arith.constant 0 : i32
    %c0_i32_0 = arith.constant 0 : i32
    %c0_i32_1 = arith.constant 0 : i32
    %c0_i32_2 = arith.constant 0 : i32
    return %c0_i32, %c0_i32_0, %c0_i32_1 : i32, i32, i32
  }
  func.func @transform_19(%arg0: i32) -> (i32, i32, i32) {
    %c0_i32 = arith.constant 0 : i32
    %c0_i32_0 = arith.constant 0 : i32
    %c0_i32_1 = arith.constant 0 : i32
    %c0_i32_2 = arith.constant 0 : i32
    return %c0_i32, %c0_i32_0, %c0_i32_1 : i32, i32, i32
  }
  func.func @transform_20(%arg0: i32) -> (i32, i32, i32) {
    %c0_i32 = arith.constant 0 : i32
    %c0_i32_0 = arith.constant 0 : i32
    %c0_i32_1 = arith.constant 0 : i32
    %c0_i32_2 = arith.constant 0 : i32
    return %c0_i32, %c0_i32_0, %c0_i32_1 : i32, i32, i32
  }
  func.func @transform_21(%arg0: i32) -> (i32, i32, i32) {
    %c0_i32 = arith.constant 0 : i32
    %c0_i32_0 = arith.constant 0 : i32
    %c0_i32_1 = arith.constant 0 : i32
    %c0_i32_2 = arith.constant 0 : i32
    return %c0_i32, %c0_i32_0, %c0_i32_1 : i32, i32, i32
  }
  func.func @transform_22(%arg0: i32) -> (i32, i32) {
    %c0_i32 = arith.constant 0 : i32
    %c0_i32_0 = arith.constant 0 : i32
    %c0_i32_1 = arith.constant 0 : i32
    return %c0_i32, %c0_i32_0 : i32, i32
  }
  func.func @transform_23(%arg0: i32) -> (i32, i32) {
    %c0_i32 = arith.constant 0 : i32
    %c0_i32_0 = arith.constant 0 : i32
    %c0_i32_1 = arith.constant 0 : i32
    return %c0_i32, %c0_i32_0 : i32, i32
  }
  func.func @transform_24(%arg0: i32) -> (i32, i32) {
    %c0_i32 = arith.constant 0 : i32
    %c0_i32_0 = arith.constant 0 : i32
    %c0_i32_1 = arith.constant 0 : i32
    return %c0_i32, %c0_i32_0 : i32, i32
  }
  func.func @transform_25(%arg0: i32) -> (i32, i32) {
    %c0_i32 = arith.constant 0 : i32
    %c0_i32_0 = arith.constant 0 : i32
    %c0_i32_1 = arith.constant 0 : i32
    return %c0_i32, %c0_i32_0 : i32, i32
  }
  func.func @transform_26(%arg0: i32) -> (i32, i32) {
    %c0_i32 = arith.constant 0 : i32
    %c0_i32_0 = arith.constant 0 : i32
    %c0_i32_1 = arith.constant 0 : i32
    return %c0_i32, %c0_i32_0 : i32, i32
  }
  func.func @transform_27(%arg0: i32) -> (i32, i32, i32) {
    %c0_i32 = arith.constant 0 : i32
    %c0_i32_0 = arith.constant 0 : i32
    %c0_i32_1 = arith.constant 0 : i32
    return %arg0, %c0_i32, %c0_i32_0 : i32, i32, i32
  }
}

</mosaic_0001>

<llo_original>
// kernel: tile.6
$region0: #{tile.6}
  #allocation0 [shape = 's32[1]{0}', space=sflag, size = 0x4, scoped, tag = 'scoped memory for tile.6']
  %s0 = inlined_call_operand.vmem [shape: f32[9], index: 0, kind: input, shape index: {}]
  %s1 = inlined_call_operand.vmem [shape: f32[8,9], index: 1, kind: output, shape index: {}]
  // Predicated region
  $region2: #{tile.6} parent=0 // pred_check
    _
  $region3: #{tile.6} parent=0 // pred_check_branch
    %3 = sbr.rel (0) target = $region5
  $region4: #{tile.6} parent=0 // pred_region
    _
  $region5: #{tile.6} parent=0 // pred_fallthru
    _
  %v4 = vld [vmem:[%s0] ss:$0 sm:$0xff]
  %5 = vst [vmem:[%s1] sm:$0xff] %v4

// kernel: tile.7
$region0: #{tile.7}
  %s0 = inlined_call_operand.vmem [shape: f32[8,9], index: 0, kind: input, shape index: {}]
  %s1 = inlined_call_operand.vmem [shape: f32[1,72], index: 1, kind: output, shape index: {}]
  $region1: #{tile.7} parent=0
    #allocation0 [shape = 'u8[4096]{0}', space=vmem, size = 0x1000, scoped, tag = 'scoped mem for output reshape']
    %v2 = vld [vmem:[%s0] sm:$0x1]
    %vm3 = vcmask 72704
    %4 = vst.msk [vmem:[#allocation0] sm:$0x1] %vm3, %v2
    %s5 = scalar_lea.vmem %s0, 7
    %v6 = vld [vmem:[%s5] sm:$0x1]
    %7 = vrot.lane.b32.xlu0 %v6, 63
    %v8 = vpop.permute.xlu0 %7
    %vm9 = vcmask 589304
    %10 = vst.msk [vmem:[#allocation0] sm:$0x1] %vm9, %v8
    %s11 = scalar_lea.vmem %s0, 6
    %v12 = vld [vmem:[%s11] sm:$0x1]
    %13 = vrot.lane.b32.xlu0 %v12, 54
    %v14 = vpop.permute.xlu0 %13
    %vm15 = vcmask 515504
    %16 = vst.msk [vmem:[#allocation0] sm:$0x1] %vm15, %v14
    %s17 = scalar_lea.vmem %s0, 5
    %v18 = vld [vmem:[%s17] sm:$0x1]
    %19 = vrot.lane.b32.xlu0 %v18, 45
    %v20 = vpop.permute.xlu0 %19
    %vm21 = vcmask 441704
    %22 = vst.msk [vmem:[#allocation0] sm:$0x1] %vm21, %v20
    %s23 = scalar_lea.vmem %s0, 4
    %v24 = vld [vmem:[%s23] sm:$0x1]
    %25 = vrot.lane.b32.xlu0 %v24, 36
    %v26 = vpop.permute.xlu0 %25
    %vm27 = vcmask 367904
    %28 = vst.msk [vmem:[#allocation0] sm:$0x1] %vm27, %v26
    %s29 = scalar_lea.vmem %s0, 3
    %v30 = vld [vmem:[%s29] sm:$0x1]
    %31 = vrot.lane.b32.xlu0 %v30, 27
    %v32 = vpop.permute.xlu0 %31
    %vm33 = vcmask 294104
    %34 = vst.msk [vmem:[#allocation0] sm:$0x1] %vm33, %v32
    %s35 = scalar_lea.vmem %s0, 2
    %v36 = vld [vmem:[%s35] sm:$0x1]
    %37 = vrot.lane.b32.xlu0 %v36, 18
    %v38 = vpop.permute.xlu0 %37
    %vm39 = vcmask 220304
    %40 = vst.msk [vmem:[#allocation0] sm:$0x1] %vm39, %v38
    %s41 = scalar_lea.vmem %s0, 1
    %v42 = vld [vmem:[%s41] sm:$0x1]
    %43 = vrot.lane.b32.xlu0 %v42, 9
    %v44 = vpop.permute.xlu0 %43
    %vm45 = vcmask 146504
    %46 = vst.msk [vmem:[#allocation0] sm:$0x1] %vm45, %v44
    %s48 = sshll.u32 1, 1
    %s49 = ssub.s32 %s48, 1
    %v51 = vld [vmem:[#allocation0] sm:%s49]
    %s52 = sshll.u32 1, 1
    %s53 = ssub.s32 %s52, 1
    %54 = vst [vmem:[%s1] sm:%s53] %v51

// kernel: _lambda_.1
$region0: #{_lambda_.1}
  #allocation0 [shape = 'u32[]', space=smem, size = 0x4, offset = 0x4, fixed_abs, tag = 'smem constant byte address 0x4 - core index']
  #allocation1 [shape = 'u32[144,128]{1,0:T(1,128)}', space=vmem, size = 0x12000, scoped, tag = 'internal scratch']
  %s0 = inlined_call_operand.vmem [shape: f32[2,24,192], index: 0, kind: input, shape index: {}]
  %s1 = inlined_call_operand.vmem [shape: f32[1,192], index: 1, kind: input, shape index: {}]
  %s2 = inlined_call_operand.vmem [shape: f32[1,192], index: 2, kind: input, shape index: {}]
  %s3 = inlined_call_operand.vmem [shape: bf16[192,32], index: 3, kind: input, shape index: {}]
  %s4 = inlined_call_operand.vmem [shape: f32[1,32], index: 4, kind: input, shape index: {}, may-alias: {4,6,23}]
  %s5 = inlined_call_operand.vmem [shape: f32[1,32], index: 5, kind: input, shape index: {}, may-alias: {5,22}]
  %s6 = inlined_call_operand.vmem [shape: f32[1,32], index: 6, kind: input, shape index: {}, may-alias: {4,6,23}]
  %s7 = inlined_call_operand.vmem [shape: f32[1,32], index: 7, kind: input, shape index: {}]
  %s8 = inlined_call_operand.vmem [shape: f32[24,32], index: 8, kind: input, shape index: {}]
  %s9 = inlined_call_operand.vmem [shape: f32[2,1,32], index: 9, kind: input, shape index: {}, may-alias: {9,16}]
  %s10 = inlined_call_operand.vmem [shape: f32[2,1,32], index: 10, kind: input, shape index: {}, may-alias: {10,15,17,21}]
  %s11 = inlined_call_operand.vmem [shape: bf16[2,4,32,8], index: 11, kind: input, shape index: {}]
  %s12 = inlined_call_operand.vmem [shape: bf16[2,4,32,8], index: 12, kind: input, shape index: {}]
  %s13 = inlined_call_operand.vmem [shape: bf16[2,4,32,8], index: 13, kind: input, shape index: {}]
  %s14 = inlined_call_operand.vmem [shape: bf16[2,32,32], index: 14, kind: input, shape index: {}]
  %s15 = inlined_call_operand.vmem [shape: f32[2,1,32], index: 15, kind: input, shape index: {}, may-alias: {10,15,17,21}]
  %s16 = inlined_call_operand.vmem [shape: f32[2,1,32], index: 16, kind: input, shape index: {}, may-alias: {9,16}]
  %s17 = inlined_call_operand.vmem [shape: f32[2,1,32], index: 17, kind: input, shape index: {}, may-alias: {10,15,17,21}]
  %s18 = inlined_call_operand.vmem [shape: bf16[2,32,64], index: 18, kind: input, shape index: {}]
  %s19 = inlined_call_operand.vmem [shape: f32[2,1,64], index: 19, kind: input, shape index: {}]
  %s20 = inlined_call_operand.vmem [shape: bf16[2,64,32], index: 20, kind: input, shape index: {}]
  %s21 = inlined_call_operand.vmem [shape: f32[2,1,32], index: 21, kind: input, shape index: {}, may-alias: {10,15,17,21}]
  %s22 = inlined_call_operand.vmem [shape: f32[1,32], index: 22, kind: input, shape index: {}, may-alias: {5,22}]
  %s23 = inlined_call_operand.vmem [shape: f32[1,32], index: 23, kind: input, shape index: {}, may-alias: {4,6,23}]
  %s24 = inlined_call_operand.vmem [shape: bf16[32,72], index: 24, kind: input, shape index: {}]
  %s25 = inlined_call_operand.vmem [shape: f32[1,72], index: 25, kind: input, shape index: {}]
  %s26 = inlined_call_operand.vmem [shape: f32[1,72], index: 26, kind: input, shape index: {}]
  %s27 = inlined_call_operand.vmem [shape: f32[2,1,72], index: 27, kind: output, shape index: {}]
  %s28 = sld [smem:[#allocation0]]
  $region141: #{_lambda_.1} parent=0
    _
  %s30 = ssub.s32 1, %s28
  %s31 = scalar_select 0, %s30, %s28
  loop: start=0, step=1, limit=4
  $region2: #{_lambda_.1} parent=0 // loop_pre_header
    _
  $region3: #{_lambda_.1} parent=0 // loop_header
    %s33 = sphi 0, %s37
    %p34 = scmp.ge.s32.totalorder %s33, 4
    %s43 = sphi 0, %s45
    %s46 = sphi 0, %s43
    %s47 = sphi 0, %s46
    %s63 = sphi 0, %s47
    %s67 = sphi 0, %s67
    %s69 = sphi 0, %s67
    %s70 = sphi 0, %s69
    %s84 = sphi 0, %s70
    %s88 = sphi 0, %s88
    %s90 = sphi 0, %s88
    %s91 = sphi 0, %s90
    %s105 = sphi 0, %s91
    %s109 = sphi 0, %s109
    %s111 = sphi 0, %s109
    %s112 = sphi 0, %s111
    %s126 = sphi 0, %s112
    %s130 = sphi 0, %s130
    %s132 = sphi 0, %s130
    %s133 = sphi 0, %s132
    %s147 = sphi 0, %s133
    %s151 = sphi 0, %s151
    %s153 = sphi 0, %s151
    %s154 = sphi 0, %s153
    %s168 = sphi 0, %s154
    %s172 = sphi 0, %s172
    %s174 = sphi 0, %s172
    %s175 = sphi 0, %s174
    %s189 = sphi 0, %s175
    %s193 = sphi 0, %s193
    %s195 = sphi 0, %s193
    %s196 = sphi 0, %s195
    %s210 = sphi 0, %s196
    %s214 = sphi 0, %s214
    %s216 = sphi 0, %s214
    %s217 = sphi 0, %s216
    %s231 = sphi 0, %s217
    %s235 = sphi 0, %s235
    %s237 = sphi 0, %s235
    %s238 = sphi 0, %s237
    %s252 = sphi 0, %s238
    %s256 = sphi 0, %s256
    %s258 = sphi 0, %s256
    %s259 = sphi 0, %s258
    %s273 = sphi 0, %s259
    %s277 = sphi 0, %s277
    %s279 = sphi 0, %s277
    %s280 = sphi 0, %s279
    %s294 = sphi 0, %s280
    %s298 = sphi 0, %s298
    %s300 = sphi 0, %s298
    %s301 = sphi 0, %s300
    %s315 = sphi 0, %s301
    %s319 = sphi 0, %s319
    %s321 = sphi 0, %s319
    %s322 = sphi 0, %s321
    %s336 = sphi 0, %s322
    %s340 = sphi 0, %s340
    %s342 = sphi 0, %s340
    %s343 = sphi 0, %s342
    %s357 = sphi 0, %s343
    %s361 = sphi 0, %s361
    %s363 = sphi 0, %s361
    %s364 = sphi 0, %s363
    %s378 = sphi 0, %s364
    %s382 = sphi 0, %s382
    %s384 = sphi 0, %s382
    %s385 = sphi 0, %s384
    %s399 = sphi 0, %s385
    %s403 = sphi 0, %s403
    %s405 = sphi 0, %s403
    %s406 = sphi 0, %s405
    %s420 = sphi 0, %s406
    %s424 = sphi 0, %s424
    %s426 = sphi 0, %s424
    %s427 = sphi 0, %s426
    %s441 = sphi 0, %s427
    %s445 = sphi 0, %s445
    %s447 = sphi 0, %s445
    %s448 = sphi 0, %s447
    %s462 = sphi 0, %s448
    %s466 = sphi 0, %s466
    %s468 = sphi 0, %s466
    %s469 = sphi 0, %s468
    %s483 = sphi 0, %s469
    %s487 = sphi 0, %s487
    %s489 = sphi 0, %s487
    %s490 = sphi 0, %s489
    %s504 = sphi 0, %s490
    %s508 = sphi 0, %s508
    %s510 = sphi 0, %s508
    %s511 = sphi 0, %s510
    %s525 = sphi 0, %s511
    %s529 = sphi 0, %s529
    %s531 = sphi 0, %s529
    %s532 = sphi 0, %s531
    %s546 = sphi 0, %s532
    %s550 = sphi 0, %s550
    %s552 = sphi 0, %s550
    %s553 = sphi 0, %s552
    %s567 = sphi 0, %s553
    %s571 = sphi 0, %s571
    %s573 = sphi 0, %s571
    %s574 = sphi 0, %s573
    %s588 = sphi 0, %s574
    %s592 = sphi 0, %s592
    %s594 = sphi 0, %s592
    %s595 = sphi 0, %s594
    %s609 = sphi 0, %s595
    %s615 = sphi 0, %s617
    %s618 = sphi 0, %s615
    %s619 = sphi 0, %s618
    %s635 = sphi 0, %s619
  $region4: #{_lambda_.1} parent=0 // loop_header_branch
    %36 = sbr.rel (%p34) target = $region8
  $region5: #{_lambda_.1} parent=0 // loop_body
    %s38 = ssub.s32 %s33, 1
    %s39 = ssub.s32 %s33, 2
    %s40 = sadd.s32 %s33, 1
    %s41 = ssub.s32 %s33, %s40
    %p42 = scmp.eq.s32.totalorder %s41, 0
    %s44 = sadd.s32 %s43, 1
    %s45 = scalar_select %p42, %s43, %s44
    %p48 = pneg %p42
    %p49 = scmp.eq.s32.totalorder %s33, 1
    %p50 = por %p48, %p49
    %p51 = scmp.ne.s32.totalorder %s43, %s46
    %p52 = scmp.eq.s32.totalorder %s33, 0
    %p53 = por %p51, %p52
    %p54 = scmp.ne.s32.totalorder %s43, %s46
    %p55 = scmp.eq.s32.totalorder %s38, 1
    %p56 = por %p54, %p55
    %p57 = scmp.ne.s32.totalorder %s46, %s47
    %p58 = scmp.eq.s32.totalorder %s38, 0
    %p59 = por %p57, %p58
    %p60 = scmp.ne.s32.totalorder %s46, %s47
    %p61 = scmp.eq.s32.totalorder %s39, 1
    %p62 = por %p60, %p61
    %p64 = scmp.ne.s32.totalorder %s47, %s63
    %p65 = scmp.eq.s32.totalorder %s39, 0
    %p66 = por %p64, %p65
    %s68 = sadd.s32 %s67, 1
    %p71 = scmp.eq.s32.totalorder %s33, 1
    %p72 = scmp.ne.s32.totalorder %s67, %s69
    %p73 = scmp.eq.s32.totalorder %s33, 0
    %p74 = por %p72, %p73
    %p75 = scmp.ne.s32.totalorder %s67, %s69
    %p76 = scmp.eq.s32.totalorder %s38, 1
    %p77 = por %p75, %p76
    %p78 = scmp.ne.s32.totalorder %s69, %s70
    %p79 = scmp.eq.s32.totalorder %s38, 0
    %p80 = por %p78, %p79
    %p81 = scmp.ne.s32.totalorder %s69, %s70
    %p82 = scmp.eq.s32.totalorder %s39, 1
    %p83 = por %p81, %p82
    %p85 = scmp.ne.s32.totalorder %s70, %s84
    %p86 = scmp.eq.s32.totalorder %s39, 0
    %p87 = por %p85, %p86
    %s89 = sadd.s32 %s88, 1
    %p92 = scmp.eq.s32.totalorder %s33, 1
    %p93 = scmp.ne.s32.totalorder %s88, %s90
    %p94 = scmp.eq.s32.totalorder %s33, 0
    %p95 = por %p93, %p94
    %p96 = scmp.ne.s32.totalorder %s88, %s90
    %p97 = scmp.eq.s32.totalorder %s38, 1
    %p98 = por %p96, %p97
    %p99 = scmp.ne.s32.totalorder %s90, %s91
    %p100 = scmp.eq.s32.totalorder %s38, 0
    %p101 = por %p99, %p100
    %p102 = scmp.ne.s32.totalorder %s90, %s91
    %p103 = scmp.eq.s32.totalorder %s39, 1
    %p104 = por %p102, %p103
    %p106 = scmp.ne.s32.totalorder %s91, %s105
    %p107 = scmp.eq.s32.totalorder %s39, 0
    %p108 = por %p106, %p107
    %s110 = sadd.s32 %s109, 1
    %p113 = scmp.eq.s32.totalorder %s33, 1
    %p114 = scmp.ne.s32.totalorder %s109, %s111
    %p115 = scmp.eq.s32.totalorder %s33, 0
    %p116 = por %p114, %p115
    %p117 = scmp.ne.s32.totalorder %s109, %s111
    %p118 = scmp.eq.s32.totalorder %s38, 1
    %p119 = por %p117, %p118
    %p120 = scmp.ne.s32.totalorder %s111, %s112
    %p121 = scmp.eq.s32.totalorder %s38, 0
    %p122 = por %p120, %p121
    %p123 = scmp.ne.s32.totalorder %s111, %s112
    %p124 = scmp.eq.s32.totalorder %s39, 1
    %p125 = por %p123, %p124
    %p127 = scmp.ne.s32.totalorder %s112, %s126
    %p128 = scmp.eq.s32.totalorder %s39, 0
    %p129 = por %p127, %p128
    %s131 = sadd.s32 %s130, 1
    %p134 = scmp.eq.s32.totalorder %s33, 1
    %p135 = scmp.ne.s32.totalorder %s130, %s132
    %p136 = scmp.eq.s32.totalorder %s33, 0
    %p137 = por %p135, %p136
    %p138 = scmp.ne.s32.totalorder %s130, %s132
    %p139 = scmp.eq.s32.totalorder %s38, 1
    %p140 = por %p138, %p139
    %p141 = scmp.ne.s32.totalorder %s132, %s133
    %p142 = scmp.eq.s32.totalorder %s38, 0
    %p143 = por %p141, %p142
    %p144 = scmp.ne.s32.totalorder %s132, %s133
    %p145 = scmp.eq.s32.totalorder %s39, 1
    %p146 = por %p144, %p145
    %p148 = scmp.ne.s32.totalorder %s133, %s147
    %p149 = scmp.eq.s32.totalorder %s39, 0
    %p150 = por %p148, %p149
    %s152 = sadd.s32 %s151, 1
    %p155 = scmp.eq.s32.totalorder %s33, 1
    %p156 = scmp.ne.s32.totalorder %s151, %s153
    %p157 = scmp.eq.s32.totalorder %s33, 0
    %p158 = por %p156, %p157
    %p159 = scmp.ne.s32.totalorder %s151, %s153
    %p160 = scmp.eq.s32.totalorder %s38, 1
    %p161 = por %p159, %p160
    %p162 = scmp.ne.s32.totalorder %s153, %s154
    %p163 = scmp.eq.s32.totalorder %s38, 0
    %p164 = por %p162, %p163
    %p165 = scmp.ne.s32.totalorder %s153, %s154
    %p166 = scmp.eq.s32.totalorder %s39, 1
    %p167 = por %p165, %p166
    %p169 = scmp.ne.s32.totalorder %s154, %s168
    %p170 = scmp.eq.s32.totalorder %s39, 0
    %p171 = por %p169, %p170
    %s173 = sadd.s32 %s172, 1
    %p176 = scmp.eq.s32.totalorder %s33, 1
    %p177 = scmp.ne.s32.totalorder %s172, %s174
    %p178 = scmp.eq.s32.totalorder %s33, 0
    %p179 = por %p177, %p178
    %p180 = scmp.ne.s32.totalorder %s172, %s174
    %p181 = scmp.eq.s32.totalorder %s38, 1
    %p182 = por %p180, %p181
    %p183 = scmp.ne.s32.totalorder %s174, %s175
    %p184 = scmp.eq.s32.totalorder %s38, 0
    %p185 = por %p183, %p184
    %p186 = scmp.ne.s32.totalorder %s174, %s175
    %p187 = scmp.eq.s32.totalorder %s39, 1
    %p188 = por %p186, %p187
    %p190 = scmp.ne.s32.totalorder %s175, %s189
    %p191 = scmp.eq.s32.totalorder %s39, 0
    %p192 = por %p190, %p191
    %s194 = sadd.s32 %s193, 1
    %p197 = scmp.eq.s32.totalorder %s33, 1
    %p198 = scmp.ne.s32.totalorder %s193, %s195
    %p199 = scmp.eq.s32.totalorder %s33, 0
    %p200 = por %p198, %p199
    %p201 = scmp.ne.s32.totalorder %s193, %s195
    %p202 = scmp.eq.s32.totalorder %s38, 1
    %p203 = por %p201, %p202
    %p204 = scmp.ne.s32.totalorder %s195, %s196
    %p205 = scmp.eq.s32.totalorder %s38, 0
    %p206 = por %p204, %p205
    %p207 = scmp.ne.s32.totalorder %s195, %s196
    %p208 = scmp.eq.s32.totalorder %s39, 1
    %p209 = por %p207, %p208
    %p211 = scmp.ne.s32.totalorder %s196, %s210
    %p212 = scmp.eq.s32.totalorder %s39, 0
    %p213 = por %p211, %p212
    %s215 = sadd.s32 %s214, 1
    %p218 = scmp.eq.s32.totalorder %s33, 1
    %p219 = scmp.ne.s32.totalorder %s214, %s216
    %p220 = scmp.eq.s32.totalorder %s33, 0
    %p221 = por %p219, %p220
    %p222 = scmp.ne.s32.totalorder %s214, %s216
    %p223 = scmp.eq.s32.totalorder %s38, 1
    %p224 = por %p222, %p223
    %p225 = scmp.ne.s32.totalorder %s216, %s217
    %p226 = scmp.eq.s32.totalorder %s38, 0
    %p227 = por %p225, %p226
    %p228 = scmp.ne.s32.totalorder %s216, %s217
    %p229 = scmp.eq.s32.totalorder %s39, 1
    %p230 = por %p228, %p229
    %p232 = scmp.ne.s32.totalorder %s217, %s231
    %p233 = scmp.eq.s32.totalorder %s39, 0
    %p234 = por %p232, %p233
    %s236 = sadd.s32 %s235, 1
    %p239 = scmp.eq.s32.totalorder %s33, 1
    %p240 = scmp.ne.s32.totalorder %s235, %s237
    %p241 = scmp.eq.s32.totalorder %s33, 0
    %p242 = por %p240, %p241
    %p243 = scmp.ne.s32.totalorder %s235, %s237
    %p244 = scmp.eq.s32.totalorder %s38, 1
    %p245 = por %p243, %p244
    %p246 = scmp.ne.s32.totalorder %s237, %s238
    %p247 = scmp.eq.s32.totalorder %s38, 0
    %p248 = por %p246, %p247
    %p249 = scmp.ne.s32.totalorder %s237, %s238
    %p250 = scmp.eq.s32.totalorder %s39, 1
    %p251 = por %p249, %p250
    %p253 = scmp.ne.s32.totalorder %s238, %s252
    %p254 = scmp.eq.s32.totalorder %s39, 0
    %p255 = por %p253, %p254
    %s257 = sadd.s32 %s256, 1
    %p260 = scmp.eq.s32.totalorder %s33, 1
    %p261 = scmp.ne.s32.totalorder %s256, %s258
    %p262 = scmp.eq.s32.totalorder %s33, 0
    %p263 = por %p261, %p262
    %p264 = scmp.ne.s32.totalorder %s256, %s258
    %p265 = scmp.eq.s32.totalorder %s38, 1
    %p266 = por %p264, %p265
    %p267 = scmp.ne.s32.totalorder %s258, %s259
    %p268 = scmp.eq.s32.totalorder %s38, 0
    %p269 = por %p267, %p268
    %p270 = scmp.ne.s32.totalorder %s258, %s259
    %p271 = scmp.eq.s32.totalorder %s39, 1
    %p272 = por %p270, %p271
    %p274 = scmp.ne.s32.totalorder %s259, %s273
    %p275 = scmp.eq.s32.totalorder %s39, 0
    %p276 = por %p274, %p275
    %s278 = sadd.s32 %s277, 1
    %p281 = scmp.eq.s32.totalorder %s33, 1
    %p282 = scmp.ne.s32.totalorder %s277, %s279
    %p283 = scmp.eq.s32.totalorder %s33, 0
    %p284 = por %p282, %p283
    %p285 = scmp.ne.s32.totalorder %s277, %s279
    %p286 = scmp.eq.s32.totalorder %s38, 1
    %p287 = por %p285, %p286
    %p288 = scmp.ne.s32.totalorder %s279, %s280
    %p289 = scmp.eq.s32.totalorder %s38, 0
    %p290 = por %p288, %p289
    %p291 = scmp.ne.s32.totalorder %s279, %s280
    %p292 = scmp.eq.s32.totalorder %s39, 1
    %p293 = por %p291, %p292
    %p295 = scmp.ne.s32.totalorder %s280, %s294
    %p296 = scmp.eq.s32.totalorder %s39, 0
    %p297 = por %p295, %p296
    %s299 = sadd.s32 %s298, 1
    %p302 = scmp.eq.s32.totalorder %s33, 1
    %p303 = scmp.ne.s32.totalorder %s298, %s300
    %p304 = scmp.eq.s32.totalorder %s33, 0
    %p305 = por %p303, %p304
    %p306 = scmp.ne.s32.totalorder %s298, %s300
    %p307 = scmp.eq.s32.totalorder %s38, 1
    %p308 = por %p306, %p307
    %p309 = scmp.ne.s32.totalorder %s300, %s301
    %p310 = scmp.eq.s32.totalorder %s38, 0
    %p311 = por %p309, %p310
    %p312 = scmp.ne.s32.totalorder %s300, %s301
    %p313 = scmp.eq.s32.totalorder %s39, 1
    %p314 = por %p312, %p313
    %p316 = scmp.ne.s32.totalorder %s301, %s315
    %p317 = scmp.eq.s32.totalorder %s39, 0
    %p318 = por %p316, %p317
    %s320 = sadd.s32 %s319, 1
    %p323 = scmp.eq.s32.totalorder %s33, 1
    %p324 = scmp.ne.s32.totalorder %s319, %s321
    %p325 = scmp.eq.s32.totalorder %s33, 0
    %p326 = por %p324, %p325
    %p327 = scmp.ne.s32.totalorder %s319, %s321
    %p328 = scmp.eq.s32.totalorder %s38, 1
    %p329 = por %p327, %p328
    %p330 = scmp.ne.s32.totalorder %s321, %s322
    %p331 = scmp.eq.s32.totalorder %s38, 0
    %p332 = por %p330, %p331
    %p333 = scmp.ne.s32.totalorder %s321, %s322
    %p334 = scmp.eq.s32.totalorder %s39, 1
    %p335 = por %p333, %p334
    %p337 = scmp.ne.s32.totalorder %s322, %s336
    %p338 = scmp.eq.s32.totalorder %s39, 0
    %p339 = por %p337, %p338
    %s341 = sadd.s32 %s340, 1
    %p344 = scmp.eq.s32.totalorder %s33, 1
    %p345 = scmp.ne.s32.totalorder %s340, %s342
    %p346 = scmp.eq.s32.totalorder %s33, 0
    %p347 = por %p345, %p346
    %p348 = scmp.ne.s32.totalorder %s340, %s342
    %p349 = scmp.eq.s32.totalorder %s38, 1
    %p350 = por %p348, %p349
    %p351 = scmp.ne.s32.totalorder %s342, %s343
    %p352 = scmp.eq.s32.totalorder %s38, 0
    %p353 = por %p351, %p352
    %p354 = scmp.ne.s32.totalorder %s342, %s343
    %p355 = scmp.eq.s32.totalorder %s39, 1
    %p356 = por %p354, %p355
    %p358 = scmp.ne.s32.totalorder %s343, %s357
    %p359 = scmp.eq.s32.totalorder %s39, 0
    %p360 = por %p358, %p359
    %s362 = sadd.s32 %s361, 1
    %p365 = scmp.eq.s32.totalorder %s33, 1
    %p366 = scmp.ne.s32.totalorder %s361, %s363
    %p367 = scmp.eq.s32.totalorder %s33, 0
    %p368 = por %p366, %p367
    %p369 = scmp.ne.s32.totalorder %s361, %s363
    %p370 = scmp.eq.s32.totalorder %s38, 1
    %p371 = por %p369, %p370
    %p372 = scmp.ne.s32.totalorder %s363, %s364
    %p373 = scmp.eq.s32.totalorder %s38, 0
    %p374 = por %p372, %p373
    %p375 = scmp.ne.s32.totalorder %s363, %s364
    %p376 = scmp.eq.s32.totalorder %s39, 1
    %p377 = por %p375, %p376
    %p379 = scmp.ne.s32.totalorder %s364, %s378
    %p380 = scmp.eq.s32.totalorder %s39, 0
    %p381 = por %p379, %p380
    %s383 = sadd.s32 %s382, 1
    %p386 = scmp.eq.s32.totalorder %s33, 1
    %p387 = scmp.ne.s32.totalorder %s382, %s384
    %p388 = scmp.eq.s32.totalorder %s33, 0
    %p389 = por %p387, %p388
    %p390 = scmp.ne.s32.totalorder %s382, %s384
    %p391 = scmp.eq.s32.totalorder %s38, 1
    %p392 = por %p390, %p391
    %p393 = scmp.ne.s32.totalorder %s384, %s385
    %p394 = scmp.eq.s32.totalorder %s38, 0
    %p395 = por %p393, %p394
    %p396 = scmp.ne.s32.totalorder %s384, %s385
    %p397 = scmp.eq.s32.totalorder %s39, 1
    %p398 = por %p396, %p397
    %p400 = scmp.ne.s32.totalorder %s385, %s399
    %p401 = scmp.eq.s32.totalorder %s39, 0
    %p402 = por %p400, %p401
    %s404 = sadd.s32 %s403, 1
    %p407 = scmp.eq.s32.totalorder %s33, 1
    %p408 = scmp.ne.s32.totalorder %s403, %s405
    %p409 = scmp.eq.s32.totalorder %s33, 0
    %p410 = por %p408, %p409
    %p411 = scmp.ne.s32.totalorder %s403, %s405
    %p412 = scmp.eq.s32.totalorder %s38, 1
    %p413 = por %p411, %p412
    %p414 = scmp.ne.s32.totalorder %s405, %s406
    %p415 = scmp.eq.s32.totalorder %s38, 0
    %p416 = por %p414, %p415
    %p417 = scmp.ne.s32.totalorder %s405, %s406
    %p418 = scmp.eq.s32.totalorder %s39, 1
    %p419 = por %p417, %p418
    %p421 = scmp.ne.s32.totalorder %s406, %s420
    %p422 = scmp.eq.s32.totalorder %s39, 0
    %p423 = por %p421, %p422
    %s425 = sadd.s32 %s424, 1
    %p428 = scmp.eq.s32.totalorder %s33, 1
    %p429 = scmp.ne.s32.totalorder %s424, %s426
    %p430 = scmp.eq.s32.totalorder %s33, 0
    %p431 = por %p429, %p430
    %p432 = scmp.ne.s32.totalorder %s424, %s426
    %p433 = scmp.eq.s32.totalorder %s38, 1
    %p434 = por %p432, %p433
    %p435 = scmp.ne.s32.totalorder %s426, %s427
    %p436 = scmp.eq.s32.totalorder %s38, 0
    %p437 = por %p435, %p436
    %p438 = scmp.ne.s32.totalorder %s426, %s427
    %p439 = scmp.eq.s32.totalorder %s39, 1
    %p440 = por %p438, %p439
    %p442 = scmp.ne.s32.totalorder %s427, %s441
    %p443 = scmp.eq.s32.totalorder %s39, 0
    %p444 = por %p442, %p443
    %s446 = sadd.s32 %s445, 1
    %p449 = scmp.eq.s32.totalorder %s33, 1
    %p450 = scmp.ne.s32.totalorder %s445, %s447
    %p451 = scmp.eq.s32.totalorder %s33, 0
    %p452 = por %p450, %p451
    %p453 = scmp.ne.s32.totalorder %s445, %s447
    %p454 = scmp.eq.s32.totalorder %s38, 1
    %p455 = por %p453, %p454
    %p456 = scmp.ne.s32.totalorder %s447, %s448
    %p457 = scmp.eq.s32.totalorder %s38, 0
    %p458 = por %p456, %p457
    %p459 = scmp.ne.s32.totalorder %s447, %s448
    %p460 = scmp.eq.s32.totalorder %s39, 1
    %p461 = por %p459, %p460
    %p463 = scmp.ne.s32.totalorder %s448, %s462
    %p464 = scmp.eq.s32.totalorder %s39, 0
    %p465 = por %p463, %p464
    %s467 = sadd.s32 %s466, 1
    %p470 = scmp.eq.s32.totalorder %s33, 1
    %p471 = scmp.ne.s32.totalorder %s466, %s468
    %p472 = scmp.eq.s32.totalorder %s33, 0
    %p473 = por %p471, %p472
    %p474 = scmp.ne.s32.totalorder %s466, %s468
    %p475 = scmp.eq.s32.totalorder %s38, 1
    %p476 = por %p474, %p475
    %p477 = scmp.ne.s32.totalorder %s468, %s469
    %p478 = scmp.eq.s32.totalorder %s38, 0
    %p479 = por %p477, %p478
    %p480 = scmp.ne.s32.totalorder %s468, %s469
    %p481 = scmp.eq.s32.totalorder %s39, 1
    %p482 = por %p480, %p481
    %p484 = scmp.ne.s32.totalorder %s469, %s483
    %p485 = scmp.eq.s32.totalorder %s39, 0
    %p486 = por %p484, %p485
    %s488 = sadd.s32 %s487, 1
    %p491 = scmp.eq.s32.totalorder %s33, 1
    %p492 = scmp.ne.s32.totalorder %s487, %s489
    %p493 = scmp.eq.s32.totalorder %s33, 0
    %p494 = por %p492, %p493
    %p495 = scmp.ne.s32.totalorder %s487, %s489
    %p496 = scmp.eq.s32.totalorder %s38, 1
    %p497 = por %p495, %p496
    %p498 = scmp.ne.s32.totalorder %s489, %s490
    %p499 = scmp.eq.s32.totalorder %s38, 0
    %p500 = por %p498, %p499
    %p501 = scmp.ne.s32.totalorder %s489, %s490
    %p502 = scmp.eq.s32.totalorder %s39, 1
    %p503 = por %p501, %p502
    %p505 = scmp.ne.s32.totalorder %s490, %s504
    %p506 = scmp.eq.s32.totalorder %s39, 0
    %p507 = por %p505, %p506
    %s509 = sadd.s32 %s508, 1
    %p512 = scmp.eq.s32.totalorder %s33, 1
    %p513 = scmp.ne.s32.totalorder %s508, %s510
    %p514 = scmp.eq.s32.totalorder %s33, 0
    %p515 = por %p513, %p514
    %p516 = scmp.ne.s32.totalorder %s508, %s510
    %p517 = scmp.eq.s32.totalorder %s38, 1
    %p518 = por %p516, %p517
    %p519 = scmp.ne.s32.totalorder %s510, %s511
    %p520 = scmp.eq.s32.totalorder %s38, 0
    %p521 = por %p519, %p520
    %p522 = scmp.ne.s32.totalorder %s510, %s511
    %p523 = scmp.eq.s32.totalorder %s39, 1
    %p524 = por %p522, %p523
    %p526 = scmp.ne.s32.totalorder %s511, %s525
    %p527 = scmp.eq.s32.totalorder %s39, 0
    %p528 = por %p526, %p527
    %s530 = sadd.s32 %s529, 1
    %p533 = scmp.eq.s32.totalorder %s33, 1
    %p534 = scmp.ne.s32.totalorder %s529, %s531
    %p535 = scmp.eq.s32.totalorder %s33, 0
    %p536 = por %p534, %p535
    %p537 = scmp.ne.s32.totalorder %s529, %s531
    %p538 = scmp.eq.s32.totalorder %s38, 1
    %p539 = por %p537, %p538
    %p540 = scmp.ne.s32.totalorder %s531, %s532
    %p541 = scmp.eq.s32.totalorder %s38, 0
    %p542 = por %p540, %p541
    %p543 = scmp.ne.s32.totalorder %s531, %s532
    %p544 = scmp.eq.s32.totalorder %s39, 1
    %p545 = por %p543, %p544
    %p547 = scmp.ne.s32.totalorder %s532, %s546
    %p548 = scmp.eq.s32.totalorder %s39, 0
    %p549 = por %p547, %p548
    %s551 = sadd.s32 %s550, 1
    %p554 = scmp.eq.s32.totalorder %s33, 1
    %p555 = scmp.ne.s32.totalorder %s550, %s552
    %p556 = scmp.eq.s32.totalorder %s33, 0
    %p557 = por %p555, %p556
    %p558 = scmp.ne.s32.totalorder %s550, %s552
    %p559 = scmp.eq.s32.totalorder %s38, 1
    %p560 = por %p558, %p559
    %p561 = scmp.ne.s32.totalorder %s552, %s553
    %p562 = scmp.eq.s32.totalorder %s38, 0
    %p563 = por %p561, %p562
    %p564 = scmp.ne.s32.totalorder %s552, %s553
    %p565 = scmp.eq.s32.totalorder %s39, 1
    %p566 = por %p564, %p565
    %p568 = scmp.ne.s32.totalorder %s553, %s567
    %p569 = scmp.eq.s32.totalorder %s39, 0
    %p570 = por %p568, %p569
    %s572 = sadd.s32 %s571, 1
    %p575 = scmp.eq.s32.totalorder %s33, 1
    %p576 = scmp.ne.s32.totalorder %s571, %s573
    %p577 = scmp.eq.s32.totalorder %s33, 0
    %p578 = por %p576, %p577
    %p579 = scmp.ne.s32.totalorder %s571, %s573
    %p580 = scmp.eq.s32.totalorder %s38, 1
    %p581 = por %p579, %p580
    %p582 = scmp.ne.s32.totalorder %s573, %s574
    %p583 = scmp.eq.s32.totalorder %s38, 0
    %p584 = por %p582, %p583
    %p585 = scmp.ne.s32.totalorder %s573, %s574
    %p586 = scmp.eq.s32.totalorder %s39, 1
    %p587 = por %p585, %p586
    %p589 = scmp.ne.s32.totalorder %s574, %s588
    %p590 = scmp.eq.s32.totalorder %s39, 0
    %p591 = por %p589, %p590
    %s593 = sadd.s32 %s592, 1
    %p596 = scmp.eq.s32.totalorder %s33, 1
    %p597 = scmp.ne.s32.totalorder %s592, %s594
    %p598 = scmp.eq.s32.totalorder %s33, 0
    %p599 = por %p597, %p598
    %p600 = scmp.ne.s32.totalorder %s592, %s594
    %p601 = scmp.eq.s32.totalorder %s38, 1
    %p602 = por %p600, %p601
    %p603 = scmp.ne.s32.totalorder %s594, %s595
    %p604 = scmp.eq.s32.totalorder %s38, 0
    %p605 = por %p603, %p604
    %p606 = scmp.ne.s32.totalorder %s594, %s595
    %p607 = scmp.eq.s32.totalorder %s39, 1
    %p608 = por %p606, %p607
    %p610 = scmp.ne.s32.totalorder %s595, %s609
    %p611 = scmp.eq.s32.totalorder %s39, 0
    %p612 = por %p610, %p611
    %s613 = ssub.s32 %s33, %s40
    %p614 = scmp.eq.s32.totalorder %s613, 0
    %s616 = sadd.s32 %s615, 1
    %s617 = scalar_select %p614, %s615, %s616
    %p620 = pneg %p614
    %p621 = scmp.eq.s32.totalorder %s33, 1
    %p622 = por %p620, %p621
    %p623 = scmp.ne.s32.totalorder %s615, %s618
    %p624 = scmp.eq.s32.totalorder %s33, 0
    %p625 = por %p623, %p624
    %p626 = scmp.ne.s32.totalorder %s615, %s618
    %p627 = scmp.eq.s32.totalorder %s38, 1
    %p628 = por %p626, %p627
    %p629 = scmp.ne.s32.totalorder %s618, %s619
    %p630 = scmp.eq.s32.totalorder %s38, 0
    %p631 = por %p629, %p630
    %p632 = scmp.ne.s32.totalorder %s618, %s619
    %p633 = scmp.eq.s32.totalorder %s39, 1
    %p634 = por %p632, %p633
    %p636 = scmp.ne.s32.totalorder %s619, %s635
    %p637 = scmp.eq.s32.totalorder %s39, 0
    %p638 = por %p636, %p637
    %p639 = scmp.le.s32.totalorder 1, %s33
    %p640 = scmp.lt.s32.totalorder %s33, 3
    %p641 = pnand %p639, %p640
    %p642 = pneg %p641
    // Predicated region
    $region9: #{_lambda_.1} parent=5 // pred_check
      _
    $region10: #{_lambda_.1} parent=5 // pred_check_branch
      %644 = sbr.rel (%p641) target = $region12
    $region11: #{_lambda_.1} parent=5 // pred_region
      %s645 = ssub.s32 %s33, 1
      // Predicated region
      $region13: #{_lambda_.1} parent=11 // pred_check
        %p646 = pneg %p80
      $region14: #{_lambda_.1} parent=11 // pred_check_branch
        %648 = sbr.rel (%p646) target = $region16
      $region15: #{_lambda_.1} parent=11 // pred_region
        _
      $region16: #{_lambda_.1} parent=11 // pred_fallthru
        _
      // Predicated region
      $region17: #{_lambda_.1} parent=11 // pred_check
        %p649 = pneg %p101
      $region18: #{_lambda_.1} parent=11 // pred_check_branch
        %651 = sbr.rel (%p649) target = $region20
      $region19: #{_lambda_.1} parent=11 // pred_region
        _
      $region20: #{_lambda_.1} parent=11 // pred_fallthru
        _
      // Predicated region
      $region21: #{_lambda_.1} parent=11 // pred_check
        %p652 = pneg %p122
      $region22: #{_lambda_.1} parent=11 // pred_check_branch
        %654 = sbr.rel (%p652) target = $region24
      $region23: #{_lambda_.1} parent=11 // pred_region
        _
      $region24: #{_lambda_.1} parent=11 // pred_fallthru
        _
      // Predicated region
      $region25: #{_lambda_.1} parent=11 // pred_check
        %p655 = pneg %p143
      $region26: #{_lambda_.1} parent=11 // pred_check_branch
        %657 = sbr.rel (%p655) target = $region28
      $region27: #{_lambda_.1} parent=11 // pred_region
        _
      $region28: #{_lambda_.1} parent=11 // pred_fallthru
        _
      // Predicated region
      $region29: #{_lambda_.1} parent=11 // pred_check
        %p658 = pneg %p164
      $region30: #{_lambda_.1} parent=11 // pred_check_branch
        %660 = sbr.rel (%p658) target = $region32
      $region31: #{_lambda_.1} parent=11 // pred_region
        _
      $region32: #{_lambda_.1} parent=11 // pred_fallthru
        _
      // Predicated region
      $region33: #{_lambda_.1} parent=11 // pred_check
        %p661 = pneg %p185
      $region34: #{_lambda_.1} parent=11 // pred_check_branch
        %663 = sbr.rel (%p661) target = $region36
      $region35: #{_lambda_.1} parent=11 // pred_region
        _
      $region36: #{_lambda_.1} parent=11 // pred_fallthru
        _
      // Predicated region
      $region37: #{_lambda_.1} parent=11 // pred_check
        %p664 = pneg %p206
      $region38: #{_lambda_.1} parent=11 // pred_check_branch
        %666 = sbr.rel (%p664) target = $region40
      $region39: #{_lambda_.1} parent=11 // pred_region
        _
      $region40: #{_lambda_.1} parent=11 // pred_fallthru
        _
      // Predicated region
      $region41: #{_lambda_.1} parent=11 // pred_check
        %p667 = pneg %p227
      $region42: #{_lambda_.1} parent=11 // pred_check_branch
        %669 = sbr.rel (%p667) target = $region44
      $region43: #{_lambda_.1} parent=11 // pred_region
        _
      $region44: #{_lambda_.1} parent=11 // pred_fallthru
        _
      // Predicated region
      $region45: #{_lambda_.1} parent=11 // pred_check
        %p670 = pneg %p248
      $region46: #{_lambda_.1} parent=11 // pred_check_branch
        %672 = sbr.rel (%p670) target = $region48
      $region47: #{_lambda_.1} parent=11 // pred_region
        _
      $region48: #{_lambda_.1} parent=11 // pred_fallthru
        _
      // Predicated region
      $region49: #{_lambda_.1} parent=11 // pred_check
        %p673 = pneg %p269
      $region50: #{_lambda_.1} parent=11 // pred_check_branch
        %675 = sbr.rel (%p673) target = $region52
      $region51: #{_lambda_.1} parent=11 // pred_region
        _
      $region52: #{_lambda_.1} parent=11 // pred_fallthru
        _
      // Predicated region
      $region53: #{_lambda_.1} parent=11 // pred_check
        %p676 = pneg %p290
      $region54: #{_lambda_.1} parent=11 // pred_check_branch
        %678 = sbr.rel (%p676) target = $region56
      $region55: #{_lambda_.1} parent=11 // pred_region
        _
      $region56: #{_lambda_.1} parent=11 // pred_fallthru
        _
      // Predicated region
      $region57: #{_lambda_.1} parent=11 // pred_check
        %p679 = pneg %p311
      $region58: #{_lambda_.1} parent=11 // pred_check_branch
        %681 = sbr.rel (%p679) target = $region60
      $region59: #{_lambda_.1} parent=11 // pred_region
        _
      $region60: #{_lambda_.1} parent=11 // pred_fallthru
        _
      // Predicated region
      $region61: #{_lambda_.1} parent=11 // pred_check
        %p682 = pneg %p332
      $region62: #{_lambda_.1} parent=11 // pred_check_branch
        %684 = sbr.rel (%p682) target = $region64
      $region63: #{_lambda_.1} parent=11 // pred_region
        _
      $region64: #{_lambda_.1} parent=11 // pred_fallthru
        _
      // Predicated region
      $region65: #{_lambda_.1} parent=11 // pred_check
        %p685 = pneg %p353
      $region66: #{_lambda_.1} parent=11 // pred_check_branch
        %687 = sbr.rel (%p685) target = $region68
      $region67: #{_lambda_.1} parent=11 // pred_region
        _
      $region68: #{_lambda_.1} parent=11 // pred_fallthru
        _
      // Predicated region
      $region69: #{_lambda_.1} parent=11 // pred_check
        %p688 = pneg %p374
      $region70: #{_lambda_.1} parent=11 // pred_check_branch
        %690 = sbr.rel (%p688) target = $region72
      $region71: #{_lambda_.1} parent=11 // pred_region
        _
      $region72: #{_lambda_.1} parent=11 // pred_fallthru
        _
      // Predicated region
      $region73: #{_lambda_.1} parent=11 // pred_check
        %p691 = pneg %p395
      $region74: #{_lambda_.1} parent=11 // pred_check_branch
        %693 = sbr.rel (%p691) target = $region76
      $region75: #{_lambda_.1} parent=11 // pred_region
        _
      $region76: #{_lambda_.1} parent=11 // pred_fallthru
        _
      // Predicated region
      $region77: #{_lambda_.1} parent=11 // pred_check
        %p694 = pneg %p416
      $region78: #{_lambda_.1} parent=11 // pred_check_branch
        %696 = sbr.rel (%p694) target = $region80
      $region79: #{_lambda_.1} parent=11 // pred_region
        _
      $region80: #{_lambda_.1} parent=11 // pred_fallthru
        _
      // Predicated region
      $region81: #{_lambda_.1} parent=11 // pred_check
        %p697 = pneg %p437
      $region82: #{_lambda_.1} parent=11 // pred_check_branch
        %699 = sbr.rel (%p697) target = $region84
      $region83: #{_lambda_.1} parent=11 // pred_region
        _
      $region84: #{_lambda_.1} parent=11 // pred_fallthru
        _
      // Predicated region
      $region85: #{_lambda_.1} parent=11 // pred_check
        %p700 = pneg %p458
      $region86: #{_lambda_.1} parent=11 // pred_check_branch
        %702 = sbr.rel (%p700) target = $region88
      $region87: #{_lambda_.1} parent=11 // pred_region
        _
      $region88: #{_lambda_.1} parent=11 // pred_fallthru
        _
      // Predicated region
      $region89: #{_lambda_.1} parent=11 // pred_check
        %p703 = pneg %p479
      $region90: #{_lambda_.1} parent=11 // pred_check_branch
        %705 = sbr.rel (%p703) target = $region92
      $region91: #{_lambda_.1} parent=11 // pred_region
        _
      $region92: #{_lambda_.1} parent=11 // pred_fallthru
        _
      // Predicated region
      $region93: #{_lambda_.1} parent=11 // pred_check
        %p706 = pneg %p500
      $region94: #{_lambda_.1} parent=11 // pred_check_branch
        %708 = sbr.rel (%p706) target = $region96
      $region95: #{_lambda_.1} parent=11 // pred_region
        _
      $region96: #{_lambda_.1} parent=11 // pred_fallthru
        _
      // Predicated region
      $region97: #{_lambda_.1} parent=11 // pred_check
        %p709 = pneg %p521
      $region98: #{_lambda_.1} parent=11 // pred_check_branch
        %711 = sbr.rel (%p709) target = $region100
      $region99: #{_lambda_.1} parent=11 // pred_region
        _
      $region100: #{_lambda_.1} parent=11 // pred_fallthru
        _
      // Predicated region
      $region101: #{_lambda_.1} parent=11 // pred_check
        %p712 = pneg %p542
      $region102: #{_lambda_.1} parent=11 // pred_check_branch
        %714 = sbr.rel (%p712) target = $region104
      $region103: #{_lambda_.1} parent=11 // pred_region
        _
      $region104: #{_lambda_.1} parent=11 // pred_fallthru
        _
      // Predicated region
      $region105: #{_lambda_.1} parent=11 // pred_check
        %p715 = pneg %p563
      $region106: #{_lambda_.1} parent=11 // pred_check_branch
        %717 = sbr.rel (%p715) target = $region108
      $region107: #{_lambda_.1} parent=11 // pred_region
        _
      $region108: #{_lambda_.1} parent=11 // pred_fallthru
        _
      // Predicated region
      $region109: #{_lambda_.1} parent=11 // pred_check
        %p718 = pneg %p584
      $region110: #{_lambda_.1} parent=11 // pred_check_branch
        %720 = sbr.rel (%p718) target = $region112
      $region111: #{_lambda_.1} parent=11 // pred_region
        _
      $region112: #{_lambda_.1} parent=11 // pred_fallthru
        _
      // Predicated region
      $region113: #{_lambda_.1} parent=11 // pred_check
        %p721 = pneg %p605
      $region114: #{_lambda_.1} parent=11 // pred_check_branch
        %723 = sbr.rel (%p721) target = $region116
      $region115: #{_lambda_.1} parent=11 // pred_region
        _
      $region116: #{_lambda_.1} parent=11 // pred_fallthru
        _
    $region12: #{_lambda_.1} parent=5 // pred_fallthru
      _
    %p724 = scmp.lt.s32.totalorder %s33, 2
    // Predicated region
    $region117: #{_lambda_.1} parent=5 // pred_check
      %p725 = pneg %p724
    $region118: #{_lambda_.1} parent=5 // pred_check_branch
      %727 = sbr.rel (%p725) target = $region120
    $region119: #{_lambda_.1} parent=5 // pred_region
      // Predicated region
      $region121: #{_lambda_.1} parent=119 // pred_check
        %p728 = pneg %p53
      $region122: #{_lambda_.1} parent=119 // pred_check_branch
        %730 = sbr.rel (%p728) target = $region124
      $region123: #{_lambda_.1} parent=119 // pred_region
        %p731 = scmp.lt.s32.totalorder %s33, 1
        %s732 = scalar_select %p731, %s33, 1
        %s733 = smul.addr %s732, 6
        %s734 = smul.addr %s733, 8
        %s735 = scalar_lea.vmem %s0, %s734
      $region124: #{_lambda_.1} parent=119 // pred_fallthru
        _
    $region120: #{_lambda_.1} parent=5 // pred_fallthru
      _
    %p736 = scmp.le.s32.totalorder 1, %s33
    %p737 = scmp.lt.s32.totalorder %s33, 3
    %p738 = pnand %p736, %p737
    %p739 = pneg %p738
    // Predicated region
    $region125: #{_lambda_.1} parent=5 // pred_check
      _
    $region126: #{_lambda_.1} parent=5 // pred_check_branch
      %741 = sbr.rel (%p738) target = $region128
    $region127: #{_lambda_.1} parent=5 // pred_region
      %s742 = ssub.s32 %s33, 1
      %p743 = scmp.lt.s32.totalorder %s38, 1
      %s744 = scalar_select %p743, %s38, 1
      %s745 = smul.addr %s744, 6
      %s746 = smul.addr %s745, 8
      %s747 = scalar_lea.vmem %s0, %s746
      %p748 = pneg %p59
      %p749 = pneg %p56
      %p750 = pneg %p80
      %p751 = pneg %p77
      %p752 = pneg %p101
      %p753 = pneg %p98
      %p754 = pneg %p122
      %p755 = pneg %p119
      %p756 = pneg %p143
      %p757 = pneg %p140
      %p758 = pneg %p164
      %p759 = pneg %p161
      %p760 = pneg %p185
      %p761 = pneg %p182
      %p762 = pneg %p206
      %p763 = pneg %p203
      %p764 = pneg %p227
      %p765 = pneg %p224
      %p766 = pneg %p248
      %p767 = pneg %p245
      %p768 = pneg %p269
      %p769 = pneg %p266
      %p770 = pneg %p290
      %p771 = pneg %p287
      %p772 = pneg %p311
      %p773 = pneg %p308
      %p774 = pneg %p332
      %p775 = pneg %p329
      %p776 = pneg %p353
      %p777 = pneg %p350
      %p778 = pneg %p374
      %p779 = pneg %p371
      %p780 = pneg %p395
      %p781 = pneg %p392
      %p782 = pneg %p416
      %p783 = pneg %p413
      %p784 = pneg %p437
      %p785 = pneg %p434
      %p786 = pneg %p458
      %p787 = pneg %p455
      %p788 = pneg %p479
      %p789 = pneg %p476
      %p790 = pneg %p500
      %p791 = pneg %p497
      %p792 = pneg %p521
      %p793 = pneg %p518
      %p794 = pneg %p542
      %p795 = pneg %p539
      %p796 = pneg %p563
      %p797 = pneg %p560
      %p798 = pneg %p584
      %p799 = pneg %p581
      %p800 = pneg %p605
      %p801 = pneg %p602
      %p802 = pneg %p631
      %p803 = pneg %p628
      %p804 = scmp.lt.s32.totalorder %s38, 1
      %s805 = scalar_select %p804, %s38, 1
      %s806 = scalar_lea.vmem %s27, %s805
      %p807 = scmp.lt.s32.totalorder %s38, 1
      %s808 = scalar_select %p807, %s38, 1
      %s809 = smul.addr %s808, 6
      %s810 = smul.addr %s809, 8
      %s811 = scalar_lea.vmem %s0, %s810
      %p812 = scmp.lt.s32.totalorder %s38, 1
      %s813 = scalar_select %p812, %s38, 1
      %s814 = scalar_lea.vmem %s27, %s813
      %v816 = vlaneseq
      %v817 = vand.u32 %v816, 127
      %vm818 = vcmp.ge.s32.totalorder %v817, 17
      %v819 = vsel %vm818, -1e+30, 0.0
      %v820 = vld [vmem:[%s811] sm:$0xff]
      %v821 = vld [vmem:[%s811 + $0x8] sm:$0xff]
      %v822 = vld [vmem:[%s811 + $0x10] sm:$0xff]
      %v823 = vld [vmem:[%s811 + $0x18] sm:$0xff]
      %v824 = vld [vmem:[%s811 + $0x20] sm:$0xff]
      %v825 = vld [vmem:[%s811 + $0x28] sm:$0xff]
      %v826 = vld [vmem:[%s1] sm:$0x3]
      %v827 = vld [vmem:[%s2] sm:$0x3]
      %vm828 = vcmask 523264
      %v829 = vsel %vm828, %v821, 0.0
      %v830 = vadd.f32 %v820, %v829
      %831 = vadd.xlane.f32.xlu0 %v830
      %v832 = vpop.xlane.xlu0 %831
      %v833 = vsel %vm828, %v823, 0.0
      %v834 = vadd.f32 %v822, %v833
      %835 = vadd.xlane.f32.xlu0 %v834
      %v836 = vpop.xlane.xlu0 %835
      %v837 = vsel %vm828, %v825, 0.0
      %v838 = vadd.f32 %v824, %v837
      %839 = vadd.xlane.f32.xlu0 %v838
      %v840 = vpop.xlane.xlu0 %839
      %v841 = vrcp.pop 192.0
      %v842 = vmul.f32 %v832, %v841
      %v843 = vmul.f32 %v836, %v841
      %v844 = vmul.f32 %v840, %v841
      %v845 = vsub.f32 %v820, %v842
      %v846 = vsub.f32 %v821, %v842
      %v847 = vsub.f32 %v822, %v843
      %v848 = vsub.f32 %v823, %v843
      %v849 = vsub.f32 %v824, %v844
      %v850 = vsub.f32 %v825, %v844
      %v851 = vmul.f32 %v845, %v845
      %v852 = vmul.f32 %v846, %v846
      %v853 = vmul.f32 %v847, %v847
      %v854 = vmul.f32 %v848, %v848
      %v855 = vmul.f32 %v849, %v849
      %v856 = vmul.f32 %v850, %v850
      %v857 = vsel %vm828, %v852, 0.0
      %v858 = vadd.f32 %v851, %v857
      %859 = vadd.xlane.f32.xlu0 %v858
      %v860 = vpop.xlane.xlu0 %859
      %v861 = vsel %vm828, %v854, 0.0
      %v862 = vadd.f32 %v853, %v861
      %863 = vadd.xlane.f32.xlu0 %v862
      %v864 = vpop.xlane.xlu0 %863
      %v865 = vsel %vm828, %v856, 0.0
      %v866 = vadd.f32 %v855, %v865
      %867 = vadd.xlane.f32.xlu0 %v866
      %v868 = vpop.xlane.xlu0 %867
      %v869 = vmul.f32 %v860, %v841
      %v870 = vmul.f32 %v864, %v841
      %v871 = vmul.f32 %v868, %v841
      %v872 = vadd.f32 %v869, 1e-05
      %v873 = vadd.f32 %v870, 1e-05
      %v874 = vadd.f32 %v871, 1e-05
      %v875 = vrsqrt.pop %v872
      %v876 = vrsqrt.pop %v873
      %v877 = vrsqrt.pop %v874
      %v878 = vmul.f32 %v845, %v875
      %v879 = vmul.f32 %v846, %v875
      %v880 = vmul.f32 %v847, %v876
      %v881 = vmul.f32 %v848, %v876
      %v882 = vmul.f32 %v849, %v877
      %v883 = vmul.f32 %v850, %v877
      %v885 = vlaneseq
      %v886 = vshrl.u32 %v885, 7
      %v887 = vsub.s32 0, %v886
      %v888 = vrot.slane %v826, %v887
      %v889 = vlaneseq
      %v890 = vshrl.u32 %v889, 7
      %v891 = vsub.s32 1, %v890
      %v892 = vrot.slane %v826, %v891
      %v895 = vmul.f32 %v878, %v888
      %v896 = vmul.f32 %v879, %v892
      %v897 = vmul.f32 %v880, %v888
      %v898 = vmul.f32 %v881, %v892
      %v899 = vmul.f32 %v882, %v888
      %v900 = vmul.f32 %v883, %v892
      %v902 = vlaneseq
      %v903 = vshrl.u32 %v902, 7
      %v904 = vsub.s32 0, %v903
      %v905 = vrot.slane %v827, %v904
      %v906 = vlaneseq
      %v907 = vshrl.u32 %v906, 7
      %v908 = vsub.s32 1, %v907
      %v909 = vrot.slane %v827, %v908
      %v912 = vadd.f32 %v895, %v905
      %v913 = vadd.f32 %v896, %v909
      %v914 = vadd.f32 %v897, %v905
      %v915 = vadd.f32 %v898, %v909
      %v916 = vadd.f32 %v899, %v905
      %v917 = vadd.f32 %v900, %v909
      %v918 = vld [vmem:[%s3] sm:$0xf]
      %v919 = vld [vmem:[%s3 + $0x4] sm:$0xf]
      %v920 = vld [vmem:[%s3 + $0x8] sm:$0xf]
      %v921 = vld [vmem:[%s3 + $0xc] sm:$0xf]
      %v922 = vld [vmem:[%s3 + $0x10] sm:$0xf]
      %v923 = vld [vmem:[%s3 + $0x14] sm:$0xf]
      %v924 = vld [vmem:[%s3 + $0x18] sm:$0xf]
      %v925 = vld [vmem:[%s3 + $0x1c] sm:$0xf]
      %v926 = vld [vmem:[%s3 + $0x20] sm:$0xf]
      %v927 = vld [vmem:[%s3 + $0x24] sm:$0xf]
      %v928 = vld [vmem:[%s3 + $0x28] sm:$0xf]
      %v929 = vld [vmem:[%s3 + $0x2c] sm:$0xf]
      %v930 = vld [vmem:[%s3 + $0x30] sm:$0xf]
      %v931 = vld [vmem:[%s3 + $0x34] sm:$0xf]
      %v932 = vld [vmem:[%s3 + $0x38] sm:$0xf]
      %v933 = vld [vmem:[%s3 + $0x3c] sm:$0xf]
      %v934 = vld [vmem:[%s3 + $0x40] sm:$0xf]
      %v935 = vld [vmem:[%s3 + $0x44] sm:$0xf]
      %v936 = vld [vmem:[%s3 + $0x48] sm:$0xf]
      %v937 = vld [vmem:[%s3 + $0x4c] sm:$0xf]
      %v938 = vld [vmem:[%s3 + $0x50] sm:$0xf]
      %v939 = vld [vmem:[%s3 + $0x54] sm:$0xf]
      %v940 = vld [vmem:[%s3 + $0x58] sm:$0xf]
      %v941 = vld [vmem:[%s3 + $0x5c] sm:$0xf]
      %v942 = vpack.c.bf16 %v914, %v912
      %v943 = vpack.c.bf16 %v915, %v913
      %v944 = vpack.c.bf16 %v916, %v916
      %v945 = vpack.c.bf16 %v917, %v917
      %v946 = vld [vmem:[%s4] sm:$0x1]
      %v948 = vlaneseq
      %v949 = vshrl.u32 %v948, 7
      %v950 = vsub.s32 0, %v949
      %v951 = vrot.slane %v946, %v950
      %v977 = vunpack.c.l.b16 %v918
      %v978 = vunpack.c.l.b16 %v919
      %v979 = vunpack.c.l.b16 %v920
      %v980 = vunpack.c.l.b16 %v921
      %v981 = vunpack.c.l.b16 %v922
      %v982 = vunpack.c.l.b16 %v923
      %v983 = vunpack.c.l.b16 %v924
      %v984 = vunpack.c.l.b16 %v925
      %v985 = vunpack.c.l.b16 %v926
      %v986 = vunpack.c.l.b16 %v927
      %v987 = vunpack.c.l.b16 %v928
      %v988 = vunpack.c.l.b16 %v929
      %v989 = vunpack.c.l.b16 %v930
      %v990 = vunpack.c.l.b16 %v931
      %v991 = vunpack.c.l.b16 %v932
      %v992 = vunpack.c.l.b16 %v933
      %v993 = vunpack.c.l.b16 %v934
      %v994 = vunpack.c.l.b16 %v935
      %v995 = vunpack.c.l.b16 %v936
      %v996 = vunpack.c.l.b16 %v937
      %v997 = vunpack.c.l.b16 %v938
      %v998 = vunpack.c.l.b16 %v939
      %v999 = vunpack.c.l.b16 %v940
      %v1000 = vunpack.c.l.b16 %v941
      %v1001 = vpack.c.b16 %v978, %v977
      %v1002 = vpack.c.b16 %v980, %v979
      %v1003 = vpack.c.b16 %v982, %v981
      %v1004 = vpack.c.b16 %v984, %v983
      %v1005 = vpack.c.b16 %v986, %v985
      %v1006 = vpack.c.b16 %v988, %v987
      %v1007 = vpack.c.b16 %v990, %v989
      %v1008 = vpack.c.b16 %v992, %v991
      %v1009 = vpack.c.b16 %v994, %v993
      %v1010 = vpack.c.b16 %v996, %v995
      %v1011 = vpack.c.b16 %v998, %v997
      %v1012 = vpack.c.b16 %v1000, %v999
      %v1026 = vsel %vm828, %v943, 0
      %v1029 = vsel %vm828, %v945, 0
      %1031 = vmatprep.subr.bf16.mxu0 0
      %1032 = vmatpush1.bf16.msra.mxu0 %v1008
      %1033 = vmatprep.subr.bf16.mxu0 0
      %1034 = vmatpush1.bf16.msra.mxu0 %v1007
      %1035 = vmatprep.subr.bf16.mxu0 0
      %1036 = vmatpush1.bf16.msra.mxu0 %v1006
      %1037 = vmatprep.subr.bf16.mxu0 0
      %1038 = vmatpush1.bf16.msra.mxu0 %v1005
      %1039 = vmatprep.subr.bf16.mxu0 0
      %1040 = vmatpush1.bf16.msra.mxu0 %v1004
      %1041 = vmatprep.subr.bf16.mxu0 0
      %1042 = vmatpush1.bf16.msra.mxu0 %v1003
      %1043 = vmatprep.subr.bf16.mxu0 0
      %1044 = vmatpush1.bf16.msra.mxu0 %v1002
      %1045 = vmatprep.subr.bf16.mxu0 0
      %1046 = vmatpush1.bf16.msra.mxu0 %v1001
      %1047 = vmatprep.subr.bf16.mxu0 0
      %1048 = vmatpush2.bf16.msra.mxu0 0
      %1049 = vmatprep.subr.bf16.mxu0 0
      %1050 = vmatpush2.bf16.msra.mxu0 0
      %1051 = vmatprep.subr.bf16.mxu0 0
      %1052 = vmatpush2.bf16.msra.mxu0 0
      %1053 = vmatprep.subr.bf16.mxu0 0
      %1054 = vmatpush2.bf16.msra.mxu0 0
      %1055 = vmatprep.subr.bf16.mxu0 0
      %1056 = vmatpush2.bf16.msra.mxu0 %v1012
      %1057 = vmatprep.subr.bf16.mxu0 0
      %1058 = vmatpush2.bf16.msra.mxu0 %v1011
      %1059 = vmatprep.subr.bf16.mxu0 0
      %1060 = vmatpush2.bf16.msra.mxu0 %v1010
      %1061 = vmatprep.subr.bf16.mxu0 0
      %1062 = vmatpush2.bf16.msra.mxu0 %v1009
      %1063 = vmatprep.mubr.bf16.mxu0 %v1026
      %1064 = vmatmul.mubr.bf16.gmra.mxu0 %v942
      %v1065 = vpop.f32.mrf.mxu0
      %v1066 = vadd.f32 %v951, %v1065
      %v1067 = vpop.f32.mrf.mxu0
      %v1068 = vpop.f32.mrf.mxu0
      %v1069 = vadd.f32 %v951, %v1068
      %v1070 = vpop.f32.mrf.mxu0
      %1071 = vmatprep.mubr.bf16.mxu0 %v1029
      %1072 = vmatmul.mubr.bf16.gmra.mxu0 %v944
      %v1073 = vpop.f32.mrf.mxu0
      %v1074 = vadd.f32 %v951, %v1073
      %v1075 = vpop.f32.mrf.mxu0
      %v1076 = vpop.f32.mrf.mxu0
      %v1077 = vpop.f32.mrf.mxu0
      %1078 = vdwg.mxu0
      %v1079 = vld [vmem:[%s5] sm:$0x1]
      %v1080 = vld [vmem:[%s6] sm:$0x1]
      %vm1081 = vcmask 261120
      %v1082 = vsel %vm1081, %v1066, 0.0
      %1083 = vadd.xlane.f32.xlu0 %v1082
      %v1084 = vpop.xlane.xlu0 %1083
      %v1085 = vsel %vm1081, %v1069, 0.0
      %1086 = vadd.xlane.f32.xlu0 %v1085
      %v1087 = vpop.xlane.xlu0 %1086
      %v1088 = vsel %vm1081, %v1074, 0.0
      %1089 = vadd.xlane.f32.xlu0 %v1088
      %v1090 = vpop.xlane.xlu0 %1089
      %v1091 = vrcp.pop 32.0
      %v1092 = vmul.f32 %v1084, %v1091
      %v1093 = vmul.f32 %v1087, %v1091
      %v1094 = vmul.f32 %v1090, %v1091
      %v1095 = vsub.f32 %v1066, %v1092
      %v1096 = vsub.f32 %v1069, %v1093
      %v1097 = vsub.f32 %v1074, %v1094
      %v1098 = vmul.f32 %v1095, %v1095
      %v1099 = vmul.f32 %v1096, %v1096
      %v1100 = vmul.f32 %v1097, %v1097
      %v1101 = vsel %vm1081, %v1098, 0.0
      %1102 = vadd.xlane.f32.xlu0 %v1101
      %v1103 = vpop.xlane.xlu0 %1102
      %v1104 = vsel %vm1081, %v1099, 0.0
      %1105 = vadd.xlane.f32.xlu0 %v1104
      %v1106 = vpop.xlane.xlu0 %1105
      %v1107 = vsel %vm1081, %v1100, 0.0
      %1108 = vadd.xlane.f32.xlu0 %v1107
      %v1109 = vpop.xlane.xlu0 %1108
      %v1110 = vmul.f32 %v1103, %v1091
      %v1111 = vmul.f32 %v1106, %v1091
      %v1112 = vmul.f32 %v1109, %v1091
      %v1113 = vadd.f32 %v1110, 1e-05
      %v1114 = vadd.f32 %v1111, 1e-05
      %v1115 = vadd.f32 %v1112, 1e-05
      %v1116 = vrsqrt.pop %v1113
      %v1117 = vrsqrt.pop %v1114
      %v1118 = vrsqrt.pop %v1115
      %v1119 = vmul.f32 %v1095, %v1116
      %v1120 = vmul.f32 %v1096, %v1117
      %v1121 = vmul.f32 %v1097, %v1118
      %v1123 = vlaneseq
      %v1124 = vshrl.u32 %v1123, 7
      %v1125 = vsub.s32 0, %v1124
      %v1126 = vrot.slane %v1079, %v1125
      %v1128 = vmul.f32 %v1119, %v1126
      %v1129 = vmul.f32 %v1120, %v1126
      %v1130 = vmul.f32 %v1121, %v1126
      %v1132 = vlaneseq
      %v1133 = vshrl.u32 %v1132, 7
      %v1134 = vsub.s32 0, %v1133
      %v1135 = vrot.slane %v1080, %v1134
      %v1137 = vadd.f32 %v1128, %v1135
      %v1138 = vadd.f32 %v1129, %v1135
      %v1139 = vadd.f32 %v1130, %v1135
      %v1140 = vlaneseq
      %v1141 = vshrl.u32 %v1140, 7
      %v1142 = vadd.s32 %v1141, 8
      %v1143 = vadd.s32 %v1141, 16
      %vm1144 = vcmp.eq.s32.totalorder %v1141, 0
      %vm1145 = vcmp.eq.s32.totalorder %v1142, 0
      %vm1146 = vcmp.eq.s32.totalorder %v1143, 0
      %v1147 = vld [vmem:[%s7] sm:$0x1]
      %v1148 = vsel %vm1144, 1, 0
      %v1149 = vsel %vm1145, 1, 0
      %v1150 = vsel %vm1146, 1, 0
      %vm1151 = vcmp.eq.s32.totalorder %v1148, 1
      %vm1152 = vcmp.eq.s32.totalorder %v1149, 1
      %vm1153 = vcmp.eq.s32.totalorder %v1150, 1
      %v1155 = vlaneseq
      %v1156 = vshrl.u32 %v1155, 7
      %v1157 = vsub.s32 0, %v1156
      %v1158 = vrot.slane %v1147, %v1157
      %v1160 = vsel %vm1151, %v1158, %v1137
      %v1161 = vsel %vm1152, %v1158, %v1138
      %v1162 = vsel %vm1153, %v1158, %v1139
      %v1163 = vld [vmem:[%s8] sm:$0xff]
      %v1164 = vld [vmem:[%s8 + $0x8] sm:$0xff]
      %v1165 = vld [vmem:[%s8 + $0x10] sm:$0xff]
      %v1166 = vadd.f32 %v1160, %v1163
      %v1167 = vadd.f32 %v1161, %v1164
      %v1168 = vadd.f32 %v1162, %v1165
      %v1169 = vld [vmem:[%s9] sm:$0x1]
      %v1170 = vld [vmem:[%s10] sm:$0x1]
      %v1171 = vsel %vm1081, %v1166, 0.0
      %1172 = vadd.xlane.f32.xlu0 %v1171
      %v1173 = vpop.xlane.xlu0 %1172
      %v1174 = vsel %vm1081, %v1167, 0.0
      %1175 = vadd.xlane.f32.xlu0 %v1174
      %v1176 = vpop.xlane.xlu0 %1175
      %v1177 = vsel %vm1081, %v1168, 0.0
      %1178 = vadd.xlane.f32.xlu0 %v1177
      %v1179 = vpop.xlane.xlu0 %1178
      %v1180 = vmul.f32 %v1173, %v1091
      %v1181 = vmul.f32 %v1176, %v1091
      %v1182 = vmul.f32 %v1179, %v1091
      %v1183 = vsub.f32 %v1166, %v1180
      %v1184 = vsub.f32 %v1167, %v1181
      %v1185 = vsub.f32 %v1168, %v1182
      %v1186 = vmul.f32 %v1183, %v1183
      %v1187 = vmul.f32 %v1184, %v1184
      %v1188 = vmul.f32 %v1185, %v1185
      %v1189 = vsel %vm1081, %v1186, 0.0
      %1190 = vadd.xlane.f32.xlu0 %v1189
      %v1191 = vpop.xlane.xlu0 %1190
      %v1192 = vsel %vm1081, %v1187, 0.0
      %1193 = vadd.xlane.f32.xlu0 %v1192
      %v1194 = vpop.xlane.xlu0 %1193
      %v1195 = vsel %vm1081, %v1188, 0.0
      %1196 = vadd.xlane.f32.xlu0 %v1195
      %v1197 = vpop.xlane.xlu0 %1196
      %v1198 = vmul.f32 %v1191, %v1091
      %v1199 = vmul.f32 %v1194, %v1091
      %v1200 = vmul.f32 %v1197, %v1091
      %v1201 = vadd.f32 %v1198, 1e-05
      %v1202 = vadd.f32 %v1199, 1e-05
      %v1203 = vadd.f32 %v1200, 1e-05
      %v1204 = vrsqrt.pop %v1201
      %v1205 = vrsqrt.pop %v1202
      %v1206 = vrsqrt.pop %v1203
      %v1207 = vmul.f32 %v1183, %v1204
      %v1208 = vmul.f32 %v1184, %v1205
      %v1209 = vmul.f32 %v1185, %v1206
      %v1211 = vlaneseq
      %v1212 = vshrl.u32 %v1211, 7
      %v1213 = vsub.s32 0, %v1212
      %v1214 = vrot.slane %v1169, %v1213
      %v1216 = vmul.f32 %v1207, %v1214
      %v1217 = vmul.f32 %v1208, %v1214
      %v1218 = vmul.f32 %v1209, %v1214
      %v1220 = vlaneseq
      %v1221 = vshrl.u32 %v1220, 7
      %v1222 = vsub.s32 0, %v1221
      %v1223 = vrot.slane %v1170, %v1222
      %v1225 = vadd.f32 %v1216, %v1223
      %v1226 = vadd.f32 %v1217, %v1223
      %v1227 = vadd.f32 %v1218, %v1223
      %v1228 = vld [vmem:[%s11] sm:$0xf]
      %v1229 = vld [vmem:[%s11 + $0x4] sm:$0xf]
      %v1230 = vld [vmem:[%s11 + $0x8] sm:$0xf]
      %v1231 = vld [vmem:[%s11 + $0xc] sm:$0xf]
      %v1232 = vpack.c.bf16 %v1226, %v1225
      %v1233 = vpack.c.bf16 %v1227, %v1227
      %v1238 = vunpack.c.l.b16 %v1228
      %v1239 = vunpack.c.l.b16 %v1229
      %v1240 = vunpack.c.l.b16 %v1230
      %v1241 = vunpack.c.l.b16 %v1231
      %v1242 = vpack.c.b16 %v1239, %v1238
      %v1243 = vpack.c.b16 %v1241, %v1240
      %v1247 = vsel %vm1081, %v1232, 0
      %v1250 = vsel %vm1081, %v1233, 0
      %1252 = vmatprep.subr.bf16.mxu0 0
      %1253 = vmatpush1.bf16.msra.mxu0 0
      %1254 = vmatprep.subr.bf16.mxu0 0
      %1255 = vmatpush1.bf16.msra.mxu0 0
      %1256 = vmatprep.subr.bf16.mxu0 0
      %1257 = vmatpush1.bf16.msra.mxu0 0
      %1258 = vmatprep.subr.bf16.mxu0 0
      %1259 = vmatpush1.bf16.msra.mxu0 0
      %1260 = vmatprep.subr.bf16.mxu0 0
      %1261 = vmatpush1.bf16.msra.mxu0 0
      %1262 = vmatprep.subr.bf16.mxu0 0
      %1263 = vmatpush1.bf16.msra.mxu0 0
      %1264 = vmatprep.subr.bf16.mxu0 0
      %1265 = vmatpush1.bf16.msra.mxu0 %v1243
      %1266 = vmatprep.subr.bf16.mxu0 0
      %1267 = vmatpush1.bf16.msra.mxu0 %v1242
      %1268 = vmatprep.subr.bf16.mxu0 0
      %1269 = vmatpush2.bf16.msra.mxu0 0
      %1270 = vmatprep.subr.bf16.mxu0 0
      %1271 = vmatpush2.bf16.msra.mxu0 0
      %1272 = vmatprep.subr.bf16.mxu0 0
      %1273 = vmatpush2.bf16.msra.mxu0 0
      %1274 = vmatprep.subr.bf16.mxu0 0
      %1275 = vmatpush2.bf16.msra.mxu0 0
      %1276 = vmatprep.subr.bf16.mxu0 0
      %1277 = vmatpush2.bf16.msra.mxu0 0
      %1278 = vmatprep.subr.bf16.mxu0 0
      %1279 = vmatpush2.bf16.msra.mxu0 0
      %1280 = vmatprep.subr.bf16.mxu0 0
      %1281 = vmatpush2.bf16.msra.mxu0 0
      %1282 = vmatprep.subr.bf16.mxu0 0
      %1283 = vmatpush2.bf16.msra.mxu0 0
      %1284 = vmatprep.mubr.bf16.mxu0 0
      %1285 = vmatmul.mubr.bf16.gmra.mxu0 %v1247
      %v1286 = vpop.f32.mrf.mxu0
      %v1287 = vadd.f32 0.0, %v1286
      %v1288 = vpop.f32.mrf.mxu0
      %v1289 = vpop.f32.mrf.mxu0
      %v1290 = vadd.f32 0.0, %v1289
      %v1291 = vpop.f32.mrf.mxu0
      %1292 = vmatprep.mubr.bf16.mxu0 0
      %1293 = vmatmul.mubr.bf16.gmra.mxu0 %v1250
      %v1294 = vpop.f32.mrf.mxu0
      %v1295 = vadd.f32 0.0, %v1294
      %v1296 = vpop.f32.mrf.mxu0
      %v1297 = vpop.f32.mrf.mxu0
      %v1298 = vpop.f32.mrf.mxu0
      %1299 = vdwg.mxu0
      %v1300 = vld [vmem:[%s12] sm:$0xf]
      %v1301 = vld [vmem:[%s12 + $0x4] sm:$0xf]
      %v1302 = vld [vmem:[%s12 + $0x8] sm:$0xf]
      %v1303 = vld [vmem:[%s12 + $0xc] sm:$0xf]
      %v1308 = vunpack.c.l.b16 %v1300
      %v1309 = vunpack.c.l.b16 %v1301
      %v1310 = vunpack.c.l.b16 %v1302
      %v1311 = vunpack.c.l.b16 %v1303
      %v1312 = vpack.c.b16 %v1309, %v1308
      %v1313 = vpack.c.b16 %v1311, %v1310
      %1316 = vmatprep.subr.bf16.mxu0 0
      %1317 = vmatpush1.bf16.msra.mxu0 0
      %1318 = vmatprep.subr.bf16.mxu0 0
      %1319 = vmatpush1.bf16.msra.mxu0 0
      %1320 = vmatprep.subr.bf16.mxu0 0
      %1321 = vmatpush1.bf16.msra.mxu0 0
      %1322 = vmatprep.subr.bf16.mxu0 0
      %1323 = vmatpush1.bf16.msra.mxu0 0
      %1324 = vmatprep.subr.bf16.mxu0 0
      %1325 = vmatpush1.bf16.msra.mxu0 0
      %1326 = vmatprep.subr.bf16.mxu0 0
      %1327 = vmatpush1.bf16.msra.mxu0 0
      %1328 = vmatprep.subr.bf16.mxu0 0
      %1329 = vmatpush1.bf16.msra.mxu0 %v1313
      %1330 = vmatprep.subr.bf16.mxu0 0
      %1331 = vmatpush1.bf16.msra.mxu0 %v1312
      %1332 = vmatprep.subr.bf16.mxu0 0
      %1333 = vmatpush2.bf16.msra.mxu0 0
      %1334 = vmatprep.subr.bf16.mxu0 0
      %1335 = vmatpush2.bf16.msra.mxu0 0
      %1336 = vmatprep.subr.bf16.mxu0 0
      %1337 = vmatpush2.bf16.msra.mxu0 0
      %1338 = vmatprep.subr.bf16.mxu0 0
      %1339 = vmatpush2.bf16.msra.mxu0 0
      %1340 = vmatprep.subr.bf16.mxu0 0
      %1341 = vmatpush2.bf16.msra.mxu0 0
      %1342 = vmatprep.subr.bf16.mxu0 0
      %1343 = vmatpush2.bf16.msra.mxu0 0
      %1344 = vmatprep.subr.bf16.mxu0 0
      %1345 = vmatpush2.bf16.msra.mxu0 0
      %1346 = vmatprep.subr.bf16.mxu0 0
      %1347 = vmatpush2.bf16.msra.mxu0 0
      %1348 = vmatprep.mubr.bf16.mxu0 0
      %1349 = vmatmul.mubr.bf16.gmra.mxu0 %v1247
      %v1350 = vpop.f32.mrf.mxu0
      %v1351 = vadd.f32 0.0, %v1350
      %v1352 = vpop.f32.mrf.mxu0
      %v1353 = vpop.f32.mrf.mxu0
      %v1354 = vadd.f32 0.0, %v1353
      %v1355 = vpop.f32.mrf.mxu0
      %1356 = vmatprep.mubr.bf16.mxu0 0
      %1357 = vmatmul.mubr.bf16.gmra.mxu0 %v1250
      %v1358 = vpop.f32.mrf.mxu0
      %v1359 = vadd.f32 0.0, %v1358
      %v1360 = vpop.f32.mrf.mxu0
      %v1361 = vpop.f32.mrf.mxu0
      %v1362 = vpop.f32.mrf.mxu0
      %1363 = vdwg.mxu0
      %v1364 = vld [vmem:[%s13] sm:$0xf]
      %v1365 = vld [vmem:[%s13 + $0x4] sm:$0xf]
      %v1366 = vld [vmem:[%s13 + $0x8] sm:$0xf]
      %v1367 = vld [vmem:[%s13 + $0xc] sm:$0xf]
      %v1372 = vunpack.c.l.b16 %v1364
      %v1373 = vunpack.c.l.b16 %v1365
      %v1374 = vunpack.c.l.b16 %v1366
      %v1375 = vunpack.c.l.b16 %v1367
      %v1376 = vpack.c.b16 %v1373, %v1372
      %v1377 = vpack.c.b16 %v1375, %v1374
      %1380 = vmatprep.subr.bf16.mxu0 0
      %1381 = vmatpush1.bf16.msra.mxu0 0
      %1382 = vmatprep.subr.bf16.mxu0 0
      %1383 = vmatpush1.bf16.msra.mxu0 0
      %1384 = vmatprep.subr.bf16.mxu0 0
      %1385 = vmatpush1.bf16.msra.mxu0 0
      %1386 = vmatprep.subr.bf16.mxu0 0
      %1387 = vmatpush1.bf16.msra.mxu0 0
      %1388 = vmatprep.subr.bf16.mxu0 0
      %1389 = vmatpush1.bf16.msra.mxu0 0
      %1390 = vmatprep.subr.bf16.mxu0 0
      %1391 = vmatpush1.bf16.msra.mxu0 0
      %1392 = vmatprep.subr.bf16.mxu0 0
      %1393 = vmatpush1.bf16.msra.mxu0 %v1377
      %1394 = vmatprep.subr.bf16.mxu0 0
      %1395 = vmatpush1.bf16.msra.mxu0 %v1376
      %1396 = vmatprep.subr.bf16.mxu0 0
      %1397 = vmatpush2.bf16.msra.mxu0 0
      %1398 = vmatprep.subr.bf16.mxu0 0
      %1399 = vmatpush2.bf16.msra.mxu0 0
      %1400 = vmatprep.subr.bf16.mxu0 0
      %1401 = vmatpush2.bf16.msra.mxu0 0
      %1402 = vmatprep.subr.bf16.mxu0 0
      %1403 = vmatpush2.bf16.msra.mxu0 0
      %1404 = vmatprep.subr.bf16.mxu0 0
      %1405 = vmatpush2.bf16.msra.mxu0 0
      %1406 = vmatprep.subr.bf16.mxu0 0
      %1407 = vmatpush2.bf16.msra.mxu0 0
      %1408 = vmatprep.subr.bf16.mxu0 0
      %1409 = vmatpush2.bf16.msra.mxu0 0
      %1410 = vmatprep.subr.bf16.mxu0 0
      %1411 = vmatpush2.bf16.msra.mxu0 0
      %1412 = vmatprep.mubr.bf16.mxu0 0
      %1413 = vmatmul.mubr.bf16.gmra.mxu0 %v1247
      %v1414 = vpop.f32.mrf.mxu0
      %v1415 = vadd.f32 0.0, %v1414
      %v1416 = vpop.f32.mrf.mxu0
      %v1417 = vpop.f32.mrf.mxu0
      %v1418 = vadd.f32 0.0, %v1417
      %v1419 = vpop.f32.mrf.mxu0
      %1420 = vmatprep.mubr.bf16.mxu0 0
      %1421 = vmatmul.mubr.bf16.gmra.mxu0 %v1250
      %v1422 = vpop.f32.mrf.mxu0
      %v1423 = vadd.f32 0.0, %v1422
      %v1424 = vpop.f32.mrf.mxu0
      %v1425 = vpop.f32.mrf.mxu0
      %v1426 = vpop.f32.mrf.mxu0
      %1427 = vdwg.mxu0
      %v1428 = vpack.c.bf16 %v1290, %v1287
      %v1429 = vpack.c.bf16 %v1295, %v1295
      %v1430 = vpack.c.bf16 %v1354, %v1351
      %v1431 = vpack.c.bf16 %v1359, %v1359
      %vm1432 = vcmask 64512
      %v1434 = vsel %vm1432, %v1428, 0
      %v1437 = vsel %vm1432, %v1429, 0
      %v1440 = vsel %vm1432, %v1430, 0
      %v1443 = vsel %vm1432, %v1431, 0
      %1445 = vmatprep.subr.bf16.mxu0 0
      %1446 = vmatpush1.bf16.xpose.msra.mxu0 0
      %1447 = vmatprep.subr.bf16.mxu0 0
      %1448 = vmatpush1.bf16.xpose.msra.mxu0 0
      %1449 = vmatprep.subr.bf16.mxu0 0
      %1450 = vmatpush1.bf16.xpose.msra.mxu0 0
      %1451 = vmatprep.subr.bf16.mxu0 0
      %1452 = vmatpush1.bf16.xpose.msra.mxu0 0
      %1453 = vmatprep.subr.bf16.mxu0 0
      %1454 = vmatpush1.bf16.xpose.msra.mxu0 0
      %1455 = vmatprep.subr.bf16.mxu0 0
      %1456 = vmatpush1.bf16.xpose.msra.mxu0 0
      %1457 = vmatprep.subr.bf16.mxu0 0
      %1458 = vmatpush1.bf16.xpose.msra.mxu0 %v1443
      %1459 = vmatprep.subr.bf16.mxu0 0
      %1460 = vmatpush1.bf16.xpose.msra.mxu0 %v1440
      %1461 = vmatprep.subr.bf16.mxu0 0
      %1462 = vmatpush2.bf16.xpose.msra.mxu0 0
      %1463 = vmatprep.subr.bf16.mxu0 0
      %1464 = vmatpush2.bf16.xpose.msra.mxu0 0
      %1465 = vmatprep.subr.bf16.mxu0 0
      %1466 = vmatpush2.bf16.xpose.msra.mxu0 0
      %1467 = vmatprep.subr.bf16.mxu0 0
      %1468 = vmatpush2.bf16.xpose.msra.mxu0 0
      %1469 = vmatprep.subr.bf16.mxu0 0
      %1470 = vmatpush2.bf16.xpose.msra.mxu0 0
      %1471 = vmatprep.subr.bf16.mxu0 0
      %1472 = vmatpush2.bf16.xpose.msra.mxu0 0
      %1473 = vmatprep.subr.bf16.mxu0 0
      %1474 = vmatpush2.bf16.xpose.msra.mxu0 0
      %1475 = vmatprep.subr.bf16.mxu0 0
      %1476 = vmatpush2.bf16.xpose.msra.mxu0 0
      %1477 = vmatprep.mubr.bf16.mxu0 0
      %1478 = vmatmul.mubr.bf16.gmra.mxu0 %v1434
      %v1479 = vpop.f32.mrf.mxu0
      %v1480 = vadd.f32 0.0, %v1479
      %v1481 = vpop.f32.mrf.mxu0
      %v1482 = vpop.f32.mrf.mxu0
      %v1483 = vadd.f32 0.0, %v1482
      %v1484 = vpop.f32.mrf.mxu0
      %1485 = vmatprep.mubr.bf16.mxu0 0
      %1486 = vmatmul.mubr.bf16.gmra.mxu0 %v1437
      %v1487 = vpop.f32.mrf.mxu0
      %v1488 = vadd.f32 0.0, %v1487
      %v1489 = vpop.f32.mrf.mxu0
      %v1490 = vpop.f32.mrf.mxu0
      %v1491 = vpop.f32.mrf.mxu0
      %1492 = vdwg.mxu0
      %v1493 = vmul.f32 %v1480, 0.35355338
      %v1494 = vmul.f32 %v1483, 0.35355338
      %v1495 = vmul.f32 %v1488, 0.35355338
      %v1496 = vadd.f32 %v1493, %v819
      %v1497 = vadd.f32 %v1494, %v819
      %v1498 = vadd.f32 %v1495, %v819
      %vm1499 = vcmask 195584
      %v1500 = vsel %vm1499, %v1496, -inf
      %1501 = vmax.xlane.f32.xlu0 %v1500
      %v1502 = vpop.xlane.xlu0 %1501
      %v1503 = vsel %vm1499, %v1497, -inf
      %1504 = vmax.xlane.f32.xlu0 %v1503
      %v1505 = vpop.xlane.xlu0 %1504
      %v1506 = vsel %vm1499, %v1498, -inf
      %1507 = vmax.xlane.f32.xlu0 %v1506
      %v1508 = vpop.xlane.xlu0 %1507
      %v1509 = vsub.f32 %v1496, %v1502
      %v1510 = vsub.f32 %v1497, %v1505
      %v1511 = vsub.f32 %v1498, %v1508
      %v1512 = vmul.f32 %v1509, 1.442695
      %v1513 = vpow.pop %v1512
      %v1514 = vmul.f32 %v1510, 1.442695
      %v1515 = vpow.pop %v1514
      %v1516 = vmul.f32 %v1511, 1.442695
      %v1517 = vpow.pop %v1516
      %v1518 = vsel %vm1499, %v1513, 0.0
      %1519 = vadd.xlane.f32.xlu0 %v1518
      %v1520 = vpop.xlane.xlu0 %1519
      %v1521 = vsel %vm1499, %v1515, 0.0
      %1522 = vadd.xlane.f32.xlu0 %v1521
      %v1523 = vpop.xlane.xlu0 %1522
      %v1524 = vsel %vm1499, %v1517, 0.0
      %1525 = vadd.xlane.f32.xlu0 %v1524
      %v1526 = vpop.xlane.xlu0 %1525
      %v1527 = vrcp.pop %v1520
      %v1528 = vrcp.pop %v1523
      %v1529 = vrcp.pop %v1526
      %v1530 = vmul.f32 %v1513, %v1527
      %v1531 = vmul.f32 %v1515, %v1528
      %v1532 = vmul.f32 %v1517, %v1529
      %v1533 = vpack.c.bf16 %v1531, %v1530
      %v1534 = vpack.c.bf16 %v1532, %v1532
      %v1535 = vpack.c.bf16 %v1418, %v1415
      %v1536 = vpack.c.bf16 %v1423, %v1423
      %v1538 = vsel %vm1499, %v1533, 0
      %v1541 = vsel %vm1499, %v1534, 0
      %vm1543 = vcmask 1043456
      %v1545 = vsel %vm1543, %v1536, 0
      %1547 = vmatprep.subr.bf16.mxu0 0
      %1548 = vmatpush1.bf16.msra.mxu0 0
      %1549 = vmatprep.subr.bf16.mxu0 0
      %1550 = vmatpush1.bf16.msra.mxu0 0
      %1551 = vmatprep.subr.bf16.mxu0 0
      %1552 = vmatpush1.bf16.msra.mxu0 0
      %1553 = vmatprep.subr.bf16.mxu0 0
      %1554 = vmatpush1.bf16.msra.mxu0 0
      %1555 = vmatprep.subr.bf16.mxu0 0
      %1556 = vmatpush1.bf16.msra.mxu0 0
      %1557 = vmatprep.subr.bf16.mxu0 0
      %1558 = vmatpush1.bf16.msra.mxu0 0
      %1559 = vmatprep.subr.bf16.mxu0 0
      %1560 = vmatpush1.bf16.msra.mxu0 %v1545
      %1561 = vmatprep.subr.bf16.mxu0 0
      %1562 = vmatpush1.bf16.msra.mxu0 %v1535
      %1563 = vmatprep.subr.bf16.mxu0 0
      %1564 = vmatpush2.bf16.msra.mxu0 0
      %1565 = vmatprep.subr.bf16.mxu0 0
      %1566 = vmatpush2.bf16.msra.mxu0 0
      %1567 = vmatprep.subr.bf16.mxu0 0
      %1568 = vmatpush2.bf16.msra.mxu0 0
      %1569 = vmatprep.subr.bf16.mxu0 0
      %1570 = vmatpush2.bf16.msra.mxu0 0
      %1571 = vmatprep.subr.bf16.mxu0 0
      %1572 = vmatpush2.bf16.msra.mxu0 0
      %1573 = vmatprep.subr.bf16.mxu0 0
      %1574 = vmatpush2.bf16.msra.mxu0 0
      %1575 = vmatprep.subr.bf16.mxu0 0
      %1576 = vmatpush2.bf16.msra.mxu0 0
      %1577 = vmatprep.subr.bf16.mxu0 0
      %1578 = vmatpush2.bf16.msra.mxu0 0
      %1579 = vmatprep.mubr.bf16.mxu0 0
      %1580 = vmatmul.mubr.bf16.gmra.mxu0 %v1538
      %v1581 = vpop.f32.mrf.mxu0
      %v1582 = vadd.f32 0.0, %v1581
      %v1583 = vpop.f32.mrf.mxu0
      %v1584 = vpop.f32.mrf.mxu0
      %v1585 = vadd.f32 0.0, %v1584
      %v1586 = vpop.f32.mrf.mxu0
      %1587 = vmatprep.mubr.bf16.mxu0 0
      %1588 = vmatmul.mubr.bf16.gmra.mxu0 %v1541
      %v1589 = vpop.f32.mrf.mxu0
      %v1590 = vadd.f32 0.0, %v1589
      %v1591 = vpop.f32.mrf.mxu0
      %v1592 = vpop.f32.mrf.mxu0
      %v1593 = vpop.f32.mrf.mxu0
      %1594 = vdwg.mxu0
      %s1595 = scalar_lea.vmem %s11, 16
      %v1596 = vld [vmem:[%s1595] sm:$0xf]
      %v1597 = vld [vmem:[%s1595 + $0x4] sm:$0xf]
      %v1598 = vld [vmem:[%s1595 + $0x8] sm:$0xf]
      %v1599 = vld [vmem:[%s1595 + $0xc] sm:$0xf]
      %v1604 = vunpack.c.l.b16 %v1596
      %v1605 = vunpack.c.l.b16 %v1597
      %v1606 = vunpack.c.l.b16 %v1598
      %v1607 = vunpack.c.l.b16 %v1599
      %v1608 = vpack.c.b16 %v1605, %v1604
      %v1609 = vpack.c.b16 %v1607, %v1606
      %1612 = vmatprep.subr.bf16.mxu0 0
      %1613 = vmatpush1.bf16.msra.mxu0 0
      %1614 = vmatprep.subr.bf16.mxu0 0
      %1615 = vmatpush1.bf16.msra.mxu0 0
      %1616 = vmatprep.subr.bf16.mxu0 0
      %1617 = vmatpush1.bf16.msra.mxu0 0
      %1618 = vmatprep.subr.bf16.mxu0 0
      %1619 = vmatpush1.bf16.msra.mxu0 0
      %1620 = vmatprep.subr.bf16.mxu0 0
      %1621 = vmatpush1.bf16.msra.mxu0 0
      %1622 = vmatprep.subr.bf16.mxu0 0
      %1623 = vmatpush1.bf16.msra.mxu0 0
      %1624 = vmatprep.subr.bf16.mxu0 0
      %1625 = vmatpush1.bf16.msra.mxu0 %v1609
      %1626 = vmatprep.subr.bf16.mxu0 0
      %1627 = vmatpush1.bf16.msra.mxu0 %v1608
      %1628 = vmatprep.subr.bf16.mxu0 0
      %1629 = vmatpush2.bf16.msra.mxu0 0
      %1630 = vmatprep.subr.bf16.mxu0 0
      %1631 = vmatpush2.bf16.msra.mxu0 0
      %1632 = vmatprep.subr.bf16.mxu0 0
      %1633 = vmatpush2.bf16.msra.mxu0 0
      %1634 = vmatprep.subr.bf16.mxu0 0
      %1635 = vmatpush2.bf16.msra.mxu0 0
      %1636 = vmatprep.subr.bf16.mxu0 0
      %1637 = vmatpush2.bf16.msra.mxu0 0
      %1638 = vmatprep.subr.bf16.mxu0 0
      %1639 = vmatpush2.bf16.msra.mxu0 0
      %1640 = vmatprep.subr.bf16.mxu0 0
      %1641 = vmatpush2.bf16.msra.mxu0 0
      %1642 = vmatprep.subr.bf16.mxu0 0
      %1643 = vmatpush2.bf16.msra.mxu0 0
      %1644 = vmatprep.mubr.bf16.mxu0 0
      %1645 = vmatmul.mubr.bf16.gmra.mxu0 %v1247
      %v1646 = vpop.f32.mrf.mxu0
      %v1647 = vadd.f32 0.0, %v1646
      %v1648 = vpop.f32.mrf.mxu0
      %v1649 = vpop.f32.mrf.mxu0
      %v1650 = vadd.f32 0.0, %v1649
      %v1651 = vpop.f32.mrf.mxu0
      %1652 = vmatprep.mubr.bf16.mxu0 0
      %1653 = vmatmul.mubr.bf16.gmra.mxu0 %v1250
      %v1654 = vpop.f32.mrf.mxu0
      %v1655 = vadd.f32 0.0, %v1654
      %v1656 = vpop.f32.mrf.mxu0
      %v1657 = vpop.f32.mrf.mxu0
      %v1658 = vpop.f32.mrf.mxu0
      %1659 = vdwg.mxu0
      %s1660 = scalar_lea.vmem %s12, 16
      %v1661 = vld [vmem:[%s1660] sm:$0xf]
      %v1662 = vld [vmem:[%s1660 + $0x4] sm:$0xf]
      %v1663 = vld [vmem:[%s1660 + $0x8] sm:$0xf]
      %v1664 = vld [vmem:[%s1660 + $0xc] sm:$0xf]
      %v1669 = vunpack.c.l.b16 %v1661
      %v1670 = vunpack.c.l.b16 %v1662
      %v1671 = vunpack.c.l.b16 %v1663
      %v1672 = vunpack.c.l.b16 %v1664
      %v1673 = vpack.c.b16 %v1670, %v1669
      %v1674 = vpack.c.b16 %v1672, %v1671
      %1677 = vmatprep.subr.bf16.mxu0 0
      %1678 = vmatpush1.bf16.msra.mxu0 0
      %1679 = vmatprep.subr.bf16.mxu0 0
      %1680 = vmatpush1.bf16.msra.mxu0 0
      %1681 = vmatprep.subr.bf16.mxu0 0
      %1682 = vmatpush1.bf16.msra.mxu0 0
      %1683 = vmatprep.subr.bf16.mxu0 0
      %1684 = vmatpush1.bf16.msra.mxu0 0
      %1685 = vmatprep.subr.bf16.mxu0 0
      %1686 = vmatpush1.bf16.msra.mxu0 0
      %1687 = vmatprep.subr.bf16.mxu0 0
      %1688 = vmatpush1.bf16.msra.mxu0 0
      %1689 = vmatprep.subr.bf16.mxu0 0
      %1690 = vmatpush1.bf16.msra.mxu0 %v1674
      %1691 = vmatprep.subr.bf16.mxu0 0
      %1692 = vmatpush1.bf16.msra.mxu0 %v1673
      %1693 = vmatprep.subr.bf16.mxu0 0
      %1694 = vmatpush2.bf16.msra.mxu0 0
      %1695 = vmatprep.subr.bf16.mxu0 0
      %1696 = vmatpush2.bf16.msra.mxu0 0
      %1697 = vmatprep.subr.bf16.mxu0 0
      %1698 = vmatpush2.bf16.msra.mxu0 0
      %1699 = vmatprep.subr.bf16.mxu0 0
      %1700 = vmatpush2.bf16.msra.mxu0 0
      %1701 = vmatprep.subr.bf16.mxu0 0
      %1702 = vmatpush2.bf16.msra.mxu0 0
      %1703 = vmatprep.subr.bf16.mxu0 0
      %1704 = vmatpush2.bf16.msra.mxu0 0
      %1705 = vmatprep.subr.bf16.mxu0 0
      %1706 = vmatpush2.bf16.msra.mxu0 0
      %1707 = vmatprep.subr.bf16.mxu0 0
      %1708 = vmatpush2.bf16.msra.mxu0 0
      %1709 = vmatprep.mubr.bf16.mxu0 0
      %1710 = vmatmul.mubr.bf16.gmra.mxu0 %v1247
      %v1711 = vpop.f32.mrf.mxu0
      %v1712 = vadd.f32 0.0, %v1711
      %v1713 = vpop.f32.mrf.mxu0
      %v1714 = vpop.f32.mrf.mxu0
      %v1715 = vadd.f32 0.0, %v1714
      %v1716 = vpop.f32.mrf.mxu0
      %1717 = vmatprep.mubr.bf16.mxu0 0
      %1718 = vmatmul.mubr.bf16.gmra.mxu0 %v1250
      %v1719 = vpop.f32.mrf.mxu0
      %v1720 = vadd.f32 0.0, %v1719
      %v1721 = vpop.f32.mrf.mxu0
      %v1722 = vpop.f32.mrf.mxu0
      %v1723 = vpop.f32.mrf.mxu0
      %1724 = vdwg.mxu0
      %s1725 = scalar_lea.vmem %s13, 16
      %v1726 = vld [vmem:[%s1725] sm:$0xf]
      %v1727 = vld [vmem:[%s1725 + $0x4] sm:$0xf]
      %v1728 = vld [vmem:[%s1725 + $0x8] sm:$0xf]
      %v1729 = vld [vmem:[%s1725 + $0xc] sm:$0xf]
      %v1734 = vunpack.c.l.b16 %v1726
      %v1735 = vunpack.c.l.b16 %v1727
      %v1736 = vunpack.c.l.b16 %v1728
      %v1737 = vunpack.c.l.b16 %v1729
      %v1738 = vpack.c.b16 %v1735, %v1734
      %v1739 = vpack.c.b16 %v1737, %v1736
      %1742 = vmatprep.subr.bf16.mxu0 0
      %1743 = vmatpush1.bf16.msra.mxu0 0
      %1744 = vmatprep.subr.bf16.mxu0 0
      %1745 = vmatpush1.bf16.msra.mxu0 0
      %1746 = vmatprep.subr.bf16.mxu0 0
      %1747 = vmatpush1.bf16.msra.mxu0 0
      %1748 = vmatprep.subr.bf16.mxu0 0
      %1749 = vmatpush1.bf16.msra.mxu0 0
      %1750 = vmatprep.subr.bf16.mxu0 0
      %1751 = vmatpush1.bf16.msra.mxu0 0
      %1752 = vmatprep.subr.bf16.mxu0 0
      %1753 = vmatpush1.bf16.msra.mxu0 0
      %1754 = vmatprep.subr.bf16.mxu0 0
      %1755 = vmatpush1.bf16.msra.mxu0 %v1739
      %1756 = vmatprep.subr.bf16.mxu0 0
      %1757 = vmatpush1.bf16.msra.mxu0 %v1738
      %1758 = vmatprep.subr.bf16.mxu0 0
      %1759 = vmatpush2.bf16.msra.mxu0 0
      %1760 = vmatprep.subr.bf16.mxu0 0
      %1761 = vmatpush2.bf16.msra.mxu0 0
      %1762 = vmatprep.subr.bf16.mxu0 0
      %1763 = vmatpush2.bf16.msra.mxu0 0
      %1764 = vmatprep.subr.bf16.mxu0 0
      %1765 = vmatpush2.bf16.msra.mxu0 0
      %1766 = vmatprep.subr.bf16.mxu0 0
      %1767 = vmatpush2.bf16.msra.mxu0 0
      %1768 = vmatprep.subr.bf16.mxu0 0
      %1769 = vmatpush2.bf16.msra.mxu0 0
      %1770 = vmatprep.subr.bf16.mxu0 0
      %1771 = vmatpush2.bf16.msra.mxu0 0
      %1772 = vmatprep.subr.bf16.mxu0 0
      %1773 = vmatpush2.bf16.msra.mxu0 0
      %1774 = vmatprep.mubr.bf16.mxu0 0
      %1775 = vmatmul.mubr.bf16.gmra.mxu0 %v1247
      %v1776 = vpop.f32.mrf.mxu0
      %v1777 = vadd.f32 0.0, %v1776
      %v1778 = vpop.f32.mrf.mxu0
      %v1779 = vpop.f32.mrf.mxu0
      %v1780 = vadd.f32 0.0, %v1779
      %v1781 = vpop.f32.mrf.mxu0
      %1782 = vmatprep.mubr.bf16.mxu0 0
      %1783 = vmatmul.mubr.bf16.gmra.mxu0 %v1250
      %v1784 = vpop.f32.mrf.mxu0
      %v1785 = vadd.f32 0.0, %v1784
      %v1786 = vpop.f32.mrf.mxu0
      %v1787 = vpop.f32.mrf.mxu0
      %v1788 = vpop.f32.mrf.mxu0
      %1789 = vdwg.mxu0
      %v1790 = vpack.c.bf16 %v1650, %v1647
      %v1791 = vpack.c.bf16 %v1655, %v1655
      %v1792 = vpack.c.bf16 %v1715, %v1712
      %v1793 = vpack.c.bf16 %v1720, %v1720
      %v1795 = vsel %vm1432, %v1790, 0
      %v1798 = vsel %vm1432, %v1791, 0
      %v1801 = vsel %vm1432, %v1792, 0
      %v1804 = vsel %vm1432, %v1793, 0
      %1806 = vmatprep.subr.bf16.mxu0 0
      %1807 = vmatpush1.bf16.xpose.msra.mxu0 0
      %1808 = vmatprep.subr.bf16.mxu0 0
      %1809 = vmatpush1.bf16.xpose.msra.mxu0 0
      %1810 = vmatprep.subr.bf16.mxu0 0
      %1811 = vmatpush1.bf16.xpose.msra.mxu0 0
      %1812 = vmatprep.subr.bf16.mxu0 0
      %1813 = vmatpush1.bf16.xpose.msra.mxu0 0
      %1814 = vmatprep.subr.bf16.mxu0 0
      %1815 = vmatpush1.bf16.xpose.msra.mxu0 0
      %1816 = vmatprep.subr.bf16.mxu0 0
      %1817 = vmatpush1.bf16.xpose.msra.mxu0 0
      %1818 = vmatprep.subr.bf16.mxu0 0
      %1819 = vmatpush1.bf16.xpose.msra.mxu0 %v1804
      %1820 = vmatprep.subr.bf16.mxu0 0
      %1821 = vmatpush1.bf16.xpose.msra.mxu0 %v1801
      %1822 = vmatprep.subr.bf16.mxu0 0
      %1823 = vmatpush2.bf16.xpose.msra.mxu0 0
      %1824 = vmatprep.subr.bf16.mxu0 0
      %1825 = vmatpush2.bf16.xpose.msra.mxu0 0
      %1826 = vmatprep.subr.bf16.mxu0 0
      %1827 = vmatpush2.bf16.xpose.msra.mxu0 0
      %1828 = vmatprep.subr.bf16.mxu0 0
      %1829 = vmatpush2.bf16.xpose.msra.mxu0 0
      %1830 = vmatprep.subr.bf16.mxu0 0
      %1831 = vmatpush2.bf16.xpose.msra.mxu0 0
      %1832 = vmatprep.subr.bf16.mxu0 0
      %1833 = vmatpush2.bf16.xpose.msra.mxu0 0
      %1834 = vmatprep.subr.bf16.mxu0 0
      %1835 = vmatpush2.bf16.xpose.msra.mxu0 0
      %1836 = vmatprep.subr.bf16.mxu0 0
      %1837 = vmatpush2.bf16.xpose.msra.mxu0 0
      %1838 = vmatprep.mubr.bf16.mxu0 0
      %1839 = vmatmul.mubr.bf16.gmra.mxu0 %v1795
      %v1840 = vpop.f32.mrf.mxu0
      %v1841 = vadd.f32 0.0, %v1840
      %v1842 = vpop.f32.mrf.mxu0
      %v1843 = vpop.f32.mrf.mxu0
      %v1844 = vadd.f32 0.0, %v1843
      %v1845 = vpop.f32.mrf.mxu0
      %1846 = vmatprep.mubr.bf16.mxu0 0
      %1847 = vmatmul.mubr.bf16.gmra.mxu0 %v1798
      %v1848 = vpop.f32.mrf.mxu0
      %v1849 = vadd.f32 0.0, %v1848
      %v1850 = vpop.f32.mrf.mxu0
      %v1851 = vpop.f32.mrf.mxu0
      %v1852 = vpop.f32.mrf.mxu0
      %1853 = vdwg.mxu0
      %v1854 = vmul.f32 %v1841, 0.35355338
      %v1855 = vmul.f32 %v1844, 0.35355338
      %v1856 = vmul.f32 %v1849, 0.35355338
      %v1857 = vadd.f32 %v1854, %v819
      %v1858 = vadd.f32 %v1855, %v819
      %v1859 = vadd.f32 %v1856, %v819
      %v1860 = vsel %vm1499, %v1857, -inf
      %1861 = vmax.xlane.f32.xlu0 %v1860
      %v1862 = vpop.xlane.xlu0 %1861
      %v1863 = vsel %vm1499, %v1858, -inf
      %1864 = vmax.xlane.f32.xlu0 %v1863
      %v1865 = vpop.xlane.xlu0 %1864
      %v1866 = vsel %vm1499, %v1859, -inf
      %1867 = vmax.xlane.f32.xlu0 %v1866
      %v1868 = vpop.xlane.xlu0 %1867
      %v1869 = vsub.f32 %v1857, %v1862
      %v1870 = vsub.f32 %v1858, %v1865
      %v1871 = vsub.f32 %v1859, %v1868
      %v1872 = vmul.f32 %v1869, 1.442695
      %v1873 = vpow.pop %v1872
      %v1874 = vmul.f32 %v1870, 1.442695
      %v1875 = vpow.pop %v1874
      %v1876 = vmul.f32 %v1871, 1.442695
      %v1877 = vpow.pop %v1876
      %v1878 = vsel %vm1499, %v1873, 0.0
      %1879 = vadd.xlane.f32.xlu0 %v1878
      %v1880 = vpop.xlane.xlu0 %1879
      %v1881 = vsel %vm1499, %v1875, 0.0
      %1882 = vadd.xlane.f32.xlu0 %v1881
      %v1883 = vpop.xlane.xlu0 %1882
      %v1884 = vsel %vm1499, %v1877, 0.0
      %1885 = vadd.xlane.f32.xlu0 %v1884
      %v1886 = vpop.xlane.xlu0 %1885
      %v1887 = vrcp.pop %v1880
      %v1888 = vrcp.pop %v1883
      %v1889 = vrcp.pop %v1886
      %v1890 = vmul.f32 %v1873, %v1887
      %v1891 = vmul.f32 %v1875, %v1888
      %v1892 = vmul.f32 %v1877, %v1889
      %v1893 = vpack.c.bf16 %v1891, %v1890
      %v1894 = vpack.c.bf16 %v1892, %v1892
      %v1895 = vpack.c.bf16 %v1780, %v1777
      %v1896 = vpack.c.bf16 %v1785, %v1785
      %v1898 = vsel %vm1499, %v1893, 0
      %v1901 = vsel %vm1499, %v1894, 0
      %v1904 = vsel %vm1543, %v1896, 0
      %1906 = vmatprep.subr.bf16.mxu0 0
      %1907 = vmatpush1.bf16.msra.mxu0 0
      %1908 = vmatprep.subr.bf16.mxu0 0
      %1909 = vmatpush1.bf16.msra.mxu0 0
      %1910 = vmatprep.subr.bf16.mxu0 0
      %1911 = vmatpush1.bf16.msra.mxu0 0
      %1912 = vmatprep.subr.bf16.mxu0 0
      %1913 = vmatpush1.bf16.msra.mxu0 0
      %1914 = vmatprep.subr.bf16.mxu0 0
      %1915 = vmatpush1.bf16.msra.mxu0 0
      %1916 = vmatprep.subr.bf16.mxu0 0
      %1917 = vmatpush1.bf16.msra.mxu0 0
      %1918 = vmatprep.subr.bf16.mxu0 0
      %1919 = vmatpush1.bf16.msra.mxu0 %v1904
      %1920 = vmatprep.subr.bf16.mxu0 0
      %1921 = vmatpush1.bf16.msra.mxu0 %v1895
      %1922 = vmatprep.subr.bf16.mxu0 0
      %1923 = vmatpush2.bf16.msra.mxu0 0
      %1924 = vmatprep.subr.bf16.mxu0 0
      %1925 = vmatpush2.bf16.msra.mxu0 0
      %1926 = vmatprep.subr.bf16.mxu0 0
      %1927 = vmatpush2.bf16.msra.mxu0 0
      %1928 = vmatprep.subr.bf16.mxu0 0
      %1929 = vmatpush2.bf16.msra.mxu0 0
      %1930 = vmatprep.subr.bf16.mxu0 0
      %1931 = vmatpush2.bf16.msra.mxu0 0
      %1932 = vmatprep.subr.bf16.mxu0 0
      %1933 = vmatpush2.bf16.msra.mxu0 0
      %1934 = vmatprep.subr.bf16.mxu0 0
      %1935 = vmatpush2.bf16.msra.mxu0 0
      %1936 = vmatprep.subr.bf16.mxu0 0
      %1937 = vmatpush2.bf16.msra.mxu0 0
      %1938 = vmatprep.mubr.bf16.mxu0 0
      %1939 = vmatmul.mubr.bf16.gmra.mxu0 %v1898
      %v1940 = vpop.f32.mrf.mxu0
      %v1941 = vadd.f32 0.0, %v1940
      %v1942 = vpop.f32.mrf.mxu0
      %v1943 = vpop.f32.mrf.mxu0
      %v1944 = vadd.f32 0.0, %v1943
      %v1945 = vpop.f32.mrf.mxu0
      %1946 = vmatprep.mubr.bf16.mxu0 0
      %1947 = vmatmul.mubr.bf16.gmra.mxu0 %v1901
      %v1948 = vpop.f32.mrf.mxu0
      %v1949 = vadd.f32 0.0, %v1948
      %v1950 = vpop.f32.mrf.mxu0
      %v1951 = vpop.f32.mrf.mxu0
      %v1952 = vpop.f32.mrf.mxu0
      %1953 = vdwg.mxu0
      %s1954 = scalar_lea.vmem %s11, 32
      %v1955 = vld [vmem:[%s1954] sm:$0xf]
      %v1956 = vld [vmem:[%s1954 + $0x4] sm:$0xf]
      %v1957 = vld [vmem:[%s1954 + $0x8] sm:$0xf]
      %v1958 = vld [vmem:[%s1954 + $0xc] sm:$0xf]
      %v1963 = vunpack.c.l.b16 %v1955
      %v1964 = vunpack.c.l.b16 %v1956
      %v1965 = vunpack.c.l.b16 %v1957
      %v1966 = vunpack.c.l.b16 %v1958
      %v1967 = vpack.c.b16 %v1964, %v1963
      %v1968 = vpack.c.b16 %v1966, %v1965
      %1971 = vmatprep.subr.bf16.mxu0 0
      %1972 = vmatpush1.bf16.msra.mxu0 0
      %1973 = vmatprep.subr.bf16.mxu0 0
      %1974 = vmatpush1.bf16.msra.mxu0 0
      %1975 = vmatprep.subr.bf16.mxu0 0
      %1976 = vmatpush1.bf16.msra.mxu0 0
      %1977 = vmatprep.subr.bf16.mxu0 0
      %1978 = vmatpush1.bf16.msra.mxu0 0
      %1979 = vmatprep.subr.bf16.mxu0 0
      %1980 = vmatpush1.bf16.msra.mxu0 0
      %1981 = vmatprep.subr.bf16.mxu0 0
      %1982 = vmatpush1.bf16.msra.mxu0 0
      %1983 = vmatprep.subr.bf16.mxu0 0
      %1984 = vmatpush1.bf16.msra.mxu0 %v1968
      %1985 = vmatprep.subr.bf16.mxu0 0
      %1986 = vmatpush1.bf16.msra.mxu0 %v1967
      %1987 = vmatprep.subr.bf16.mxu0 0
      %1988 = vmatpush2.bf16.msra.mxu0 0
      %1989 = vmatprep.subr.bf16.mxu0 0
      %1990 = vmatpush2.bf16.msra.mxu0 0
      %1991 = vmatprep.subr.bf16.mxu0 0
      %1992 = vmatpush2.bf16.msra.mxu0 0
      %1993 = vmatprep.subr.bf16.mxu0 0
      %1994 = vmatpush2.bf16.msra.mxu0 0
      %1995 = vmatprep.subr.bf16.mxu0 0
      %1996 = vmatpush2.bf16.msra.mxu0 0
      %1997 = vmatprep.subr.bf16.mxu0 0
      %1998 = vmatpush2.bf16.msra.mxu0 0
      %1999 = vmatprep.subr.bf16.mxu0 0
      %2000 = vmatpush2.bf16.msra.mxu0 0
      %2001 = vmatprep.subr.bf16.mxu0 0
      %2002 = vmatpush2.bf16.msra.mxu0 0
      %2003 = vmatprep.mubr.bf16.mxu0 0
      %2004 = vmatmul.mubr.bf16.gmra.mxu0 %v1247
      %v2005 = vpop.f32.mrf.mxu0
      %v2006 = vadd.f32 0.0, %v2005
      %v2007 = vpop.f32.mrf.mxu0
      %v2008 = vpop.f32.mrf.mxu0
      %v2009 = vadd.f32 0.0, %v2008
      %v2010 = vpop.f32.mrf.mxu0
      %2011 = vmatprep.mubr.bf16.mxu0 0
      %2012 = vmatmul.mubr.bf16.gmra.mxu0 %v1250
      %v2013 = vpop.f32.mrf.mxu0
      %v2014 = vadd.f32 0.0, %v2013
      %v2015 = vpop.f32.mrf.mxu0
      %v2016 = vpop.f32.mrf.mxu0
      %v2017 = vpop.f32.mrf.mxu0
      %2018 = vdwg.mxu0
      %s2019 = scalar_lea.vmem %s12, 32
      %v2020 = vld [vmem:[%s2019] sm:$0xf]
      %v2021 = vld [vmem:[%s2019 + $0x4] sm:$0xf]
      %v2022 = vld [vmem:[%s2019 + $0x8] sm:$0xf]
      %v2023 = vld [vmem:[%s2019 + $0xc] sm:$0xf]
      %v2028 = vunpack.c.l.b16 %v2020
      %v2029 = vunpack.c.l.b16 %v2021
      %v2030 = vunpack.c.l.b16 %v2022
      %v2031 = vunpack.c.l.b16 %v2023
      %v2032 = vpack.c.b16 %v2029, %v2028
      %v2033 = vpack.c.b16 %v2031, %v2030
      %2036 = vmatprep.subr.bf16.mxu0 0
      %2037 = vmatpush1.bf16.msra.mxu0 0
      %2038 = vmatprep.subr.bf16.mxu0 0
      %2039 = vmatpush1.bf16.msra.mxu0 0
      %2040 = vmatprep.subr.bf16.mxu0 0
      %2041 = vmatpush1.bf16.msra.mxu0 0
      %2042 = vmatprep.subr.bf16.mxu0 0
      %2043 = vmatpush1.bf16.msra.mxu0 0
      %2044 = vmatprep.subr.bf16.mxu0 0
      %2045 = vmatpush1.bf16.msra.mxu0 0
      %2046 = vmatprep.subr.bf16.mxu0 0
      %2047 = vmatpush1.bf16.msra.mxu0 0
      %2048 = vmatprep.subr.bf16.mxu0 0
      %2049 = vmatpush1.bf16.msra.mxu0 %v2033
      %2050 = vmatprep.subr.bf16.mxu0 0
      %2051 = vmatpush1.bf16.msra.mxu0 %v2032
      %2052 = vmatprep.subr.bf16.mxu0 0
      %2053 = vmatpush2.bf16.msra.mxu0 0
      %2054 = vmatprep.subr.bf16.mxu0 0
      %2055 = vmatpush2.bf16.msra.mxu0 0
      %2056 = vmatprep.subr.bf16.mxu0 0
      %2057 = vmatpush2.bf16.msra.mxu0 0
      %2058 = vmatprep.subr.bf16.mxu0 0
      %2059 = vmatpush2.bf16.msra.mxu0 0
      %2060 = vmatprep.subr.bf16.mxu0 0
      %2061 = vmatpush2.bf16.msra.mxu0 0
      %2062 = vmatprep.subr.bf16.mxu0 0
      %2063 = vmatpush2.bf16.msra.mxu0 0
      %2064 = vmatprep.subr.bf16.mxu0 0
      %2065 = vmatpush2.bf16.msra.mxu0 0
      %2066 = vmatprep.subr.bf16.mxu0 0
      %2067 = vmatpush2.bf16.msra.mxu0 0
      %2068 = vmatprep.mubr.bf16.mxu0 0
      %2069 = vmatmul.mubr.bf16.gmra.mxu0 %v1247
      %v2070 = vpop.f32.mrf.mxu0
      %v2071 = vadd.f32 0.0, %v2070
      %v2072 = vpop.f32.mrf.mxu0
      %v2073 = vpop.f32.mrf.mxu0
      %v2074 = vadd.f32 0.0, %v2073
      %v2075 = vpop.f32.mrf.mxu0
      %2076 = vmatprep.mubr.bf16.mxu0 0
      %2077 = vmatmul.mubr.bf16.gmra.mxu0 %v1250
      %v2078 = vpop.f32.mrf.mxu0
      %v2079 = vadd.f32 0.0, %v2078
      %v2080 = vpop.f32.mrf.mxu0
      %v2081 = vpop.f32.mrf.mxu0
      %v2082 = vpop.f32.mrf.mxu0
      %2083 = vdwg.mxu0
      %s2084 = scalar_lea.vmem %s13, 32
      %v2085 = vld [vmem:[%s2084] sm:$0xf]
      %v2086 = vld [vmem:[%s2084 + $0x4] sm:$0xf]
      %v2087 = vld [vmem:[%s2084 + $0x8] sm:$0xf]
      %v2088 = vld [vmem:[%s2084 + $0xc] sm:$0xf]
      %v2093 = vunpack.c.l.b16 %v2085
      %v2094 = vunpack.c.l.b16 %v2086
      %v2095 = vunpack.c.l.b16 %v2087
      %v2096 = vunpack.c.l.b16 %v2088
      %v2097 = vpack.c.b16 %v2094, %v2093
      %v2098 = vpack.c.b16 %v2096, %v2095
      %2101 = vmatprep.subr.bf16.mxu0 0
      %2102 = vmatpush1.bf16.msra.mxu0 0
      %2103 = vmatprep.subr.bf16.mxu0 0
      %2104 = vmatpush1.bf16.msra.mxu0 0
      %2105 = vmatprep.subr.bf16.mxu0 0
      %2106 = vmatpush1.bf16.msra.mxu0 0
      %2107 = vmatprep.subr.bf16.mxu0 0
      %2108 = vmatpush1.bf16.msra.mxu0 0
      %2109 = vmatprep.subr.bf16.mxu0 0
      %2110 = vmatpush1.bf16.msra.mxu0 0
      %2111 = vmatprep.subr.bf16.mxu0 0
      %2112 = vmatpush1.bf16.msra.mxu0 0
      %2113 = vmatprep.subr.bf16.mxu0 0
      %2114 = vmatpush1.bf16.msra.mxu0 %v2098
      %2115 = vmatprep.subr.bf16.mxu0 0
      %2116 = vmatpush1.bf16.msra.mxu0 %v2097
      %2117 = vmatprep.subr.bf16.mxu0 0
      %2118 = vmatpush2.bf16.msra.mxu0 0
      %2119 = vmatprep.subr.bf16.mxu0 0
      %2120 = vmatpush2.bf16.msra.mxu0 0
      %2121 = vmatprep.subr.bf16.mxu0 0
      %2122 = vmatpush2.bf16.msra.mxu0 0
      %2123 = vmatprep.subr.bf16.mxu0 0
      %2124 = vmatpush2.bf16.msra.mxu0 0
      %2125 = vmatprep.subr.bf16.mxu0 0
      %2126 = vmatpush2.bf16.msra.mxu0 0
      %2127 = vmatprep.subr.bf16.mxu0 0
      %2128 = vmatpush2.bf16.msra.mxu0 0
      %2129 = vmatprep.subr.bf16.mxu0 0
      %2130 = vmatpush2.bf16.msra.mxu0 0
      %2131 = vmatprep.subr.bf16.mxu0 0
      %2132 = vmatpush2.bf16.msra.mxu0 0
      %2133 = vmatprep.mubr.bf16.mxu0 0
      %2134 = vmatmul.mubr.bf16.gmra.mxu0 %v1247
      %v2135 = vpop.f32.mrf.mxu0
      %v2136 = vadd.f32 0.0, %v2135
      %v2137 = vpop.f32.mrf.mxu0
      %v2138 = vpop.f32.mrf.mxu0
      %v2139 = vadd.f32 0.0, %v2138
      %v2140 = vpop.f32.mrf.mxu0
      %2141 = vmatprep.mubr.bf16.mxu0 0
      %2142 = vmatmul.mubr.bf16.gmra.mxu0 %v1250
      %v2143 = vpop.f32.mrf.mxu0
      %v2144 = vadd.f32 0.0, %v2143
      %v2145 = vpop.f32.mrf.mxu0
      %v2146 = vpop.f32.mrf.mxu0
      %v2147 = vpop.f32.mrf.mxu0
      %2148 = vdwg.mxu0
      %v2149 = vpack.c.bf16 %v2009, %v2006
      %v2150 = vpack.c.bf16 %v2014, %v2014
      %v2151 = vpack.c.bf16 %v2074, %v2071
      %v2152 = vpack.c.bf16 %v2079, %v2079
      %v2154 = vsel %vm1432, %v2149, 0
      %v2157 = vsel %vm1432, %v2150, 0
      %v2160 = vsel %vm1432, %v2151, 0
      %v2163 = vsel %vm1432, %v2152, 0
      %2165 = vmatprep.subr.bf16.mxu0 0
      %2166 = vmatpush1.bf16.xpose.msra.mxu0 0
      %2167 = vmatprep.subr.bf16.mxu0 0
      %2168 = vmatpush1.bf16.xpose.msra.mxu0 0
      %2169 = vmatprep.subr.bf16.mxu0 0
      %2170 = vmatpush1.bf16.xpose.msra.mxu0 0
      %2171 = vmatprep.subr.bf16.mxu0 0
      %2172 = vmatpush1.bf16.xpose.msra.mxu0 0
      %2173 = vmatprep.subr.bf16.mxu0 0
      %2174 = vmatpush1.bf16.xpose.msra.mxu0 0
      %2175 = vmatprep.subr.bf16.mxu0 0
      %2176 = vmatpush1.bf16.xpose.msra.mxu0 0
      %2177 = vmatprep.subr.bf16.mxu0 0
      %2178 = vmatpush1.bf16.xpose.msra.mxu0 %v2163
      %2179 = vmatprep.subr.bf16.mxu0 0
      %2180 = vmatpush1.bf16.xpose.msra.mxu0 %v2160
      %2181 = vmatprep.subr.bf16.mxu0 0
      %2182 = vmatpush2.bf16.xpose.msra.mxu0 0
      %2183 = vmatprep.subr.bf16.mxu0 0
      %2184 = vmatpush2.bf16.xpose.msra.mxu0 0
      %2185 = vmatprep.subr.bf16.mxu0 0
      %2186 = vmatpush2.bf16.xpose.msra.mxu0 0
      %2187 = vmatprep.subr.bf16.mxu0 0
      %2188 = vmatpush2.bf16.xpose.msra.mxu0 0
      %2189 = vmatprep.subr.bf16.mxu0 0
      %2190 = vmatpush2.bf16.xpose.msra.mxu0 0
      %2191 = vmatprep.subr.bf16.mxu0 0
      %2192 = vmatpush2.bf16.xpose.msra.mxu0 0
      %2193 = vmatprep.subr.bf16.mxu0 0
      %2194 = vmatpush2.bf16.xpose.msra.mxu0 0
      %2195 = vmatprep.subr.bf16.mxu0 0
      %2196 = vmatpush2.bf16.xpose.msra.mxu0 0
      %2197 = vmatprep.mubr.bf16.mxu0 0
      %2198 = vmatmul.mubr.bf16.gmra.mxu0 %v2154
      %v2199 = vpop.f32.mrf.mxu0
      %v2200 = vadd.f32 0.0, %v2199
      %v2201 = vpop.f32.mrf.mxu0
      %v2202 = vpop.f32.mrf.mxu0
      %v2203 = vadd.f32 0.0, %v2202
      %v2204 = vpop.f32.mrf.mxu0
      %2205 = vmatprep.mubr.bf16.mxu0 0
      %2206 = vmatmul.mubr.bf16.gmra.mxu0 %v2157
      %v2207 = vpop.f32.mrf.mxu0
      %v2208 = vadd.f32 0.0, %v2207
      %v2209 = vpop.f32.mrf.mxu0
      %v2210 = vpop.f32.mrf.mxu0
      %v2211 = vpop.f32.mrf.mxu0
      %2212 = vdwg.mxu0
      %v2213 = vmul.f32 %v2200, 0.35355338
      %v2214 = vmul.f32 %v2203, 0.35355338
      %v2215 = vmul.f32 %v2208, 0.35355338
      %v2216 = vadd.f32 %v2213, %v819
      %v2217 = vadd.f32 %v2214, %v819
      %v2218 = vadd.f32 %v2215, %v819
      %v2219 = vsel %vm1499, %v2216, -inf
      %2220 = vmax.xlane.f32.xlu0 %v2219
      %v2221 = vpop.xlane.xlu0 %2220
      %v2222 = vsel %vm1499, %v2217, -inf
      %2223 = vmax.xlane.f32.xlu0 %v2222
      %v2224 = vpop.xlane.xlu0 %2223
      %v2225 = vsel %vm1499, %v2218, -inf
      %2226 = vmax.xlane.f32.xlu0 %v2225
      %v2227 = vpop.xlane.xlu0 %2226
      %v2228 = vsub.f32 %v2216, %v2221
      %v2229 = vsub.f32 %v2217, %v2224
      %v2230 = vsub.f32 %v2218, %v2227
      %v2231 = vmul.f32 %v2228, 1.442695
      %v2232 = vpow.pop %v2231
      %v2233 = vmul.f32 %v2229, 1.442695
      %v2234 = vpow.pop %v2233
      %v2235 = vmul.f32 %v2230, 1.442695
      %v2236 = vpow.pop %v2235
      %v2237 = vsel %vm1499, %v2232, 0.0
      %2238 = vadd.xlane.f32.xlu0 %v2237
      %v2239 = vpop.xlane.xlu0 %2238
      %v2240 = vsel %vm1499, %v2234, 0.0
      %2241 = vadd.xlane.f32.xlu0 %v2240
      %v2242 = vpop.xlane.xlu0 %2241
      %v2243 = vsel %vm1499, %v2236, 0.0
      %2244 = vadd.xlane.f32.xlu0 %v2243
      %v2245 = vpop.xlane.xlu0 %2244
      %v2246 = vrcp.pop %v2239
      %v2247 = vrcp.pop %v2242
      %v2248 = vrcp.pop %v2245
      %v2249 = vmul.f32 %v2232, %v2246
      %v2250 = vmul.f32 %v2234, %v2247
      %v2251 = vmul.f32 %v2236, %v2248
      %v2252 = vpack.c.bf16 %v2250, %v2249
      %v2253 = vpack.c.bf16 %v2251, %v2251
      %v2254 = vpack.c.bf16 %v2139, %v2136
      %v2255 = vpack.c.bf16 %v2144, %v2144
      %v2257 = vsel %vm1499, %v2252, 0
      %v2260 = vsel %vm1499, %v2253, 0
      %v2263 = vsel %vm1543, %v2255, 0
      %2265 = vmatprep.subr.bf16.mxu0 0
      %2266 = vmatpush1.bf16.msra.mxu0 0
      %2267 = vmatprep.subr.bf16.mxu0 0
      %2268 = vmatpush1.bf16.msra.mxu0 0
      %2269 = vmatprep.subr.bf16.mxu0 0
      %2270 = vmatpush1.bf16.msra.mxu0 0
      %2271 = vmatprep.subr.bf16.mxu0 0
      %2272 = vmatpush1.bf16.msra.mxu0 0
      %2273 = vmatprep.subr.bf16.mxu0 0
      %2274 = vmatpush1.bf16.msra.mxu0 0
      %2275 = vmatprep.subr.bf16.mxu0 0
      %2276 = vmatpush1.bf16.msra.mxu0 0
      %2277 = vmatprep.subr.bf16.mxu0 0
      %2278 = vmatpush1.bf16.msra.mxu0 %v2263
      %2279 = vmatprep.subr.bf16.mxu0 0
      %2280 = vmatpush1.bf16.msra.mxu0 %v2254
      %2281 = vmatprep.subr.bf16.mxu0 0
      %2282 = vmatpush2.bf16.msra.mxu0 0
      %2283 = vmatprep.subr.bf16.mxu0 0
      %2284 = vmatpush2.bf16.msra.mxu0 0
      %2285 = vmatprep.subr.bf16.mxu0 0
      %2286 = vmatpush2.bf16.msra.mxu0 0
      %2287 = vmatprep.subr.bf16.mxu0 0
      %2288 = vmatpush2.bf16.msra.mxu0 0
      %2289 = vmatprep.subr.bf16.mxu0 0
      %2290 = vmatpush2.bf16.msra.mxu0 0
      %2291 = vmatprep.subr.bf16.mxu0 0
      %2292 = vmatpush2.bf16.msra.mxu0 0
      %2293 = vmatprep.subr.bf16.mxu0 0
      %2294 = vmatpush2.bf16.msra.mxu0 0
      %2295 = vmatprep.subr.bf16.mxu0 0
      %2296 = vmatpush2.bf16.msra.mxu0 0
      %2297 = vmatprep.mubr.bf16.mxu0 0
      %2298 = vmatmul.mubr.bf16.gmra.mxu0 %v2257
      %v2299 = vpop.f32.mrf.mxu0
      %v2300 = vadd.f32 0.0, %v2299
      %v2301 = vpop.f32.mrf.mxu0
      %v2302 = vpop.f32.mrf.mxu0
      %v2303 = vadd.f32 0.0, %v2302
      %v2304 = vpop.f32.mrf.mxu0
      %2305 = vmatprep.mubr.bf16.mxu0 0
      %2306 = vmatmul.mubr.bf16.gmra.mxu0 %v2260
      %v2307 = vpop.f32.mrf.mxu0
      %v2308 = vadd.f32 0.0, %v2307
      %v2309 = vpop.f32.mrf.mxu0
      %v2310 = vpop.f32.mrf.mxu0
      %v2311 = vpop.f32.mrf.mxu0
      %2312 = vdwg.mxu0
      %s2313 = scalar_lea.vmem %s11, 48
      %v2314 = vld [vmem:[%s2313] sm:$0xf]
      %v2315 = vld [vmem:[%s2313 + $0x4] sm:$0xf]
      %v2316 = vld [vmem:[%s2313 + $0x8] sm:$0xf]
      %v2317 = vld [vmem:[%s2313 + $0xc] sm:$0xf]
      %v2322 = vunpack.c.l.b16 %v2314
      %v2323 = vunpack.c.l.b16 %v2315
      %v2324 = vunpack.c.l.b16 %v2316
      %v2325 = vunpack.c.l.b16 %v2317
      %v2326 = vpack.c.b16 %v2323, %v2322
      %v2327 = vpack.c.b16 %v2325, %v2324
      %2330 = vmatprep.subr.bf16.mxu0 0
      %2331 = vmatpush1.bf16.msra.mxu0 0
      %2332 = vmatprep.subr.bf16.mxu0 0
      %2333 = vmatpush1.bf16.msra.mxu0 0
      %2334 = vmatprep.subr.bf16.mxu0 0
      %2335 = vmatpush1.bf16.msra.mxu0 0
      %2336 = vmatprep.subr.bf16.mxu0 0
      %2337 = vmatpush1.bf16.msra.mxu0 0
      %2338 = vmatprep.subr.bf16.mxu0 0
      %2339 = vmatpush1.bf16.msra.mxu0 0
      %2340 = vmatprep.subr.bf16.mxu0 0
      %2341 = vmatpush1.bf16.msra.mxu0 0
      %2342 = vmatprep.subr.bf16.mxu0 0
      %2343 = vmatpush1.bf16.msra.mxu0 %v2327
      %2344 = vmatprep.subr.bf16.mxu0 0
      %2345 = vmatpush1.bf16.msra.mxu0 %v2326
      %2346 = vmatprep.subr.bf16.mxu0 0
      %2347 = vmatpush2.bf16.msra.mxu0 0
      %2348 = vmatprep.subr.bf16.mxu0 0
      %2349 = vmatpush2.bf16.msra.mxu0 0
      %2350 = vmatprep.subr.bf16.mxu0 0
      %2351 = vmatpush2.bf16.msra.mxu0 0
      %2352 = vmatprep.subr.bf16.mxu0 0
      %2353 = vmatpush2.bf16.msra.mxu0 0
      %2354 = vmatprep.subr.bf16.mxu0 0
      %2355 = vmatpush2.bf16.msra.mxu0 0
      %2356 = vmatprep.subr.bf16.mxu0 0
      %2357 = vmatpush2.bf16.msra.mxu0 0
      %2358 = vmatprep.subr.bf16.mxu0 0
      %2359 = vmatpush2.bf16.msra.mxu0 0
      %2360 = vmatprep.subr.bf16.mxu0 0
      %2361 = vmatpush2.bf16.msra.mxu0 0
      %2362 = vmatprep.mubr.bf16.mxu0 0
      %2363 = vmatmul.mubr.bf16.gmra.mxu0 %v1247
      %v2364 = vpop.f32.mrf.mxu0
      %v2365 = vadd.f32 0.0, %v2364
      %v2366 = vpop.f32.mrf.mxu0
      %v2367 = vpop.f32.mrf.mxu0
      %v2368 = vadd.f32 0.0, %v2367
      %v2369 = vpop.f32.mrf.mxu0
      %2370 = vmatprep.mubr.bf16.mxu0 0
      %2371 = vmatmul.mubr.bf16.gmra.mxu0 %v1250
      %v2372 = vpop.f32.mrf.mxu0
      %v2373 = vadd.f32 0.0, %v2372
      %v2374 = vpop.f32.mrf.mxu0
      %v2375 = vpop.f32.mrf.mxu0
      %v2376 = vpop.f32.mrf.mxu0
      %2377 = vdwg.mxu0
      %s2378 = scalar_lea.vmem %s12, 48
      %v2379 = vld [vmem:[%s2378] sm:$0xf]
      %v2380 = vld [vmem:[%s2378 + $0x4] sm:$0xf]
      %v2381 = vld [vmem:[%s2378 + $0x8] sm:$0xf]
      %v2382 = vld [vmem:[%s2378 + $0xc] sm:$0xf]
      %v2387 = vunpack.c.l.b16 %v2379
      %v2388 = vunpack.c.l.b16 %v2380
      %v2389 = vunpack.c.l.b16 %v2381
      %v2390 = vunpack.c.l.b16 %v2382
      %v2391 = vpack.c.b16 %v2388, %v2387
      %v2392 = vpack.c.b16 %v2390, %v2389
      %2395 = vmatprep.subr.bf16.mxu0 0
      %2396 = vmatpush1.bf16.msra.mxu0 0
      %2397 = vmatprep.subr.bf16.mxu0 0
      %2398 = vmatpush1.bf16.msra.mxu0 0
      %2399 = vmatprep.subr.bf16.mxu0 0
      %2400 = vmatpush1.bf16.msra.mxu0 0
      %2401 = vmatprep.subr.bf16.mxu0 0
      %2402 = vmatpush1.bf16.msra.mxu0 0
      %2403 = vmatprep.subr.bf16.mxu0 0
      %2404 = vmatpush1.bf16.msra.mxu0 0
      %2405 = vmatprep.subr.bf16.mxu0 0
      %2406 = vmatpush1.bf16.msra.mxu0 0
      %2407 = vmatprep.subr.bf16.mxu0 0
      %2408 = vmatpush1.bf16.msra.mxu0 %v2392
      %2409 = vmatprep.subr.bf16.mxu0 0
      %2410 = vmatpush1.bf16.msra.mxu0 %v2391
      %2411 = vmatprep.subr.bf16.mxu0 0
      %2412 = vmatpush2.bf16.msra.mxu0 0
      %2413 = vmatprep.subr.bf16.mxu0 0
      %2414 = vmatpush2.bf16.msra.mxu0 0
      %2415 = vmatprep.subr.bf16.mxu0 0
      %2416 = vmatpush2.bf16.msra.mxu0 0
      %2417 = vmatprep.subr.bf16.mxu0 0
      %2418 = vmatpush2.bf16.msra.mxu0 0
      %2419 = vmatprep.subr.bf16.mxu0 0
      %2420 = vmatpush2.bf16.msra.mxu0 0
      %2421 = vmatprep.subr.bf16.mxu0 0
      %2422 = vmatpush2.bf16.msra.mxu0 0
      %2423 = vmatprep.subr.bf16.mxu0 0
      %2424 = vmatpush2.bf16.msra.mxu0 0
      %2425 = vmatprep.subr.bf16.mxu0 0
      %2426 = vmatpush2.bf16.msra.mxu0 0
      %2427 = vmatprep.mubr.bf16.mxu0 0
      %2428 = vmatmul.mubr.bf16.gmra.mxu0 %v1247
      %v2429 = vpop.f32.mrf.mxu0
      %v2430 = vadd.f32 0.0, %v2429
      %v2431 = vpop.f32.mrf.mxu0
      %v2432 = vpop.f32.mrf.mxu0
      %v2433 = vadd.f32 0.0, %v2432
      %v2434 = vpop.f32.mrf.mxu0
      %2435 = vmatprep.mubr.bf16.mxu0 0
      %2436 = vmatmul.mubr.bf16.gmra.mxu0 %v1250
      %v2437 = vpop.f32.mrf.mxu0
      %v2438 = vadd.f32 0.0, %v2437
      %v2439 = vpop.f32.mrf.mxu0
      %v2440 = vpop.f32.mrf.mxu0
      %v2441 = vpop.f32.mrf.mxu0
      %2442 = vdwg.mxu0
      %s2443 = scalar_lea.vmem %s13, 48
      %v2444 = vld [vmem:[%s2443] sm:$0xf]
      %v2445 = vld [vmem:[%s2443 + $0x4] sm:$0xf]
      %v2446 = vld [vmem:[%s2443 + $0x8] sm:$0xf]
      %v2447 = vld [vmem:[%s2443 + $0xc] sm:$0xf]
      %v2452 = vunpack.c.l.b16 %v2444
      %v2453 = vunpack.c.l.b16 %v2445
      %v2454 = vunpack.c.l.b16 %v2446
      %v2455 = vunpack.c.l.b16 %v2447
      %v2456 = vpack.c.b16 %v2453, %v2452
      %v2457 = vpack.c.b16 %v2455, %v2454
      %2460 = vmatprep.subr.bf16.mxu0 0
      %2461 = vmatpush1.bf16.msra.mxu0 0
      %2462 = vmatprep.subr.bf16.mxu0 0
      %2463 = vmatpush1.bf16.msra.mxu0 0
      %2464 = vmatprep.subr.bf16.mxu0 0
      %2465 = vmatpush1.bf16.msra.mxu0 0
      %2466 = vmatprep.subr.bf16.mxu0 0
      %2467 = vmatpush1.bf16.msra.mxu0 0
      %2468 = vmatprep.subr.bf16.mxu0 0
      %2469 = vmatpush1.bf16.msra.mxu0 0
      %2470 = vmatprep.subr.bf16.mxu0 0
      %2471 = vmatpush1.bf16.msra.mxu0 0
      %2472 = vmatprep.subr.bf16.mxu0 0
      %2473 = vmatpush1.bf16.msra.mxu0 %v2457
      %2474 = vmatprep.subr.bf16.mxu0 0
      %2475 = vmatpush1.bf16.msra.mxu0 %v2456
      %2476 = vmatprep.subr.bf16.mxu0 0
      %2477 = vmatpush2.bf16.msra.mxu0 0
      %2478 = vmatprep.subr.bf16.mxu0 0
      %2479 = vmatpush2.bf16.msra.mxu0 0
      %2480 = vmatprep.subr.bf16.mxu0 0
      %2481 = vmatpush2.bf16.msra.mxu0 0
      %2482 = vmatprep.subr.bf16.mxu0 0
      %2483 = vmatpush2.bf16.msra.mxu0 0
      %2484 = vmatprep.subr.bf16.mxu0 0
      %2485 = vmatpush2.bf16.msra.mxu0 0
      %2486 = vmatprep.subr.bf16.mxu0 0
      %2487 = vmatpush2.bf16.msra.mxu0 0
      %2488 = vmatprep.subr.bf16.mxu0 0
      %2489 = vmatpush2.bf16.msra.mxu0 0
      %2490 = vmatprep.subr.bf16.mxu0 0
      %2491 = vmatpush2.bf16.msra.mxu0 0
      %2492 = vmatprep.mubr.bf16.mxu0 0
      %2493 = vmatmul.mubr.bf16.gmra.mxu0 %v1247
      %v2494 = vpop.f32.mrf.mxu0
      %v2495 = vadd.f32 0.0, %v2494
      %v2496 = vpop.f32.mrf.mxu0
      %v2497 = vpop.f32.mrf.mxu0
      %v2498 = vadd.f32 0.0, %v2497
      %v2499 = vpop.f32.mrf.mxu0
      %2500 = vmatprep.mubr.bf16.mxu0 0
      %2501 = vmatmul.mubr.bf16.gmra.mxu0 %v1250
      %v2502 = vpop.f32.mrf.mxu0
      %v2503 = vadd.f32 0.0, %v2502
      %v2504 = vpop.f32.mrf.mxu0
      %v2505 = vpop.f32.mrf.mxu0
      %v2506 = vpop.f32.mrf.mxu0
      %2507 = vdwg.mxu0
      %v2508 = vpack.c.bf16 %v2368, %v2365
      %v2509 = vpack.c.bf16 %v2373, %v2373
      %v2510 = vpack.c.bf16 %v2433, %v2430
      %v2511 = vpack.c.bf16 %v2438, %v2438
      %v2513 = vsel %vm1432, %v2508, 0
      %v2516 = vsel %vm1432, %v2509, 0
      %v2519 = vsel %vm1432, %v2510, 0
      %v2522 = vsel %vm1432, %v2511, 0
      %2524 = vmatprep.subr.bf16.mxu0 0
      %2525 = vmatpush1.bf16.xpose.msra.mxu0 0
      %2526 = vmatprep.subr.bf16.mxu0 0
      %2527 = vmatpush1.bf16.xpose.msra.mxu0 0
      %2528 = vmatprep.subr.bf16.mxu0 0
      %2529 = vmatpush1.bf16.xpose.msra.mxu0 0
      %2530 = vmatprep.subr.bf16.mxu0 0
      %2531 = vmatpush1.bf16.xpose.msra.mxu0 0
      %2532 = vmatprep.subr.bf16.mxu0 0
      %2533 = vmatpush1.bf16.xpose.msra.mxu0 0
      %2534 = vmatprep.subr.bf16.mxu0 0
      %2535 = vmatpush1.bf16.xpose.msra.mxu0 0
      %2536 = vmatprep.subr.bf16.mxu0 0
      %2537 = vmatpush1.bf16.xpose.msra.mxu0 %v2522
      %2538 = vmatprep.subr.bf16.mxu0 0
      %2539 = vmatpush1.bf16.xpose.msra.mxu0 %v2519
      %2540 = vmatprep.subr.bf16.mxu0 0
      %2541 = vmatpush2.bf16.xpose.msra.mxu0 0
      %2542 = vmatprep.subr.bf16.mxu0 0
      %2543 = vmatpush2.bf16.xpose.msra.mxu0 0
      %2544 = vmatprep.subr.bf16.mxu0 0
      %2545 = vmatpush2.bf16.xpose.msra.mxu0 0
      %2546 = vmatprep.subr.bf16.mxu0 0
      %2547 = vmatpush2.bf16.xpose.msra.mxu0 0
      %2548 = vmatprep.subr.bf16.mxu0 0
      %2549 = vmatpush2.bf16.xpose.msra.mxu0 0
      %2550 = vmatprep.subr.bf16.mxu0 0
      %2551 = vmatpush2.bf16.xpose.msra.mxu0 0
      %2552 = vmatprep.subr.bf16.mxu0 0
      %2553 = vmatpush2.bf16.xpose.msra.mxu0 0
      %2554 = vmatprep.subr.bf16.mxu0 0
      %2555 = vmatpush2.bf16.xpose.msra.mxu0 0
      %2556 = vmatprep.mubr.bf16.mxu0 0
      %2557 = vmatmul.mubr.bf16.gmra.mxu0 %v2513
      %v2558 = vpop.f32.mrf.mxu0
      %v2559 = vadd.f32 0.0, %v2558
      %v2560 = vpop.f32.mrf.mxu0
      %v2561 = vpop.f32.mrf.mxu0
      %v2562 = vadd.f32 0.0, %v2561
      %v2563 = vpop.f32.mrf.mxu0
      %2564 = vmatprep.mubr.bf16.mxu0 0
      %2565 = vmatmul.mubr.bf16.gmra.mxu0 %v2516
      %v2566 = vpop.f32.mrf.mxu0
      %v2567 = vadd.f32 0.0, %v2566
      %v2568 = vpop.f32.mrf.mxu0
      %v2569 = vpop.f32.mrf.mxu0
      %v2570 = vpop.f32.mrf.mxu0
      %2571 = vdwg.mxu0
      %v2572 = vmul.f32 %v2559, 0.35355338
      %v2573 = vmul.f32 %v2562, 0.35355338
      %v2574 = vmul.f32 %v2567, 0.35355338
      %v2575 = vadd.f32 %v2572, %v819
      %v2576 = vadd.f32 %v2573, %v819
      %v2577 = vadd.f32 %v2574, %v819
      %v2578 = vsel %vm1499, %v2575, -inf
      %2579 = vmax.xlane.f32.xlu0 %v2578
      %v2580 = vpop.xlane.xlu0 %2579
      %v2581 = vsel %vm1499, %v2576, -inf
      %2582 = vmax.xlane.f32.xlu0 %v2581
      %v2583 = vpop.xlane.xlu0 %2582
      %v2584 = vsel %vm1499, %v2577, -inf
      %2585 = vmax.xlane.f32.xlu0 %v2584
      %v2586 = vpop.xlane.xlu0 %2585
      %v2587 = vsub.f32 %v2575, %v2580
      %v2588 = vsub.f32 %v2576, %v2583
      %v2589 = vsub.f32 %v2577, %v2586
      %v2590 = vmul.f32 %v2587, 1.442695
      %v2591 = vpow.pop %v2590
      %v2592 = vmul.f32 %v2588, 1.442695
      %v2593 = vpow.pop %v2592
      %v2594 = vmul.f32 %v2589, 1.442695
      %v2595 = vpow.pop %v2594
      %v2596 = vsel %vm1499, %v2591, 0.0
      %2597 = vadd.xlane.f32.xlu0 %v2596
      %v2598 = vpop.xlane.xlu0 %2597
      %v2599 = vsel %vm1499, %v2593, 0.0
      %2600 = vadd.xlane.f32.xlu0 %v2599
      %v2601 = vpop.xlane.xlu0 %2600
      %v2602 = vsel %vm1499, %v2595, 0.0
      %2603 = vadd.xlane.f32.xlu0 %v2602
      %v2604 = vpop.xlane.xlu0 %2603
      %v2605 = vrcp.pop %v2598
      %v2606 = vrcp.pop %v2601
      %v2607 = vrcp.pop %v2604
      %v2608 = vmul.f32 %v2591, %v2605
      %v2609 = vmul.f32 %v2593, %v2606
      %v2610 = vmul.f32 %v2595, %v2607
      %v2611 = vpack.c.bf16 %v2609, %v2608
      %v2612 = vpack.c.bf16 %v2610, %v2610
      %v2613 = vpack.c.bf16 %v2498, %v2495
      %v2614 = vpack.c.bf16 %v2503, %v2503
      %v2616 = vsel %vm1499, %v2611, 0
      %v2619 = vsel %vm1499, %v2612, 0
      %v2622 = vsel %vm1543, %v2614, 0
      %2624 = vmatprep.subr.bf16.mxu0 0
      %2625 = vmatpush1.bf16.msra.mxu0 0
      %2626 = vmatprep.subr.bf16.mxu0 0
      %2627 = vmatpush1.bf16.msra.mxu0 0
      %2628 = vmatprep.subr.bf16.mxu0 0
      %2629 = vmatpush1.bf16.msra.mxu0 0
      %2630 = vmatprep.subr.bf16.mxu0 0
      %2631 = vmatpush1.bf16.msra.mxu0 0
      %2632 = vmatprep.subr.bf16.mxu0 0
      %2633 = vmatpush1.bf16.msra.mxu0 0
      %2634 = vmatprep.subr.bf16.mxu0 0
      %2635 = vmatpush1.bf16.msra.mxu0 0
      %2636 = vmatprep.subr.bf16.mxu0 0
      %2637 = vmatpush1.bf16.msra.mxu0 %v2622
      %2638 = vmatprep.subr.bf16.mxu0 0
      %2639 = vmatpush1.bf16.msra.mxu0 %v2613
      %2640 = vmatprep.subr.bf16.mxu0 0
      %2641 = vmatpush2.bf16.msra.mxu0 0
      %2642 = vmatprep.subr.bf16.mxu0 0
      %2643 = vmatpush2.bf16.msra.mxu0 0
      %2644 = vmatprep.subr.bf16.mxu0 0
      %2645 = vmatpush2.bf16.msra.mxu0 0
      %2646 = vmatprep.subr.bf16.mxu0 0
      %2647 = vmatpush2.bf16.msra.mxu0 0
      %2648 = vmatprep.subr.bf16.mxu0 0
      %2649 = vmatpush2.bf16.msra.mxu0 0
      %2650 = vmatprep.subr.bf16.mxu0 0
      %2651 = vmatpush2.bf16.msra.mxu0 0
      %2652 = vmatprep.subr.bf16.mxu0 0
      %2653 = vmatpush2.bf16.msra.mxu0 0
      %2654 = vmatprep.subr.bf16.mxu0 0
      %2655 = vmatpush2.bf16.msra.mxu0 0
      %2656 = vmatprep.mubr.bf16.mxu0 0
      %2657 = vmatmul.mubr.bf16.gmra.mxu0 %v2616
      %v2658 = vpop.f32.mrf.mxu0
      %v2659 = vadd.f32 0.0, %v2658
      %v2660 = vpop.f32.mrf.mxu0
      %v2661 = vpop.f32.mrf.mxu0
      %v2662 = vadd.f32 0.0, %v2661
      %v2663 = vpop.f32.mrf.mxu0
      %2664 = vmatprep.mubr.bf16.mxu0 0
      %2665 = vmatmul.mubr.bf16.gmra.mxu0 %v2619
      %v2666 = vpop.f32.mrf.mxu0
      %v2667 = vadd.f32 0.0, %v2666
      %v2668 = vpop.f32.mrf.mxu0
      %v2669 = vpop.f32.mrf.mxu0
      %v2670 = vpop.f32.mrf.mxu0
      %2671 = vdwg.mxu0
      %2675 = vrot.lane.b32.xlu0 %v1941, 8
      %v2676 = vpop.permute.xlu0 %2675
      %2677 = vrot.lane.b32.xlu0 %v1944, 8
      %v2678 = vpop.permute.xlu0 %2677
      %2679 = vrot.lane.b32.xlu0 %v1949, 8
      %v2680 = vpop.permute.xlu0 %2679
      %2687 = vrot.lane.b32.xlu0 %v2300, 16
      %v2688 = vpop.permute.xlu0 %2687
      %2689 = vrot.lane.b32.xlu0 %v2303, 16
      %v2690 = vpop.permute.xlu0 %2689
      %2691 = vrot.lane.b32.xlu0 %v2308, 16
      %v2692 = vpop.permute.xlu0 %2691
      %2699 = vrot.lane.b32.xlu0 %v2659, 24
      %v2700 = vpop.permute.xlu0 %2699
      %2701 = vrot.lane.b32.xlu0 %v2662, 24
      %v2702 = vpop.permute.xlu0 %2701
      %2703 = vrot.lane.b32.xlu0 %v2667, 24
      %v2704 = vpop.permute.xlu0 %2703
      %v2708 = vsel %vm1432, %v1582, %v2676
      %v2709 = vsel %vm1432, %v1585, %v2678
      %v2710 = vsel %vm1432, %v1590, %v2680
      %vm2711 = vcmask 130048
      %v2712 = vsel %vm2711, %v2708, %v2688
      %v2713 = vsel %vm2711, %v2709, %v2690
      %v2714 = vsel %vm2711, %v2710, %v2692
      %v2715 = vsel %vm1499, %v2712, %v2700
      %v2716 = vsel %vm1499, %v2713, %v2702
      %v2717 = vsel %vm1499, %v2714, %v2704
      %v2718 = vld [vmem:[%s14] sm:$0xf]
      %v2719 = vld [vmem:[%s14 + $0x4] sm:$0xf]
      %v2720 = vld [vmem:[%s14 + $0x8] sm:$0xf]
      %v2721 = vld [vmem:[%s14 + $0xc] sm:$0xf]
      %v2722 = vpack.c.bf16 %v2716, %v2715
      %v2723 = vpack.c.bf16 %v2717, %v2717
      %v2728 = vunpack.c.l.b16 %v2718
      %v2729 = vunpack.c.l.b16 %v2719
      %v2730 = vunpack.c.l.b16 %v2720
      %v2731 = vunpack.c.l.b16 %v2721
      %v2732 = vpack.c.b16 %v2729, %v2728
      %v2733 = vpack.c.b16 %v2731, %v2730
      %v2737 = vsel %vm1081, %v2722, 0
      %v2740 = vsel %vm1081, %v2723, 0
      %2742 = vmatprep.subr.bf16.mxu0 0
      %2743 = vmatpush1.bf16.msra.mxu0 0
      %2744 = vmatprep.subr.bf16.mxu0 0
      %2745 = vmatpush1.bf16.msra.mxu0 0
      %2746 = vmatprep.subr.bf16.mxu0 0
      %2747 = vmatpush1.bf16.msra.mxu0 0
      %2748 = vmatprep.subr.bf16.mxu0 0
      %2749 = vmatpush1.bf16.msra.mxu0 0
      %2750 = vmatprep.subr.bf16.mxu0 0
      %2751 = vmatpush1.bf16.msra.mxu0 0
      %2752 = vmatprep.subr.bf16.mxu0 0
      %2753 = vmatpush1.bf16.msra.mxu0 0
      %2754 = vmatprep.subr.bf16.mxu0 0
      %2755 = vmatpush1.bf16.msra.mxu0 %v2733
      %2756 = vmatprep.subr.bf16.mxu0 0
      %2757 = vmatpush1.bf16.msra.mxu0 %v2732
      %2758 = vmatprep.subr.bf16.mxu0 0
      %2759 = vmatpush2.bf16.msra.mxu0 0
      %2760 = vmatprep.subr.bf16.mxu0 0
      %2761 = vmatpush2.bf16.msra.mxu0 0
      %2762 = vmatprep.subr.bf16.mxu0 0
      %2763 = vmatpush2.bf16.msra.mxu0 0
      %2764 = vmatprep.subr.bf16.mxu0 0
      %2765 = vmatpush2.bf16.msra.mxu0 0
      %2766 = vmatprep.subr.bf16.mxu0 0
      %2767 = vmatpush2.bf16.msra.mxu0 0
      %2768 = vmatprep.subr.bf16.mxu0 0
      %2769 = vmatpush2.bf16.msra.mxu0 0
      %2770 = vmatprep.subr.bf16.mxu0 0
      %2771 = vmatpush2.bf16.msra.mxu0 0
      %2772 = vmatprep.subr.bf16.mxu0 0
      %2773 = vmatpush2.bf16.msra.mxu0 0
      %2774 = vmatprep.mubr.bf16.mxu0 0
      %2775 = vmatmul.mubr.bf16.gmra.mxu0 %v2737
      %v2776 = vpop.f32.mrf.mxu0
      %v2777 = vadd.f32 0.0, %v2776
      %v2778 = vpop.f32.mrf.mxu0
      %v2779 = vpop.f32.mrf.mxu0
      %v2780 = vadd.f32 0.0, %v2779
      %v2781 = vpop.f32.mrf.mxu0
      %2782 = vmatprep.mubr.bf16.mxu0 0
      %2783 = vmatmul.mubr.bf16.gmra.mxu0 %v2740
      %v2784 = vpop.f32.mrf.mxu0
      %v2785 = vadd.f32 0.0, %v2784
      %v2786 = vpop.f32.mrf.mxu0
      %v2787 = vpop.f32.mrf.mxu0
      %v2788 = vpop.f32.mrf.mxu0
      %2789 = vdwg.mxu0
      %v2790 = vadd.f32 %v1166, %v2777
      %v2791 = vadd.f32 %v1167, %v2780
      %v2792 = vadd.f32 %v1168, %v2785
      %v2793 = vld [vmem:[%s15] sm:$0x1]
      %v2795 = vlaneseq
      %v2796 = vshrl.u32 %v2795, 7
      %v2797 = vsub.s32 0, %v2796
      %v2798 = vrot.slane %v2793, %v2797
      %v2800 = vadd.f32 %v2790, %v2798
      %v2801 = vadd.f32 %v2791, %v2798
      %v2802 = vadd.f32 %v2792, %v2798
      %v2803 = vld [vmem:[%s16] sm:$0x1]
      %v2804 = vld [vmem:[%s17] sm:$0x1]
      %v2805 = vsel %vm1081, %v2800, 0.0
      %2806 = vadd.xlane.f32.xlu0 %v2805
      %v2807 = vpop.xlane.xlu0 %2806
      %v2808 = vsel %vm1081, %v2801, 0.0
      %2809 = vadd.xlane.f32.xlu0 %v2808
      %v2810 = vpop.xlane.xlu0 %2809
      %v2811 = vsel %vm1081, %v2802, 0.0
      %2812 = vadd.xlane.f32.xlu0 %v2811
      %v2813 = vpop.xlane.xlu0 %2812
      %v2814 = vmul.f32 %v2807, %v1091
      %v2815 = vmul.f32 %v2810, %v1091
      %v2816 = vmul.f32 %v2813, %v1091
      %v2817 = vsub.f32 %v2800, %v2814
      %v2818 = vsub.f32 %v2801, %v2815
      %v2819 = vsub.f32 %v2802, %v2816
      %v2820 = vmul.f32 %v2817, %v2817
      %v2821 = vmul.f32 %v2818, %v2818
      %v2822 = vmul.f32 %v2819, %v2819
      %v2823 = vsel %vm1081, %v2820, 0.0
      %2824 = vadd.xlane.f32.xlu0 %v2823
      %v2825 = vpop.xlane.xlu0 %2824
      %v2826 = vsel %vm1081, %v2821, 0.0
      %2827 = vadd.xlane.f32.xlu0 %v2826
      %v2828 = vpop.xlane.xlu0 %2827
      %v2829 = vsel %vm1081, %v2822, 0.0
      %2830 = vadd.xlane.f32.xlu0 %v2829
      %v2831 = vpop.xlane.xlu0 %2830
      %v2832 = vmul.f32 %v2825, %v1091
      %v2833 = vmul.f32 %v2828, %v1091
      %v2834 = vmul.f32 %v2831, %v1091
      %v2835 = vadd.f32 %v2832, 1e-05
      %v2836 = vadd.f32 %v2833, 1e-05
      %v2837 = vadd.f32 %v2834, 1e-05
      %v2838 = vrsqrt.pop %v2835
      %v2839 = vrsqrt.pop %v2836
      %v2840 = vrsqrt.pop %v2837
      %v2841 = vmul.f32 %v2817, %v2838
      %v2842 = vmul.f32 %v2818, %v2839
      %v2843 = vmul.f32 %v2819, %v2840
      %v2845 = vlaneseq
      %v2846 = vshrl.u32 %v2845, 7
      %v2847 = vsub.s32 0, %v2846
      %v2848 = vrot.slane %v2803, %v2847
      %v2850 = vmul.f32 %v2841, %v2848
      %v2851 = vmul.f32 %v2842, %v2848
      %v2852 = vmul.f32 %v2843, %v2848
      %v2854 = vlaneseq
      %v2855 = vshrl.u32 %v2854, 7
      %v2856 = vsub.s32 0, %v2855
      %v2857 = vrot.slane %v2804, %v2856
      %v2859 = vadd.f32 %v2850, %v2857
      %v2860 = vadd.f32 %v2851, %v2857
      %v2861 = vadd.f32 %v2852, %v2857
      %v2862 = vld [vmem:[%s18] sm:$0xf]
      %v2863 = vld [vmem:[%s18 + $0x4] sm:$0xf]
      %v2864 = vld [vmem:[%s18 + $0x8] sm:$0xf]
      %v2865 = vld [vmem:[%s18 + $0xc] sm:$0xf]
      %v2866 = vpack.c.bf16 %v2860, %v2859
      %v2867 = vpack.c.bf16 %v2861, %v2861
      %v2868 = vld [vmem:[%s19] sm:$0x1]
      %v2870 = vlaneseq
      %v2871 = vshrl.u32 %v2870, 7
      %v2872 = vsub.s32 0, %v2871
      %v2873 = vrot.slane %v2868, %v2872
      %v2879 = vunpack.c.l.b16 %v2862
      %v2880 = vunpack.c.l.b16 %v2863
      %v2881 = vunpack.c.l.b16 %v2864
      %v2882 = vunpack.c.l.b16 %v2865
      %v2883 = vpack.c.b16 %v2880, %v2879
      %v2884 = vpack.c.b16 %v2882, %v2881
      %v2888 = vsel %vm1081, %v2866, 0
      %v2891 = vsel %vm1081, %v2867, 0
      %2893 = vmatprep.subr.bf16.mxu0 0
      %2894 = vmatpush1.bf16.msra.mxu0 0
      %2895 = vmatprep.subr.bf16.mxu0 0
      %2896 = vmatpush1.bf16.msra.mxu0 0
      %2897 = vmatprep.subr.bf16.mxu0 0
      %2898 = vmatpush1.bf16.msra.mxu0 0
      %2899 = vmatprep.subr.bf16.mxu0 0
      %2900 = vmatpush1.bf16.msra.mxu0 0
      %2901 = vmatprep.subr.bf16.mxu0 0
      %2902 = vmatpush1.bf16.msra.mxu0 0
      %2903 = vmatprep.subr.bf16.mxu0 0
      %2904 = vmatpush1.bf16.msra.mxu0 0
      %2905 = vmatprep.subr.bf16.mxu0 0
      %2906 = vmatpush1.bf16.msra.mxu0 %v2884
      %2907 = vmatprep.subr.bf16.mxu0 0
      %2908 = vmatpush1.bf16.msra.mxu0 %v2883
      %2909 = vmatprep.subr.bf16.mxu0 0
      %2910 = vmatpush2.bf16.msra.mxu0 0
      %2911 = vmatprep.subr.bf16.mxu0 0
      %2912 = vmatpush2.bf16.msra.mxu0 0
      %2913 = vmatprep.subr.bf16.mxu0 0
      %2914 = vmatpush2.bf16.msra.mxu0 0
      %2915 = vmatprep.subr.bf16.mxu0 0
      %2916 = vmatpush2.bf16.msra.mxu0 0
      %2917 = vmatprep.subr.bf16.mxu0 0
      %2918 = vmatpush2.bf16.msra.mxu0 0
      %2919 = vmatprep.subr.bf16.mxu0 0
      %2920 = vmatpush2.bf16.msra.mxu0 0
      %2921 = vmatprep.subr.bf16.mxu0 0
      %2922 = vmatpush2.bf16.msra.mxu0 0
      %2923 = vmatprep.subr.bf16.mxu0 0
      %2924 = vmatpush2.bf16.msra.mxu0 0
      %2925 = vmatprep.mubr.bf16.mxu0 0
      %2926 = vmatmul.mubr.bf16.gmra.mxu0 %v2888
      %v2927 = vpop.f32.mrf.mxu0
      %v2928 = vadd.f32 %v2873, %v2927
      %v2929 = vpop.f32.mrf.mxu0
      %v2930 = vpop.f32.mrf.mxu0
      %v2931 = vadd.f32 %v2873, %v2930
      %v2932 = vpop.f32.mrf.mxu0
      %2933 = vmatprep.mubr.bf16.mxu0 0
      %2934 = vmatmul.mubr.bf16.gmra.mxu0 %v2891
      %v2935 = vpop.f32.mrf.mxu0
      %v2936 = vadd.f32 %v2873, %v2935
      %v2937 = vpop.f32.mrf.mxu0
      %v2938 = vpop.f32.mrf.mxu0
      %v2939 = vpop.f32.mrf.mxu0
      %2940 = vdwg.mxu0
      %v2941 = vmul.f32 %v2928, %v2928
      %v2942 = vmul.f32 %v2931, %v2931
      %v2943 = vmul.f32 %v2936, %v2936
      %v2944 = vmul.f32 %v2928, %v2941
      %v2945 = vmul.f32 %v2931, %v2942
      %v2946 = vmul.f32 %v2936, %v2943
      %v2947 = vmul.f32 %v2944, 0.044715
      %v2948 = vmul.f32 %v2945, 0.044715
      %v2949 = vmul.f32 %v2946, 0.044715
      %v2950 = vadd.f32 %v2928, %v2947
      %v2951 = vadd.f32 %v2931, %v2948
      %v2952 = vadd.f32 %v2936, %v2949
      %v2953 = vmul.f32 %v2950, 0.7978846
      %v2954 = vmul.f32 %v2951, 0.7978846
      %v2955 = vmul.f32 %v2952, 0.7978846
      %v2956 = vtanh.pop %v2953
      %v2957 = vtanh.pop %v2954
      %v2958 = vtanh.pop %v2955
      %v2959 = vadd.f32 %v2956, 1.0
      %v2960 = vadd.f32 %v2957, 1.0
      %v2961 = vadd.f32 %v2958, 1.0
      %v2962 = vmul.f32 %v2959, 0.5
      %v2963 = vmul.f32 %v2960, 0.5
      %v2964 = vmul.f32 %v2961, 0.5
      %v2965 = vmul.f32 %v2928, %v2962
      %v2966 = vmul.f32 %v2931, %v2963
      %v2967 = vmul.f32 %v2936, %v2964
      %v2968 = vld [vmem:[%s20] sm:$0xf]
      %v2969 = vld [vmem:[%s20 + $0x4] sm:$0xf]
      %v2970 = vld [vmem:[%s20 + $0x8] sm:$0xf]
      %v2971 = vld [vmem:[%s20 + $0xc] sm:$0xf]
      %v2972 = vld [vmem:[%s20 + $0x10] sm:$0xf]
      %v2973 = vld [vmem:[%s20 + $0x14] sm:$0xf]
      %v2974 = vld [vmem:[%s20 + $0x18] sm:$0xf]
      %v2975 = vld [vmem:[%s20 + $0x1c] sm:$0xf]
      %v2976 = vpack.c.bf16 %v2966, %v2965
      %v2977 = vpack.c.bf16 %v2967, %v2967
      %v2986 = vunpack.c.l.b16 %v2968
      %v2987 = vunpack.c.l.b16 %v2969
      %v2988 = vunpack.c.l.b16 %v2970
      %v2989 = vunpack.c.l.b16 %v2971
      %v2990 = vunpack.c.l.b16 %v2972
      %v2991 = vunpack.c.l.b16 %v2973
      %v2992 = vunpack.c.l.b16 %v2974
      %v2993 = vunpack.c.l.b16 %v2975
      %v2994 = vpack.c.b16 %v2987, %v2986
      %v2995 = vpack.c.b16 %v2989, %v2988
      %v2996 = vpack.c.b16 %v2991, %v2990
      %v2997 = vpack.c.b16 %v2993, %v2992
      %v3003 = vsel %vm828, %v2976, 0
      %v3006 = vsel %vm828, %v2977, 0
      %3008 = vmatprep.subr.bf16.mxu0 0
      %3009 = vmatpush1.bf16.msra.mxu0 0
      %3010 = vmatprep.subr.bf16.mxu0 0
      %3011 = vmatpush1.bf16.msra.mxu0 0
      %3012 = vmatprep.subr.bf16.mxu0 0
      %3013 = vmatpush1.bf16.msra.mxu0 0
      %3014 = vmatprep.subr.bf16.mxu0 0
      %3015 = vmatpush1.bf16.msra.mxu0 0
      %3016 = vmatprep.subr.bf16.mxu0 0
      %3017 = vmatpush1.bf16.msra.mxu0 %v2997
      %3018 = vmatprep.subr.bf16.mxu0 0
      %3019 = vmatpush1.bf16.msra.mxu0 %v2996
      %3020 = vmatprep.subr.bf16.mxu0 0
      %3021 = vmatpush1.bf16.msra.mxu0 %v2995
      %3022 = vmatprep.subr.bf16.mxu0 0
      %3023 = vmatpush1.bf16.msra.mxu0 %v2994
      %3024 = vmatprep.subr.bf16.mxu0 0
      %3025 = vmatpush2.bf16.msra.mxu0 0
      %3026 = vmatprep.subr.bf16.mxu0 0
      %3027 = vmatpush2.bf16.msra.mxu0 0
      %3028 = vmatprep.subr.bf16.mxu0 0
      %3029 = vmatpush2.bf16.msra.mxu0 0
      %3030 = vmatprep.subr.bf16.mxu0 0
      %3031 = vmatpush2.bf16.msra.mxu0 0
      %3032 = vmatprep.subr.bf16.mxu0 0
      %3033 = vmatpush2.bf16.msra.mxu0 0
      %3034 = vmatprep.subr.bf16.mxu0 0
      %3035 = vmatpush2.bf16.msra.mxu0 0
      %3036 = vmatprep.subr.bf16.mxu0 0
      %3037 = vmatpush2.bf16.msra.mxu0 0
      %3038 = vmatprep.subr.bf16.mxu0 0
      %3039 = vmatpush2.bf16.msra.mxu0 0
      %3040 = vmatprep.mubr.bf16.mxu0 0
      %3041 = vmatmul.mubr.bf16.gmra.mxu0 %v3003
      %v3042 = vpop.f32.mrf.mxu0
      %v3043 = vadd.f32 0.0, %v3042
      %v3044 = vpop.f32.mrf.mxu0
      %v3045 = vpop.f32.mrf.mxu0
      %v3046 = vadd.f32 0.0, %v3045
      %v3047 = vpop.f32.mrf.mxu0
      %3048 = vmatprep.mubr.bf16.mxu0 0
      %3049 = vmatmul.mubr.bf16.gmra.mxu0 %v3006
      %v3050 = vpop.f32.mrf.mxu0
      %v3051 = vadd.f32 0.0, %v3050
      %v3052 = vpop.f32.mrf.mxu0
      %v3053 = vpop.f32.mrf.mxu0
      %v3054 = vpop.f32.mrf.mxu0
      %3055 = vdwg.mxu0
      %v3056 = vadd.f32 %v2800, %v3043
      %v3057 = vadd.f32 %v2801, %v3046
      %v3058 = vadd.f32 %v2802, %v3051
      %v3059 = vld [vmem:[%s21] sm:$0x1]
      %v3061 = vlaneseq
      %v3062 = vshrl.u32 %v3061, 7
      %v3063 = vsub.s32 0, %v3062
      %v3064 = vrot.slane %v3059, %v3063
      %v3066 = vadd.f32 %v3056, %v3064
      %v3067 = vadd.f32 %v3057, %v3064
      %v3068 = vadd.f32 %v3058, %v3064
      %s3069 = scalar_lea.vmem %s9, 1
      %v3070 = vld [vmem:[%s3069] sm:$0x1]
      %s3071 = scalar_lea.vmem %s10, 1
      %v3072 = vld [vmem:[%s3071] sm:$0x1]
      %v3073 = vsel %vm1081, %v3066, 0.0
      %3074 = vadd.xlane.f32.xlu0 %v3073
      %v3075 = vpop.xlane.xlu0 %3074
      %v3076 = vsel %vm1081, %v3067, 0.0
      %3077 = vadd.xlane.f32.xlu0 %v3076
      %v3078 = vpop.xlane.xlu0 %3077
      %v3079 = vsel %vm1081, %v3068, 0.0
      %3080 = vadd.xlane.f32.xlu0 %v3079
      %v3081 = vpop.xlane.xlu0 %3080
      %v3082 = vmul.f32 %v3075, %v1091
      %v3083 = vmul.f32 %v3078, %v1091
      %v3084 = vmul.f32 %v3081, %v1091
      %v3085 = vsub.f32 %v3066, %v3082
      %v3086 = vsub.f32 %v3067, %v3083
      %v3087 = vsub.f32 %v3068, %v3084
      %v3088 = vmul.f32 %v3085, %v3085
      %v3089 = vmul.f32 %v3086, %v3086
      %v3090 = vmul.f32 %v3087, %v3087
      %v3091 = vsel %vm1081, %v3088, 0.0
      %3092 = vadd.xlane.f32.xlu0 %v3091
      %v3093 = vpop.xlane.xlu0 %3092
      %v3094 = vsel %vm1081, %v3089, 0.0
      %3095 = vadd.xlane.f32.xlu0 %v3094
      %v3096 = vpop.xlane.xlu0 %3095
      %v3097 = vsel %vm1081, %v3090, 0.0
      %3098 = vadd.xlane.f32.xlu0 %v3097
      %v3099 = vpop.xlane.xlu0 %3098
      %v3100 = vmul.f32 %v3093, %v1091
      %v3101 = vmul.f32 %v3096, %v1091
      %v3102 = vmul.f32 %v3099, %v1091
      %v3103 = vadd.f32 %v3100, 1e-05
      %v3104 = vadd.f32 %v3101, 1e-05
      %v3105 = vadd.f32 %v3102, 1e-05
      %v3106 = vrsqrt.pop %v3103
      %v3107 = vrsqrt.pop %v3104
      %v3108 = vrsqrt.pop %v3105
      %v3109 = vmul.f32 %v3085, %v3106
      %v3110 = vmul.f32 %v3086, %v3107
      %v3111 = vmul.f32 %v3087, %v3108
      %v3113 = vlaneseq
      %v3114 = vshrl.u32 %v3113, 7
      %v3115 = vsub.s32 0, %v3114
      %v3116 = vrot.slane %v3070, %v3115
      %v3118 = vmul.f32 %v3109, %v3116
      %v3119 = vmul.f32 %v3110, %v3116
      %v3120 = vmul.f32 %v3111, %v3116
      %v3122 = vlaneseq
      %v3123 = vshrl.u32 %v3122, 7
      %v3124 = vsub.s32 0, %v3123
      %v3125 = vrot.slane %v3072, %v3124
      %v3127 = vadd.f32 %v3118, %v3125
      %v3128 = vadd.f32 %v3119, %v3125
      %v3129 = vadd.f32 %v3120, %v3125
      %s3130 = scalar_lea.vmem %s11, 64
      %v3131 = vld [vmem:[%s3130] sm:$0xf]
      %v3132 = vld [vmem:[%s3130 + $0x4] sm:$0xf]
      %v3133 = vld [vmem:[%s3130 + $0x8] sm:$0xf]
      %v3134 = vld [vmem:[%s3130 + $0xc] sm:$0xf]
      %v3135 = vpack.c.bf16 %v3128, %v3127
      %v3136 = vpack.c.bf16 %v3129, %v3129
      %v3141 = vunpack.c.l.b16 %v3131
      %v3142 = vunpack.c.l.b16 %v3132
      %v3143 = vunpack.c.l.b16 %v3133
      %v3144 = vunpack.c.l.b16 %v3134
      %v3145 = vpack.c.b16 %v3142, %v3141
      %v3146 = vpack.c.b16 %v3144, %v3143
      %v3150 = vsel %vm1081, %v3135, 0
      %v3153 = vsel %vm1081, %v3136, 0
      %3155 = vmatprep.subr.bf16.mxu0 0
      %3156 = vmatpush1.bf16.msra.mxu0 0
      %3157 = vmatprep.subr.bf16.mxu0 0
      %3158 = vmatpush1.bf16.msra.mxu0 0
      %3159 = vmatprep.subr.bf16.mxu0 0
      %3160 = vmatpush1.bf16.msra.mxu0 0
      %3161 = vmatprep.subr.bf16.mxu0 0
      %3162 = vmatpush1.bf16.msra.mxu0 0
      %3163 = vmatprep.subr.bf16.mxu0 0
      %3164 = vmatpush1.bf16.msra.mxu0 0
      %3165 = vmatprep.subr.bf16.mxu0 0
      %3166 = vmatpush1.bf16.msra.mxu0 0
      %3167 = vmatprep.subr.bf16.mxu0 0
      %3168 = vmatpush1.bf16.msra.mxu0 %v3146
      %3169 = vmatprep.subr.bf16.mxu0 0
      %3170 = vmatpush1.bf16.msra.mxu0 %v3145
      %3171 = vmatprep.subr.bf16.mxu0 0
      %3172 = vmatpush2.bf16.msra.mxu0 0
      %3173 = vmatprep.subr.bf16.mxu0 0
      %3174 = vmatpush2.bf16.msra.mxu0 0
      %3175 = vmatprep.subr.bf16.mxu0 0
      %3176 = vmatpush2.bf16.msra.mxu0 0
      %3177 = vmatprep.subr.bf16.mxu0 0
      %3178 = vmatpush2.bf16.msra.mxu0 0
      %3179 = vmatprep.subr.bf16.mxu0 0
      %3180 = vmatpush2.bf16.msra.mxu0 0
      %3181 = vmatprep.subr.bf16.mxu0 0
      %3182 = vmatpush2.bf16.msra.mxu0 0
      %3183 = vmatprep.subr.bf16.mxu0 0
      %3184 = vmatpush2.bf16.msra.mxu0 0
      %3185 = vmatprep.subr.bf16.mxu0 0
      %3186 = vmatpush2.bf16.msra.mxu0 0
      %3187 = vmatprep.mubr.bf16.mxu0 0
      %3188 = vmatmul.mubr.bf16.gmra.mxu0 %v3150
      %v3189 = vpop.f32.mrf.mxu0
      %v3190 = vadd.f32 0.0, %v3189
      %v3191 = vpop.f32.mrf.mxu0
      %v3192 = vpop.f32.mrf.mxu0
      %v3193 = vadd.f32 0.0, %v3192
      %v3194 = vpop.f32.mrf.mxu0
      %3195 = vmatprep.mubr.bf16.mxu0 0
      %3196 = vmatmul.mubr.bf16.gmra.mxu0 %v3153
      %v3197 = vpop.f32.mrf.mxu0
      %v3198 = vadd.f32 0.0, %v3197
      %v3199 = vpop.f32.mrf.mxu0
      %v3200 = vpop.f32.mrf.mxu0
      %v3201 = vpop.f32.mrf.mxu0
      %3202 = vdwg.mxu0
      %s3203 = scalar_lea.vmem %s12, 64
      %v3204 = vld [vmem:[%s3203] sm:$0xf]
      %v3205 = vld [vmem:[%s3203 + $0x4] sm:$0xf]
      %v3206 = vld [vmem:[%s3203 + $0x8] sm:$0xf]
      %v3207 = vld [vmem:[%s3203 + $0xc] sm:$0xf]
      %v3212 = vunpack.c.l.b16 %v3204
      %v3213 = vunpack.c.l.b16 %v3205
      %v3214 = vunpack.c.l.b16 %v3206
      %v3215 = vunpack.c.l.b16 %v3207
      %v3216 = vpack.c.b16 %v3213, %v3212
      %v3217 = vpack.c.b16 %v3215, %v3214
      %3220 = vmatprep.subr.bf16.mxu0 0
      %3221 = vmatpush1.bf16.msra.mxu0 0
      %3222 = vmatprep.subr.bf16.mxu0 0
      %3223 = vmatpush1.bf16.msra.mxu0 0
      %3224 = vmatprep.subr.bf16.mxu0 0
      %3225 = vmatpush1.bf16.msra.mxu0 0
      %3226 = vmatprep.subr.bf16.mxu0 0
      %3227 = vmatpush1.bf16.msra.mxu0 0
      %3228 = vmatprep.subr.bf16.mxu0 0
      %3229 = vmatpush1.bf16.msra.mxu0 0
      %3230 = vmatprep.subr.bf16.mxu0 0
      %3231 = vmatpush1.bf16.msra.mxu0 0
      %3232 = vmatprep.subr.bf16.mxu0 0
      %3233 = vmatpush1.bf16.msra.mxu0 %v3217
      %3234 = vmatprep.subr.bf16.mxu0 0
      %3235 = vmatpush1.bf16.msra.mxu0 %v3216
      %3236 = vmatprep.subr.bf16.mxu0 0
      %3237 = vmatpush2.bf16.msra.mxu0 0
      %3238 = vmatprep.subr.bf16.mxu0 0
      %3239 = vmatpush2.bf16.msra.mxu0 0
      %3240 = vmatprep.subr.bf16.mxu0 0
      %3241 = vmatpush2.bf16.msra.mxu0 0
      %3242 = vmatprep.subr.bf16.mxu0 0
      %3243 = vmatpush2.bf16.msra.mxu0 0
      %3244 = vmatprep.subr.bf16.mxu0 0
      %3245 = vmatpush2.bf16.msra.mxu0 0
      %3246 = vmatprep.subr.bf16.mxu0 0
      %3247 = vmatpush2.bf16.msra.mxu0 0
      %3248 = vmatprep.subr.bf16.mxu0 0
      %3249 = vmatpush2.bf16.msra.mxu0 0
      %3250 = vmatprep.subr.bf16.mxu0 0
      %3251 = vmatpush2.bf16.msra.mxu0 0
      %3252 = vmatprep.mubr.bf16.mxu0 0
      %3253 = vmatmul.mubr.bf16.gmra.mxu0 %v3150
      %v3254 = vpop.f32.mrf.mxu0
      %v3255 = vadd.f32 0.0, %v3254
      %v3256 = vpop.f32.mrf.mxu0
      %v3257 = vpop.f32.mrf.mxu0
      %v3258 = vadd.f32 0.0, %v3257
      %v3259 = vpop.f32.mrf.mxu0
      %3260 = vmatprep.mubr.bf16.mxu0 0
      %3261 = vmatmul.mubr.bf16.gmra.mxu0 %v3153
      %v3262 = vpop.f32.mrf.mxu0
      %v3263 = vadd.f32 0.0, %v3262
      %v3264 = vpop.f32.mrf.mxu0
      %v3265 = vpop.f32.mrf.mxu0
      %v3266 = vpop.f32.mrf.mxu0
      %3267 = vdwg.mxu0
      %s3268 = scalar_lea.vmem %s13, 64
      %v3269 = vld [vmem:[%s3268] sm:$0xf]
      %v3270 = vld [vmem:[%s3268 + $0x4] sm:$0xf]
      %v3271 = vld [vmem:[%s3268 + $0x8] sm:$0xf]
      %v3272 = vld [vmem:[%s3268 + $0xc] sm:$0xf]
      %v3277 = vunpack.c.l.b16 %v3269
      %v3278 = vunpack.c.l.b16 %v3270
      %v3279 = vunpack.c.l.b16 %v3271
      %v3280 = vunpack.c.l.b16 %v3272
      %v3281 = vpack.c.b16 %v3278, %v3277
      %v3282 = vpack.c.b16 %v3280, %v3279
      %3285 = vmatprep.subr.bf16.mxu0 0
      %3286 = vmatpush1.bf16.msra.mxu0 0
      %3287 = vmatprep.subr.bf16.mxu0 0
      %3288 = vmatpush1.bf16.msra.mxu0 0
      %3289 = vmatprep.subr.bf16.mxu0 0
      %3290 = vmatpush1.bf16.msra.mxu0 0
      %3291 = vmatprep.subr.bf16.mxu0 0
      %3292 = vmatpush1.bf16.msra.mxu0 0
      %3293 = vmatprep.subr.bf16.mxu0 0
      %3294 = vmatpush1.bf16.msra.mxu0 0
      %3295 = vmatprep.subr.bf16.mxu0 0
      %3296 = vmatpush1.bf16.msra.mxu0 0
      %3297 = vmatprep.subr.bf16.mxu0 0
      %3298 = vmatpush1.bf16.msra.mxu0 %v3282
      %3299 = vmatprep.subr.bf16.mxu0 0
      %3300 = vmatpush1.bf16.msra.mxu0 %v3281
      %3301 = vmatprep.subr.bf16.mxu0 0
      %3302 = vmatpush2.bf16.msra.mxu0 0
      %3303 = vmatprep.subr.bf16.mxu0 0
      %3304 = vmatpush2.bf16.msra.mxu0 0
      %3305 = vmatprep.subr.bf16.mxu0 0
      %3306 = vmatpush2.bf16.msra.mxu0 0
      %3307 = vmatprep.subr.bf16.mxu0 0
      %3308 = vmatpush2.bf16.msra.mxu0 0
      %3309 = vmatprep.subr.bf16.mxu0 0
      %3310 = vmatpush2.bf16.msra.mxu0 0
      %3311 = vmatprep.subr.bf16.mxu0 0
      %3312 = vmatpush2.bf16.msra.mxu0 0
      %3313 = vmatprep.subr.bf16.mxu0 0
      %3314 = vmatpush2.bf16.msra.mxu0 0
      %3315 = vmatprep.subr.bf16.mxu0 0
      %3316 = vmatpush2.bf16.msra.mxu0 0
      %3317 = vmatprep.mubr.bf16.mxu0 0
      %3318 = vmatmul.mubr.bf16.gmra.mxu0 %v3150
      %v3319 = vpop.f32.mrf.mxu0
      %v3320 = vadd.f32 0.0, %v3319
      %v3321 = vpop.f32.mrf.mxu0
      %v3322 = vpop.f32.mrf.mxu0
      %v3323 = vadd.f32 0.0, %v3322
      %v3324 = vpop.f32.mrf.mxu0
      %3325 = vmatprep.mubr.bf16.mxu0 0
      %3326 = vmatmul.mubr.bf16.gmra.mxu0 %v3153
      %v3327 = vpop.f32.mrf.mxu0
      %v3328 = vadd.f32 0.0, %v3327
      %v3329 = vpop.f32.mrf.mxu0
      %v3330 = vpop.f32.mrf.mxu0
      %v3331 = vpop.f32.mrf.mxu0
      %3332 = vdwg.mxu0
      %v3333 = vpack.c.bf16 %v3193, %v3190
      %v3334 = vpack.c.bf16 %v3198, %v3198
      %v3335 = vpack.c.bf16 %v3258, %v3255
      %v3336 = vpack.c.bf16 %v3263, %v3263
      %v3338 = vsel %vm1432, %v3333, 0
      %v3341 = vsel %vm1432, %v3334, 0
      %v3344 = vsel %vm1432, %v3335, 0
      %v3347 = vsel %vm1432, %v3336, 0
      %3349 = vmatprep.subr.bf16.mxu0 0
      %3350 = vmatpush1.bf16.xpose.msra.mxu0 0
      %3351 = vmatprep.subr.bf16.mxu0 0
      %3352 = vmatpush1.bf16.xpose.msra.mxu0 0
      %3353 = vmatprep.subr.bf16.mxu0 0
      %3354 = vmatpush1.bf16.xpose.msra.mxu0 0
      %3355 = vmatprep.subr.bf16.mxu0 0
      %3356 = vmatpush1.bf16.xpose.msra.mxu0 0
      %3357 = vmatprep.subr.bf16.mxu0 0
      %3358 = vmatpush1.bf16.xpose.msra.mxu0 0
      %3359 = vmatprep.subr.bf16.mxu0 0
      %3360 = vmatpush1.bf16.xpose.msra.mxu0 0
      %3361 = vmatprep.subr.bf16.mxu0 0
      %3362 = vmatpush1.bf16.xpose.msra.mxu0 %v3347
      %3363 = vmatprep.subr.bf16.mxu0 0
      %3364 = vmatpush1.bf16.xpose.msra.mxu0 %v3344
      %3365 = vmatprep.subr.bf16.mxu0 0
      %3366 = vmatpush2.bf16.xpose.msra.mxu0 0
      %3367 = vmatprep.subr.bf16.mxu0 0
      %3368 = vmatpush2.bf16.xpose.msra.mxu0 0
      %3369 = vmatprep.subr.bf16.mxu0 0
      %3370 = vmatpush2.bf16.xpose.msra.mxu0 0
      %3371 = vmatprep.subr.bf16.mxu0 0
      %3372 = vmatpush2.bf16.xpose.msra.mxu0 0
      %3373 = vmatprep.subr.bf16.mxu0 0
      %3374 = vmatpush2.bf16.xpose.msra.mxu0 0
      %3375 = vmatprep.subr.bf16.mxu0 0
      %3376 = vmatpush2.bf16.xpose.msra.mxu0 0
      %3377 = vmatprep.subr.bf16.mxu0 0
      %3378 = vmatpush2.bf16.xpose.msra.mxu0 0
      %3379 = vmatprep.subr.bf16.mxu0 0
      %3380 = vmatpush2.bf16.xpose.msra.mxu0 0
      %3381 = vmatprep.mubr.bf16.mxu0 0
      %3382 = vmatmul.mubr.bf16.gmra.mxu0 %v3338
      %v3383 = vpop.f32.mrf.mxu0
      %v3384 = vadd.f32 0.0, %v3383
      %v3385 = vpop.f32.mrf.mxu0
      %v3386 = vpop.f32.mrf.mxu0
      %v3387 = vadd.f32 0.0, %v3386
      %v3388 = vpop.f32.mrf.mxu0
      %3389 = vmatprep.mubr.bf16.mxu0 0
      %3390 = vmatmul.mubr.bf16.gmra.mxu0 %v3341
      %v3391 = vpop.f32.mrf.mxu0
      %v3392 = vadd.f32 0.0, %v3391
      %v3393 = vpop.f32.mrf.mxu0
      %v3394 = vpop.f32.mrf.mxu0
      %v3395 = vpop.f32.mrf.mxu0
      %3396 = vdwg.mxu0
      %v3397 = vmul.f32 %v3384, 0.35355338
      %v3398 = vmul.f32 %v3387, 0.35355338
      %v3399 = vmul.f32 %v3392, 0.35355338
      %v3400 = vadd.f32 %v3397, %v819
      %v3401 = vadd.f32 %v3398, %v819
      %v3402 = vadd.f32 %v3399, %v819
      %v3403 = vsel %vm1499, %v3400, -inf
      %3404 = vmax.xlane.f32.xlu0 %v3403
      %v3405 = vpop.xlane.xlu0 %3404
      %v3406 = vsel %vm1499, %v3401, -inf
      %3407 = vmax.xlane.f32.xlu0 %v3406
      %v3408 = vpop.xlane.xlu0 %3407
      %v3409 = vsel %vm1499, %v3402, -inf
      %3410 = vmax.xlane.f32.xlu0 %v3409
      %v3411 = vpop.xlane.xlu0 %3410
      %v3412 = vsub.f32 %v3400, %v3405
      %v3413 = vsub.f32 %v3401, %v3408
      %v3414 = vsub.f32 %v3402, %v3411
      %v3415 = vmul.f32 %v3412, 1.442695
      %v3416 = vpow.pop %v3415
      %v3417 = vmul.f32 %v3413, 1.442695
      %v3418 = vpow.pop %v3417
      %v3419 = vmul.f32 %v3414, 1.442695
      %v3420 = vpow.pop %v3419
      %v3421 = vsel %vm1499, %v3416, 0.0
      %3422 = vadd.xlane.f32.xlu0 %v3421
      %v3423 = vpop.xlane.xlu0 %3422
      %v3424 = vsel %vm1499, %v3418, 0.0
      %3425 = vadd.xlane.f32.xlu0 %v3424
      %v3426 = vpop.xlane.xlu0 %3425
      %v3427 = vsel %vm1499, %v3420, 0.0
      %3428 = vadd.xlane.f32.xlu0 %v3427
      %v3429 = vpop.xlane.xlu0 %3428
      %v3430 = vrcp.pop %v3423
      %v3431 = vrcp.pop %v3426
      %v3432 = vrcp.pop %v3429
      %v3433 = vmul.f32 %v3416, %v3430
      %v3434 = vmul.f32 %v3418, %v3431
      %v3435 = vmul.f32 %v3420, %v3432
      %v3436 = vpack.c.bf16 %v3434, %v3433
      %v3437 = vpack.c.bf16 %v3435, %v3435
      %v3438 = vpack.c.bf16 %v3323, %v3320
      %v3439 = vpack.c.bf16 %v3328, %v3328
      %v3441 = vsel %vm1499, %v3436, 0
      %v3444 = vsel %vm1499, %v3437, 0
      %v3447 = vsel %vm1543, %v3439, 0
      %3449 = vmatprep.subr.bf16.mxu0 0
      %3450 = vmatpush1.bf16.msra.mxu0 0
      %3451 = vmatprep.subr.bf16.mxu0 0
      %3452 = vmatpush1.bf16.msra.mxu0 0
      %3453 = vmatprep.subr.bf16.mxu0 0
      %3454 = vmatpush1.bf16.msra.mxu0 0
      %3455 = vmatprep.subr.bf16.mxu0 0
      %3456 = vmatpush1.bf16.msra.mxu0 0
      %3457 = vmatprep.subr.bf16.mxu0 0
      %3458 = vmatpush1.bf16.msra.mxu0 0
      %3459 = vmatprep.subr.bf16.mxu0 0
      %3460 = vmatpush1.bf16.msra.mxu0 0
      %3461 = vmatprep.subr.bf16.mxu0 0
      %3462 = vmatpush1.bf16.msra.mxu0 %v3447
      %3463 = vmatprep.subr.bf16.mxu0 0
      %3464 = vmatpush1.bf16.msra.mxu0 %v3438
      %3465 = vmatprep.subr.bf16.mxu0 0
      %3466 = vmatpush2.bf16.msra.mxu0 0
      %3467 = vmatprep.subr.bf16.mxu0 0
      %3468 = vmatpush2.bf16.msra.mxu0 0
      %3469 = vmatprep.subr.bf16.mxu0 0
      %3470 = vmatpush2.bf16.msra.mxu0 0
      %3471 = vmatprep.subr.bf16.mxu0 0
      %3472 = vmatpush2.bf16.msra.mxu0 0
      %3473 = vmatprep.subr.bf16.mxu0 0
      %3474 = vmatpush2.bf16.msra.mxu0 0
      %3475 = vmatprep.subr.bf16.mxu0 0
      %3476 = vmatpush2.bf16.msra.mxu0 0
      %3477 = vmatprep.subr.bf16.mxu0 0
      %3478 = vmatpush2.bf16.msra.mxu0 0
      %3479 = vmatprep.subr.bf16.mxu0 0
      %3480 = vmatpush2.bf16.msra.mxu0 0
      %3481 = vmatprep.mubr.bf16.mxu0 0
      %3482 = vmatmul.mubr.bf16.gmra.mxu0 %v3441
      %v3483 = vpop.f32.mrf.mxu0
      %v3484 = vadd.f32 0.0, %v3483
      %v3485 = vpop.f32.mrf.mxu0
      %v3486 = vpop.f32.mrf.mxu0
      %v3487 = vadd.f32 0.0, %v3486
      %v3488 = vpop.f32.mrf.mxu0
      %3489 = vmatprep.mubr.bf16.mxu0 0
      %3490 = vmatmul.mubr.bf16.gmra.mxu0 %v3444
      %v3491 = vpop.f32.mrf.mxu0
      %v3492 = vadd.f32 0.0, %v3491
      %v3493 = vpop.f32.mrf.mxu0
      %v3494 = vpop.f32.mrf.mxu0
      %v3495 = vpop.f32.mrf.mxu0
      %3496 = vdwg.mxu0
      %s3497 = scalar_lea.vmem %s11, 80
      %v3498 = vld [vmem:[%s3497] sm:$0xf]
      %v3499 = vld [vmem:[%s3497 + $0x4] sm:$0xf]
      %v3500 = vld [vmem:[%s3497 + $0x8] sm:$0xf]
      %v3501 = vld [vmem:[%s3497 + $0xc] sm:$0xf]
      %v3506 = vunpack.c.l.b16 %v3498
      %v3507 = vunpack.c.l.b16 %v3499
      %v3508 = vunpack.c.l.b16 %v3500
      %v3509 = vunpack.c.l.b16 %v3501
      %v3510 = vpack.c.b16 %v3507, %v3506
      %v3511 = vpack.c.b16 %v3509, %v3508
      %3514 = vmatprep.subr.bf16.mxu0 0
      %3515 = vmatpush1.bf16.msra.mxu0 0
      %3516 = vmatprep.subr.bf16.mxu0 0
      %3517 = vmatpush1.bf16.msra.mxu0 0
      %3518 = vmatprep.subr.bf16.mxu0 0
      %3519 = vmatpush1.bf16.msra.mxu0 0
      %3520 = vmatprep.subr.bf16.mxu0 0
      %3521 = vmatpush1.bf16.msra.mxu0 0
      %3522 = vmatprep.subr.bf16.mxu0 0
      %3523 = vmatpush1.bf16.msra.mxu0 0
      %3524 = vmatprep.subr.bf16.mxu0 0
      %3525 = vmatpush1.bf16.msra.mxu0 0
      %3526 = vmatprep.subr.bf16.mxu0 0
      %3527 = vmatpush1.bf16.msra.mxu0 %v3511
      %3528 = vmatprep.subr.bf16.mxu0 0
      %3529 = vmatpush1.bf16.msra.mxu0 %v3510
      %3530 = vmatprep.subr.bf16.mxu0 0
      %3531 = vmatpush2.bf16.msra.mxu0 0
      %3532 = vmatprep.subr.bf16.mxu0 0
      %3533 = vmatpush2.bf16.msra.mxu0 0
      %3534 = vmatprep.subr.bf16.mxu0 0
      %3535 = vmatpush2.bf16.msra.mxu0 0
      %3536 = vmatprep.subr.bf16.mxu0 0
      %3537 = vmatpush2.bf16.msra.mxu0 0
      %3538 = vmatprep.subr.bf16.mxu0 0
      %3539 = vmatpush2.bf16.msra.mxu0 0
      %3540 = vmatprep.subr.bf16.mxu0 0
      %3541 = vmatpush2.bf16.msra.mxu0 0
      %3542 = vmatprep.subr.bf16.mxu0 0
      %3543 = vmatpush2.bf16.msra.mxu0 0
      %3544 = vmatprep.subr.bf16.mxu0 0
      %3545 = vmatpush2.bf16.msra.mxu0 0
      %3546 = vmatprep.mubr.bf16.mxu0 0
      %3547 = vmatmul.mubr.bf16.gmra.mxu0 %v3150
      %v3548 = vpop.f32.mrf.mxu0
      %v3549 = vadd.f32 0.0, %v3548
      %v3550 = vpop.f32.mrf.mxu0
      %v3551 = vpop.f32.mrf.mxu0
      %v3552 = vadd.f32 0.0, %v3551
      %v3553 = vpop.f32.mrf.mxu0
      %3554 = vmatprep.mubr.bf16.mxu0 0
      %3555 = vmatmul.mubr.bf16.gmra.mxu0 %v3153
      %v3556 = vpop.f32.mrf.mxu0
      %v3557 = vadd.f32 0.0, %v3556
      %v3558 = vpop.f32.mrf.mxu0
      %v3559 = vpop.f32.mrf.mxu0
      %v3560 = vpop.f32.mrf.mxu0
      %3561 = vdwg.mxu0
      %s3562 = scalar_lea.vmem %s12, 80
      %v3563 = vld [vmem:[%s3562] sm:$0xf]
      %v3564 = vld [vmem:[%s3562 + $0x4] sm:$0xf]
      %v3565 = vld [vmem:[%s3562 + $0x8] sm:$0xf]
      %v3566 = vld [vmem:[%s3562 + $0xc] sm:$0xf]
      %v3571 = vunpack.c.l.b16 %v3563
      %v3572 = vunpack.c.l.b16 %v3564
      %v3573 = vunpack.c.l.b16 %v3565
      %v3574 = vunpack.c.l.b16 %v3566
      %v3575 = vpack.c.b16 %v3572, %v3571
      %v3576 = vpack.c.b16 %v3574, %v3573
      %3579 = vmatprep.subr.bf16.mxu0 0
      %3580 = vmatpush1.bf16.msra.mxu0 0
      %3581 = vmatprep.subr.bf16.mxu0 0
      %3582 = vmatpush1.bf16.msra.mxu0 0
      %3583 = vmatprep.subr.bf16.mxu0 0
      %3584 = vmatpush1.bf16.msra.mxu0 0
      %3585 = vmatprep.subr.bf16.mxu0 0
      %3586 = vmatpush1.bf16.msra.mxu0 0
      %3587 = vmatprep.subr.bf16.mxu0 0
      %3588 = vmatpush1.bf16.msra.mxu0 0
      %3589 = vmatprep.subr.bf16.mxu0 0
      %3590 = vmatpush1.bf16.msra.mxu0 0
      %3591 = vmatprep.subr.bf16.mxu0 0
      %3592 = vmatpush1.bf16.msra.mxu0 %v3576
      %3593 = vmatprep.subr.bf16.mxu0 0
      %3594 = vmatpush1.bf16.msra.mxu0 %v3575
      %3595 = vmatprep.subr.bf16.mxu0 0
      %3596 = vmatpush2.bf16.msra.mxu0 0
      %3597 = vmatprep.subr.bf16.mxu0 0
      %3598 = vmatpush2.bf16.msra.mxu0 0
      %3599 = vmatprep.subr.bf16.mxu0 0
      %3600 = vmatpush2.bf16.msra.mxu0 0
      %3601 = vmatprep.subr.bf16.mxu0 0
      %3602 = vmatpush2.bf16.msra.mxu0 0
      %3603 = vmatprep.subr.bf16.mxu0 0
      %3604 = vmatpush2.bf16.msra.mxu0 0
      %3605 = vmatprep.subr.bf16.mxu0 0
      %3606 = vmatpush2.bf16.msra.mxu0 0
      %3607 = vmatprep.subr.bf16.mxu0 0
      %3608 = vmatpush2.bf16.msra.mxu0 0
      %3609 = vmatprep.subr.bf16.mxu0 0
      %3610 = vmatpush2.bf16.msra.mxu0 0
      %3611 = vmatprep.mubr.bf16.mxu0 0
      %3612 = vmatmul.mubr.bf16.gmra.mxu0 %v3150
      %v3613 = vpop.f32.mrf.mxu0
      %v3614 = vadd.f32 0.0, %v3613
      %v3615 = vpop.f32.mrf.mxu0
      %v3616 = vpop.f32.mrf.mxu0
      %v3617 = vadd.f32 0.0, %v3616
      %v3618 = vpop.f32.mrf.mxu0
      %3619 = vmatprep.mubr.bf16.mxu0 0
      %3620 = vmatmul.mubr.bf16.gmra.mxu0 %v3153
      %v3621 = vpop.f32.mrf.mxu0
      %v3622 = vadd.f32 0.0, %v3621
      %v3623 = vpop.f32.mrf.mxu0
      %v3624 = vpop.f32.mrf.mxu0
      %v3625 = vpop.f32.mrf.mxu0
      %3626 = vdwg.mxu0
      %s3627 = scalar_lea.vmem %s13, 80
      %v3628 = vld [vmem:[%s3627] sm:$0xf]
      %v3629 = vld [vmem:[%s3627 + $0x4] sm:$0xf]
      %v3630 = vld [vmem:[%s3627 + $0x8] sm:$0xf]
      %v3631 = vld [vmem:[%s3627 + $0xc] sm:$0xf]
      %v3636 = vunpack.c.l.b16 %v3628
      %v3637 = vunpack.c.l.b16 %v3629
      %v3638 = vunpack.c.l.b16 %v3630
      %v3639 = vunpack.c.l.b16 %v3631
      %v3640 = vpack.c.b16 %v3637, %v3636
      %v3641 = vpack.c.b16 %v3639, %v3638
      %3644 = vmatprep.subr.bf16.mxu0 0
      %3645 = vmatpush1.bf16.msra.mxu0 0
      %3646 = vmatprep.subr.bf16.mxu0 0
      %3647 = vmatpush1.bf16.msra.mxu0 0
      %3648 = vmatprep.subr.bf16.mxu0 0
      %3649 = vmatpush1.bf16.msra.mxu0 0
      %3650 = vmatprep.subr.bf16.mxu0 0
      %3651 = vmatpush1.bf16.msra.mxu0 0
      %3652 = vmatprep.subr.bf16.mxu0 0
      %3653 = vmatpush1.bf16.msra.mxu0 0
      %3654 = vmatprep.subr.bf16.mxu0 0
      %3655 = vmatpush1.bf16.msra.mxu0 0
      %3656 = vmatprep.subr.bf16.mxu0 0
      %3657 = vmatpush1.bf16.msra.mxu0 %v3641
      %3658 = vmatprep.subr.bf16.mxu0 0
      %3659 = vmatpush1.bf16.msra.mxu0 %v3640
      %3660 = vmatprep.subr.bf16.mxu0 0
      %3661 = vmatpush2.bf16.msra.mxu0 0
      %3662 = vmatprep.subr.bf16.mxu0 0
      %3663 = vmatpush2.bf16.msra.mxu0 0
      %3664 = vmatprep.subr.bf16.mxu0 0
      %3665 = vmatpush2.bf16.msra.mxu0 0
      %3666 = vmatprep.subr.bf16.mxu0 0
      %3667 = vmatpush2.bf16.msra.mxu0 0
      %3668 = vmatprep.subr.bf16.mxu0 0
      %3669 = vmatpush2.bf16.msra.mxu0 0
      %3670 = vmatprep.subr.bf16.mxu0 0
      %3671 = vmatpush2.bf16.msra.mxu0 0
      %3672 = vmatprep.subr.bf16.mxu0 0
      %3673 = vmatpush2.bf16.msra.mxu0 0
      %3674 = vmatprep.subr.bf16.mxu0 0
      %3675 = vmatpush2.bf16.msra.mxu0 0
      %3676 = vmatprep.mubr.bf16.mxu0 0
      %3677 = vmatmul.mubr.bf16.gmra.mxu0 %v3150
      %v3678 = vpop.f32.mrf.mxu0
      %v3679 = vadd.f32 0.0, %v3678
      %v3680 = vpop.f32.mrf.mxu0
      %v3681 = vpop.f32.mrf.mxu0
      %v3682 = vadd.f32 0.0, %v3681
      %v3683 = vpop.f32.mrf.mxu0
      %3684 = vmatprep.mubr.bf16.mxu0 0
      %3685 = vmatmul.mubr.bf16.gmra.mxu0 %v3153
      %v3686 = vpop.f32.mrf.mxu0
      %v3687 = vadd.f32 0.0, %v3686
      %v3688 = vpop.f32.mrf.mxu0
      %v3689 = vpop.f32.mrf.mxu0
      %v3690 = vpop.f32.mrf.mxu0
      %3691 = vdwg.mxu0
      %v3692 = vpack.c.bf16 %v3552, %v3549
      %v3693 = vpack.c.bf16 %v3557, %v3557
      %v3694 = vpack.c.bf16 %v3617, %v3614
      %v3695 = vpack.c.bf16 %v3622, %v3622
      %v3697 = vsel %vm1432, %v3692, 0
      %v3700 = vsel %vm1432, %v3693, 0
      %v3703 = vsel %vm1432, %v3694, 0
      %v3706 = vsel %vm1432, %v3695, 0
      %3708 = vmatprep.subr.bf16.mxu0 0
      %3709 = vmatpush1.bf16.xpose.msra.mxu0 0
      %3710 = vmatprep.subr.bf16.mxu0 0
      %3711 = vmatpush1.bf16.xpose.msra.mxu0 0
      %3712 = vmatprep.subr.bf16.mxu0 0
      %3713 = vmatpush1.bf16.xpose.msra.mxu0 0
      %3714 = vmatprep.subr.bf16.mxu0 0
      %3715 = vmatpush1.bf16.xpose.msra.mxu0 0
      %3716 = vmatprep.subr.bf16.mxu0 0
      %3717 = vmatpush1.bf16.xpose.msra.mxu0 0
      %3718 = vmatprep.subr.bf16.mxu0 0
      %3719 = vmatpush1.bf16.xpose.msra.mxu0 0
      %3720 = vmatprep.subr.bf16.mxu0 0
      %3721 = vmatpush1.bf16.xpose.msra.mxu0 %v3706
      %3722 = vmatprep.subr.bf16.mxu0 0
      %3723 = vmatpush1.bf16.xpose.msra.mxu0 %v3703
      %3724 = vmatprep.subr.bf16.mxu0 0
      %3725 = vmatpush2.bf16.xpose.msra.mxu0 0
      %3726 = vmatprep.subr.bf16.mxu0 0
      %3727 = vmatpush2.bf16.xpose.msra.mxu0 0
      %3728 = vmatprep.subr.bf16.mxu0 0
      %3729 = vmatpush2.bf16.xpose.msra.mxu0 0
      %3730 = vmatprep.subr.bf16.mxu0 0
      %3731 = vmatpush2.bf16.xpose.msra.mxu0 0
      %3732 = vmatprep.subr.bf16.mxu0 0
      %3733 = vmatpush2.bf16.xpose.msra.mxu0 0
      %3734 = vmatprep.subr.bf16.mxu0 0
      %3735 = vmatpush2.bf16.xpose.msra.mxu0 0
      %3736 = vmatprep.subr.bf16.mxu0 0
      %3737 = vmatpush2.bf16.xpose.msra.mxu0 0
      %3738 = vmatprep.subr.bf16.mxu0 0
      %3739 = vmatpush2.bf16.xpose.msra.mxu0 0
      %3740 = vmatprep.mubr.bf16.mxu0 0
      %3741 = vmatmul.mubr.bf16.gmra.mxu0 %v3697
      %v3742 = vpop.f32.mrf.mxu0
      %v3743 = vadd.f32 0.0, %v3742
      %v3744 = vpop.f32.mrf.mxu0
      %v3745 = vpop.f32.mrf.mxu0
      %v3746 = vadd.f32 0.0, %v3745
      %v3747 = vpop.f32.mrf.mxu0
      %3748 = vmatprep.mubr.bf16.mxu0 0
      %3749 = vmatmul.mubr.bf16.gmra.mxu0 %v3700
      %v3750 = vpop.f32.mrf.mxu0
      %v3751 = vadd.f32 0.0, %v3750
      %v3752 = vpop.f32.mrf.mxu0
      %v3753 = vpop.f32.mrf.mxu0
      %v3754 = vpop.f32.mrf.mxu0
      %3755 = vdwg.mxu0
      %v3756 = vmul.f32 %v3743, 0.35355338
      %v3757 = vmul.f32 %v3746, 0.35355338
      %v3758 = vmul.f32 %v3751, 0.35355338
      %v3759 = vadd.f32 %v3756, %v819
      %v3760 = vadd.f32 %v3757, %v819
      %v3761 = vadd.f32 %v3758, %v819
      %v3762 = vsel %vm1499, %v3759, -inf
      %3763 = vmax.xlane.f32.xlu0 %v3762
      %v3764 = vpop.xlane.xlu0 %3763
      %v3765 = vsel %vm1499, %v3760, -inf
      %3766 = vmax.xlane.f32.xlu0 %v3765
      %v3767 = vpop.xlane.xlu0 %3766
      %v3768 = vsel %vm1499, %v3761, -inf
      %3769 = vmax.xlane.f32.xlu0 %v3768
      %v3770 = vpop.xlane.xlu0 %3769
      %v3771 = vsub.f32 %v3759, %v3764
      %v3772 = vsub.f32 %v3760, %v3767
      %v3773 = vsub.f32 %v3761, %v3770
      %v3774 = vmul.f32 %v3771, 1.442695
      %v3775 = vpow.pop %v3774
      %v3776 = vmul.f32 %v3772, 1.442695
      %v3777 = vpow.pop %v3776
      %v3778 = vmul.f32 %v3773, 1.442695
      %v3779 = vpow.pop %v3778
      %v3780 = vsel %vm1499, %v3775, 0.0
      %3781 = vadd.xlane.f32.xlu0 %v3780
      %v3782 = vpop.xlane.xlu0 %3781
      %v3783 = vsel %vm1499, %v3777, 0.0
      %3784 = vadd.xlane.f32.xlu0 %v3783
      %v3785 = vpop.xlane.xlu0 %3784
      %v3786 = vsel %vm1499, %v3779, 0.0
      %3787 = vadd.xlane.f32.xlu0 %v3786
      %v3788 = vpop.xlane.xlu0 %3787
      %v3789 = vrcp.pop %v3782
      %v3790 = vrcp.pop %v3785
      %v3791 = vrcp.pop %v3788
      %v3792 = vmul.f32 %v3775, %v3789
      %v3793 = vmul.f32 %v3777, %v3790
      %v3794 = vmul.f32 %v3779, %v3791
      %v3795 = vpack.c.bf16 %v3793, %v3792
      %v3796 = vpack.c.bf16 %v3794, %v3794
      %v3797 = vpack.c.bf16 %v3682, %v3679
      %v3798 = vpack.c.bf16 %v3687, %v3687
      %v3800 = vsel %vm1499, %v3795, 0
      %v3803 = vsel %vm1499, %v3796, 0
      %v3806 = vsel %vm1543, %v3798, 0
      %3808 = vmatprep.subr.bf16.mxu0 0
      %3809 = vmatpush1.bf16.msra.mxu0 0
      %3810 = vmatprep.subr.bf16.mxu0 0
      %3811 = vmatpush1.bf16.msra.mxu0 0
      %3812 = vmatprep.subr.bf16.mxu0 0
      %3813 = vmatpush1.bf16.msra.mxu0 0
      %3814 = vmatprep.subr.bf16.mxu0 0
      %3815 = vmatpush1.bf16.msra.mxu0 0
      %3816 = vmatprep.subr.bf16.mxu0 0
      %3817 = vmatpush1.bf16.msra.mxu0 0
      %3818 = vmatprep.subr.bf16.mxu0 0
      %3819 = vmatpush1.bf16.msra.mxu0 0
      %3820 = vmatprep.subr.bf16.mxu0 0
      %3821 = vmatpush1.bf16.msra.mxu0 %v3806
      %3822 = vmatprep.subr.bf16.mxu0 0
      %3823 = vmatpush1.bf16.msra.mxu0 %v3797
      %3824 = vmatprep.subr.bf16.mxu0 0
      %3825 = vmatpush2.bf16.msra.mxu0 0
      %3826 = vmatprep.subr.bf16.mxu0 0
      %3827 = vmatpush2.bf16.msra.mxu0 0
      %3828 = vmatprep.subr.bf16.mxu0 0
      %3829 = vmatpush2.bf16.msra.mxu0 0
      %3830 = vmatprep.subr.bf16.mxu0 0
      %3831 = vmatpush2.bf16.msra.mxu0 0
      %3832 = vmatprep.subr.bf16.mxu0 0
      %3833 = vmatpush2.bf16.msra.mxu0 0
      %3834 = vmatprep.subr.bf16.mxu0 0
      %3835 = vmatpush2.bf16.msra.mxu0 0
      %3836 = vmatprep.subr.bf16.mxu0 0
      %3837 = vmatpush2.bf16.msra.mxu0 0
      %3838 = vmatprep.subr.bf16.mxu0 0
      %3839 = vmatpush2.bf16.msra.mxu0 0
      %3840 = vmatprep.mubr.bf16.mxu0 0
      %3841 = vmatmul.mubr.bf16.gmra.mxu0 %v3800
      %v3842 = vpop.f32.mrf.mxu0
      %v3843 = vadd.f32 0.0, %v3842
      %v3844 = vpop.f32.mrf.mxu0
      %v3845 = vpop.f32.mrf.mxu0
      %v3846 = vadd.f32 0.0, %v3845
      %v3847 = vpop.f32.mrf.mxu0
      %3848 = vmatprep.mubr.bf16.mxu0 0
      %3849 = vmatmul.mubr.bf16.gmra.mxu0 %v3803
      %v3850 = vpop.f32.mrf.mxu0
      %v3851 = vadd.f32 0.0, %v3850
      %v3852 = vpop.f32.mrf.mxu0
      %v3853 = vpop.f32.mrf.mxu0
      %v3854 = vpop.f32.mrf.mxu0
      %3855 = vdwg.mxu0
      %s3856 = scalar_lea.vmem %s11, 96
      %v3857 = vld [vmem:[%s3856] sm:$0xf]
      %v3858 = vld [vmem:[%s3856 + $0x4] sm:$0xf]
      %v3859 = vld [vmem:[%s3856 + $0x8] sm:$0xf]
      %v3860 = vld [vmem:[%s3856 + $0xc] sm:$0xf]
      %v3865 = vunpack.c.l.b16 %v3857
      %v3866 = vunpack.c.l.b16 %v3858
      %v3867 = vunpack.c.l.b16 %v3859
      %v3868 = vunpack.c.l.b16 %v3860
      %v3869 = vpack.c.b16 %v3866, %v3865
      %v3870 = vpack.c.b16 %v3868, %v3867
      %3873 = vmatprep.subr.bf16.mxu0 0
      %3874 = vmatpush1.bf16.msra.mxu0 0
      %3875 = vmatprep.subr.bf16.mxu0 0
      %3876 = vmatpush1.bf16.msra.mxu0 0
      %3877 = vmatprep.subr.bf16.mxu0 0
      %3878 = vmatpush1.bf16.msra.mxu0 0
      %3879 = vmatprep.subr.bf16.mxu0 0
      %3880 = vmatpush1.bf16.msra.mxu0 0
      %3881 = vmatprep.subr.bf16.mxu0 0
      %3882 = vmatpush1.bf16.msra.mxu0 0
      %3883 = vmatprep.subr.bf16.mxu0 0
      %3884 = vmatpush1.bf16.msra.mxu0 0
      %3885 = vmatprep.subr.bf16.mxu0 0
      %3886 = vmatpush1.bf16.msra.mxu0 %v3870
      %3887 = vmatprep.subr.bf16.mxu0 0
      %3888 = vmatpush1.bf16.msra.mxu0 %v3869
      %3889 = vmatprep.subr.bf16.mxu0 0
      %3890 = vmatpush2.bf16.msra.mxu0 0
      %3891 = vmatprep.subr.bf16.mxu0 0
      %3892 = vmatpush2.bf16.msra.mxu0 0
      %3893 = vmatprep.subr.bf16.mxu0 0
      %3894 = vmatpush2.bf16.msra.mxu0 0
      %3895 = vmatprep.subr.bf16.mxu0 0
      %3896 = vmatpush2.bf16.msra.mxu0 0
      %3897 = vmatprep.subr.bf16.mxu0 0
      %3898 = vmatpush2.bf16.msra.mxu0 0
      %3899 = vmatprep.subr.bf16.mxu0 0
      %3900 = vmatpush2.bf16.msra.mxu0 0
      %3901 = vmatprep.subr.bf16.mxu0 0
      %3902 = vmatpush2.bf16.msra.mxu0 0
      %3903 = vmatprep.subr.bf16.mxu0 0
      %3904 = vmatpush2.bf16.msra.mxu0 0
      %3905 = vmatprep.mubr.bf16.mxu0 0
      %3906 = vmatmul.mubr.bf16.gmra.mxu0 %v3150
      %v3907 = vpop.f32.mrf.mxu0
      %v3908 = vadd.f32 0.0, %v3907
      %v3909 = vpop.f32.mrf.mxu0
      %v3910 = vpop.f32.mrf.mxu0
      %v3911 = vadd.f32 0.0, %v3910
      %v3912 = vpop.f32.mrf.mxu0
      %3913 = vmatprep.mubr.bf16.mxu0 0
      %3914 = vmatmul.mubr.bf16.gmra.mxu0 %v3153
      %v3915 = vpop.f32.mrf.mxu0
      %v3916 = vadd.f32 0.0, %v3915
      %v3917 = vpop.f32.mrf.mxu0
      %v3918 = vpop.f32.mrf.mxu0
      %v3919 = vpop.f32.mrf.mxu0
      %3920 = vdwg.mxu0
      %s3921 = scalar_lea.vmem %s12, 96
      %v3922 = vld [vmem:[%s3921] sm:$0xf]
      %v3923 = vld [vmem:[%s3921 + $0x4] sm:$0xf]
      %v3924 = vld [vmem:[%s3921 + $0x8] sm:$0xf]
      %v3925 = vld [vmem:[%s3921 + $0xc] sm:$0xf]
      %v3930 = vunpack.c.l.b16 %v3922
      %v3931 = vunpack.c.l.b16 %v3923
      %v3932 = vunpack.c.l.b16 %v3924
      %v3933 = vunpack.c.l.b16 %v3925
      %v3934 = vpack.c.b16 %v3931, %v3930
      %v3935 = vpack.c.b16 %v3933, %v3932
      %3938 = vmatprep.subr.bf16.mxu0 0
      %3939 = vmatpush1.bf16.msra.mxu0 0
      %3940 = vmatprep.subr.bf16.mxu0 0
      %3941 = vmatpush1.bf16.msra.mxu0 0
      %3942 = vmatprep.subr.bf16.mxu0 0
      %3943 = vmatpush1.bf16.msra.mxu0 0
      %3944 = vmatprep.subr.bf16.mxu0 0
      %3945 = vmatpush1.bf16.msra.mxu0 0
      %3946 = vmatprep.subr.bf16.mxu0 0
      %3947 = vmatpush1.bf16.msra.mxu0 0
      %3948 = vmatprep.subr.bf16.mxu0 0
      %3949 = vmatpush1.bf16.msra.mxu0 0
      %3950 = vmatprep.subr.bf16.mxu0 0
      %3951 = vmatpush1.bf16.msra.mxu0 %v3935
      %3952 = vmatprep.subr.bf16.mxu0 0
      %3953 = vmatpush1.bf16.msra.mxu0 %v3934
      %3954 = vmatprep.subr.bf16.mxu0 0
      %3955 = vmatpush2.bf16.msra.mxu0 0
      %3956 = vmatprep.subr.bf16.mxu0 0
      %3957 = vmatpush2.bf16.msra.mxu0 0
      %3958 = vmatprep.subr.bf16.mxu0 0
      %3959 = vmatpush2.bf16.msra.mxu0 0
      %3960 = vmatprep.subr.bf16.mxu0 0
      %3961 = vmatpush2.bf16.msra.mxu0 0
      %3962 = vmatprep.subr.bf16.mxu0 0
      %3963 = vmatpush2.bf16.msra.mxu0 0
      %3964 = vmatprep.subr.bf16.mxu0 0
      %3965 = vmatpush2.bf16.msra.mxu0 0
      %3966 = vmatprep.subr.bf16.mxu0 0
      %3967 = vmatpush2.bf16.msra.mxu0 0
      %3968 = vmatprep.subr.bf16.mxu0 0
      %3969 = vmatpush2.bf16.msra.mxu0 0
      %3970 = vmatprep.mubr.bf16.mxu0 0
      %3971 = vmatmul.mubr.bf16.gmra.mxu0 %v3150
      %v3972 = vpop.f32.mrf.mxu0
      %v3973 = vadd.f32 0.0, %v3972
      %v3974 = vpop.f32.mrf.mxu0
      %v3975 = vpop.f32.mrf.mxu0
      %v3976 = vadd.f32 0.0, %v3975
      %v3977 = vpop.f32.mrf.mxu0
      %3978 = vmatprep.mubr.bf16.mxu0 0
      %3979 = vmatmul.mubr.bf16.gmra.mxu0 %v3153
      %v3980 = vpop.f32.mrf.mxu0
      %v3981 = vadd.f32 0.0, %v3980
      %v3982 = vpop.f32.mrf.mxu0
      %v3983 = vpop.f32.mrf.mxu0
      %v3984 = vpop.f32.mrf.mxu0
      %3985 = vdwg.mxu0
      %s3986 = scalar_lea.vmem %s13, 96
      %v3987 = vld [vmem:[%s3986] sm:$0xf]
      %v3988 = vld [vmem:[%s3986 + $0x4] sm:$0xf]
      %v3989 = vld [vmem:[%s3986 + $0x8] sm:$0xf]
      %v3990 = vld [vmem:[%s3986 + $0xc] sm:$0xf]
      %v3995 = vunpack.c.l.b16 %v3987
      %v3996 = vunpack.c.l.b16 %v3988
      %v3997 = vunpack.c.l.b16 %v3989
      %v3998 = vunpack.c.l.b16 %v3990
      %v3999 = vpack.c.b16 %v3996, %v3995
      %v4000 = vpack.c.b16 %v3998, %v3997
      %4003 = vmatprep.subr.bf16.mxu0 0
      %4004 = vmatpush1.bf16.msra.mxu0 0
      %4005 = vmatprep.subr.bf16.mxu0 0
      %4006 = vmatpush1.bf16.msra.mxu0 0
      %4007 = vmatprep.subr.bf16.mxu0 0
      %4008 = vmatpush1.bf16.msra.mxu0 0
      %4009 = vmatprep.subr.bf16.mxu0 0
      %4010 = vmatpush1.bf16.msra.mxu0 0
      %4011 = vmatprep.subr.bf16.mxu0 0
      %4012 = vmatpush1.bf16.msra.mxu0 0
      %4013 = vmatprep.subr.bf16.mxu0 0
      %4014 = vmatpush1.bf16.msra.mxu0 0
      %4015 = vmatprep.subr.bf16.mxu0 0
      %4016 = vmatpush1.bf16.msra.mxu0 %v4000
      %4017 = vmatprep.subr.bf16.mxu0 0
      %4018 = vmatpush1.bf16.msra.mxu0 %v3999
      %4019 = vmatprep.subr.bf16.mxu0 0
      %4020 = vmatpush2.bf16.msra.mxu0 0
      %4021 = vmatprep.subr.bf16.mxu0 0
      %4022 = vmatpush2.bf16.msra.mxu0 0
      %4023 = vmatprep.subr.bf16.mxu0 0
      %4024 = vmatpush2.bf16.msra.mxu0 0
      %4025 = vmatprep.subr.bf16.mxu0 0
      %4026 = vmatpush2.bf16.msra.mxu0 0
      %4027 = vmatprep.subr.bf16.mxu0 0
      %4028 = vmatpush2.bf16.msra.mxu0 0
      %4029 = vmatprep.subr.bf16.mxu0 0
      %4030 = vmatpush2.bf16.msra.mxu0 0
      %4031 = vmatprep.subr.bf16.mxu0 0
      %4032 = vmatpush2.bf16.msra.mxu0 0
      %4033 = vmatprep.subr.bf16.mxu0 0
      %4034 = vmatpush2.bf16.msra.mxu0 0
      %4035 = vmatprep.mubr.bf16.mxu0 0
      %4036 = vmatmul.mubr.bf16.gmra.mxu0 %v3150
      %v4037 = vpop.f32.mrf.mxu0
      %v4038 = vadd.f32 0.0, %v4037
      %v4039 = vpop.f32.mrf.mxu0
      %v4040 = vpop.f32.mrf.mxu0
      %v4041 = vadd.f32 0.0, %v4040
      %v4042 = vpop.f32.mrf.mxu0
      %4043 = vmatprep.mubr.bf16.mxu0 0
      %4044 = vmatmul.mubr.bf16.gmra.mxu0 %v3153
      %v4045 = vpop.f32.mrf.mxu0
      %v4046 = vadd.f32 0.0, %v4045
      %v4047 = vpop.f32.mrf.mxu0
      %v4048 = vpop.f32.mrf.mxu0
      %v4049 = vpop.f32.mrf.mxu0
      %4050 = vdwg.mxu0
      %v4051 = vpack.c.bf16 %v3911, %v3908
      %v4052 = vpack.c.bf16 %v3916, %v3916
      %v4053 = vpack.c.bf16 %v3976, %v3973
      %v4054 = vpack.c.bf16 %v3981, %v3981
      %v4056 = vsel %vm1432, %v4051, 0
      %v4059 = vsel %vm1432, %v4052, 0
      %v4062 = vsel %vm1432, %v4053, 0
      %v4065 = vsel %vm1432, %v4054, 0
      %4067 = vmatprep.subr.bf16.mxu0 0
      %4068 = vmatpush1.bf16.xpose.msra.mxu0 0
      %4069 = vmatprep.subr.bf16.mxu0 0
      %4070 = vmatpush1.bf16.xpose.msra.mxu0 0
      %4071 = vmatprep.subr.bf16.mxu0 0
      %4072 = vmatpush1.bf16.xpose.msra.mxu0 0
      %4073 = vmatprep.subr.bf16.mxu0 0
      %4074 = vmatpush1.bf16.xpose.msra.mxu0 0
      %4075 = vmatprep.subr.bf16.mxu0 0
      %4076 = vmatpush1.bf16.xpose.msra.mxu0 0
      %4077 = vmatprep.subr.bf16.mxu0 0
      %4078 = vmatpush1.bf16.xpose.msra.mxu0 0
      %4079 = vmatprep.subr.bf16.mxu0 0
      %4080 = vmatpush1.bf16.xpose.msra.mxu0 %v4065
      %4081 = vmatprep.subr.bf16.mxu0 0
      %4082 = vmatpush1.bf16.xpose.msra.mxu0 %v4062
      %4083 = vmatprep.subr.bf16.mxu0 0
      %4084 = vmatpush2.bf16.xpose.msra.mxu0 0
      %4085 = vmatprep.subr.bf16.mxu0 0
      %4086 = vmatpush2.bf16.xpose.msra.mxu0 0
      %4087 = vmatprep.subr.bf16.mxu0 0
      %4088 = vmatpush2.bf16.xpose.msra.mxu0 0
      %4089 = vmatprep.subr.bf16.mxu0 0
      %4090 = vmatpush2.bf16.xpose.msra.mxu0 0
      %4091 = vmatprep.subr.bf16.mxu0 0
      %4092 = vmatpush2.bf16.xpose.msra.mxu0 0
      %4093 = vmatprep.subr.bf16.mxu0 0
      %4094 = vmatpush2.bf16.xpose.msra.mxu0 0
      %4095 = vmatprep.subr.bf16.mxu0 0
      %4096 = vmatpush2.bf16.xpose.msra.mxu0 0
      %4097 = vmatprep.subr.bf16.mxu0 0
      %4098 = vmatpush2.bf16.xpose.msra.mxu0 0
      %4099 = vmatprep.mubr.bf16.mxu0 0
      %4100 = vmatmul.mubr.bf16.gmra.mxu0 %v4056
      %v4101 = vpop.f32.mrf.mxu0
      %v4102 = vadd.f32 0.0, %v4101
      %v4103 = vpop.f32.mrf.mxu0
      %v4104 = vpop.f32.mrf.mxu0
      %v4105 = vadd.f32 0.0, %v4104
      %v4106 = vpop.f32.mrf.mxu0
      %4107 = vmatprep.mubr.bf16.mxu0 0
      %4108 = vmatmul.mubr.bf16.gmra.mxu0 %v4059
      %v4109 = vpop.f32.mrf.mxu0
      %v4110 = vadd.f32 0.0, %v4109
      %v4111 = vpop.f32.mrf.mxu0
      %v4112 = vpop.f32.mrf.mxu0
      %v4113 = vpop.f32.mrf.mxu0
      %4114 = vdwg.mxu0
      %v4115 = vmul.f32 %v4102, 0.35355338
      %v4116 = vmul.f32 %v4105, 0.35355338
      %v4117 = vmul.f32 %v4110, 0.35355338
      %v4118 = vadd.f32 %v4115, %v819
      %v4119 = vadd.f32 %v4116, %v819
      %v4120 = vadd.f32 %v4117, %v819
      %v4121 = vsel %vm1499, %v4118, -inf
      %4122 = vmax.xlane.f32.xlu0 %v4121
      %v4123 = vpop.xlane.xlu0 %4122
      %v4124 = vsel %vm1499, %v4119, -inf
      %4125 = vmax.xlane.f32.xlu0 %v4124
      %v4126 = vpop.xlane.xlu0 %4125
      %v4127 = vsel %vm1499, %v4120, -inf
      %4128 = vmax.xlane.f32.xlu0 %v4127
      %v4129 = vpop.xlane.xlu0 %4128
      %v4130 = vsub.f32 %v4118, %v4123
      %v4131 = vsub.f32 %v4119, %v4126
      %v4132 = vsub.f32 %v4120, %v4129
      %v4133 = vmul.f32 %v4130, 1.442695
      %v4134 = vpow.pop %v4133
      %v4135 = vmul.f32 %v4131, 1.442695
      %v4136 = vpow.pop %v4135
      %v4137 = vmul.f32 %v4132, 1.442695
      %v4138 = vpow.pop %v4137
      %v4139 = vsel %vm1499, %v4134, 0.0
      %4140 = vadd.xlane.f32.xlu0 %v4139
      %v4141 = vpop.xlane.xlu0 %4140
      %v4142 = vsel %vm1499, %v4136, 0.0
      %4143 = vadd.xlane.f32.xlu0 %v4142
      %v4144 = vpop.xlane.xlu0 %4143
      %v4145 = vsel %vm1499, %v4138, 0.0
      %4146 = vadd.xlane.f32.xlu0 %v4145
      %v4147 = vpop.xlane.xlu0 %4146
      %v4148 = vrcp.pop %v4141
      %v4149 = vrcp.pop %v4144
      %v4150 = vrcp.pop %v4147
      %v4151 = vmul.f32 %v4134, %v4148
      %v4152 = vmul.f32 %v4136, %v4149
      %v4153 = vmul.f32 %v4138, %v4150
      %v4154 = vpack.c.bf16 %v4152, %v4151
      %v4155 = vpack.c.bf16 %v4153, %v4153
      %v4156 = vpack.c.bf16 %v4041, %v4038
      %v4157 = vpack.c.bf16 %v4046, %v4046
      %v4159 = vsel %vm1499, %v4154, 0
      %v4162 = vsel %vm1499, %v4155, 0
      %v4165 = vsel %vm1543, %v4157, 0
      %4167 = vmatprep.subr.bf16.mxu0 0
      %4168 = vmatpush1.bf16.msra.mxu0 0
      %4169 = vmatprep.subr.bf16.mxu0 0
      %4170 = vmatpush1.bf16.msra.mxu0 0
      %4171 = vmatprep.subr.bf16.mxu0 0
      %4172 = vmatpush1.bf16.msra.mxu0 0
      %4173 = vmatprep.subr.bf16.mxu0 0
      %4174 = vmatpush1.bf16.msra.mxu0 0
      %4175 = vmatprep.subr.bf16.mxu0 0
      %4176 = vmatpush1.bf16.msra.mxu0 0
      %4177 = vmatprep.subr.bf16.mxu0 0
      %4178 = vmatpush1.bf16.msra.mxu0 0
      %4179 = vmatprep.subr.bf16.mxu0 0
      %4180 = vmatpush1.bf16.msra.mxu0 %v4165
      %4181 = vmatprep.subr.bf16.mxu0 0
      %4182 = vmatpush1.bf16.msra.mxu0 %v4156
      %4183 = vmatprep.subr.bf16.mxu0 0
      %4184 = vmatpush2.bf16.msra.mxu0 0
      %4185 = vmatprep.subr.bf16.mxu0 0
      %4186 = vmatpush2.bf16.msra.mxu0 0
      %4187 = vmatprep.subr.bf16.mxu0 0
      %4188 = vmatpush2.bf16.msra.mxu0 0
      %4189 = vmatprep.subr.bf16.mxu0 0
      %4190 = vmatpush2.bf16.msra.mxu0 0
      %4191 = vmatprep.subr.bf16.mxu0 0
      %4192 = vmatpush2.bf16.msra.mxu0 0
      %4193 = vmatprep.subr.bf16.mxu0 0
      %4194 = vmatpush2.bf16.msra.mxu0 0
      %4195 = vmatprep.subr.bf16.mxu0 0
      %4196 = vmatpush2.bf16.msra.mxu0 0
      %4197 = vmatprep.subr.bf16.mxu0 0
      %4198 = vmatpush2.bf16.msra.mxu0 0
      %4199 = vmatprep.mubr.bf16.mxu0 0
      %4200 = vmatmul.mubr.bf16.gmra.mxu0 %v4159
      %v4201 = vpop.f32.mrf.mxu0
      %v4202 = vadd.f32 0.0, %v4201
      %v4203 = vpop.f32.mrf.mxu0
      %v4204 = vpop.f32.mrf.mxu0
      %v4205 = vadd.f32 0.0, %v4204
      %v4206 = vpop.f32.mrf.mxu0
      %4207 = vmatprep.mubr.bf16.mxu0 0
      %4208 = vmatmul.mubr.bf16.gmra.mxu0 %v4162
      %v4209 = vpop.f32.mrf.mxu0
      %v4210 = vadd.f32 0.0, %v4209
      %v4211 = vpop.f32.mrf.mxu0
      %v4212 = vpop.f32.mrf.mxu0
      %v4213 = vpop.f32.mrf.mxu0
      %4214 = vdwg.mxu0
      %s4215 = scalar_lea.vmem %s11, 112
      %v4216 = vld [vmem:[%s4215] sm:$0xf]
      %v4217 = vld [vmem:[%s4215 + $0x4] sm:$0xf]
      %v4218 = vld [vmem:[%s4215 + $0x8] sm:$0xf]
      %v4219 = vld [vmem:[%s4215 + $0xc] sm:$0xf]
      %v4224 = vunpack.c.l.b16 %v4216
      %v4225 = vunpack.c.l.b16 %v4217
      %v4226 = vunpack.c.l.b16 %v4218
      %v4227 = vunpack.c.l.b16 %v4219
      %v4228 = vpack.c.b16 %v4225, %v4224
      %v4229 = vpack.c.b16 %v4227, %v4226
      %4232 = vmatprep.subr.bf16.mxu0 0
      %4233 = vmatpush1.bf16.msra.mxu0 0
      %4234 = vmatprep.subr.bf16.mxu0 0
      %4235 = vmatpush1.bf16.msra.mxu0 0
      %4236 = vmatprep.subr.bf16.mxu0 0
      %4237 = vmatpush1.bf16.msra.mxu0 0
      %4238 = vmatprep.subr.bf16.mxu0 0
      %4239 = vmatpush1.bf16.msra.mxu0 0
      %4240 = vmatprep.subr.bf16.mxu0 0
      %4241 = vmatpush1.bf16.msra.mxu0 0
      %4242 = vmatprep.subr.bf16.mxu0 0
      %4243 = vmatpush1.bf16.msra.mxu0 0
      %4244 = vmatprep.subr.bf16.mxu0 0
      %4245 = vmatpush1.bf16.msra.mxu0 %v4229
      %4246 = vmatprep.subr.bf16.mxu0 0
      %4247 = vmatpush1.bf16.msra.mxu0 %v4228
      %4248 = vmatprep.subr.bf16.mxu0 0
      %4249 = vmatpush2.bf16.msra.mxu0 0
      %4250 = vmatprep.subr.bf16.mxu0 0
      %4251 = vmatpush2.bf16.msra.mxu0 0
      %4252 = vmatprep.subr.bf16.mxu0 0
      %4253 = vmatpush2.bf16.msra.mxu0 0
      %4254 = vmatprep.subr.bf16.mxu0 0
      %4255 = vmatpush2.bf16.msra.mxu0 0
      %4256 = vmatprep.subr.bf16.mxu0 0
      %4257 = vmatpush2.bf16.msra.mxu0 0
      %4258 = vmatprep.subr.bf16.mxu0 0
      %4259 = vmatpush2.bf16.msra.mxu0 0
      %4260 = vmatprep.subr.bf16.mxu0 0
      %4261 = vmatpush2.bf16.msra.mxu0 0
      %4262 = vmatprep.subr.bf16.mxu0 0
      %4263 = vmatpush2.bf16.msra.mxu0 0
      %4264 = vmatprep.mubr.bf16.mxu0 0
      %4265 = vmatmul.mubr.bf16.gmra.mxu0 %v3150
      %v4266 = vpop.f32.mrf.mxu0
      %v4267 = vadd.f32 0.0, %v4266
      %v4268 = vpop.f32.mrf.mxu0
      %v4269 = vpop.f32.mrf.mxu0
      %v4270 = vadd.f32 0.0, %v4269
      %v4271 = vpop.f32.mrf.mxu0
      %4272 = vmatprep.mubr.bf16.mxu0 0
      %4273 = vmatmul.mubr.bf16.gmra.mxu0 %v3153
      %v4274 = vpop.f32.mrf.mxu0
      %v4275 = vadd.f32 0.0, %v4274
      %v4276 = vpop.f32.mrf.mxu0
      %v4277 = vpop.f32.mrf.mxu0
      %v4278 = vpop.f32.mrf.mxu0
      %4279 = vdwg.mxu0
      %s4280 = scalar_lea.vmem %s12, 112
      %v4281 = vld [vmem:[%s4280] sm:$0xf]
      %v4282 = vld [vmem:[%s4280 + $0x4] sm:$0xf]
      %v4283 = vld [vmem:[%s4280 + $0x8] sm:$0xf]
      %v4284 = vld [vmem:[%s4280 + $0xc] sm:$0xf]
      %v4289 = vunpack.c.l.b16 %v4281
      %v4290 = vunpack.c.l.b16 %v4282
      %v4291 = vunpack.c.l.b16 %v4283
      %v4292 = vunpack.c.l.b16 %v4284
      %v4293 = vpack.c.b16 %v4290, %v4289
      %v4294 = vpack.c.b16 %v4292, %v4291
      %4297 = vmatprep.subr.bf16.mxu0 0
      %4298 = vmatpush1.bf16.msra.mxu0 0
      %4299 = vmatprep.subr.bf16.mxu0 0
      %4300 = vmatpush1.bf16.msra.mxu0 0
      %4301 = vmatprep.subr.bf16.mxu0 0
      %4302 = vmatpush1.bf16.msra.mxu0 0
      %4303 = vmatprep.subr.bf16.mxu0 0
      %4304 = vmatpush1.bf16.msra.mxu0 0
      %4305 = vmatprep.subr.bf16.mxu0 0
      %4306 = vmatpush1.bf16.msra.mxu0 0
      %4307 = vmatprep.subr.bf16.mxu0 0
      %4308 = vmatpush1.bf16.msra.mxu0 0
      %4309 = vmatprep.subr.bf16.mxu0 0
      %4310 = vmatpush1.bf16.msra.mxu0 %v4294
      %4311 = vmatprep.subr.bf16.mxu0 0
      %4312 = vmatpush1.bf16.msra.mxu0 %v4293
      %4313 = vmatprep.subr.bf16.mxu0 0
      %4314 = vmatpush2.bf16.msra.mxu0 0
      %4315 = vmatprep.subr.bf16.mxu0 0
      %4316 = vmatpush2.bf16.msra.mxu0 0
      %4317 = vmatprep.subr.bf16.mxu0 0
      %4318 = vmatpush2.bf16.msra.mxu0 0
      %4319 = vmatprep.subr.bf16.mxu0 0
      %4320 = vmatpush2.bf16.msra.mxu0 0
      %4321 = vmatprep.subr.bf16.mxu0 0
      %4322 = vmatpush2.bf16.msra.mxu0 0
      %4323 = vmatprep.subr.bf16.mxu0 0
      %4324 = vmatpush2.bf16.msra.mxu0 0
      %4325 = vmatprep.subr.bf16.mxu0 0
      %4326 = vmatpush2.bf16.msra.mxu0 0
      %4327 = vmatprep.subr.bf16.mxu0 0
      %4328 = vmatpush2.bf16.msra.mxu0 0
      %4329 = vmatprep.mubr.bf16.mxu0 0
      %4330 = vmatmul.mubr.bf16.gmra.mxu0 %v3150
      %v4331 = vpop.f32.mrf.mxu0
      %v4332 = vadd.f32 0.0, %v4331
      %v4333 = vpop.f32.mrf.mxu0
      %v4334 = vpop.f32.mrf.mxu0
      %v4335 = vadd.f32 0.0, %v4334
      %v4336 = vpop.f32.mrf.mxu0
      %4337 = vmatprep.mubr.bf16.mxu0 0
      %4338 = vmatmul.mubr.bf16.gmra.mxu0 %v3153
      %v4339 = vpop.f32.mrf.mxu0
      %v4340 = vadd.f32 0.0, %v4339
      %v4341 = vpop.f32.mrf.mxu0
      %v4342 = vpop.f32.mrf.mxu0
      %v4343 = vpop.f32.mrf.mxu0
      %4344 = vdwg.mxu0
      %s4345 = scalar_lea.vmem %s13, 112
      %v4346 = vld [vmem:[%s4345] sm:$0xf]
      %v4347 = vld [vmem:[%s4345 + $0x4] sm:$0xf]
      %v4348 = vld [vmem:[%s4345 + $0x8] sm:$0xf]
      %v4349 = vld [vmem:[%s4345 + $0xc] sm:$0xf]
      %v4354 = vunpack.c.l.b16 %v4346
      %v4355 = vunpack.c.l.b16 %v4347
      %v4356 = vunpack.c.l.b16 %v4348
      %v4357 = vunpack.c.l.b16 %v4349
      %v4358 = vpack.c.b16 %v4355, %v4354
      %v4359 = vpack.c.b16 %v4357, %v4356
      %4362 = vmatprep.subr.bf16.mxu0 0
      %4363 = vmatpush1.bf16.msra.mxu0 0
      %4364 = vmatprep.subr.bf16.mxu0 0
      %4365 = vmatpush1.bf16.msra.mxu0 0
      %4366 = vmatprep.subr.bf16.mxu0 0
      %4367 = vmatpush1.bf16.msra.mxu0 0
      %4368 = vmatprep.subr.bf16.mxu0 0
      %4369 = vmatpush1.bf16.msra.mxu0 0
      %4370 = vmatprep.subr.bf16.mxu0 0
      %4371 = vmatpush1.bf16.msra.mxu0 0
      %4372 = vmatprep.subr.bf16.mxu0 0
      %4373 = vmatpush1.bf16.msra.mxu0 0
      %4374 = vmatprep.subr.bf16.mxu0 0
      %4375 = vmatpush1.bf16.msra.mxu0 %v4359
      %4376 = vmatprep.subr.bf16.mxu0 0
      %4377 = vmatpush1.bf16.msra.mxu0 %v4358
      %4378 = vmatprep.subr.bf16.mxu0 0
      %4379 = vmatpush2.bf16.msra.mxu0 0
      %4380 = vmatprep.subr.bf16.mxu0 0
      %4381 = vmatpush2.bf16.msra.mxu0 0
      %4382 = vmatprep.subr.bf16.mxu0 0
      %4383 = vmatpush2.bf16.msra.mxu0 0
      %4384 = vmatprep.subr.bf16.mxu0 0
      %4385 = vmatpush2.bf16.msra.mxu0 0
      %4386 = vmatprep.subr.bf16.mxu0 0
      %4387 = vmatpush2.bf16.msra.mxu0 0
      %4388 = vmatprep.subr.bf16.mxu0 0
      %4389 = vmatpush2.bf16.msra.mxu0 0
      %4390 = vmatprep.subr.bf16.mxu0 0
      %4391 = vmatpush2.bf16.msra.mxu0 0
      %4392 = vmatprep.subr.bf16.mxu0 0
      %4393 = vmatpush2.bf16.msra.mxu0 0
      %4394 = vmatprep.mubr.bf16.mxu0 0
      %4395 = vmatmul.mubr.bf16.gmra.mxu0 %v3150
      %v4396 = vpop.f32.mrf.mxu0
      %v4397 = vadd.f32 0.0, %v4396
      %v4398 = vpop.f32.mrf.mxu0
      %v4399 = vpop.f32.mrf.mxu0
      %v4400 = vadd.f32 0.0, %v4399
      %v4401 = vpop.f32.mrf.mxu0
      %4402 = vmatprep.mubr.bf16.mxu0 0
      %4403 = vmatmul.mubr.bf16.gmra.mxu0 %v3153
      %v4404 = vpop.f32.mrf.mxu0
      %v4405 = vadd.f32 0.0, %v4404
      %v4406 = vpop.f32.mrf.mxu0
      %v4407 = vpop.f32.mrf.mxu0
      %v4408 = vpop.f32.mrf.mxu0
      %4409 = vdwg.mxu0
      %v4410 = vpack.c.bf16 %v4270, %v4267
      %v4411 = vpack.c.bf16 %v4275, %v4275
      %v4412 = vpack.c.bf16 %v4335, %v4332
      %v4413 = vpack.c.bf16 %v4340, %v4340
      %v4415 = vsel %vm1432, %v4410, 0
      %v4418 = vsel %vm1432, %v4411, 0
      %v4421 = vsel %vm1432, %v4412, 0
      %v4424 = vsel %vm1432, %v4413, 0
      %4426 = vmatprep.subr.bf16.mxu0 0
      %4427 = vmatpush1.bf16.xpose.msra.mxu0 0
      %4428 = vmatprep.subr.bf16.mxu0 0
      %4429 = vmatpush1.bf16.xpose.msra.mxu0 0
      %4430 = vmatprep.subr.bf16.mxu0 0
      %4431 = vmatpush1.bf16.xpose.msra.mxu0 0
      %4432 = vmatprep.subr.bf16.mxu0 0
      %4433 = vmatpush1.bf16.xpose.msra.mxu0 0
      %4434 = vmatprep.subr.bf16.mxu0 0
      %4435 = vmatpush1.bf16.xpose.msra.mxu0 0
      %4436 = vmatprep.subr.bf16.mxu0 0
      %4437 = vmatpush1.bf16.xpose.msra.mxu0 0
      %4438 = vmatprep.subr.bf16.mxu0 0
      %4439 = vmatpush1.bf16.xpose.msra.mxu0 %v4424
      %4440 = vmatprep.subr.bf16.mxu0 0
      %4441 = vmatpush1.bf16.xpose.msra.mxu0 %v4421
      %4442 = vmatprep.subr.bf16.mxu0 0
      %4443 = vmatpush2.bf16.xpose.msra.mxu0 0
      %4444 = vmatprep.subr.bf16.mxu0 0
      %4445 = vmatpush2.bf16.xpose.msra.mxu0 0
      %4446 = vmatprep.subr.bf16.mxu0 0
      %4447 = vmatpush2.bf16.xpose.msra.mxu0 0
      %4448 = vmatprep.subr.bf16.mxu0 0
      %4449 = vmatpush2.bf16.xpose.msra.mxu0 0
      %4450 = vmatprep.subr.bf16.mxu0 0
      %4451 = vmatpush2.bf16.xpose.msra.mxu0 0
      %4452 = vmatprep.subr.bf16.mxu0 0
      %4453 = vmatpush2.bf16.xpose.msra.mxu0 0
      %4454 = vmatprep.subr.bf16.mxu0 0
      %4455 = vmatpush2.bf16.xpose.msra.mxu0 0
      %4456 = vmatprep.subr.bf16.mxu0 0
      %4457 = vmatpush2.bf16.xpose.msra.mxu0 0
      %4458 = vmatprep.mubr.bf16.mxu0 0
      %4459 = vmatmul.mubr.bf16.gmra.mxu0 %v4415
      %v4460 = vpop.f32.mrf.mxu0
      %v4461 = vadd.f32 0.0, %v4460
      %v4462 = vpop.f32.mrf.mxu0
      %v4463 = vpop.f32.mrf.mxu0
      %v4464 = vadd.f32 0.0, %v4463
      %v4465 = vpop.f32.mrf.mxu0
      %4466 = vmatprep.mubr.bf16.mxu0 0
      %4467 = vmatmul.mubr.bf16.gmra.mxu0 %v4418
      %v4468 = vpop.f32.mrf.mxu0
      %v4469 = vadd.f32 0.0, %v4468
      %v4470 = vpop.f32.mrf.mxu0
      %v4471 = vpop.f32.mrf.mxu0
      %v4472 = vpop.f32.mrf.mxu0
      %4473 = vdwg.mxu0
      %v4474 = vmul.f32 %v4461, 0.35355338
      %v4475 = vmul.f32 %v4464, 0.35355338
      %v4476 = vmul.f32 %v4469, 0.35355338
      %v4477 = vadd.f32 %v4474, %v819
      %v4478 = vadd.f32 %v4475, %v819
      %v4479 = vadd.f32 %v4476, %v819
      %v4480 = vsel %vm1499, %v4477, -inf
      %4481 = vmax.xlane.f32.xlu0 %v4480
      %v4482 = vpop.xlane.xlu0 %4481
      %v4483 = vsel %vm1499, %v4478, -inf
      %4484 = vmax.xlane.f32.xlu0 %v4483
      %v4485 = vpop.xlane.xlu0 %4484
      %v4486 = vsel %vm1499, %v4479, -inf
      %4487 = vmax.xlane.f32.xlu0 %v4486
      %v4488 = vpop.xlane.xlu0 %4487
      %v4489 = vsub.f32 %v4477, %v4482
      %v4490 = vsub.f32 %v4478, %v4485
      %v4491 = vsub.f32 %v4479, %v4488
      %v4492 = vmul.f32 %v4489, 1.442695
      %v4493 = vpow.pop %v4492
      %v4494 = vmul.f32 %v4490, 1.442695
      %v4495 = vpow.pop %v4494
      %v4496 = vmul.f32 %v4491, 1.442695
      %v4497 = vpow.pop %v4496
      %v4498 = vsel %vm1499, %v4493, 0.0
      %4499 = vadd.xlane.f32.xlu0 %v4498
      %v4500 = vpop.xlane.xlu0 %4499
      %v4501 = vsel %vm1499, %v4495, 0.0
      %4502 = vadd.xlane.f32.xlu0 %v4501
      %v4503 = vpop.xlane.xlu0 %4502
      %v4504 = vsel %vm1499, %v4497, 0.0
      %4505 = vadd.xlane.f32.xlu0 %v4504
      %v4506 = vpop.xlane.xlu0 %4505
      %v4507 = vrcp.pop %v4500
      %v4508 = vrcp.pop %v4503
      %v4509 = vrcp.pop %v4506
      %v4510 = vmul.f32 %v4493, %v4507
      %v4511 = vmul.f32 %v4495, %v4508
      %v4512 = vmul.f32 %v4497, %v4509
      %v4513 = vpack.c.bf16 %v4511, %v4510
      %v4514 = vpack.c.bf16 %v4512, %v4512
      %v4515 = vpack.c.bf16 %v4400, %v4397
      %v4516 = vpack.c.bf16 %v4405, %v4405
      %v4518 = vsel %vm1499, %v4513, 0
      %v4521 = vsel %vm1499, %v4514, 0
      %v4524 = vsel %vm1543, %v4516, 0
      %4526 = vmatprep.subr.bf16.mxu0 0
      %4527 = vmatpush1.bf16.msra.mxu0 0
      %4528 = vmatprep.subr.bf16.mxu0 0
      %4529 = vmatpush1.bf16.msra.mxu0 0
      %4530 = vmatprep.subr.bf16.mxu0 0
      %4531 = vmatpush1.bf16.msra.mxu0 0
      %4532 = vmatprep.subr.bf16.mxu0 0
      %4533 = vmatpush1.bf16.msra.mxu0 0
      %4534 = vmatprep.subr.bf16.mxu0 0
      %4535 = vmatpush1.bf16.msra.mxu0 0
      %4536 = vmatprep.subr.bf16.mxu0 0
      %4537 = vmatpush1.bf16.msra.mxu0 0
      %4538 = vmatprep.subr.bf16.mxu0 0
      %4539 = vmatpush1.bf16.msra.mxu0 %v4524
      %4540 = vmatprep.subr.bf16.mxu0 0
      %4541 = vmatpush1.bf16.msra.mxu0 %v4515
      %4542 = vmatprep.subr.bf16.mxu0 0
      %4543 = vmatpush2.bf16.msra.mxu0 0
      %4544 = vmatprep.subr.bf16.mxu0 0
      %4545 = vmatpush2.bf16.msra.mxu0 0
      %4546 = vmatprep.subr.bf16.mxu0 0
      %4547 = vmatpush2.bf16.msra.mxu0 0
      %4548 = vmatprep.subr.bf16.mxu0 0
      %4549 = vmatpush2.bf16.msra.mxu0 0
      %4550 = vmatprep.subr.bf16.mxu0 0
      %4551 = vmatpush2.bf16.msra.mxu0 0
      %4552 = vmatprep.subr.bf16.mxu0 0
      %4553 = vmatpush2.bf16.msra.mxu0 0
      %4554 = vmatprep.subr.bf16.mxu0 0
      %4555 = vmatpush2.bf16.msra.mxu0 0
      %4556 = vmatprep.subr.bf16.mxu0 0
      %4557 = vmatpush2.bf16.msra.mxu0 0
      %4558 = vmatprep.mubr.bf16.mxu0 0
      %4559 = vmatmul.mubr.bf16.gmra.mxu0 %v4518
      %v4560 = vpop.f32.mrf.mxu0
      %v4561 = vadd.f32 0.0, %v4560
      %v4562 = vpop.f32.mrf.mxu0
      %v4563 = vpop.f32.mrf.mxu0
      %v4564 = vadd.f32 0.0, %v4563
      %v4565 = vpop.f32.mrf.mxu0
      %4566 = vmatprep.mubr.bf16.mxu0 0
      %4567 = vmatmul.mubr.bf16.gmra.mxu0 %v4521
      %v4568 = vpop.f32.mrf.mxu0
      %v4569 = vadd.f32 0.0, %v4568
      %v4570 = vpop.f32.mrf.mxu0
      %v4571 = vpop.f32.mrf.mxu0
      %v4572 = vpop.f32.mrf.mxu0
      %4573 = vdwg.mxu0
      %4577 = vrot.lane.b32.xlu0 %v3843, 8
      %v4578 = vpop.permute.xlu0 %4577
      %4579 = vrot.lane.b32.xlu0 %v3846, 8
      %v4580 = vpop.permute.xlu0 %4579
      %4581 = vrot.lane.b32.xlu0 %v3851, 8
      %v4582 = vpop.permute.xlu0 %4581
      %4589 = vrot.lane.b32.xlu0 %v4202, 16
      %v4590 = vpop.permute.xlu0 %4589
      %4591 = vrot.lane.b32.xlu0 %v4205, 16
      %v4592 = vpop.permute.xlu0 %4591
      %4593 = vrot.lane.b32.xlu0 %v4210, 16
      %v4594 = vpop.permute.xlu0 %4593
      %4601 = vrot.lane.b32.xlu0 %v4561, 24
      %v4602 = vpop.permute.xlu0 %4601
      %4603 = vrot.lane.b32.xlu0 %v4564, 24
      %v4604 = vpop.permute.xlu0 %4603
      %4605 = vrot.lane.b32.xlu0 %v4569, 24
      %v4606 = vpop.permute.xlu0 %4605
      %v4610 = vsel %vm1432, %v3484, %v4578
      %v4611 = vsel %vm1432, %v3487, %v4580
      %v4612 = vsel %vm1432, %v3492, %v4582
      %v4613 = vsel %vm2711, %v4610, %v4590
      %v4614 = vsel %vm2711, %v4611, %v4592
      %v4615 = vsel %vm2711, %v4612, %v4594
      %v4616 = vsel %vm1499, %v4613, %v4602
      %v4617 = vsel %vm1499, %v4614, %v4604
      %v4618 = vsel %vm1499, %v4615, %v4606
      %s4619 = scalar_lea.vmem %s14, 16
      %v4620 = vld [vmem:[%s4619] sm:$0xf]
      %v4621 = vld [vmem:[%s4619 + $0x4] sm:$0xf]
      %v4622 = vld [vmem:[%s4619 + $0x8] sm:$0xf]
      %v4623 = vld [vmem:[%s4619 + $0xc] sm:$0xf]
      %v4624 = vpack.c.bf16 %v4617, %v4616
      %v4625 = vpack.c.bf16 %v4618, %v4618
      %v4630 = vunpack.c.l.b16 %v4620
      %v4631 = vunpack.c.l.b16 %v4621
      %v4632 = vunpack.c.l.b16 %v4622
      %v4633 = vunpack.c.l.b16 %v4623
      %v4634 = vpack.c.b16 %v4631, %v4630
      %v4635 = vpack.c.b16 %v4633, %v4632
      %v4639 = vsel %vm1081, %v4624, 0
      %v4642 = vsel %vm1081, %v4625, 0
      %4644 = vmatprep.subr.bf16.mxu0 0
      %4645 = vmatpush1.bf16.msra.mxu0 0
      %4646 = vmatprep.subr.bf16.mxu0 0
      %4647 = vmatpush1.bf16.msra.mxu0 0
      %4648 = vmatprep.subr.bf16.mxu0 0
      %4649 = vmatpush1.bf16.msra.mxu0 0
      %4650 = vmatprep.subr.bf16.mxu0 0
      %4651 = vmatpush1.bf16.msra.mxu0 0
      %4652 = vmatprep.subr.bf16.mxu0 0
      %4653 = vmatpush1.bf16.msra.mxu0 0
      %4654 = vmatprep.subr.bf16.mxu0 0
      %4655 = vmatpush1.bf16.msra.mxu0 0
      %4656 = vmatprep.subr.bf16.mxu0 0
      %4657 = vmatpush1.bf16.msra.mxu0 %v4635
      %4658 = vmatprep.subr.bf16.mxu0 0
      %4659 = vmatpush1.bf16.msra.mxu0 %v4634
      %4660 = vmatprep.subr.bf16.mxu0 0
      %4661 = vmatpush2.bf16.msra.mxu0 0
      %4662 = vmatprep.subr.bf16.mxu0 0
      %4663 = vmatpush2.bf16.msra.mxu0 0
      %4664 = vmatprep.subr.bf16.mxu0 0
      %4665 = vmatpush2.bf16.msra.mxu0 0
      %4666 = vmatprep.subr.bf16.mxu0 0
      %4667 = vmatpush2.bf16.msra.mxu0 0
      %4668 = vmatprep.subr.bf16.mxu0 0
      %4669 = vmatpush2.bf16.msra.mxu0 0
      %4670 = vmatprep.subr.bf16.mxu0 0
      %4671 = vmatpush2.bf16.msra.mxu0 0
      %4672 = vmatprep.subr.bf16.mxu0 0
      %4673 = vmatpush2.bf16.msra.mxu0 0
      %4674 = vmatprep.subr.bf16.mxu0 0
      %4675 = vmatpush2.bf16.msra.mxu0 0
      %4676 = vmatprep.mubr.bf16.mxu0 0
      %4677 = vmatmul.mubr.bf16.gmra.mxu0 %v4639
      %v4678 = vpop.f32.mrf.mxu0
      %v4679 = vadd.f32 0.0, %v4678
      %v4680 = vpop.f32.mrf.mxu0
      %v4681 = vpop.f32.mrf.mxu0
      %v4682 = vadd.f32 0.0, %v4681
      %v4683 = vpop.f32.mrf.mxu0
      %4684 = vmatprep.mubr.bf16.mxu0 0
      %4685 = vmatmul.mubr.bf16.gmra.mxu0 %v4642
      %v4686 = vpop.f32.mrf.mxu0
      %v4687 = vadd.f32 0.0, %v4686
      %v4688 = vpop.f32.mrf.mxu0
      %v4689 = vpop.f32.mrf.mxu0
      %v4690 = vpop.f32.mrf.mxu0
      %4691 = vdwg.mxu0
      %v4692 = vadd.f32 %v3066, %v4679
      %v4693 = vadd.f32 %v3067, %v4682
      %v4694 = vadd.f32 %v3068, %v4687
      %s4695 = scalar_lea.vmem %s15, 1
      %v4696 = vld [vmem:[%s4695] sm:$0x1]
      %v4698 = vlaneseq
      %v4699 = vshrl.u32 %v4698, 7
      %v4700 = vsub.s32 0, %v4699
      %v4701 = vrot.slane %v4696, %v4700
      %v4703 = vadd.f32 %v4692, %v4701
      %v4704 = vadd.f32 %v4693, %v4701
      %v4705 = vadd.f32 %v4694, %v4701
      %s4706 = scalar_lea.vmem %s16, 1
      %v4707 = vld [vmem:[%s4706] sm:$0x1]
      %s4708 = scalar_lea.vmem %s17, 1
      %v4709 = vld [vmem:[%s4708] sm:$0x1]
      %v4710 = vsel %vm1081, %v4703, 0.0
      %4711 = vadd.xlane.f32.xlu0 %v4710
      %v4712 = vpop.xlane.xlu0 %4711
      %v4713 = vsel %vm1081, %v4704, 0.0
      %4714 = vadd.xlane.f32.xlu0 %v4713
      %v4715 = vpop.xlane.xlu0 %4714
      %v4716 = vsel %vm1081, %v4705, 0.0
      %4717 = vadd.xlane.f32.xlu0 %v4716
      %v4718 = vpop.xlane.xlu0 %4717
      %v4719 = vmul.f32 %v4712, %v1091
      %v4720 = vmul.f32 %v4715, %v1091
      %v4721 = vmul.f32 %v4718, %v1091
      %v4722 = vsub.f32 %v4703, %v4719
      %v4723 = vsub.f32 %v4704, %v4720
      %v4724 = vsub.f32 %v4705, %v4721
      %v4725 = vmul.f32 %v4722, %v4722
      %v4726 = vmul.f32 %v4723, %v4723
      %v4727 = vmul.f32 %v4724, %v4724
      %v4728 = vsel %vm1081, %v4725, 0.0
      %4729 = vadd.xlane.f32.xlu0 %v4728
      %v4730 = vpop.xlane.xlu0 %4729
      %v4731 = vsel %vm1081, %v4726, 0.0
      %4732 = vadd.xlane.f32.xlu0 %v4731
      %v4733 = vpop.xlane.xlu0 %4732
      %v4734 = vsel %vm1081, %v4727, 0.0
      %4735 = vadd.xlane.f32.xlu0 %v4734
      %v4736 = vpop.xlane.xlu0 %4735
      %v4737 = vmul.f32 %v4730, %v1091
      %v4738 = vmul.f32 %v4733, %v1091
      %v4739 = vmul.f32 %v4736, %v1091
      %v4740 = vadd.f32 %v4737, 1e-05
      %v4741 = vadd.f32 %v4738, 1e-05
      %v4742 = vadd.f32 %v4739, 1e-05
      %v4743 = vrsqrt.pop %v4740
      %v4744 = vrsqrt.pop %v4741
      %v4745 = vrsqrt.pop %v4742
      %v4746 = vmul.f32 %v4722, %v4743
      %v4747 = vmul.f32 %v4723, %v4744
      %v4748 = vmul.f32 %v4724, %v4745
      %v4750 = vlaneseq
      %v4751 = vshrl.u32 %v4750, 7
      %v4752 = vsub.s32 0, %v4751
      %v4753 = vrot.slane %v4707, %v4752
      %v4755 = vmul.f32 %v4746, %v4753
      %v4756 = vmul.f32 %v4747, %v4753
      %v4757 = vmul.f32 %v4748, %v4753
      %v4759 = vlaneseq
      %v4760 = vshrl.u32 %v4759, 7
      %v4761 = vsub.s32 0, %v4760
      %v4762 = vrot.slane %v4709, %v4761
      %v4764 = vadd.f32 %v4755, %v4762
      %v4765 = vadd.f32 %v4756, %v4762
      %v4766 = vadd.f32 %v4757, %v4762
      %s4767 = scalar_lea.vmem %s18, 16
      %v4768 = vld [vmem:[%s4767] sm:$0xf]
      %v4769 = vld [vmem:[%s4767 + $0x4] sm:$0xf]
      %v4770 = vld [vmem:[%s4767 + $0x8] sm:$0xf]
      %v4771 = vld [vmem:[%s4767 + $0xc] sm:$0xf]
      %v4772 = vpack.c.bf16 %v4765, %v4764
      %v4773 = vpack.c.bf16 %v4766, %v4766
      %s4774 = scalar_lea.vmem %s19, 1
      %v4775 = vld [vmem:[%s4774] sm:$0x1]
      %v4777 = vlaneseq
      %v4778 = vshrl.u32 %v4777, 7
      %v4779 = vsub.s32 0, %v4778
      %v4780 = vrot.slane %v4775, %v4779
      %v4786 = vunpack.c.l.b16 %v4768
      %v4787 = vunpack.c.l.b16 %v4769
      %v4788 = vunpack.c.l.b16 %v4770
      %v4789 = vunpack.c.l.b16 %v4771
      %v4790 = vpack.c.b16 %v4787, %v4786
      %v4791 = vpack.c.b16 %v4789, %v4788
      %v4795 = vsel %vm1081, %v4772, 0
      %v4798 = vsel %vm1081, %v4773, 0
      %4800 = vmatprep.subr.bf16.mxu0 0
      %4801 = vmatpush1.bf16.msra.mxu0 0
      %4802 = vmatprep.subr.bf16.mxu0 0
      %4803 = vmatpush1.bf16.msra.mxu0 0
      %4804 = vmatprep.subr.bf16.mxu0 0
      %4805 = vmatpush1.bf16.msra.mxu0 0
      %4806 = vmatprep.subr.bf16.mxu0 0
      %4807 = vmatpush1.bf16.msra.mxu0 0
      %4808 = vmatprep.subr.bf16.mxu0 0
      %4809 = vmatpush1.bf16.msra.mxu0 0
      %4810 = vmatprep.subr.bf16.mxu0 0
      %4811 = vmatpush1.bf16.msra.mxu0 0
      %4812 = vmatprep.subr.bf16.mxu0 0
      %4813 = vmatpush1.bf16.msra.mxu0 %v4791
      %4814 = vmatprep.subr.bf16.mxu0 0
      %4815 = vmatpush1.bf16.msra.mxu0 %v4790
      %4816 = vmatprep.subr.bf16.mxu0 0
      %4817 = vmatpush2.bf16.msra.mxu0 0
      %4818 = vmatprep.subr.bf16.mxu0 0
      %4819 = vmatpush2.bf16.msra.mxu0 0
      %4820 = vmatprep.subr.bf16.mxu0 0
      %4821 = vmatpush2.bf16.msra.mxu0 0
      %4822 = vmatprep.subr.bf16.mxu0 0
      %4823 = vmatpush2.bf16.msra.mxu0 0
      %4824 = vmatprep.subr.bf16.mxu0 0
      %4825 = vmatpush2.bf16.msra.mxu0 0
      %4826 = vmatprep.subr.bf16.mxu0 0
      %4827 = vmatpush2.bf16.msra.mxu0 0
      %4828 = vmatprep.subr.bf16.mxu0 0
      %4829 = vmatpush2.bf16.msra.mxu0 0
      %4830 = vmatprep.subr.bf16.mxu0 0
      %4831 = vmatpush2.bf16.msra.mxu0 0
      %4832 = vmatprep.mubr.bf16.mxu0 0
      %4833 = vmatmul.mubr.bf16.gmra.mxu0 %v4795
      %v4834 = vpop.f32.mrf.mxu0
      %v4835 = vadd.f32 %v4780, %v4834
      %v4836 = vpop.f32.mrf.mxu0
      %v4837 = vpop.f32.mrf.mxu0
      %v4838 = vadd.f32 %v4780, %v4837
      %v4839 = vpop.f32.mrf.mxu0
      %4840 = vmatprep.mubr.bf16.mxu0 0
      %4841 = vmatmul.mubr.bf16.gmra.mxu0 %v4798
      %v4842 = vpop.f32.mrf.mxu0
      %v4843 = vadd.f32 %v4780, %v4842
      %v4844 = vpop.f32.mrf.mxu0
      %v4845 = vpop.f32.mrf.mxu0
      %v4846 = vpop.f32.mrf.mxu0
      %4847 = vdwg.mxu0
      %v4848 = vmul.f32 %v4835, %v4835
      %v4849 = vmul.f32 %v4838, %v4838
      %v4850 = vmul.f32 %v4843, %v4843
      %v4851 = vmul.f32 %v4835, %v4848
      %v4852 = vmul.f32 %v4838, %v4849
      %v4853 = vmul.f32 %v4843, %v4850
      %v4854 = vmul.f32 %v4851, 0.044715
      %v4855 = vmul.f32 %v4852, 0.044715
      %v4856 = vmul.f32 %v4853, 0.044715
      %v4857 = vadd.f32 %v4835, %v4854
      %v4858 = vadd.f32 %v4838, %v4855
      %v4859 = vadd.f32 %v4843, %v4856
      %v4860 = vmul.f32 %v4857, 0.7978846
      %v4861 = vmul.f32 %v4858, 0.7978846
      %v4862 = vmul.f32 %v4859, 0.7978846
      %v4863 = vtanh.pop %v4860
      %v4864 = vtanh.pop %v4861
      %v4865 = vtanh.pop %v4862
      %v4866 = vadd.f32 %v4863, 1.0
      %v4867 = vadd.f32 %v4864, 1.0
      %v4868 = vadd.f32 %v4865, 1.0
      %v4869 = vmul.f32 %v4866, 0.5
      %v4870 = vmul.f32 %v4867, 0.5
      %v4871 = vmul.f32 %v4868, 0.5
      %v4872 = vmul.f32 %v4835, %v4869
      %v4873 = vmul.f32 %v4838, %v4870
      %v4874 = vmul.f32 %v4843, %v4871
      %s4875 = scalar_lea.vmem %s20, 32
      %v4876 = vld [vmem:[%s4875] sm:$0xf]
      %v4877 = vld [vmem:[%s4875 + $0x4] sm:$0xf]
      %v4878 = vld [vmem:[%s4875 + $0x8] sm:$0xf]
      %v4879 = vld [vmem:[%s4875 + $0xc] sm:$0xf]
      %v4880 = vld [vmem:[%s4875 + $0x10] sm:$0xf]
      %v4881 = vld [vmem:[%s4875 + $0x14] sm:$0xf]
      %v4882 = vld [vmem:[%s4875 + $0x18] sm:$0xf]
      %v4883 = vld [vmem:[%s4875 + $0x1c] sm:$0xf]
      %v4884 = vpack.c.bf16 %v4873, %v4872
      %v4885 = vpack.c.bf16 %v4874, %v4874
      %v4894 = vunpack.c.l.b16 %v4876
      %v4895 = vunpack.c.l.b16 %v4877
      %v4896 = vunpack.c.l.b16 %v4878
      %v4897 = vunpack.c.l.b16 %v4879
      %v4898 = vunpack.c.l.b16 %v4880
      %v4899 = vunpack.c.l.b16 %v4881
      %v4900 = vunpack.c.l.b16 %v4882
      %v4901 = vunpack.c.l.b16 %v4883
      %v4902 = vpack.c.b16 %v4895, %v4894
      %v4903 = vpack.c.b16 %v4897, %v4896
      %v4904 = vpack.c.b16 %v4899, %v4898
      %v4905 = vpack.c.b16 %v4901, %v4900
      %v4911 = vsel %vm828, %v4884, 0
      %v4914 = vsel %vm828, %v4885, 0
      %4916 = vmatprep.subr.bf16.mxu0 0
      %4917 = vmatpush1.bf16.msra.mxu0 0
      %4918 = vmatprep.subr.bf16.mxu0 0
      %4919 = vmatpush1.bf16.msra.mxu0 0
      %4920 = vmatprep.subr.bf16.mxu0 0
      %4921 = vmatpush1.bf16.msra.mxu0 0
      %4922 = vmatprep.subr.bf16.mxu0 0
      %4923 = vmatpush1.bf16.msra.mxu0 0
      %4924 = vmatprep.subr.bf16.mxu0 0
      %4925 = vmatpush1.bf16.msra.mxu0 %v4905
      %4926 = vmatprep.subr.bf16.mxu0 0
      %4927 = vmatpush1.bf16.msra.mxu0 %v4904
      %4928 = vmatprep.subr.bf16.mxu0 0
      %4929 = vmatpush1.bf16.msra.mxu0 %v4903
      %4930 = vmatprep.subr.bf16.mxu0 0
      %4931 = vmatpush1.bf16.msra.mxu0 %v4902
      %4932 = vmatprep.subr.bf16.mxu0 0
      %4933 = vmatpush2.bf16.msra.mxu0 0
      %4934 = vmatprep.subr.bf16.mxu0 0
      %4935 = vmatpush2.bf16.msra.mxu0 0
      %4936 = vmatprep.subr.bf16.mxu0 0
      %4937 = vmatpush2.bf16.msra.mxu0 0
      %4938 = vmatprep.subr.bf16.mxu0 0
      %4939 = vmatpush2.bf16.msra.mxu0 0
      %4940 = vmatprep.subr.bf16.mxu0 0
      %4941 = vmatpush2.bf16.msra.mxu0 0
      %4942 = vmatprep.subr.bf16.mxu0 0
      %4943 = vmatpush2.bf16.msra.mxu0 0
      %4944 = vmatprep.subr.bf16.mxu0 0
      %4945 = vmatpush2.bf16.msra.mxu0 0
      %4946 = vmatprep.subr.bf16.mxu0 0
      %4947 = vmatpush2.bf16.msra.mxu0 0
      %4948 = vmatprep.mubr.bf16.mxu0 0
      %4949 = vmatmul.mubr.bf16.gmra.mxu0 %v4911
      %v4950 = vpop.f32.mrf.mxu0
      %v4951 = vadd.f32 0.0, %v4950
      %v4952 = vpop.f32.mrf.mxu0
      %v4953 = vpop.f32.mrf.mxu0
      %v4954 = vpop.f32.mrf.mxu0
      %4955 = vmatprep.mubr.bf16.mxu0 0
      %4956 = vmatmul.mubr.bf16.gmra.mxu0 %v4914
      %v4957 = vpop.f32.mrf.mxu0
      %v4958 = vpop.f32.mrf.mxu0
      %v4959 = vpop.f32.mrf.mxu0
      %v4960 = vpop.f32.mrf.mxu0
      %4961 = vdwg.mxu0
      %v4962 = vadd.f32 %v4703, %v4951
      %s4963 = scalar_lea.vmem %s21, 1
      %v4964 = vld [vmem:[%s4963] sm:$0x1]
      %v4966 = vlaneseq
      %v4967 = vshrl.u32 %v4966, 7
      %v4968 = vsub.s32 0, %v4967
      %v4969 = vrot.slane %v4964, %v4968
      %v4971 = vadd.f32 %v4962, %v4969
      %v4972 = vld [vmem:[%s22] sm:$0x1]
      %v4973 = vld [vmem:[%s23] sm:$0x1]
      %vm4974 = vcmask 253952
      %v4975 = vsel %vm4974, %v4971, 0.0
      %4976 = vadd.xlane.f32.xlu0 %v4975
      %v4977 = vpop.xlane.xlu0 %4976
      %v4978 = vmul.f32 %v4977, %v1091
      %v4979 = vsub.f32 %v4971, %v4978
      %v4980 = vmul.f32 %v4979, %v4979
      %v4981 = vsel %vm4974, %v4980, 0.0
      %4982 = vadd.xlane.f32.xlu0 %v4981
      %v4983 = vpop.xlane.xlu0 %4982
      %v4984 = vmul.f32 %v4983, %v1091
      %v4985 = vadd.f32 %v4984, 1e-05
      %v4986 = vrsqrt.pop %v4985
      %v4987 = vmul.f32 %v4979, %v4986
      %v4988 = vmul.f32 %v4987, %v4972
      %v4989 = vadd.f32 %v4988, %v4973
      %v4990 = vld [vmem:[%s24] sm:$0xf]
      %v4991 = vld [vmem:[%s24 + $0x4] sm:$0xf]
      %v4992 = vld [vmem:[%s24 + $0x8] sm:$0xf]
      %v4993 = vld [vmem:[%s24 + $0xc] sm:$0xf]
      %v4994 = vpack.c.bf16 %v4989, %v4989
      %v4995 = vld [vmem:[%s25] sm:$0x1]
      %v5000 = vunpack.c.l.b16 %v4990
      %v5001 = vunpack.c.l.b16 %v4991
      %v5002 = vunpack.c.l.b16 %v4992
      %v5003 = vunpack.c.l.b16 %v4993
      %v5004 = vpack.c.b16 %v5001, %v5000
      %v5005 = vpack.c.b16 %v5003, %v5002
      %v5009 = vsel %vm1081, %v4994, 0
      %5011 = vmatprep.subr.bf16.mxu0 0
      %5012 = vmatpush1.bf16.msra.mxu0 0
      %5013 = vmatprep.subr.bf16.mxu0 0
      %5014 = vmatpush1.bf16.msra.mxu0 0
      %5015 = vmatprep.subr.bf16.mxu0 0
      %5016 = vmatpush1.bf16.msra.mxu0 0
      %5017 = vmatprep.subr.bf16.mxu0 0
      %5018 = vmatpush1.bf16.msra.mxu0 0
      %5019 = vmatprep.subr.bf16.mxu0 0
      %5020 = vmatpush1.bf16.msra.mxu0 0
      %5021 = vmatprep.subr.bf16.mxu0 0
      %5022 = vmatpush1.bf16.msra.mxu0 0
      %5023 = vmatprep.subr.bf16.mxu0 0
      %5024 = vmatpush1.bf16.msra.mxu0 %v5005
      %5025 = vmatprep.subr.bf16.mxu0 0
      %5026 = vmatpush1.bf16.msra.mxu0 %v5004
      %5027 = vmatprep.subr.bf16.mxu0 0
      %5028 = vmatpush2.bf16.msra.mxu0 0
      %5029 = vmatprep.subr.bf16.mxu0 0
      %5030 = vmatpush2.bf16.msra.mxu0 0
      %5031 = vmatprep.subr.bf16.mxu0 0
      %5032 = vmatpush2.bf16.msra.mxu0 0
      %5033 = vmatprep.subr.bf16.mxu0 0
      %5034 = vmatpush2.bf16.msra.mxu0 0
      %5035 = vmatprep.subr.bf16.mxu0 0
      %5036 = vmatpush2.bf16.msra.mxu0 0
      %5037 = vmatprep.subr.bf16.mxu0 0
      %5038 = vmatpush2.bf16.msra.mxu0 0
      %5039 = vmatprep.subr.bf16.mxu0 0
      %5040 = vmatpush2.bf16.msra.mxu0 0
      %5041 = vmatprep.subr.bf16.mxu0 0
      %5042 = vmatpush2.bf16.msra.mxu0 0
      %5043 = vmatprep.mubr.bf16.mxu0 0
      %5044 = vmatmul.mubr.bf16.gmra.mxu0 %v5009
      %v5045 = vpop.f32.mrf.mxu0
      %v5046 = vadd.f32 %v4995, %v5045
      %v5047 = vpop.f32.mrf.mxu0
      %v5048 = vpop.f32.mrf.mxu0
      %v5049 = vpop.f32.mrf.mxu0
      %5050 = vdwg.mxu0
      %v5051 = vxor.u32 %v5046, 2147483648
      %v5052 = vmul.f32 %v5051, 1.442695
      %v5053 = vpow.pop %v5052
      %v5054 = vadd.f32 %v5053, 1.0
      %v5055 = vrcp.pop %v5054
      %v5056 = vmul.f32 1.0, %v5055
      %v5057 = vld [vmem:[%s26] sm:$0x1]
      %v5058 = vmul.f32 %v5056, %v5057
      %vm5059 = vcmask 581632
      %5060 = vst.msk [vmem:[%s814] sm:$0x1] %vm5059, %v5058
      %p5061 = scmp.lt.s32.totalorder %s38, 1
      %s5062 = scalar_select %p5061, %s38, 1
      %s5063 = scalar_lea.vmem %s27, %s5062
      // Predicated region
      $region129: #{_lambda_.1} parent=127 // pred_check
        %p5064 = pneg %p628
      $region130: #{_lambda_.1} parent=127 // pred_check_branch
        %5066 = sbr.rel (%p5064) target = $region132
      $region131: #{_lambda_.1} parent=127 // pred_region
        _
      $region132: #{_lambda_.1} parent=127 // pred_fallthru
        _
    $region128: #{_lambda_.1} parent=5 // pred_fallthru
      _
    %p5067 = scmp.le.s32.totalorder 2, %s33
    // Predicated region
    $region133: #{_lambda_.1} parent=5 // pred_check
      %p5068 = pneg %p5067
    $region134: #{_lambda_.1} parent=5 // pred_check_branch
      %5070 = sbr.rel (%p5068) target = $region136
    $region135: #{_lambda_.1} parent=5 // pred_region
      %s5071 = ssub.s32 %s33, 2
      // Predicated region
      $region137: #{_lambda_.1} parent=135 // pred_check
        %p5072 = pneg %p634
      $region138: #{_lambda_.1} parent=135 // pred_check_branch
        %5074 = sbr.rel (%p5072) target = $region140
      $region139: #{_lambda_.1} parent=135 // pred_region
        %p5075 = scmp.lt.s32.totalorder %s39, 1
        %s5076 = scalar_select %p5075, %s39, 1
        %s5077 = scalar_lea.vmem %s27, %s5076
      $region140: #{_lambda_.1} parent=135 // pred_fallthru
        _
    $region136: #{_lambda_.1} parent=5 // pred_fallthru
      _
  $region6: #{_lambda_.1} parent=0 // loop_footer
    %s37 = sadd.s32 1, %s33
  $region7: #{_lambda_.1} parent=0 // loop_footer_branch
    %32 = sbr.rel target = $region3
  $region8: #{_lambda_.1} parent=0 // loop_exit
    _

</llo_original>
